<compile_context>
chip_gen: v7x
topology: tpu7x:2x2x1
jax: 0.10.0
libtpu: 0.0.40
codegen_flags: <defaults>
</compile_context>

<pallas_src>
import functools

import jax
import jax.numpy as jnp
from jax.experimental import pallas as pl
from jax.experimental.pallas import tpu as pltpu

B, L, H = 2, 8, 32          # batch, seq len, hidden size
NH, DH = 4, 8               # attention heads, head dim
FF = 4 * H                  # BERT intermediate size
P = 16                      # projection_head output dim
N_LAYERS = 4                # encoder layers -> hidden_states[-1] == hidden_states[4]
LN_EPS = 1e-12              # BERT LayerNorm eps


def _layernorm(x, g, b):
    mu = jnp.mean(x, axis=-1, keepdims=True)
    var = jnp.mean(jnp.square(x - mu), axis=-1, keepdims=True)
    return (x - mu) * jax.lax.rsqrt(var + LN_EPS) * g + b


def _vmem_spec():
    return pl.BlockSpec(memory_space=pltpu.MemorySpace.VMEM)


# ----------------------------- fused Pallas kernel -----------------------------

def fused_text_encoder_kernel(
        x_ref, mask_ref, pos_ref, tok_ref, emb_g_ref, emb_b_ref,
        wqkv_ref, bqkv_ref, wo_ref, bo_ref, g1_ref, be1_ref,
        w1_ref, bf1_ref, w2_ref, bf2_ref, g2_ref, be2_ref,
        wp_ref, o_ref, *, num_heads, num_layers):
    b, l, h = x_ref.shape
    dh = h // num_heads
    scale = 1.0 / (dh ** 0.5)

    # Additive attention mask built once from the int mask: (B, 1, L).
    add_mask = ((1.0 - mask_ref[...].astype(jnp.float32)) * -1e9)[:, None, :]

    # Embeddings: inputs_embeds + position + token_type(0), then LayerNorm.
    # (dropout is identity at eval time)
    x = x_ref[...] + pos_ref[...][None, :, :] + tok_ref[...][None, :, :]
    x = _layernorm(x, emb_g_ref[...], emb_b_ref[...])

    # Running sum over the selected hidden states (mean over seq, summed over the
    # three selected layers) -- avoids materializing per-layer hidden states.
    pooled = jnp.zeros((b, h), jnp.float32)

    for li in range(num_layers):                       # static loop over layers
        xf = x.reshape(b * l, h)

        # Fused QKV projection: one (B*L, H) @ (H, 3H) matmul.
        qkv = (jnp.dot(xf, wqkv_ref[li], preferred_element_type=jnp.float32)
               + bqkv_ref[li])
        q = qkv[:, 0 * h:1 * h].reshape(b, l, h)
        k = qkv[:, 1 * h:2 * h].reshape(b, l, h)
        v = qkv[:, 2 * h:3 * h].reshape(b, l, h)

        ctx_parts = []
        for hd in range(num_heads):                    # static loop over heads
            sl = slice(hd * dh, (hd + 1) * dh)
            qh, kh, vh = q[:, :, sl], k[:, :, sl], v[:, :, sl]
            s = jnp.einsum('bqd,bkd->bqk', qh, kh,
                           preferred_element_type=jnp.float32) * scale + add_mask
            s = s - jnp.max(s, axis=-1, keepdims=True)
            e = jnp.exp(s)
            p = e * pl.reciprocal(jnp.sum(e, axis=-1, keepdims=True), approx=True)
            ctx_parts.append(jnp.einsum('bqk,bkd->bqd', p, vh,
                                        preferred_element_type=jnp.float32))
        ctx = jnp.concatenate(ctx_parts, axis=-1).reshape(b * l, h)

        attn_out = (jnp.dot(ctx, wo_ref[li], preferred_element_type=jnp.float32)
                    + bo_ref[li])
        x1 = _layernorm(xf + attn_out, g1_ref[li], be1_ref[li])

        f = jnp.dot(x1, w1_ref[li], preferred_element_type=jnp.float32) + bf1_ref[li]
        f = jax.nn.gelu(f, approximate=True)
        f = jnp.dot(f, w2_ref[li], preferred_element_type=jnp.float32) + bf2_ref[li]
        x2 = _layernorm(x1 + f, g2_ref[li], be2_ref[li])

        x = x2.reshape(b, l, h)

        # hidden_states[1], [2], [-1] == outputs of layers 0, 1, num_layers-1.
        n_sel = int(li == 0) + int(li == 1) + int(li == num_layers - 1)
        if n_sel:
            pooled = pooled + float(n_sel) * jnp.mean(x, axis=1)

    pooled = pooled * (1.0 / 3.0)                      # mean over the 3 selected states
    o_ref[...] = jnp.dot(pooled, wp_ref[...], preferred_element_type=jnp.float32)


# ------------------------------ wrapper ------------------------------

def text_encoder_forward(prompts_embeddings, attention_mask, params):
    bsz = prompts_embeddings.shape[0]
    proj_dim = params['wp'].shape[1]
    args = (
        prompts_embeddings, attention_mask.astype(jnp.int32),
        params['pos'], params['tok'], params['emb_g'], params['emb_b'],
        params['wqkv'], params['bqkv'], params['wo'], params['bo'],
        params['g1'], params['be1'], params['w1'], params['bf1'],
        params['w2'], params['bf2'], params['g2'], params['be2'],
        params['wp'],
    )
    kernel = functools.partial(fused_text_encoder_kernel,
                               num_heads=NH, num_layers=N_LAYERS)
    return pl.pallas_call(
        kernel,
        out_shape=jax.ShapeDtypeStruct((bsz, proj_dim), jnp.float32),
        in_specs=[_vmem_spec() for _ in args],
        out_specs=_vmem_spec(),
    )(*args)


# --------------------------- pure-JAX reference ---------------------------

def reference_forward(prompts_embeddings, attention_mask, params):
    bsz, seq, hid = prompts_embeddings.shape
    add_mask = ((1.0 - attention_mask.astype(jnp.float32)) * -1e9).reshape(bsz, 1, seq)
    x = _layernorm(prompts_embeddings + params['pos'][None] + params['tok'][None],
                   params['emb_g'], params['emb_b'])
    hs = [x]
    for li in range(N_LAYERS):
        xf = x.reshape(bsz * seq, hid)
        qkv = xf @ params['wqkv'][li] + params['bqkv'][li]
        q = qkv[:, :hid].reshape(bsz, seq, hid)
        k = qkv[:, hid:2 * hid].reshape(bsz, seq, hid)
        v = qkv[:, 2 * hid:].reshape(bsz, seq, hid)
        parts = []
        for hd in range(NH):
            sl = slice(hd * DH, (hd + 1) * DH)
            s = jnp.einsum('bqd,bkd->bqk', q[:, :, sl], k[:, :, sl]) / (DH ** 0.5) + add_mask
            p = jax.nn.softmax(s, axis=-1)
            parts.append(jnp.einsum('bqk,bkd->bqd', p, v[:, :, sl]))
        ctx = jnp.concatenate(parts, axis=-1).reshape(bsz * seq, hid)
        x1 = _layernorm(xf + ctx @ params['wo'][li] + params['bo'][li],
                        params['g1'][li], params['be1'][li])
        f = (jax.nn.gelu(x1 @ params['w1'][li] + params['bf1'][li], approximate=True)
             @ params['w2'][li] + params['bf2'][li])
        x = _layernorm(x1 + f, params['g2'][li], params['be2'][li]).reshape(bsz, seq, hid)
        hs.append(x)
    stacked = jnp.stack([hs[1], hs[2], hs[-1]])               # (3, B, L, H)
    pooled = jnp.transpose(stacked, (1, 0, 2, 3)).mean(2).mean(1)
    return pooled @ params['wp']


# ------------------------------ init / main ------------------------------

def init_params(key):
    kmain = jax.random.split(key, 6)
    s = 0.05

    def rnd(k, shape):
        return (s * jax.random.normal(k, shape)).astype(jnp.float32)

    def gamma(k, shape):
        return (1.0 + 0.1 * jax.random.normal(k, shape)).astype(jnp.float32)

    params = {
        'pos': rnd(kmain[0], (L, H)),
        'tok': rnd(kmain[1], (1, H)),
        'emb_g': gamma(kmain[2], (1, H)),
        'emb_b': rnd(kmain[3], (1, H)),
        'wp': rnd(kmain[4], (H, P)),          # projection_head: Linear(H, P, bias=False)
    }
    lkeys = jax.random.split(kmain[5], N_LAYERS)
    wqkv, bqkv, wo, bo = [], [], [], []
    g1, be1, w1, bf1, w2, bf2, g2, be2 = ([] for _ in range(8))
    for i in range(N_LAYERS):
        k = jax.random.split(lkeys[i], 16)
        # Fuse Q|K|V at init time -> single (H, 3H) matmul inside the kernel.
        wqkv.append(jnp.concatenate([rnd(k[0], (H, H)), rnd(k[2], (H, H)),
                                     rnd(k[4], (H, H))], axis=1))
        bqkv.append(jnp.concatenate([rnd(k[1], (1, H)), rnd(k[3], (1, H)),
                                     rnd(k[5], (1, H))], axis=1))
        wo.append(rnd(k[6], (H, H))); bo.append(rnd(k[7], (1, H)))
        g1.append(gamma(k[8], (1, H))); be1.append(rnd(k[9], (1, H)))
        w1.append(rnd(k[10], (H, FF))); bf1.append(rnd(k[11], (1, FF)))
        w2.append(rnd(k[12], (FF, H))); bf2.append(rnd(k[13], (1, H)))
        g2.append(gamma(k[14], (1, H))); be2.append(rnd(k[15], (1, H)))
    for name, lst in [('wqkv', wqkv), ('bqkv', bqkv), ('wo', wo), ('bo', bo),
                      ('g1', g1), ('be1', be1), ('w1', w1), ('bf1', bf1),
                      ('w2', w2), ('bf2', bf2), ('g2', g2), ('be2', be2)]:
        params[name] = jnp.stack(lst)
    return params


if __name__ == "__main__":
    key = jax.random.PRNGKey(0)
    kp, ke = jax.random.split(key)
    params = init_params(kp)

    prompts_embeddings = (0.1 * jax.random.normal(ke, (B, L, H))).astype(jnp.float32)
    attention_mask = jnp.array([[1] * L, [1] * (L - 3) + [0] * 3], dtype=jnp.int32)

    out = text_encoder_forward(prompts_embeddings, attention_mask, params)
    out = jax.block_until_ready(out)

    ref = reference_forward(prompts_embeddings, attention_mask, params)
    assert out.shape == (B, P), out.shape
    assert jnp.allclose(out, ref, atol=2e-3, rtol=2e-3), (out, ref)

    print("KERNEL_OK")
</pallas_src>

<mosaic_0001>
module attributes {stable_mosaic.version = 11 : i64} {
  func.func @fused_text_encoder_kernel(%arg0: memref<2x8x32xf32, #tpu.memory_space<vmem>>, %arg1: memref<2x8xi32, #tpu.memory_space<vmem>>, %arg2: memref<8x32xf32, #tpu.memory_space<vmem>>, %arg3: memref<1x32xf32, #tpu.memory_space<vmem>>, %arg4: memref<1x32xf32, #tpu.memory_space<vmem>>, %arg5: memref<1x32xf32, #tpu.memory_space<vmem>>, %arg6: memref<4x32x96xf32, #tpu.memory_space<vmem>>, %arg7: memref<4x1x96xf32, #tpu.memory_space<vmem>>, %arg8: memref<4x32x32xf32, #tpu.memory_space<vmem>>, %arg9: memref<4x1x32xf32, #tpu.memory_space<vmem>>, %arg10: memref<4x1x32xf32, #tpu.memory_space<vmem>>, %arg11: memref<4x1x32xf32, #tpu.memory_space<vmem>>, %arg12: memref<4x32x128xf32, #tpu.memory_space<vmem>>, %arg13: memref<4x1x128xf32, #tpu.memory_space<vmem>>, %arg14: memref<4x128x32xf32, #tpu.memory_space<vmem>>, %arg15: memref<4x1x32xf32, #tpu.memory_space<vmem>>, %arg16: memref<4x1x32xf32, #tpu.memory_space<vmem>>, %arg17: memref<4x1x32xf32, #tpu.memory_space<vmem>>, %arg18: memref<32x16xf32, #tpu.memory_space<vmem>>, %arg19: memref<2x16xf32, #tpu.memory_space<vmem>>) attributes {dimension_semantics = [], scalar_prefetch = 0 : i64, scratch_operands = 0 : i64, tpu.core_type = #tpu.core_type<tc>} {
    %c0 = arith.constant 0 : index
    %c0_0 = arith.constant 0 : index
    %0 = vector.load %arg1[%c0, %c0_0] : memref<2x8xi32, #tpu.memory_space<vmem>>, vector<2x8xi32>
    %1 = arith.sitofp %0 : vector<2x8xi32> to vector<2x8xf32>
    %cst = arith.constant 1.000000e+00 : f32
    %2 = vector.broadcast %cst : f32 to vector<2x8xf32>
    %3 = arith.subf %2, %1 : vector<2x8xf32>
    %cst_1 = arith.constant -1.000000e+09 : f32
    %4 = vector.broadcast %cst_1 : f32 to vector<2x8xf32>
    %5 = arith.mulf %3, %4 : vector<2x8xf32>
    %6 = vector.shape_cast %5 : vector<2x8xf32> to vector<2x1x8xf32>
    %c0_2 = arith.constant 0 : index
    %c0_3 = arith.constant 0 : index
    %c0_4 = arith.constant 0 : index
    %7 = vector.load %arg0[%c0_2, %c0_3, %c0_4] : memref<2x8x32xf32, #tpu.memory_space<vmem>>, vector<2x8x32xf32>
    %c0_5 = arith.constant 0 : index
    %c0_6 = arith.constant 0 : index
    %8 = vector.load %arg2[%c0_5, %c0_6] : memref<8x32xf32, #tpu.memory_space<vmem>>, vector<8x32xf32>
    %9 = vector.shape_cast %8 : vector<8x32xf32> to vector<1x8x32xf32>
    %10 = vector.broadcast %9 : vector<1x8x32xf32> to vector<2x8x32xf32>
    %11 = arith.addf %7, %10 : vector<2x8x32xf32>
    %c0_7 = arith.constant 0 : index
    %c0_8 = arith.constant 0 : index
    %12 = vector.load %arg3[%c0_7, %c0_8] : memref<1x32xf32, #tpu.memory_space<vmem>>, vector<1x32xf32>
    %13 = vector.shape_cast %12 : vector<1x32xf32> to vector<1x1x32xf32>
    %14 = vector.broadcast %13 : vector<1x1x32xf32> to vector<2x8x32xf32>
    %15 = arith.addf %11, %14 : vector<2x8x32xf32>
    %c0_9 = arith.constant 0 : index
    %c0_10 = arith.constant 0 : index
    %16 = vector.load %arg4[%c0_9, %c0_10] : memref<1x32xf32, #tpu.memory_space<vmem>>, vector<1x32xf32>
    %c0_11 = arith.constant 0 : index
    %c0_12 = arith.constant 0 : index
    %17 = vector.load %arg5[%c0_11, %c0_12] : memref<1x32xf32, #tpu.memory_space<vmem>>, vector<1x32xf32>
    %cst_13 = arith.constant dense<0.000000e+00> : vector<2x8xf32>
    %18 = vector.multi_reduction <add>, %15, %cst_13 [2] : vector<2x8x32xf32> to vector<2x8xf32>
    %19 = vector.shape_cast %18 : vector<2x8xf32> to vector<2x8x1xf32>
    %cst_14 = arith.constant 3.200000e+01 : f32
    %20 = vector.broadcast %cst_14 : f32 to vector<2x8x1xf32>
    %21 = arith.divf %19, %20 : vector<2x8x1xf32>
    %22 = vector.broadcast %21 : vector<2x8x1xf32> to vector<2x8x32xf32>
    %23 = arith.subf %15, %22 : vector<2x8x32xf32>
    %24 = arith.mulf %23, %23 : vector<2x8x32xf32>
    %cst_15 = arith.constant dense<0.000000e+00> : vector<2x8xf32>
    %25 = vector.multi_reduction <add>, %24, %cst_15 [2] : vector<2x8x32xf32> to vector<2x8xf32>
    %26 = vector.shape_cast %25 : vector<2x8xf32> to vector<2x8x1xf32>
    %cst_16 = arith.constant 3.200000e+01 : f32
    %27 = vector.broadcast %cst_16 : f32 to vector<2x8x1xf32>
    %28 = arith.divf %26, %27 : vector<2x8x1xf32>
    %29 = vector.broadcast %21 : vector<2x8x1xf32> to vector<2x8x32xf32>
    %30 = arith.subf %15, %29 : vector<2x8x32xf32>
    %cst_17 = arith.constant 9.99999996E-13 : f32
    %31 = vector.broadcast %cst_17 : f32 to vector<2x8x1xf32>
    %32 = arith.addf %28, %31 : vector<2x8x1xf32>
    %33 = math.rsqrt %32 : vector<2x8x1xf32>
    %34 = vector.broadcast %33 : vector<2x8x1xf32> to vector<2x8x32xf32>
    %35 = arith.mulf %30, %34 : vector<2x8x32xf32>
    %36 = vector.shape_cast %16 : vector<1x32xf32> to vector<1x1x32xf32>
    %37 = vector.broadcast %36 : vector<1x1x32xf32> to vector<2x8x32xf32>
    %38 = arith.mulf %35, %37 : vector<2x8x32xf32>
    %39 = vector.shape_cast %17 : vector<1x32xf32> to vector<1x1x32xf32>
    %40 = vector.broadcast %39 : vector<1x1x32xf32> to vector<2x8x32xf32>
    %41 = arith.addf %38, %40 : vector<2x8x32xf32>
    %cst_18 = arith.constant 0.000000e+00 : f32
    %42 = vector.broadcast %cst_18 : f32 to vector<2x32xf32>
    %43 = vector.shape_cast %41 : vector<2x8x32xf32> to vector<16x32xf32>
    %c0_19 = arith.constant 0 : index
    %c0_20 = arith.constant 0 : index
    %c0_21 = arith.constant 0 : index
    %44 = vector.load %arg6[%c0_19, %c0_20, %c0_21] : memref<4x32x96xf32, #tpu.memory_space<vmem>>, vector<1x32x96xf32>
    %45 = vector.shape_cast %44 : vector<1x32x96xf32> to vector<32x96xf32>
    %cst_22 = arith.constant dense<0.000000e+00> : vector<16x96xf32>
    %46 = tpu.matmul %43, %45, %cst_22 {dimension_numbers = #tpu.dot_dimension_numbers<[1], [0], [0], [1], [0, 0, 1, 1], [], []>} : vector<16x32xf32>, vector<32x96xf32>, vector<16x96xf32> -> vector<16x96xf32>
    %c0_23 = arith.constant 0 : index
    %c0_24 = arith.constant 0 : index
    %c0_25 = arith.constant 0 : index
    %47 = vector.load %arg7[%c0_23, %c0_24, %c0_25] : memref<4x1x96xf32, #tpu.memory_space<vmem>>, vector<1x1x96xf32>
    %48 = vector.shape_cast %47 : vector<1x1x96xf32> to vector<1x96xf32>
    %49 = vector.broadcast %48 : vector<1x96xf32> to vector<16x96xf32>
    %50 = arith.addf %46, %49 : vector<16x96xf32>
    %51 = vector.extract_strided_slice %50 {offsets = [0, 0], sizes = [16, 32], strides = [1, 1]} : vector<16x96xf32> to vector<16x32xf32>
    %52 = vector.shape_cast %51 : vector<16x32xf32> to vector<2x8x32xf32>
    %53 = vector.extract_strided_slice %50 {offsets = [0, 32], sizes = [16, 32], strides = [1, 1]} : vector<16x96xf32> to vector<16x32xf32>
    %54 = vector.shape_cast %53 : vector<16x32xf32> to vector<2x8x32xf32>
    %55 = vector.extract_strided_slice %50 {offsets = [0, 64], sizes = [16, 32], strides = [1, 1]} : vector<16x96xf32> to vector<16x32xf32>
    %56 = vector.shape_cast %55 : vector<16x32xf32> to vector<2x8x32xf32>
    %57 = vector.extract_strided_slice %52 {offsets = [0, 0, 0], sizes = [2, 8, 8], strides = [1, 1, 1]} : vector<2x8x32xf32> to vector<2x8x8xf32>
    %58 = vector.extract_strided_slice %54 {offsets = [0, 0, 0], sizes = [2, 8, 8], strides = [1, 1, 1]} : vector<2x8x32xf32> to vector<2x8x8xf32>
    %59 = vector.extract_strided_slice %56 {offsets = [0, 0, 0], sizes = [2, 8, 8], strides = [1, 1, 1]} : vector<2x8x32xf32> to vector<2x8x8xf32>
    "tpu.trace_start"() <{level = 10 : i32, message = "bqd,bkd->bqk"}> : () -> ()
    %cst_26 = arith.constant dense<0.000000e+00> : vector<2x8x8xf32>
    %60 = tpu.matmul %57, %58, %cst_26 {dimension_numbers = #tpu.dot_dimension_numbers<[2], [2], [1], [1], [0, 0, 0, 1, 1, 1], [0], [0]>} : vector<2x8x8xf32>, vector<2x8x8xf32>, vector<2x8x8xf32> -> vector<2x8x8xf32>
    "tpu.trace_stop"() : () -> ()
    %cst_27 = arith.constant 0.353553385 : f32
    %61 = vector.broadcast %cst_27 : f32 to vector<2x8x8xf32>
    %62 = arith.mulf %60, %61 : vector<2x8x8xf32>
    %63 = vector.broadcast %6 : vector<2x1x8xf32> to vector<2x8x8xf32>
    %64 = arith.addf %62, %63 : vector<2x8x8xf32>
    %cst_28 = arith.constant dense<0xFF800000> : vector<2x8xf32>
    %65 = vector.multi_reduction <maximumf>, %64, %cst_28 [2] : vector<2x8x8xf32> to vector<2x8xf32>
    %66 = vector.shape_cast %65 : vector<2x8xf32> to vector<2x8x1xf32>
    %67 = vector.broadcast %66 : vector<2x8x1xf32> to vector<2x8x8xf32>
    %68 = arith.subf %64, %67 : vector<2x8x8xf32>
    %69 = math.exp %68 : vector<2x8x8xf32>
    %cst_29 = arith.constant dense<0.000000e+00> : vector<2x8xf32>
    %70 = vector.multi_reduction <add>, %69, %cst_29 [2] : vector<2x8x8xf32> to vector<2x8xf32>
    %71 = vector.shape_cast %70 : vector<2x8xf32> to vector<2x8x1xf32>
    %72 = tpu.reciprocal %71 {approx = true} : vector<2x8x1xf32> -> vector<2x8x1xf32>
    %73 = vector.broadcast %72 : vector<2x8x1xf32> to vector<2x8x8xf32>
    %74 = arith.mulf %69, %73 : vector<2x8x8xf32>
    "tpu.trace_start"() <{level = 10 : i32, message = "bqk,bkd->bqd"}> : () -> ()
    %cst_30 = arith.constant dense<0.000000e+00> : vector<2x8x8xf32>
    %75 = tpu.matmul %74, %59, %cst_30 {dimension_numbers = #tpu.dot_dimension_numbers<[2], [1], [1], [2], [0, 0, 0, 1, 1, 2], [0], [0]>} : vector<2x8x8xf32>, vector<2x8x8xf32>, vector<2x8x8xf32> -> vector<2x8x8xf32>
    "tpu.trace_stop"() : () -> ()
    %76 = vector.extract_strided_slice %52 {offsets = [0, 0, 8], sizes = [2, 8, 8], strides = [1, 1, 1]} : vector<2x8x32xf32> to vector<2x8x8xf32>
    %77 = vector.extract_strided_slice %54 {offsets = [0, 0, 8], sizes = [2, 8, 8], strides = [1, 1, 1]} : vector<2x8x32xf32> to vector<2x8x8xf32>
    %78 = vector.extract_strided_slice %56 {offsets = [0, 0, 8], sizes = [2, 8, 8], strides = [1, 1, 1]} : vector<2x8x32xf32> to vector<2x8x8xf32>
    "tpu.trace_start"() <{level = 10 : i32, message = "bqd,bkd->bqk"}> : () -> ()
    %cst_31 = arith.constant dense<0.000000e+00> : vector<2x8x8xf32>
    %79 = tpu.matmul %76, %77, %cst_31 {dimension_numbers = #tpu.dot_dimension_numbers<[2], [2], [1], [1], [0, 0, 0, 1, 1, 1], [0], [0]>} : vector<2x8x8xf32>, vector<2x8x8xf32>, vector<2x8x8xf32> -> vector<2x8x8xf32>
    "tpu.trace_stop"() : () -> ()
    %cst_32 = arith.constant 0.353553385 : f32
    %80 = vector.broadcast %cst_32 : f32 to vector<2x8x8xf32>
    %81 = arith.mulf %79, %80 : vector<2x8x8xf32>
    %82 = vector.broadcast %6 : vector<2x1x8xf32> to vector<2x8x8xf32>
    %83 = arith.addf %81, %82 : vector<2x8x8xf32>
    %cst_33 = arith.constant dense<0xFF800000> : vector<2x8xf32>
    %84 = vector.multi_reduction <maximumf>, %83, %cst_33 [2] : vector<2x8x8xf32> to vector<2x8xf32>
    %85 = vector.shape_cast %84 : vector<2x8xf32> to vector<2x8x1xf32>
    %86 = vector.broadcast %85 : vector<2x8x1xf32> to vector<2x8x8xf32>
    %87 = arith.subf %83, %86 : vector<2x8x8xf32>
    %88 = math.exp %87 : vector<2x8x8xf32>
    %cst_34 = arith.constant dense<0.000000e+00> : vector<2x8xf32>
    %89 = vector.multi_reduction <add>, %88, %cst_34 [2] : vector<2x8x8xf32> to vector<2x8xf32>
    %90 = vector.shape_cast %89 : vector<2x8xf32> to vector<2x8x1xf32>
    %91 = tpu.reciprocal %90 {approx = true} : vector<2x8x1xf32> -> vector<2x8x1xf32>
    %92 = vector.broadcast %91 : vector<2x8x1xf32> to vector<2x8x8xf32>
    %93 = arith.mulf %88, %92 : vector<2x8x8xf32>
    "tpu.trace_start"() <{level = 10 : i32, message = "bqk,bkd->bqd"}> : () -> ()
    %cst_35 = arith.constant dense<0.000000e+00> : vector<2x8x8xf32>
    %94 = tpu.matmul %93, %78, %cst_35 {dimension_numbers = #tpu.dot_dimension_numbers<[2], [1], [1], [2], [0, 0, 0, 1, 1, 2], [0], [0]>} : vector<2x8x8xf32>, vector<2x8x8xf32>, vector<2x8x8xf32> -> vector<2x8x8xf32>
    "tpu.trace_stop"() : () -> ()
    %95 = vector.extract_strided_slice %52 {offsets = [0, 0, 16], sizes = [2, 8, 8], strides = [1, 1, 1]} : vector<2x8x32xf32> to vector<2x8x8xf32>
    %96 = vector.extract_strided_slice %54 {offsets = [0, 0, 16], sizes = [2, 8, 8], strides = [1, 1, 1]} : vector<2x8x32xf32> to vector<2x8x8xf32>
    %97 = vector.extract_strided_slice %56 {offsets = [0, 0, 16], sizes = [2, 8, 8], strides = [1, 1, 1]} : vector<2x8x32xf32> to vector<2x8x8xf32>
    "tpu.trace_start"() <{level = 10 : i32, message = "bqd,bkd->bqk"}> : () -> ()
    %cst_36 = arith.constant dense<0.000000e+00> : vector<2x8x8xf32>
    %98 = tpu.matmul %95, %96, %cst_36 {dimension_numbers = #tpu.dot_dimension_numbers<[2], [2], [1], [1], [0, 0, 0, 1, 1, 1], [0], [0]>} : vector<2x8x8xf32>, vector<2x8x8xf32>, vector<2x8x8xf32> -> vector<2x8x8xf32>
    "tpu.trace_stop"() : () -> ()
    %cst_37 = arith.constant 0.353553385 : f32
    %99 = vector.broadcast %cst_37 : f32 to vector<2x8x8xf32>
    %100 = arith.mulf %98, %99 : vector<2x8x8xf32>
    %101 = vector.broadcast %6 : vector<2x1x8xf32> to vector<2x8x8xf32>
    %102 = arith.addf %100, %101 : vector<2x8x8xf32>
    %cst_38 = arith.constant dense<0xFF800000> : vector<2x8xf32>
    %103 = vector.multi_reduction <maximumf>, %102, %cst_38 [2] : vector<2x8x8xf32> to vector<2x8xf32>
    %104 = vector.shape_cast %103 : vector<2x8xf32> to vector<2x8x1xf32>
    %105 = vector.broadcast %104 : vector<2x8x1xf32> to vector<2x8x8xf32>
    %106 = arith.subf %102, %105 : vector<2x8x8xf32>
    %107 = math.exp %106 : vector<2x8x8xf32>
    %cst_39 = arith.constant dense<0.000000e+00> : vector<2x8xf32>
    %108 = vector.multi_reduction <add>, %107, %cst_39 [2] : vector<2x8x8xf32> to vector<2x8xf32>
    %109 = vector.shape_cast %108 : vector<2x8xf32> to vector<2x8x1xf32>
    %110 = tpu.reciprocal %109 {approx = true} : vector<2x8x1xf32> -> vector<2x8x1xf32>
    %111 = vector.broadcast %110 : vector<2x8x1xf32> to vector<2x8x8xf32>
    %112 = arith.mulf %107, %111 : vector<2x8x8xf32>
    "tpu.trace_start"() <{level = 10 : i32, message = "bqk,bkd->bqd"}> : () -> ()
    %cst_40 = arith.constant dense<0.000000e+00> : vector<2x8x8xf32>
    %113 = tpu.matmul %112, %97, %cst_40 {dimension_numbers = #tpu.dot_dimension_numbers<[2], [1], [1], [2], [0, 0, 0, 1, 1, 2], [0], [0]>} : vector<2x8x8xf32>, vector<2x8x8xf32>, vector<2x8x8xf32> -> vector<2x8x8xf32>
    "tpu.trace_stop"() : () -> ()
    %114 = vector.extract_strided_slice %52 {offsets = [0, 0, 24], sizes = [2, 8, 8], strides = [1, 1, 1]} : vector<2x8x32xf32> to vector<2x8x8xf32>
    %115 = vector.extract_strided_slice %54 {offsets = [0, 0, 24], sizes = [2, 8, 8], strides = [1, 1, 1]} : vector<2x8x32xf32> to vector<2x8x8xf32>
    %116 = vector.extract_strided_slice %56 {offsets = [0, 0, 24], sizes = [2, 8, 8], strides = [1, 1, 1]} : vector<2x8x32xf32> to vector<2x8x8xf32>
    "tpu.trace_start"() <{level = 10 : i32, message = "bqd,bkd->bqk"}> : () -> ()
    %cst_41 = arith.constant dense<0.000000e+00> : vector<2x8x8xf32>
    %117 = tpu.matmul %114, %115, %cst_41 {dimension_numbers = #tpu.dot_dimension_numbers<[2], [2], [1], [1], [0, 0, 0, 1, 1, 1], [0], [0]>} : vector<2x8x8xf32>, vector<2x8x8xf32>, vector<2x8x8xf32> -> vector<2x8x8xf32>
    "tpu.trace_stop"() : () -> ()
    %cst_42 = arith.constant 0.353553385 : f32
    %118 = vector.broadcast %cst_42 : f32 to vector<2x8x8xf32>
    %119 = arith.mulf %117, %118 : vector<2x8x8xf32>
    %120 = vector.broadcast %6 : vector<2x1x8xf32> to vector<2x8x8xf32>
    %121 = arith.addf %119, %120 : vector<2x8x8xf32>
    %cst_43 = arith.constant dense<0xFF800000> : vector<2x8xf32>
    %122 = vector.multi_reduction <maximumf>, %121, %cst_43 [2] : vector<2x8x8xf32> to vector<2x8xf32>
    %123 = vector.shape_cast %122 : vector<2x8xf32> to vector<2x8x1xf32>
    %124 = vector.broadcast %123 : vector<2x8x1xf32> to vector<2x8x8xf32>
    %125 = arith.subf %121, %124 : vector<2x8x8xf32>
    %126 = math.exp %125 : vector<2x8x8xf32>
    %cst_44 = arith.constant dense<0.000000e+00> : vector<2x8xf32>
    %127 = vector.multi_reduction <add>, %126, %cst_44 [2] : vector<2x8x8xf32> to vector<2x8xf32>
    %128 = vector.shape_cast %127 : vector<2x8xf32> to vector<2x8x1xf32>
    %129 = tpu.reciprocal %128 {approx = true} : vector<2x8x1xf32> -> vector<2x8x1xf32>
    %130 = vector.broadcast %129 : vector<2x8x1xf32> to vector<2x8x8xf32>
    %131 = arith.mulf %126, %130 : vector<2x8x8xf32>
    "tpu.trace_start"() <{level = 10 : i32, message = "bqk,bkd->bqd"}> : () -> ()
    %cst_45 = arith.constant dense<0.000000e+00> : vector<2x8x8xf32>
    %132 = tpu.matmul %131, %116, %cst_45 {dimension_numbers = #tpu.dot_dimension_numbers<[2], [1], [1], [2], [0, 0, 0, 1, 1, 2], [0], [0]>} : vector<2x8x8xf32>, vector<2x8x8xf32>, vector<2x8x8xf32> -> vector<2x8x8xf32>
    "tpu.trace_stop"() : () -> ()
    %133 = tpu.concatenate %75, %94, %113, %132 in 2 : vector<2x8x8xf32>, vector<2x8x8xf32>, vector<2x8x8xf32>, vector<2x8x8xf32> -> vector<2x8x32xf32>
    %134 = vector.shape_cast %133 : vector<2x8x32xf32> to vector<16x32xf32>
    %c0_46 = arith.constant 0 : index
    %c0_47 = arith.constant 0 : index
    %c0_48 = arith.constant 0 : index
    %135 = vector.load %arg8[%c0_46, %c0_47, %c0_48] : memref<4x32x32xf32, #tpu.memory_space<vmem>>, vector<1x32x32xf32>
    %136 = vector.shape_cast %135 : vector<1x32x32xf32> to vector<32x32xf32>
    %cst_49 = arith.constant dense<0.000000e+00> : vector<16x32xf32>
    %137 = tpu.matmul %134, %136, %cst_49 {dimension_numbers = #tpu.dot_dimension_numbers<[1], [0], [0], [1], [0, 0, 1, 1], [], []>} : vector<16x32xf32>, vector<32x32xf32>, vector<16x32xf32> -> vector<16x32xf32>
    %c0_50 = arith.constant 0 : index
    %c0_51 = arith.constant 0 : index
    %c0_52 = arith.constant 0 : index
    %138 = vector.load %arg9[%c0_50, %c0_51, %c0_52] : memref<4x1x32xf32, #tpu.memory_space<vmem>>, vector<1x1x32xf32>
    %139 = vector.shape_cast %138 : vector<1x1x32xf32> to vector<1x32xf32>
    %140 = vector.broadcast %139 : vector<1x32xf32> to vector<16x32xf32>
    %141 = arith.addf %137, %140 : vector<16x32xf32>
    %142 = arith.addf %43, %141 : vector<16x32xf32>
    %c0_53 = arith.constant 0 : index
    %c0_54 = arith.constant 0 : index
    %c0_55 = arith.constant 0 : index
    %143 = vector.load %arg10[%c0_53, %c0_54, %c0_55] : memref<4x1x32xf32, #tpu.memory_space<vmem>>, vector<1x1x32xf32>
    %144 = vector.shape_cast %143 : vector<1x1x32xf32> to vector<1x32xf32>
    %c0_56 = arith.constant 0 : index
    %c0_57 = arith.constant 0 : index
    %c0_58 = arith.constant 0 : index
    %145 = vector.load %arg11[%c0_56, %c0_57, %c0_58] : memref<4x1x32xf32, #tpu.memory_space<vmem>>, vector<1x1x32xf32>
    %146 = vector.shape_cast %145 : vector<1x1x32xf32> to vector<1x32xf32>
    %cst_59 = arith.constant dense<0.000000e+00> : vector<16xf32>
    %147 = vector.multi_reduction <add>, %142, %cst_59 [1] : vector<16x32xf32> to vector<16xf32>
    %148 = vector.shape_cast %147 : vector<16xf32> to vector<16x1xf32>
    %cst_60 = arith.constant 3.200000e+01 : f32
    %149 = vector.broadcast %cst_60 : f32 to vector<16x1xf32>
    %150 = arith.divf %148, %149 : vector<16x1xf32>
    %151 = vector.broadcast %150 : vector<16x1xf32> to vector<16x32xf32>
    %152 = arith.subf %142, %151 : vector<16x32xf32>
    %153 = arith.mulf %152, %152 : vector<16x32xf32>
    %cst_61 = arith.constant dense<0.000000e+00> : vector<16xf32>
    %154 = vector.multi_reduction <add>, %153, %cst_61 [1] : vector<16x32xf32> to vector<16xf32>
    %155 = vector.shape_cast %154 : vector<16xf32> to vector<16x1xf32>
    %cst_62 = arith.constant 3.200000e+01 : f32
    %156 = vector.broadcast %cst_62 : f32 to vector<16x1xf32>
    %157 = arith.divf %155, %156 : vector<16x1xf32>
    %158 = vector.broadcast %150 : vector<16x1xf32> to vector<16x32xf32>
    %159 = arith.subf %142, %158 : vector<16x32xf32>
    %cst_63 = arith.constant 9.99999996E-13 : f32
    %160 = vector.broadcast %cst_63 : f32 to vector<16x1xf32>
    %161 = arith.addf %157, %160 : vector<16x1xf32>
    %162 = math.rsqrt %161 : vector<16x1xf32>
    %163 = vector.broadcast %162 : vector<16x1xf32> to vector<16x32xf32>
    %164 = arith.mulf %159, %163 : vector<16x32xf32>
    %165 = vector.broadcast %144 : vector<1x32xf32> to vector<16x32xf32>
    %166 = arith.mulf %164, %165 : vector<16x32xf32>
    %167 = vector.broadcast %146 : vector<1x32xf32> to vector<16x32xf32>
    %168 = arith.addf %166, %167 : vector<16x32xf32>
    %c0_64 = arith.constant 0 : index
    %c0_65 = arith.constant 0 : index
    %c0_66 = arith.constant 0 : index
    %169 = vector.load %arg12[%c0_64, %c0_65, %c0_66] : memref<4x32x128xf32, #tpu.memory_space<vmem>>, vector<1x32x128xf32>
    %170 = vector.shape_cast %169 : vector<1x32x128xf32> to vector<32x128xf32>
    %cst_67 = arith.constant dense<0.000000e+00> : vector<16x128xf32>
    %171 = tpu.matmul %168, %170, %cst_67 {dimension_numbers = #tpu.dot_dimension_numbers<[1], [0], [0], [1], [0, 0, 1, 1], [], []>} : vector<16x32xf32>, vector<32x128xf32>, vector<16x128xf32> -> vector<16x128xf32>
    %c0_68 = arith.constant 0 : index
    %c0_69 = arith.constant 0 : index
    %c0_70 = arith.constant 0 : index
    %172 = vector.load %arg13[%c0_68, %c0_69, %c0_70] : memref<4x1x128xf32, #tpu.memory_space<vmem>>, vector<1x1x128xf32>
    %173 = vector.shape_cast %172 : vector<1x1x128xf32> to vector<1x128xf32>
    %174 = vector.broadcast %173 : vector<1x128xf32> to vector<16x128xf32>
    %175 = arith.addf %171, %174 : vector<16x128xf32>
    %176 = arith.mulf %175, %175 : vector<16x128xf32>
    %177 = arith.mulf %175, %176 : vector<16x128xf32>
    %cst_71 = arith.constant 4.471500e-02 : f32
    %178 = vector.broadcast %cst_71 : f32 to vector<16x128xf32>
    %179 = arith.mulf %178, %177 : vector<16x128xf32>
    %180 = arith.addf %175, %179 : vector<16x128xf32>
    %cst_72 = arith.constant 0.797884583 : f32
    %181 = vector.broadcast %cst_72 : f32 to vector<16x128xf32>
    %182 = arith.mulf %181, %180 : vector<16x128xf32>
    %183 = math.tanh %182 : vector<16x128xf32>
    %cst_73 = arith.constant 1.000000e+00 : f32
    %184 = vector.broadcast %cst_73 : f32 to vector<16x128xf32>
    %185 = arith.addf %184, %183 : vector<16x128xf32>
    %cst_74 = arith.constant 5.000000e-01 : f32
    %186 = vector.broadcast %cst_74 : f32 to vector<16x128xf32>
    %187 = arith.mulf %186, %185 : vector<16x128xf32>
    %188 = arith.mulf %175, %187 : vector<16x128xf32>
    %c0_75 = arith.constant 0 : index
    %c0_76 = arith.constant 0 : index
    %c0_77 = arith.constant 0 : index
    %189 = vector.load %arg14[%c0_75, %c0_76, %c0_77] : memref<4x128x32xf32, #tpu.memory_space<vmem>>, vector<1x128x32xf32>
    %190 = vector.shape_cast %189 : vector<1x128x32xf32> to vector<128x32xf32>
    %cst_78 = arith.constant dense<0.000000e+00> : vector<16x32xf32>
    %191 = tpu.matmul %188, %190, %cst_78 {dimension_numbers = #tpu.dot_dimension_numbers<[1], [0], [0], [1], [0, 0, 1, 1], [], []>} : vector<16x128xf32>, vector<128x32xf32>, vector<16x32xf32> -> vector<16x32xf32>
    %c0_79 = arith.constant 0 : index
    %c0_80 = arith.constant 0 : index
    %c0_81 = arith.constant 0 : index
    %192 = vector.load %arg15[%c0_79, %c0_80, %c0_81] : memref<4x1x32xf32, #tpu.memory_space<vmem>>, vector<1x1x32xf32>
    %193 = vector.shape_cast %192 : vector<1x1x32xf32> to vector<1x32xf32>
    %194 = vector.broadcast %193 : vector<1x32xf32> to vector<16x32xf32>
    %195 = arith.addf %191, %194 : vector<16x32xf32>
    %196 = arith.addf %168, %195 : vector<16x32xf32>
    %c0_82 = arith.constant 0 : index
    %c0_83 = arith.constant 0 : index
    %c0_84 = arith.constant 0 : index
    %197 = vector.load %arg16[%c0_82, %c0_83, %c0_84] : memref<4x1x32xf32, #tpu.memory_space<vmem>>, vector<1x1x32xf32>
    %198 = vector.shape_cast %197 : vector<1x1x32xf32> to vector<1x32xf32>
    %c0_85 = arith.constant 0 : index
    %c0_86 = arith.constant 0 : index
    %c0_87 = arith.constant 0 : index
    %199 = vector.load %arg17[%c0_85, %c0_86, %c0_87] : memref<4x1x32xf32, #tpu.memory_space<vmem>>, vector<1x1x32xf32>
    %200 = vector.shape_cast %199 : vector<1x1x32xf32> to vector<1x32xf32>
    %cst_88 = arith.constant dense<0.000000e+00> : vector<16xf32>
    %201 = vector.multi_reduction <add>, %196, %cst_88 [1] : vector<16x32xf32> to vector<16xf32>
    %202 = vector.shape_cast %201 : vector<16xf32> to vector<16x1xf32>
    %cst_89 = arith.constant 3.200000e+01 : f32
    %203 = vector.broadcast %cst_89 : f32 to vector<16x1xf32>
    %204 = arith.divf %202, %203 : vector<16x1xf32>
    %205 = vector.broadcast %204 : vector<16x1xf32> to vector<16x32xf32>
    %206 = arith.subf %196, %205 : vector<16x32xf32>
    %207 = arith.mulf %206, %206 : vector<16x32xf32>
    %cst_90 = arith.constant dense<0.000000e+00> : vector<16xf32>
    %208 = vector.multi_reduction <add>, %207, %cst_90 [1] : vector<16x32xf32> to vector<16xf32>
    %209 = vector.shape_cast %208 : vector<16xf32> to vector<16x1xf32>
    %cst_91 = arith.constant 3.200000e+01 : f32
    %210 = vector.broadcast %cst_91 : f32 to vector<16x1xf32>
    %211 = arith.divf %209, %210 : vector<16x1xf32>
    %212 = vector.broadcast %204 : vector<16x1xf32> to vector<16x32xf32>
    %213 = arith.subf %196, %212 : vector<16x32xf32>
    %cst_92 = arith.constant 9.99999996E-13 : f32
    %214 = vector.broadcast %cst_92 : f32 to vector<16x1xf32>
    %215 = arith.addf %211, %214 : vector<16x1xf32>
    %216 = math.rsqrt %215 : vector<16x1xf32>
    %217 = vector.broadcast %216 : vector<16x1xf32> to vector<16x32xf32>
    %218 = arith.mulf %213, %217 : vector<16x32xf32>
    %219 = vector.broadcast %198 : vector<1x32xf32> to vector<16x32xf32>
    %220 = arith.mulf %218, %219 : vector<16x32xf32>
    %221 = vector.broadcast %200 : vector<1x32xf32> to vector<16x32xf32>
    %222 = arith.addf %220, %221 : vector<16x32xf32>
    %223 = vector.shape_cast %222 : vector<16x32xf32> to vector<2x8x32xf32>
    %cst_93 = arith.constant dense<0.000000e+00> : vector<2x32xf32>
    %224 = vector.multi_reduction <add>, %223, %cst_93 [1] : vector<2x8x32xf32> to vector<2x32xf32>
    %cst_94 = arith.constant 8.000000e+00 : f32
    %225 = vector.broadcast %cst_94 : f32 to vector<2x32xf32>
    %226 = arith.divf %224, %225 : vector<2x32xf32>
    %cst_95 = arith.constant 1.000000e+00 : f32
    %227 = vector.broadcast %cst_95 : f32 to vector<2x32xf32>
    %228 = arith.mulf %227, %226 : vector<2x32xf32>
    %229 = arith.addf %42, %228 : vector<2x32xf32>
    %230 = vector.shape_cast %223 : vector<2x8x32xf32> to vector<16x32xf32>
    %c1 = arith.constant 1 : index
    %c0_96 = arith.constant 0 : index
    %c0_97 = arith.constant 0 : index
    %231 = vector.load %arg6[%c1, %c0_96, %c0_97] : memref<4x32x96xf32, #tpu.memory_space<vmem>>, vector<1x32x96xf32>
    %232 = vector.shape_cast %231 : vector<1x32x96xf32> to vector<32x96xf32>
    %cst_98 = arith.constant dense<0.000000e+00> : vector<16x96xf32>
    %233 = tpu.matmul %230, %232, %cst_98 {dimension_numbers = #tpu.dot_dimension_numbers<[1], [0], [0], [1], [0, 0, 1, 1], [], []>} : vector<16x32xf32>, vector<32x96xf32>, vector<16x96xf32> -> vector<16x96xf32>
    %c1_99 = arith.constant 1 : index
    %c0_100 = arith.constant 0 : index
    %c0_101 = arith.constant 0 : index
    %234 = vector.load %arg7[%c1_99, %c0_100, %c0_101] : memref<4x1x96xf32, #tpu.memory_space<vmem>>, vector<1x1x96xf32>
    %235 = vector.shape_cast %234 : vector<1x1x96xf32> to vector<1x96xf32>
    %236 = vector.broadcast %235 : vector<1x96xf32> to vector<16x96xf32>
    %237 = arith.addf %233, %236 : vector<16x96xf32>
    %238 = vector.extract_strided_slice %237 {offsets = [0, 0], sizes = [16, 32], strides = [1, 1]} : vector<16x96xf32> to vector<16x32xf32>
    %239 = vector.shape_cast %238 : vector<16x32xf32> to vector<2x8x32xf32>
    %240 = vector.extract_strided_slice %237 {offsets = [0, 32], sizes = [16, 32], strides = [1, 1]} : vector<16x96xf32> to vector<16x32xf32>
    %241 = vector.shape_cast %240 : vector<16x32xf32> to vector<2x8x32xf32>
    %242 = vector.extract_strided_slice %237 {offsets = [0, 64], sizes = [16, 32], strides = [1, 1]} : vector<16x96xf32> to vector<16x32xf32>
    %243 = vector.shape_cast %242 : vector<16x32xf32> to vector<2x8x32xf32>
    %244 = vector.extract_strided_slice %239 {offsets = [0, 0, 0], sizes = [2, 8, 8], strides = [1, 1, 1]} : vector<2x8x32xf32> to vector<2x8x8xf32>
    %245 = vector.extract_strided_slice %241 {offsets = [0, 0, 0], sizes = [2, 8, 8], strides = [1, 1, 1]} : vector<2x8x32xf32> to vector<2x8x8xf32>
    %246 = vector.extract_strided_slice %243 {offsets = [0, 0, 0], sizes = [2, 8, 8], strides = [1, 1, 1]} : vector<2x8x32xf32> to vector<2x8x8xf32>
    "tpu.trace_start"() <{level = 10 : i32, message = "bqd,bkd->bqk"}> : () -> ()
    %cst_102 = arith.constant dense<0.000000e+00> : vector<2x8x8xf32>
    %247 = tpu.matmul %244, %245, %cst_102 {dimension_numbers = #tpu.dot_dimension_numbers<[2], [2], [1], [1], [0, 0, 0, 1, 1, 1], [0], [0]>} : vector<2x8x8xf32>, vector<2x8x8xf32>, vector<2x8x8xf32> -> vector<2x8x8xf32>
    "tpu.trace_stop"() : () -> ()
    %cst_103 = arith.constant 0.353553385 : f32
    %248 = vector.broadcast %cst_103 : f32 to vector<2x8x8xf32>
    %249 = arith.mulf %247, %248 : vector<2x8x8xf32>
    %250 = vector.broadcast %6 : vector<2x1x8xf32> to vector<2x8x8xf32>
    %251 = arith.addf %249, %250 : vector<2x8x8xf32>
    %cst_104 = arith.constant dense<0xFF800000> : vector<2x8xf32>
    %252 = vector.multi_reduction <maximumf>, %251, %cst_104 [2] : vector<2x8x8xf32> to vector<2x8xf32>
    %253 = vector.shape_cast %252 : vector<2x8xf32> to vector<2x8x1xf32>
    %254 = vector.broadcast %253 : vector<2x8x1xf32> to vector<2x8x8xf32>
    %255 = arith.subf %251, %254 : vector<2x8x8xf32>
    %256 = math.exp %255 : vector<2x8x8xf32>
    %cst_105 = arith.constant dense<0.000000e+00> : vector<2x8xf32>
    %257 = vector.multi_reduction <add>, %256, %cst_105 [2] : vector<2x8x8xf32> to vector<2x8xf32>
    %258 = vector.shape_cast %257 : vector<2x8xf32> to vector<2x8x1xf32>
    %259 = tpu.reciprocal %258 {approx = true} : vector<2x8x1xf32> -> vector<2x8x1xf32>
    %260 = vector.broadcast %259 : vector<2x8x1xf32> to vector<2x8x8xf32>
    %261 = arith.mulf %256, %260 : vector<2x8x8xf32>
    "tpu.trace_start"() <{level = 10 : i32, message = "bqk,bkd->bqd"}> : () -> ()
    %cst_106 = arith.constant dense<0.000000e+00> : vector<2x8x8xf32>
    %262 = tpu.matmul %261, %246, %cst_106 {dimension_numbers = #tpu.dot_dimension_numbers<[2], [1], [1], [2], [0, 0, 0, 1, 1, 2], [0], [0]>} : vector<2x8x8xf32>, vector<2x8x8xf32>, vector<2x8x8xf32> -> vector<2x8x8xf32>
    "tpu.trace_stop"() : () -> ()
    %263 = vector.extract_strided_slice %239 {offsets = [0, 0, 8], sizes = [2, 8, 8], strides = [1, 1, 1]} : vector<2x8x32xf32> to vector<2x8x8xf32>
    %264 = vector.extract_strided_slice %241 {offsets = [0, 0, 8], sizes = [2, 8, 8], strides = [1, 1, 1]} : vector<2x8x32xf32> to vector<2x8x8xf32>
    %265 = vector.extract_strided_slice %243 {offsets = [0, 0, 8], sizes = [2, 8, 8], strides = [1, 1, 1]} : vector<2x8x32xf32> to vector<2x8x8xf32>
    "tpu.trace_start"() <{level = 10 : i32, message = "bqd,bkd->bqk"}> : () -> ()
    %cst_107 = arith.constant dense<0.000000e+00> : vector<2x8x8xf32>
    %266 = tpu.matmul %263, %264, %cst_107 {dimension_numbers = #tpu.dot_dimension_numbers<[2], [2], [1], [1], [0, 0, 0, 1, 1, 1], [0], [0]>} : vector<2x8x8xf32>, vector<2x8x8xf32>, vector<2x8x8xf32> -> vector<2x8x8xf32>
    "tpu.trace_stop"() : () -> ()
    %cst_108 = arith.constant 0.353553385 : f32
    %267 = vector.broadcast %cst_108 : f32 to vector<2x8x8xf32>
    %268 = arith.mulf %266, %267 : vector<2x8x8xf32>
    %269 = vector.broadcast %6 : vector<2x1x8xf32> to vector<2x8x8xf32>
    %270 = arith.addf %268, %269 : vector<2x8x8xf32>
    %cst_109 = arith.constant dense<0xFF800000> : vector<2x8xf32>
    %271 = vector.multi_reduction <maximumf>, %270, %cst_109 [2] : vector<2x8x8xf32> to vector<2x8xf32>
    %272 = vector.shape_cast %271 : vector<2x8xf32> to vector<2x8x1xf32>
    %273 = vector.broadcast %272 : vector<2x8x1xf32> to vector<2x8x8xf32>
    %274 = arith.subf %270, %273 : vector<2x8x8xf32>
    %275 = math.exp %274 : vector<2x8x8xf32>
    %cst_110 = arith.constant dense<0.000000e+00> : vector<2x8xf32>
    %276 = vector.multi_reduction <add>, %275, %cst_110 [2] : vector<2x8x8xf32> to vector<2x8xf32>
    %277 = vector.shape_cast %276 : vector<2x8xf32> to vector<2x8x1xf32>
    %278 = tpu.reciprocal %277 {approx = true} : vector<2x8x1xf32> -> vector<2x8x1xf32>
    %279 = vector.broadcast %278 : vector<2x8x1xf32> to vector<2x8x8xf32>
    %280 = arith.mulf %275, %279 : vector<2x8x8xf32>
    "tpu.trace_start"() <{level = 10 : i32, message = "bqk,bkd->bqd"}> : () -> ()
    %cst_111 = arith.constant dense<0.000000e+00> : vector<2x8x8xf32>
    %281 = tpu.matmul %280, %265, %cst_111 {dimension_numbers = #tpu.dot_dimension_numbers<[2], [1], [1], [2], [0, 0, 0, 1, 1, 2], [0], [0]>} : vector<2x8x8xf32>, vector<2x8x8xf32>, vector<2x8x8xf32> -> vector<2x8x8xf32>
    "tpu.trace_stop"() : () -> ()
    %282 = vector.extract_strided_slice %239 {offsets = [0, 0, 16], sizes = [2, 8, 8], strides = [1, 1, 1]} : vector<2x8x32xf32> to vector<2x8x8xf32>
    %283 = vector.extract_strided_slice %241 {offsets = [0, 0, 16], sizes = [2, 8, 8], strides = [1, 1, 1]} : vector<2x8x32xf32> to vector<2x8x8xf32>
    %284 = vector.extract_strided_slice %243 {offsets = [0, 0, 16], sizes = [2, 8, 8], strides = [1, 1, 1]} : vector<2x8x32xf32> to vector<2x8x8xf32>
    "tpu.trace_start"() <{level = 10 : i32, message = "bqd,bkd->bqk"}> : () -> ()
    %cst_112 = arith.constant dense<0.000000e+00> : vector<2x8x8xf32>
    %285 = tpu.matmul %282, %283, %cst_112 {dimension_numbers = #tpu.dot_dimension_numbers<[2], [2], [1], [1], [0, 0, 0, 1, 1, 1], [0], [0]>} : vector<2x8x8xf32>, vector<2x8x8xf32>, vector<2x8x8xf32> -> vector<2x8x8xf32>
    "tpu.trace_stop"() : () -> ()
    %cst_113 = arith.constant 0.353553385 : f32
    %286 = vector.broadcast %cst_113 : f32 to vector<2x8x8xf32>
    %287 = arith.mulf %285, %286 : vector<2x8x8xf32>
    %288 = vector.broadcast %6 : vector<2x1x8xf32> to vector<2x8x8xf32>
    %289 = arith.addf %287, %288 : vector<2x8x8xf32>
    %cst_114 = arith.constant dense<0xFF800000> : vector<2x8xf32>
    %290 = vector.multi_reduction <maximumf>, %289, %cst_114 [2] : vector<2x8x8xf32> to vector<2x8xf32>
    %291 = vector.shape_cast %290 : vector<2x8xf32> to vector<2x8x1xf32>
    %292 = vector.broadcast %291 : vector<2x8x1xf32> to vector<2x8x8xf32>
    %293 = arith.subf %289, %292 : vector<2x8x8xf32>
    %294 = math.exp %293 : vector<2x8x8xf32>
    %cst_115 = arith.constant dense<0.000000e+00> : vector<2x8xf32>
    %295 = vector.multi_reduction <add>, %294, %cst_115 [2] : vector<2x8x8xf32> to vector<2x8xf32>
    %296 = vector.shape_cast %295 : vector<2x8xf32> to vector<2x8x1xf32>
    %297 = tpu.reciprocal %296 {approx = true} : vector<2x8x1xf32> -> vector<2x8x1xf32>
    %298 = vector.broadcast %297 : vector<2x8x1xf32> to vector<2x8x8xf32>
    %299 = arith.mulf %294, %298 : vector<2x8x8xf32>
    "tpu.trace_start"() <{level = 10 : i32, message = "bqk,bkd->bqd"}> : () -> ()
    %cst_116 = arith.constant dense<0.000000e+00> : vector<2x8x8xf32>
    %300 = tpu.matmul %299, %284, %cst_116 {dimension_numbers = #tpu.dot_dimension_numbers<[2], [1], [1], [2], [0, 0, 0, 1, 1, 2], [0], [0]>} : vector<2x8x8xf32>, vector<2x8x8xf32>, vector<2x8x8xf32> -> vector<2x8x8xf32>
    "tpu.trace_stop"() : () -> ()
    %301 = vector.extract_strided_slice %239 {offsets = [0, 0, 24], sizes = [2, 8, 8], strides = [1, 1, 1]} : vector<2x8x32xf32> to vector<2x8x8xf32>
    %302 = vector.extract_strided_slice %241 {offsets = [0, 0, 24], sizes = [2, 8, 8], strides = [1, 1, 1]} : vector<2x8x32xf32> to vector<2x8x8xf32>
    %303 = vector.extract_strided_slice %243 {offsets = [0, 0, 24], sizes = [2, 8, 8], strides = [1, 1, 1]} : vector<2x8x32xf32> to vector<2x8x8xf32>
    "tpu.trace_start"() <{level = 10 : i32, message = "bqd,bkd->bqk"}> : () -> ()
    %cst_117 = arith.constant dense<0.000000e+00> : vector<2x8x8xf32>
    %304 = tpu.matmul %301, %302, %cst_117 {dimension_numbers = #tpu.dot_dimension_numbers<[2], [2], [1], [1], [0, 0, 0, 1, 1, 1], [0], [0]>} : vector<2x8x8xf32>, vector<2x8x8xf32>, vector<2x8x8xf32> -> vector<2x8x8xf32>
    "tpu.trace_stop"() : () -> ()
    %cst_118 = arith.constant 0.353553385 : f32
    %305 = vector.broadcast %cst_118 : f32 to vector<2x8x8xf32>
    %306 = arith.mulf %304, %305 : vector<2x8x8xf32>
    %307 = vector.broadcast %6 : vector<2x1x8xf32> to vector<2x8x8xf32>
    %308 = arith.addf %306, %307 : vector<2x8x8xf32>
    %cst_119 = arith.constant dense<0xFF800000> : vector<2x8xf32>
    %309 = vector.multi_reduction <maximumf>, %308, %cst_119 [2] : vector<2x8x8xf32> to vector<2x8xf32>
    %310 = vector.shape_cast %309 : vector<2x8xf32> to vector<2x8x1xf32>
    %311 = vector.broadcast %310 : vector<2x8x1xf32> to vector<2x8x8xf32>
    %312 = arith.subf %308, %311 : vector<2x8x8xf32>
    %313 = math.exp %312 : vector<2x8x8xf32>
    %cst_120 = arith.constant dense<0.000000e+00> : vector<2x8xf32>
    %314 = vector.multi_reduction <add>, %313, %cst_120 [2] : vector<2x8x8xf32> to vector<2x8xf32>
    %315 = vector.shape_cast %314 : vector<2x8xf32> to vector<2x8x1xf32>
    %316 = tpu.reciprocal %315 {approx = true} : vector<2x8x1xf32> -> vector<2x8x1xf32>
    %317 = vector.broadcast %316 : vector<2x8x1xf32> to vector<2x8x8xf32>
    %318 = arith.mulf %313, %317 : vector<2x8x8xf32>
    "tpu.trace_start"() <{level = 10 : i32, message = "bqk,bkd->bqd"}> : () -> ()
    %cst_121 = arith.constant dense<0.000000e+00> : vector<2x8x8xf32>
    %319 = tpu.matmul %318, %303, %cst_121 {dimension_numbers = #tpu.dot_dimension_numbers<[2], [1], [1], [2], [0, 0, 0, 1, 1, 2], [0], [0]>} : vector<2x8x8xf32>, vector<2x8x8xf32>, vector<2x8x8xf32> -> vector<2x8x8xf32>
    "tpu.trace_stop"() : () -> ()
    %320 = tpu.concatenate %262, %281, %300, %319 in 2 : vector<2x8x8xf32>, vector<2x8x8xf32>, vector<2x8x8xf32>, vector<2x8x8xf32> -> vector<2x8x32xf32>
    %321 = vector.shape_cast %320 : vector<2x8x32xf32> to vector<16x32xf32>
    %c1_122 = arith.constant 1 : index
    %c0_123 = arith.constant 0 : index
    %c0_124 = arith.constant 0 : index
    %322 = vector.load %arg8[%c1_122, %c0_123, %c0_124] : memref<4x32x32xf32, #tpu.memory_space<vmem>>, vector<1x32x32xf32>
    %323 = vector.shape_cast %322 : vector<1x32x32xf32> to vector<32x32xf32>
    %cst_125 = arith.constant dense<0.000000e+00> : vector<16x32xf32>
    %324 = tpu.matmul %321, %323, %cst_125 {dimension_numbers = #tpu.dot_dimension_numbers<[1], [0], [0], [1], [0, 0, 1, 1], [], []>} : vector<16x32xf32>, vector<32x32xf32>, vector<16x32xf32> -> vector<16x32xf32>
    %c1_126 = arith.constant 1 : index
    %c0_127 = arith.constant 0 : index
    %c0_128 = arith.constant 0 : index
    %325 = vector.load %arg9[%c1_126, %c0_127, %c0_128] : memref<4x1x32xf32, #tpu.memory_space<vmem>>, vector<1x1x32xf32>
    %326 = vector.shape_cast %325 : vector<1x1x32xf32> to vector<1x32xf32>
    %327 = vector.broadcast %326 : vector<1x32xf32> to vector<16x32xf32>
    %328 = arith.addf %324, %327 : vector<16x32xf32>
    %329 = arith.addf %230, %328 : vector<16x32xf32>
    %c1_129 = arith.constant 1 : index
    %c0_130 = arith.constant 0 : index
    %c0_131 = arith.constant 0 : index
    %330 = vector.load %arg10[%c1_129, %c0_130, %c0_131] : memref<4x1x32xf32, #tpu.memory_space<vmem>>, vector<1x1x32xf32>
    %331 = vector.shape_cast %330 : vector<1x1x32xf32> to vector<1x32xf32>
    %c1_132 = arith.constant 1 : index
    %c0_133 = arith.constant 0 : index
    %c0_134 = arith.constant 0 : index
    %332 = vector.load %arg11[%c1_132, %c0_133, %c0_134] : memref<4x1x32xf32, #tpu.memory_space<vmem>>, vector<1x1x32xf32>
    %333 = vector.shape_cast %332 : vector<1x1x32xf32> to vector<1x32xf32>
    %cst_135 = arith.constant dense<0.000000e+00> : vector<16xf32>
    %334 = vector.multi_reduction <add>, %329, %cst_135 [1] : vector<16x32xf32> to vector<16xf32>
    %335 = vector.shape_cast %334 : vector<16xf32> to vector<16x1xf32>
    %cst_136 = arith.constant 3.200000e+01 : f32
    %336 = vector.broadcast %cst_136 : f32 to vector<16x1xf32>
    %337 = arith.divf %335, %336 : vector<16x1xf32>
    %338 = vector.broadcast %337 : vector<16x1xf32> to vector<16x32xf32>
    %339 = arith.subf %329, %338 : vector<16x32xf32>
    %340 = arith.mulf %339, %339 : vector<16x32xf32>
    %cst_137 = arith.constant dense<0.000000e+00> : vector<16xf32>
    %341 = vector.multi_reduction <add>, %340, %cst_137 [1] : vector<16x32xf32> to vector<16xf32>
    %342 = vector.shape_cast %341 : vector<16xf32> to vector<16x1xf32>
    %cst_138 = arith.constant 3.200000e+01 : f32
    %343 = vector.broadcast %cst_138 : f32 to vector<16x1xf32>
    %344 = arith.divf %342, %343 : vector<16x1xf32>
    %345 = vector.broadcast %337 : vector<16x1xf32> to vector<16x32xf32>
    %346 = arith.subf %329, %345 : vector<16x32xf32>
    %cst_139 = arith.constant 9.99999996E-13 : f32
    %347 = vector.broadcast %cst_139 : f32 to vector<16x1xf32>
    %348 = arith.addf %344, %347 : vector<16x1xf32>
    %349 = math.rsqrt %348 : vector<16x1xf32>
    %350 = vector.broadcast %349 : vector<16x1xf32> to vector<16x32xf32>
    %351 = arith.mulf %346, %350 : vector<16x32xf32>
    %352 = vector.broadcast %331 : vector<1x32xf32> to vector<16x32xf32>
    %353 = arith.mulf %351, %352 : vector<16x32xf32>
    %354 = vector.broadcast %333 : vector<1x32xf32> to vector<16x32xf32>
    %355 = arith.addf %353, %354 : vector<16x32xf32>
    %c1_140 = arith.constant 1 : index
    %c0_141 = arith.constant 0 : index
    %c0_142 = arith.constant 0 : index
    %356 = vector.load %arg12[%c1_140, %c0_141, %c0_142] : memref<4x32x128xf32, #tpu.memory_space<vmem>>, vector<1x32x128xf32>
    %357 = vector.shape_cast %356 : vector<1x32x128xf32> to vector<32x128xf32>
    %cst_143 = arith.constant dense<0.000000e+00> : vector<16x128xf32>
    %358 = tpu.matmul %355, %357, %cst_143 {dimension_numbers = #tpu.dot_dimension_numbers<[1], [0], [0], [1], [0, 0, 1, 1], [], []>} : vector<16x32xf32>, vector<32x128xf32>, vector<16x128xf32> -> vector<16x128xf32>
    %c1_144 = arith.constant 1 : index
    %c0_145 = arith.constant 0 : index
    %c0_146 = arith.constant 0 : index
    %359 = vector.load %arg13[%c1_144, %c0_145, %c0_146] : memref<4x1x128xf32, #tpu.memory_space<vmem>>, vector<1x1x128xf32>
    %360 = vector.shape_cast %359 : vector<1x1x128xf32> to vector<1x128xf32>
    %361 = vector.broadcast %360 : vector<1x128xf32> to vector<16x128xf32>
    %362 = arith.addf %358, %361 : vector<16x128xf32>
    %363 = arith.mulf %362, %362 : vector<16x128xf32>
    %364 = arith.mulf %362, %363 : vector<16x128xf32>
    %cst_147 = arith.constant 4.471500e-02 : f32
    %365 = vector.broadcast %cst_147 : f32 to vector<16x128xf32>
    %366 = arith.mulf %365, %364 : vector<16x128xf32>
    %367 = arith.addf %362, %366 : vector<16x128xf32>
    %cst_148 = arith.constant 0.797884583 : f32
    %368 = vector.broadcast %cst_148 : f32 to vector<16x128xf32>
    %369 = arith.mulf %368, %367 : vector<16x128xf32>
    %370 = math.tanh %369 : vector<16x128xf32>
    %cst_149 = arith.constant 1.000000e+00 : f32
    %371 = vector.broadcast %cst_149 : f32 to vector<16x128xf32>
    %372 = arith.addf %371, %370 : vector<16x128xf32>
    %cst_150 = arith.constant 5.000000e-01 : f32
    %373 = vector.broadcast %cst_150 : f32 to vector<16x128xf32>
    %374 = arith.mulf %373, %372 : vector<16x128xf32>
    %375 = arith.mulf %362, %374 : vector<16x128xf32>
    %c1_151 = arith.constant 1 : index
    %c0_152 = arith.constant 0 : index
    %c0_153 = arith.constant 0 : index
    %376 = vector.load %arg14[%c1_151, %c0_152, %c0_153] : memref<4x128x32xf32, #tpu.memory_space<vmem>>, vector<1x128x32xf32>
    %377 = vector.shape_cast %376 : vector<1x128x32xf32> to vector<128x32xf32>
    %cst_154 = arith.constant dense<0.000000e+00> : vector<16x32xf32>
    %378 = tpu.matmul %375, %377, %cst_154 {dimension_numbers = #tpu.dot_dimension_numbers<[1], [0], [0], [1], [0, 0, 1, 1], [], []>} : vector<16x128xf32>, vector<128x32xf32>, vector<16x32xf32> -> vector<16x32xf32>
    %c1_155 = arith.constant 1 : index
    %c0_156 = arith.constant 0 : index
    %c0_157 = arith.constant 0 : index
    %379 = vector.load %arg15[%c1_155, %c0_156, %c0_157] : memref<4x1x32xf32, #tpu.memory_space<vmem>>, vector<1x1x32xf32>
    %380 = vector.shape_cast %379 : vector<1x1x32xf32> to vector<1x32xf32>
    %381 = vector.broadcast %380 : vector<1x32xf32> to vector<16x32xf32>
    %382 = arith.addf %378, %381 : vector<16x32xf32>
    %383 = arith.addf %355, %382 : vector<16x32xf32>
    %c1_158 = arith.constant 1 : index
    %c0_159 = arith.constant 0 : index
    %c0_160 = arith.constant 0 : index
    %384 = vector.load %arg16[%c1_158, %c0_159, %c0_160] : memref<4x1x32xf32, #tpu.memory_space<vmem>>, vector<1x1x32xf32>
    %385 = vector.shape_cast %384 : vector<1x1x32xf32> to vector<1x32xf32>
    %c1_161 = arith.constant 1 : index
    %c0_162 = arith.constant 0 : index
    %c0_163 = arith.constant 0 : index
    %386 = vector.load %arg17[%c1_161, %c0_162, %c0_163] : memref<4x1x32xf32, #tpu.memory_space<vmem>>, vector<1x1x32xf32>
    %387 = vector.shape_cast %386 : vector<1x1x32xf32> to vector<1x32xf32>
    %cst_164 = arith.constant dense<0.000000e+00> : vector<16xf32>
    %388 = vector.multi_reduction <add>, %383, %cst_164 [1] : vector<16x32xf32> to vector<16xf32>
    %389 = vector.shape_cast %388 : vector<16xf32> to vector<16x1xf32>
    %cst_165 = arith.constant 3.200000e+01 : f32
    %390 = vector.broadcast %cst_165 : f32 to vector<16x1xf32>
    %391 = arith.divf %389, %390 : vector<16x1xf32>
    %392 = vector.broadcast %391 : vector<16x1xf32> to vector<16x32xf32>
    %393 = arith.subf %383, %392 : vector<16x32xf32>
    %394 = arith.mulf %393, %393 : vector<16x32xf32>
    %cst_166 = arith.constant dense<0.000000e+00> : vector<16xf32>
    %395 = vector.multi_reduction <add>, %394, %cst_166 [1] : vector<16x32xf32> to vector<16xf32>
    %396 = vector.shape_cast %395 : vector<16xf32> to vector<16x1xf32>
    %cst_167 = arith.constant 3.200000e+01 : f32
    %397 = vector.broadcast %cst_167 : f32 to vector<16x1xf32>
    %398 = arith.divf %396, %397 : vector<16x1xf32>
    %399 = vector.broadcast %391 : vector<16x1xf32> to vector<16x32xf32>
    %400 = arith.subf %383, %399 : vector<16x32xf32>
    %cst_168 = arith.constant 9.99999996E-13 : f32
    %401 = vector.broadcast %cst_168 : f32 to vector<16x1xf32>
    %402 = arith.addf %398, %401 : vector<16x1xf32>
    %403 = math.rsqrt %402 : vector<16x1xf32>
    %404 = vector.broadcast %403 : vector<16x1xf32> to vector<16x32xf32>
    %405 = arith.mulf %400, %404 : vector<16x32xf32>
    %406 = vector.broadcast %385 : vector<1x32xf32> to vector<16x32xf32>
    %407 = arith.mulf %405, %406 : vector<16x32xf32>
    %408 = vector.broadcast %387 : vector<1x32xf32> to vector<16x32xf32>
    %409 = arith.addf %407, %408 : vector<16x32xf32>
    %410 = vector.shape_cast %409 : vector<16x32xf32> to vector<2x8x32xf32>
    %cst_169 = arith.constant dense<0.000000e+00> : vector<2x32xf32>
    %411 = vector.multi_reduction <add>, %410, %cst_169 [1] : vector<2x8x32xf32> to vector<2x32xf32>
    %cst_170 = arith.constant 8.000000e+00 : f32
    %412 = vector.broadcast %cst_170 : f32 to vector<2x32xf32>
    %413 = arith.divf %411, %412 : vector<2x32xf32>
    %cst_171 = arith.constant 1.000000e+00 : f32
    %414 = vector.broadcast %cst_171 : f32 to vector<2x32xf32>
    %415 = arith.mulf %414, %413 : vector<2x32xf32>
    %416 = arith.addf %229, %415 : vector<2x32xf32>
    %417 = vector.shape_cast %410 : vector<2x8x32xf32> to vector<16x32xf32>
    %c2 = arith.constant 2 : index
    %c0_172 = arith.constant 0 : index
    %c0_173 = arith.constant 0 : index
    %418 = vector.load %arg6[%c2, %c0_172, %c0_173] : memref<4x32x96xf32, #tpu.memory_space<vmem>>, vector<1x32x96xf32>
    %419 = vector.shape_cast %418 : vector<1x32x96xf32> to vector<32x96xf32>
    %cst_174 = arith.constant dense<0.000000e+00> : vector<16x96xf32>
    %420 = tpu.matmul %417, %419, %cst_174 {dimension_numbers = #tpu.dot_dimension_numbers<[1], [0], [0], [1], [0, 0, 1, 1], [], []>} : vector<16x32xf32>, vector<32x96xf32>, vector<16x96xf32> -> vector<16x96xf32>
    %c2_175 = arith.constant 2 : index
    %c0_176 = arith.constant 0 : index
    %c0_177 = arith.constant 0 : index
    %421 = vector.load %arg7[%c2_175, %c0_176, %c0_177] : memref<4x1x96xf32, #tpu.memory_space<vmem>>, vector<1x1x96xf32>
    %422 = vector.shape_cast %421 : vector<1x1x96xf32> to vector<1x96xf32>
    %423 = vector.broadcast %422 : vector<1x96xf32> to vector<16x96xf32>
    %424 = arith.addf %420, %423 : vector<16x96xf32>
    %425 = vector.extract_strided_slice %424 {offsets = [0, 0], sizes = [16, 32], strides = [1, 1]} : vector<16x96xf32> to vector<16x32xf32>
    %426 = vector.shape_cast %425 : vector<16x32xf32> to vector<2x8x32xf32>
    %427 = vector.extract_strided_slice %424 {offsets = [0, 32], sizes = [16, 32], strides = [1, 1]} : vector<16x96xf32> to vector<16x32xf32>
    %428 = vector.shape_cast %427 : vector<16x32xf32> to vector<2x8x32xf32>
    %429 = vector.extract_strided_slice %424 {offsets = [0, 64], sizes = [16, 32], strides = [1, 1]} : vector<16x96xf32> to vector<16x32xf32>
    %430 = vector.shape_cast %429 : vector<16x32xf32> to vector<2x8x32xf32>
    %431 = vector.extract_strided_slice %426 {offsets = [0, 0, 0], sizes = [2, 8, 8], strides = [1, 1, 1]} : vector<2x8x32xf32> to vector<2x8x8xf32>
    %432 = vector.extract_strided_slice %428 {offsets = [0, 0, 0], sizes = [2, 8, 8], strides = [1, 1, 1]} : vector<2x8x32xf32> to vector<2x8x8xf32>
    %433 = vector.extract_strided_slice %430 {offsets = [0, 0, 0], sizes = [2, 8, 8], strides = [1, 1, 1]} : vector<2x8x32xf32> to vector<2x8x8xf32>
    "tpu.trace_start"() <{level = 10 : i32, message = "bqd,bkd->bqk"}> : () -> ()
    %cst_178 = arith.constant dense<0.000000e+00> : vector<2x8x8xf32>
    %434 = tpu.matmul %431, %432, %cst_178 {dimension_numbers = #tpu.dot_dimension_numbers<[2], [2], [1], [1], [0, 0, 0, 1, 1, 1], [0], [0]>} : vector<2x8x8xf32>, vector<2x8x8xf32>, vector<2x8x8xf32> -> vector<2x8x8xf32>
    "tpu.trace_stop"() : () -> ()
    %cst_179 = arith.constant 0.353553385 : f32
    %435 = vector.broadcast %cst_179 : f32 to vector<2x8x8xf32>
    %436 = arith.mulf %434, %435 : vector<2x8x8xf32>
    %437 = vector.broadcast %6 : vector<2x1x8xf32> to vector<2x8x8xf32>
    %438 = arith.addf %436, %437 : vector<2x8x8xf32>
    %cst_180 = arith.constant dense<0xFF800000> : vector<2x8xf32>
    %439 = vector.multi_reduction <maximumf>, %438, %cst_180 [2] : vector<2x8x8xf32> to vector<2x8xf32>
    %440 = vector.shape_cast %439 : vector<2x8xf32> to vector<2x8x1xf32>
    %441 = vector.broadcast %440 : vector<2x8x1xf32> to vector<2x8x8xf32>
    %442 = arith.subf %438, %441 : vector<2x8x8xf32>
    %443 = math.exp %442 : vector<2x8x8xf32>
    %cst_181 = arith.constant dense<0.000000e+00> : vector<2x8xf32>
    %444 = vector.multi_reduction <add>, %443, %cst_181 [2] : vector<2x8x8xf32> to vector<2x8xf32>
    %445 = vector.shape_cast %444 : vector<2x8xf32> to vector<2x8x1xf32>
    %446 = tpu.reciprocal %445 {approx = true} : vector<2x8x1xf32> -> vector<2x8x1xf32>
    %447 = vector.broadcast %446 : vector<2x8x1xf32> to vector<2x8x8xf32>
    %448 = arith.mulf %443, %447 : vector<2x8x8xf32>
    "tpu.trace_start"() <{level = 10 : i32, message = "bqk,bkd->bqd"}> : () -> ()
    %cst_182 = arith.constant dense<0.000000e+00> : vector<2x8x8xf32>
    %449 = tpu.matmul %448, %433, %cst_182 {dimension_numbers = #tpu.dot_dimension_numbers<[2], [1], [1], [2], [0, 0, 0, 1, 1, 2], [0], [0]>} : vector<2x8x8xf32>, vector<2x8x8xf32>, vector<2x8x8xf32> -> vector<2x8x8xf32>
    "tpu.trace_stop"() : () -> ()
    %450 = vector.extract_strided_slice %426 {offsets = [0, 0, 8], sizes = [2, 8, 8], strides = [1, 1, 1]} : vector<2x8x32xf32> to vector<2x8x8xf32>
    %451 = vector.extract_strided_slice %428 {offsets = [0, 0, 8], sizes = [2, 8, 8], strides = [1, 1, 1]} : vector<2x8x32xf32> to vector<2x8x8xf32>
    %452 = vector.extract_strided_slice %430 {offsets = [0, 0, 8], sizes = [2, 8, 8], strides = [1, 1, 1]} : vector<2x8x32xf32> to vector<2x8x8xf32>
    "tpu.trace_start"() <{level = 10 : i32, message = "bqd,bkd->bqk"}> : () -> ()
    %cst_183 = arith.constant dense<0.000000e+00> : vector<2x8x8xf32>
    %453 = tpu.matmul %450, %451, %cst_183 {dimension_numbers = #tpu.dot_dimension_numbers<[2], [2], [1], [1], [0, 0, 0, 1, 1, 1], [0], [0]>} : vector<2x8x8xf32>, vector<2x8x8xf32>, vector<2x8x8xf32> -> vector<2x8x8xf32>
    "tpu.trace_stop"() : () -> ()
    %cst_184 = arith.constant 0.353553385 : f32
    %454 = vector.broadcast %cst_184 : f32 to vector<2x8x8xf32>
    %455 = arith.mulf %453, %454 : vector<2x8x8xf32>
    %456 = vector.broadcast %6 : vector<2x1x8xf32> to vector<2x8x8xf32>
    %457 = arith.addf %455, %456 : vector<2x8x8xf32>
    %cst_185 = arith.constant dense<0xFF800000> : vector<2x8xf32>
    %458 = vector.multi_reduction <maximumf>, %457, %cst_185 [2] : vector<2x8x8xf32> to vector<2x8xf32>
    %459 = vector.shape_cast %458 : vector<2x8xf32> to vector<2x8x1xf32>
    %460 = vector.broadcast %459 : vector<2x8x1xf32> to vector<2x8x8xf32>
    %461 = arith.subf %457, %460 : vector<2x8x8xf32>
    %462 = math.exp %461 : vector<2x8x8xf32>
    %cst_186 = arith.constant dense<0.000000e+00> : vector<2x8xf32>
    %463 = vector.multi_reduction <add>, %462, %cst_186 [2] : vector<2x8x8xf32> to vector<2x8xf32>
    %464 = vector.shape_cast %463 : vector<2x8xf32> to vector<2x8x1xf32>
    %465 = tpu.reciprocal %464 {approx = true} : vector<2x8x1xf32> -> vector<2x8x1xf32>
    %466 = vector.broadcast %465 : vector<2x8x1xf32> to vector<2x8x8xf32>
    %467 = arith.mulf %462, %466 : vector<2x8x8xf32>
    "tpu.trace_start"() <{level = 10 : i32, message = "bqk,bkd->bqd"}> : () -> ()
    %cst_187 = arith.constant dense<0.000000e+00> : vector<2x8x8xf32>
    %468 = tpu.matmul %467, %452, %cst_187 {dimension_numbers = #tpu.dot_dimension_numbers<[2], [1], [1], [2], [0, 0, 0, 1, 1, 2], [0], [0]>} : vector<2x8x8xf32>, vector<2x8x8xf32>, vector<2x8x8xf32> -> vector<2x8x8xf32>
    "tpu.trace_stop"() : () -> ()
    %469 = vector.extract_strided_slice %426 {offsets = [0, 0, 16], sizes = [2, 8, 8], strides = [1, 1, 1]} : vector<2x8x32xf32> to vector<2x8x8xf32>
    %470 = vector.extract_strided_slice %428 {offsets = [0, 0, 16], sizes = [2, 8, 8], strides = [1, 1, 1]} : vector<2x8x32xf32> to vector<2x8x8xf32>
    %471 = vector.extract_strided_slice %430 {offsets = [0, 0, 16], sizes = [2, 8, 8], strides = [1, 1, 1]} : vector<2x8x32xf32> to vector<2x8x8xf32>
    "tpu.trace_start"() <{level = 10 : i32, message = "bqd,bkd->bqk"}> : () -> ()
    %cst_188 = arith.constant dense<0.000000e+00> : vector<2x8x8xf32>
    %472 = tpu.matmul %469, %470, %cst_188 {dimension_numbers = #tpu.dot_dimension_numbers<[2], [2], [1], [1], [0, 0, 0, 1, 1, 1], [0], [0]>} : vector<2x8x8xf32>, vector<2x8x8xf32>, vector<2x8x8xf32> -> vector<2x8x8xf32>
    "tpu.trace_stop"() : () -> ()
    %cst_189 = arith.constant 0.353553385 : f32
    %473 = vector.broadcast %cst_189 : f32 to vector<2x8x8xf32>
    %474 = arith.mulf %472, %473 : vector<2x8x8xf32>
    %475 = vector.broadcast %6 : vector<2x1x8xf32> to vector<2x8x8xf32>
    %476 = arith.addf %474, %475 : vector<2x8x8xf32>
    %cst_190 = arith.constant dense<0xFF800000> : vector<2x8xf32>
    %477 = vector.multi_reduction <maximumf>, %476, %cst_190 [2] : vector<2x8x8xf32> to vector<2x8xf32>
    %478 = vector.shape_cast %477 : vector<2x8xf32> to vector<2x8x1xf32>
    %479 = vector.broadcast %478 : vector<2x8x1xf32> to vector<2x8x8xf32>
    %480 = arith.subf %476, %479 : vector<2x8x8xf32>
    %481 = math.exp %480 : vector<2x8x8xf32>
    %cst_191 = arith.constant dense<0.000000e+00> : vector<2x8xf32>
    %482 = vector.multi_reduction <add>, %481, %cst_191 [2] : vector<2x8x8xf32> to vector<2x8xf32>
    %483 = vector.shape_cast %482 : vector<2x8xf32> to vector<2x8x1xf32>
    %484 = tpu.reciprocal %483 {approx = true} : vector<2x8x1xf32> -> vector<2x8x1xf32>
    %485 = vector.broadcast %484 : vector<2x8x1xf32> to vector<2x8x8xf32>
    %486 = arith.mulf %481, %485 : vector<2x8x8xf32>
    "tpu.trace_start"() <{level = 10 : i32, message = "bqk,bkd->bqd"}> : () -> ()
    %cst_192 = arith.constant dense<0.000000e+00> : vector<2x8x8xf32>
    %487 = tpu.matmul %486, %471, %cst_192 {dimension_numbers = #tpu.dot_dimension_numbers<[2], [1], [1], [2], [0, 0, 0, 1, 1, 2], [0], [0]>} : vector<2x8x8xf32>, vector<2x8x8xf32>, vector<2x8x8xf32> -> vector<2x8x8xf32>
    "tpu.trace_stop"() : () -> ()
    %488 = vector.extract_strided_slice %426 {offsets = [0, 0, 24], sizes = [2, 8, 8], strides = [1, 1, 1]} : vector<2x8x32xf32> to vector<2x8x8xf32>
    %489 = vector.extract_strided_slice %428 {offsets = [0, 0, 24], sizes = [2, 8, 8], strides = [1, 1, 1]} : vector<2x8x32xf32> to vector<2x8x8xf32>
    %490 = vector.extract_strided_slice %430 {offsets = [0, 0, 24], sizes = [2, 8, 8], strides = [1, 1, 1]} : vector<2x8x32xf32> to vector<2x8x8xf32>
    "tpu.trace_start"() <{level = 10 : i32, message = "bqd,bkd->bqk"}> : () -> ()
    %cst_193 = arith.constant dense<0.000000e+00> : vector<2x8x8xf32>
    %491 = tpu.matmul %488, %489, %cst_193 {dimension_numbers = #tpu.dot_dimension_numbers<[2], [2], [1], [1], [0, 0, 0, 1, 1, 1], [0], [0]>} : vector<2x8x8xf32>, vector<2x8x8xf32>, vector<2x8x8xf32> -> vector<2x8x8xf32>
    "tpu.trace_stop"() : () -> ()
    %cst_194 = arith.constant 0.353553385 : f32
    %492 = vector.broadcast %cst_194 : f32 to vector<2x8x8xf32>
    %493 = arith.mulf %491, %492 : vector<2x8x8xf32>
    %494 = vector.broadcast %6 : vector<2x1x8xf32> to vector<2x8x8xf32>
    %495 = arith.addf %493, %494 : vector<2x8x8xf32>
    %cst_195 = arith.constant dense<0xFF800000> : vector<2x8xf32>
    %496 = vector.multi_reduction <maximumf>, %495, %cst_195 [2] : vector<2x8x8xf32> to vector<2x8xf32>
    %497 = vector.shape_cast %496 : vector<2x8xf32> to vector<2x8x1xf32>
    %498 = vector.broadcast %497 : vector<2x8x1xf32> to vector<2x8x8xf32>
    %499 = arith.subf %495, %498 : vector<2x8x8xf32>
    %500 = math.exp %499 : vector<2x8x8xf32>
    %cst_196 = arith.constant dense<0.000000e+00> : vector<2x8xf32>
    %501 = vector.multi_reduction <add>, %500, %cst_196 [2] : vector<2x8x8xf32> to vector<2x8xf32>
    %502 = vector.shape_cast %501 : vector<2x8xf32> to vector<2x8x1xf32>
    %503 = tpu.reciprocal %502 {approx = true} : vector<2x8x1xf32> -> vector<2x8x1xf32>
    %504 = vector.broadcast %503 : vector<2x8x1xf32> to vector<2x8x8xf32>
    %505 = arith.mulf %500, %504 : vector<2x8x8xf32>
    "tpu.trace_start"() <{level = 10 : i32, message = "bqk,bkd->bqd"}> : () -> ()
    %cst_197 = arith.constant dense<0.000000e+00> : vector<2x8x8xf32>
    %506 = tpu.matmul %505, %490, %cst_197 {dimension_numbers = #tpu.dot_dimension_numbers<[2], [1], [1], [2], [0, 0, 0, 1, 1, 2], [0], [0]>} : vector<2x8x8xf32>, vector<2x8x8xf32>, vector<2x8x8xf32> -> vector<2x8x8xf32>
    "tpu.trace_stop"() : () -> ()
    %507 = tpu.concatenate %449, %468, %487, %506 in 2 : vector<2x8x8xf32>, vector<2x8x8xf32>, vector<2x8x8xf32>, vector<2x8x8xf32> -> vector<2x8x32xf32>
    %508 = vector.shape_cast %507 : vector<2x8x32xf32> to vector<16x32xf32>
    %c2_198 = arith.constant 2 : index
    %c0_199 = arith.constant 0 : index
    %c0_200 = arith.constant 0 : index
    %509 = vector.load %arg8[%c2_198, %c0_199, %c0_200] : memref<4x32x32xf32, #tpu.memory_space<vmem>>, vector<1x32x32xf32>
    %510 = vector.shape_cast %509 : vector<1x32x32xf32> to vector<32x32xf32>
    %cst_201 = arith.constant dense<0.000000e+00> : vector<16x32xf32>
    %511 = tpu.matmul %508, %510, %cst_201 {dimension_numbers = #tpu.dot_dimension_numbers<[1], [0], [0], [1], [0, 0, 1, 1], [], []>} : vector<16x32xf32>, vector<32x32xf32>, vector<16x32xf32> -> vector<16x32xf32>
    %c2_202 = arith.constant 2 : index
    %c0_203 = arith.constant 0 : index
    %c0_204 = arith.constant 0 : index
    %512 = vector.load %arg9[%c2_202, %c0_203, %c0_204] : memref<4x1x32xf32, #tpu.memory_space<vmem>>, vector<1x1x32xf32>
    %513 = vector.shape_cast %512 : vector<1x1x32xf32> to vector<1x32xf32>
    %514 = vector.broadcast %513 : vector<1x32xf32> to vector<16x32xf32>
    %515 = arith.addf %511, %514 : vector<16x32xf32>
    %516 = arith.addf %417, %515 : vector<16x32xf32>
    %c2_205 = arith.constant 2 : index
    %c0_206 = arith.constant 0 : index
    %c0_207 = arith.constant 0 : index
    %517 = vector.load %arg10[%c2_205, %c0_206, %c0_207] : memref<4x1x32xf32, #tpu.memory_space<vmem>>, vector<1x1x32xf32>
    %518 = vector.shape_cast %517 : vector<1x1x32xf32> to vector<1x32xf32>
    %c2_208 = arith.constant 2 : index
    %c0_209 = arith.constant 0 : index
    %c0_210 = arith.constant 0 : index
    %519 = vector.load %arg11[%c2_208, %c0_209, %c0_210] : memref<4x1x32xf32, #tpu.memory_space<vmem>>, vector<1x1x32xf32>
    %520 = vector.shape_cast %519 : vector<1x1x32xf32> to vector<1x32xf32>
    %cst_211 = arith.constant dense<0.000000e+00> : vector<16xf32>
    %521 = vector.multi_reduction <add>, %516, %cst_211 [1] : vector<16x32xf32> to vector<16xf32>
    %522 = vector.shape_cast %521 : vector<16xf32> to vector<16x1xf32>
    %cst_212 = arith.constant 3.200000e+01 : f32
    %523 = vector.broadcast %cst_212 : f32 to vector<16x1xf32>
    %524 = arith.divf %522, %523 : vector<16x1xf32>
    %525 = vector.broadcast %524 : vector<16x1xf32> to vector<16x32xf32>
    %526 = arith.subf %516, %525 : vector<16x32xf32>
    %527 = arith.mulf %526, %526 : vector<16x32xf32>
    %cst_213 = arith.constant dense<0.000000e+00> : vector<16xf32>
    %528 = vector.multi_reduction <add>, %527, %cst_213 [1] : vector<16x32xf32> to vector<16xf32>
    %529 = vector.shape_cast %528 : vector<16xf32> to vector<16x1xf32>
    %cst_214 = arith.constant 3.200000e+01 : f32
    %530 = vector.broadcast %cst_214 : f32 to vector<16x1xf32>
    %531 = arith.divf %529, %530 : vector<16x1xf32>
    %532 = vector.broadcast %524 : vector<16x1xf32> to vector<16x32xf32>
    %533 = arith.subf %516, %532 : vector<16x32xf32>
    %cst_215 = arith.constant 9.99999996E-13 : f32
    %534 = vector.broadcast %cst_215 : f32 to vector<16x1xf32>
    %535 = arith.addf %531, %534 : vector<16x1xf32>
    %536 = math.rsqrt %535 : vector<16x1xf32>
    %537 = vector.broadcast %536 : vector<16x1xf32> to vector<16x32xf32>
    %538 = arith.mulf %533, %537 : vector<16x32xf32>
    %539 = vector.broadcast %518 : vector<1x32xf32> to vector<16x32xf32>
    %540 = arith.mulf %538, %539 : vector<16x32xf32>
    %541 = vector.broadcast %520 : vector<1x32xf32> to vector<16x32xf32>
    %542 = arith.addf %540, %541 : vector<16x32xf32>
    %c2_216 = arith.constant 2 : index
    %c0_217 = arith.constant 0 : index
    %c0_218 = arith.constant 0 : index
    %543 = vector.load %arg12[%c2_216, %c0_217, %c0_218] : memref<4x32x128xf32, #tpu.memory_space<vmem>>, vector<1x32x128xf32>
    %544 = vector.shape_cast %543 : vector<1x32x128xf32> to vector<32x128xf32>
    %cst_219 = arith.constant dense<0.000000e+00> : vector<16x128xf32>
    %545 = tpu.matmul %542, %544, %cst_219 {dimension_numbers = #tpu.dot_dimension_numbers<[1], [0], [0], [1], [0, 0, 1, 1], [], []>} : vector<16x32xf32>, vector<32x128xf32>, vector<16x128xf32> -> vector<16x128xf32>
    %c2_220 = arith.constant 2 : index
    %c0_221 = arith.constant 0 : index
    %c0_222 = arith.constant 0 : index
    %546 = vector.load %arg13[%c2_220, %c0_221, %c0_222] : memref<4x1x128xf32, #tpu.memory_space<vmem>>, vector<1x1x128xf32>
    %547 = vector.shape_cast %546 : vector<1x1x128xf32> to vector<1x128xf32>
    %548 = vector.broadcast %547 : vector<1x128xf32> to vector<16x128xf32>
    %549 = arith.addf %545, %548 : vector<16x128xf32>
    %550 = arith.mulf %549, %549 : vector<16x128xf32>
    %551 = arith.mulf %549, %550 : vector<16x128xf32>
    %cst_223 = arith.constant 4.471500e-02 : f32
    %552 = vector.broadcast %cst_223 : f32 to vector<16x128xf32>
    %553 = arith.mulf %552, %551 : vector<16x128xf32>
    %554 = arith.addf %549, %553 : vector<16x128xf32>
    %cst_224 = arith.constant 0.797884583 : f32
    %555 = vector.broadcast %cst_224 : f32 to vector<16x128xf32>
    %556 = arith.mulf %555, %554 : vector<16x128xf32>
    %557 = math.tanh %556 : vector<16x128xf32>
    %cst_225 = arith.constant 1.000000e+00 : f32
    %558 = vector.broadcast %cst_225 : f32 to vector<16x128xf32>
    %559 = arith.addf %558, %557 : vector<16x128xf32>
    %cst_226 = arith.constant 5.000000e-01 : f32
    %560 = vector.broadcast %cst_226 : f32 to vector<16x128xf32>
    %561 = arith.mulf %560, %559 : vector<16x128xf32>
    %562 = arith.mulf %549, %561 : vector<16x128xf32>
    %c2_227 = arith.constant 2 : index
    %c0_228 = arith.constant 0 : index
    %c0_229 = arith.constant 0 : index
    %563 = vector.load %arg14[%c2_227, %c0_228, %c0_229] : memref<4x128x32xf32, #tpu.memory_space<vmem>>, vector<1x128x32xf32>
    %564 = vector.shape_cast %563 : vector<1x128x32xf32> to vector<128x32xf32>
    %cst_230 = arith.constant dense<0.000000e+00> : vector<16x32xf32>
    %565 = tpu.matmul %562, %564, %cst_230 {dimension_numbers = #tpu.dot_dimension_numbers<[1], [0], [0], [1], [0, 0, 1, 1], [], []>} : vector<16x128xf32>, vector<128x32xf32>, vector<16x32xf32> -> vector<16x32xf32>
    %c2_231 = arith.constant 2 : index
    %c0_232 = arith.constant 0 : index
    %c0_233 = arith.constant 0 : index
    %566 = vector.load %arg15[%c2_231, %c0_232, %c0_233] : memref<4x1x32xf32, #tpu.memory_space<vmem>>, vector<1x1x32xf32>
    %567 = vector.shape_cast %566 : vector<1x1x32xf32> to vector<1x32xf32>
    %568 = vector.broadcast %567 : vector<1x32xf32> to vector<16x32xf32>
    %569 = arith.addf %565, %568 : vector<16x32xf32>
    %570 = arith.addf %542, %569 : vector<16x32xf32>
    %c2_234 = arith.constant 2 : index
    %c0_235 = arith.constant 0 : index
    %c0_236 = arith.constant 0 : index
    %571 = vector.load %arg16[%c2_234, %c0_235, %c0_236] : memref<4x1x32xf32, #tpu.memory_space<vmem>>, vector<1x1x32xf32>
    %572 = vector.shape_cast %571 : vector<1x1x32xf32> to vector<1x32xf32>
    %c2_237 = arith.constant 2 : index
    %c0_238 = arith.constant 0 : index
    %c0_239 = arith.constant 0 : index
    %573 = vector.load %arg17[%c2_237, %c0_238, %c0_239] : memref<4x1x32xf32, #tpu.memory_space<vmem>>, vector<1x1x32xf32>
    %574 = vector.shape_cast %573 : vector<1x1x32xf32> to vector<1x32xf32>
    %cst_240 = arith.constant dense<0.000000e+00> : vector<16xf32>
    %575 = vector.multi_reduction <add>, %570, %cst_240 [1] : vector<16x32xf32> to vector<16xf32>
    %576 = vector.shape_cast %575 : vector<16xf32> to vector<16x1xf32>
    %cst_241 = arith.constant 3.200000e+01 : f32
    %577 = vector.broadcast %cst_241 : f32 to vector<16x1xf32>
    %578 = arith.divf %576, %577 : vector<16x1xf32>
    %579 = vector.broadcast %578 : vector<16x1xf32> to vector<16x32xf32>
    %580 = arith.subf %570, %579 : vector<16x32xf32>
    %581 = arith.mulf %580, %580 : vector<16x32xf32>
    %cst_242 = arith.constant dense<0.000000e+00> : vector<16xf32>
    %582 = vector.multi_reduction <add>, %581, %cst_242 [1] : vector<16x32xf32> to vector<16xf32>
    %583 = vector.shape_cast %582 : vector<16xf32> to vector<16x1xf32>
    %cst_243 = arith.constant 3.200000e+01 : f32
    %584 = vector.broadcast %cst_243 : f32 to vector<16x1xf32>
    %585 = arith.divf %583, %584 : vector<16x1xf32>
    %586 = vector.broadcast %578 : vector<16x1xf32> to vector<16x32xf32>
    %587 = arith.subf %570, %586 : vector<16x32xf32>
    %cst_244 = arith.constant 9.99999996E-13 : f32
    %588 = vector.broadcast %cst_244 : f32 to vector<16x1xf32>
    %589 = arith.addf %585, %588 : vector<16x1xf32>
    %590 = math.rsqrt %589 : vector<16x1xf32>
    %591 = vector.broadcast %590 : vector<16x1xf32> to vector<16x32xf32>
    %592 = arith.mulf %587, %591 : vector<16x32xf32>
    %593 = vector.broadcast %572 : vector<1x32xf32> to vector<16x32xf32>
    %594 = arith.mulf %592, %593 : vector<16x32xf32>
    %595 = vector.broadcast %574 : vector<1x32xf32> to vector<16x32xf32>
    %596 = arith.addf %594, %595 : vector<16x32xf32>
    %597 = vector.shape_cast %596 : vector<16x32xf32> to vector<2x8x32xf32>
    %598 = vector.shape_cast %597 : vector<2x8x32xf32> to vector<16x32xf32>
    %c3 = arith.constant 3 : index
    %c0_245 = arith.constant 0 : index
    %c0_246 = arith.constant 0 : index
    %599 = vector.load %arg6[%c3, %c0_245, %c0_246] : memref<4x32x96xf32, #tpu.memory_space<vmem>>, vector<1x32x96xf32>
    %600 = vector.shape_cast %599 : vector<1x32x96xf32> to vector<32x96xf32>
    %cst_247 = arith.constant dense<0.000000e+00> : vector<16x96xf32>
    %601 = tpu.matmul %598, %600, %cst_247 {dimension_numbers = #tpu.dot_dimension_numbers<[1], [0], [0], [1], [0, 0, 1, 1], [], []>} : vector<16x32xf32>, vector<32x96xf32>, vector<16x96xf32> -> vector<16x96xf32>
    %c3_248 = arith.constant 3 : index
    %c0_249 = arith.constant 0 : index
    %c0_250 = arith.constant 0 : index
    %602 = vector.load %arg7[%c3_248, %c0_249, %c0_250] : memref<4x1x96xf32, #tpu.memory_space<vmem>>, vector<1x1x96xf32>
    %603 = vector.shape_cast %602 : vector<1x1x96xf32> to vector<1x96xf32>
    %604 = vector.broadcast %603 : vector<1x96xf32> to vector<16x96xf32>
    %605 = arith.addf %601, %604 : vector<16x96xf32>
    %606 = vector.extract_strided_slice %605 {offsets = [0, 0], sizes = [16, 32], strides = [1, 1]} : vector<16x96xf32> to vector<16x32xf32>
    %607 = vector.shape_cast %606 : vector<16x32xf32> to vector<2x8x32xf32>
    %608 = vector.extract_strided_slice %605 {offsets = [0, 32], sizes = [16, 32], strides = [1, 1]} : vector<16x96xf32> to vector<16x32xf32>
    %609 = vector.shape_cast %608 : vector<16x32xf32> to vector<2x8x32xf32>
    %610 = vector.extract_strided_slice %605 {offsets = [0, 64], sizes = [16, 32], strides = [1, 1]} : vector<16x96xf32> to vector<16x32xf32>
    %611 = vector.shape_cast %610 : vector<16x32xf32> to vector<2x8x32xf32>
    %612 = vector.extract_strided_slice %607 {offsets = [0, 0, 0], sizes = [2, 8, 8], strides = [1, 1, 1]} : vector<2x8x32xf32> to vector<2x8x8xf32>
    %613 = vector.extract_strided_slice %609 {offsets = [0, 0, 0], sizes = [2, 8, 8], strides = [1, 1, 1]} : vector<2x8x32xf32> to vector<2x8x8xf32>
    %614 = vector.extract_strided_slice %611 {offsets = [0, 0, 0], sizes = [2, 8, 8], strides = [1, 1, 1]} : vector<2x8x32xf32> to vector<2x8x8xf32>
    "tpu.trace_start"() <{level = 10 : i32, message = "bqd,bkd->bqk"}> : () -> ()
    %cst_251 = arith.constant dense<0.000000e+00> : vector<2x8x8xf32>
    %615 = tpu.matmul %612, %613, %cst_251 {dimension_numbers = #tpu.dot_dimension_numbers<[2], [2], [1], [1], [0, 0, 0, 1, 1, 1], [0], [0]>} : vector<2x8x8xf32>, vector<2x8x8xf32>, vector<2x8x8xf32> -> vector<2x8x8xf32>
    "tpu.trace_stop"() : () -> ()
    %cst_252 = arith.constant 0.353553385 : f32
    %616 = vector.broadcast %cst_252 : f32 to vector<2x8x8xf32>
    %617 = arith.mulf %615, %616 : vector<2x8x8xf32>
    %618 = vector.broadcast %6 : vector<2x1x8xf32> to vector<2x8x8xf32>
    %619 = arith.addf %617, %618 : vector<2x8x8xf32>
    %cst_253 = arith.constant dense<0xFF800000> : vector<2x8xf32>
    %620 = vector.multi_reduction <maximumf>, %619, %cst_253 [2] : vector<2x8x8xf32> to vector<2x8xf32>
    %621 = vector.shape_cast %620 : vector<2x8xf32> to vector<2x8x1xf32>
    %622 = vector.broadcast %621 : vector<2x8x1xf32> to vector<2x8x8xf32>
    %623 = arith.subf %619, %622 : vector<2x8x8xf32>
    %624 = math.exp %623 : vector<2x8x8xf32>
    %cst_254 = arith.constant dense<0.000000e+00> : vector<2x8xf32>
    %625 = vector.multi_reduction <add>, %624, %cst_254 [2] : vector<2x8x8xf32> to vector<2x8xf32>
    %626 = vector.shape_cast %625 : vector<2x8xf32> to vector<2x8x1xf32>
    %627 = tpu.reciprocal %626 {approx = true} : vector<2x8x1xf32> -> vector<2x8x1xf32>
    %628 = vector.broadcast %627 : vector<2x8x1xf32> to vector<2x8x8xf32>
    %629 = arith.mulf %624, %628 : vector<2x8x8xf32>
    "tpu.trace_start"() <{level = 10 : i32, message = "bqk,bkd->bqd"}> : () -> ()
    %cst_255 = arith.constant dense<0.000000e+00> : vector<2x8x8xf32>
    %630 = tpu.matmul %629, %614, %cst_255 {dimension_numbers = #tpu.dot_dimension_numbers<[2], [1], [1], [2], [0, 0, 0, 1, 1, 2], [0], [0]>} : vector<2x8x8xf32>, vector<2x8x8xf32>, vector<2x8x8xf32> -> vector<2x8x8xf32>
    "tpu.trace_stop"() : () -> ()
    %631 = vector.extract_strided_slice %607 {offsets = [0, 0, 8], sizes = [2, 8, 8], strides = [1, 1, 1]} : vector<2x8x32xf32> to vector<2x8x8xf32>
    %632 = vector.extract_strided_slice %609 {offsets = [0, 0, 8], sizes = [2, 8, 8], strides = [1, 1, 1]} : vector<2x8x32xf32> to vector<2x8x8xf32>
    %633 = vector.extract_strided_slice %611 {offsets = [0, 0, 8], sizes = [2, 8, 8], strides = [1, 1, 1]} : vector<2x8x32xf32> to vector<2x8x8xf32>
    "tpu.trace_start"() <{level = 10 : i32, message = "bqd,bkd->bqk"}> : () -> ()
    %cst_256 = arith.constant dense<0.000000e+00> : vector<2x8x8xf32>
    %634 = tpu.matmul %631, %632, %cst_256 {dimension_numbers = #tpu.dot_dimension_numbers<[2], [2], [1], [1], [0, 0, 0, 1, 1, 1], [0], [0]>} : vector<2x8x8xf32>, vector<2x8x8xf32>, vector<2x8x8xf32> -> vector<2x8x8xf32>
    "tpu.trace_stop"() : () -> ()
    %cst_257 = arith.constant 0.353553385 : f32
    %635 = vector.broadcast %cst_257 : f32 to vector<2x8x8xf32>
    %636 = arith.mulf %634, %635 : vector<2x8x8xf32>
    %637 = vector.broadcast %6 : vector<2x1x8xf32> to vector<2x8x8xf32>
    %638 = arith.addf %636, %637 : vector<2x8x8xf32>
    %cst_258 = arith.constant dense<0xFF800000> : vector<2x8xf32>
    %639 = vector.multi_reduction <maximumf>, %638, %cst_258 [2] : vector<2x8x8xf32> to vector<2x8xf32>
    %640 = vector.shape_cast %639 : vector<2x8xf32> to vector<2x8x1xf32>
    %641 = vector.broadcast %640 : vector<2x8x1xf32> to vector<2x8x8xf32>
    %642 = arith.subf %638, %641 : vector<2x8x8xf32>
    %643 = math.exp %642 : vector<2x8x8xf32>
    %cst_259 = arith.constant dense<0.000000e+00> : vector<2x8xf32>
    %644 = vector.multi_reduction <add>, %643, %cst_259 [2] : vector<2x8x8xf32> to vector<2x8xf32>
    %645 = vector.shape_cast %644 : vector<2x8xf32> to vector<2x8x1xf32>
    %646 = tpu.reciprocal %645 {approx = true} : vector<2x8x1xf32> -> vector<2x8x1xf32>
    %647 = vector.broadcast %646 : vector<2x8x1xf32> to vector<2x8x8xf32>
    %648 = arith.mulf %643, %647 : vector<2x8x8xf32>
    "tpu.trace_start"() <{level = 10 : i32, message = "bqk,bkd->bqd"}> : () -> ()
    %cst_260 = arith.constant dense<0.000000e+00> : vector<2x8x8xf32>
    %649 = tpu.matmul %648, %633, %cst_260 {dimension_numbers = #tpu.dot_dimension_numbers<[2], [1], [1], [2], [0, 0, 0, 1, 1, 2], [0], [0]>} : vector<2x8x8xf32>, vector<2x8x8xf32>, vector<2x8x8xf32> -> vector<2x8x8xf32>
    "tpu.trace_stop"() : () -> ()
    %650 = vector.extract_strided_slice %607 {offsets = [0, 0, 16], sizes = [2, 8, 8], strides = [1, 1, 1]} : vector<2x8x32xf32> to vector<2x8x8xf32>
    %651 = vector.extract_strided_slice %609 {offsets = [0, 0, 16], sizes = [2, 8, 8], strides = [1, 1, 1]} : vector<2x8x32xf32> to vector<2x8x8xf32>
    %652 = vector.extract_strided_slice %611 {offsets = [0, 0, 16], sizes = [2, 8, 8], strides = [1, 1, 1]} : vector<2x8x32xf32> to vector<2x8x8xf32>
    "tpu.trace_start"() <{level = 10 : i32, message = "bqd,bkd->bqk"}> : () -> ()
    %cst_261 = arith.constant dense<0.000000e+00> : vector<2x8x8xf32>
    %653 = tpu.matmul %650, %651, %cst_261 {dimension_numbers = #tpu.dot_dimension_numbers<[2], [2], [1], [1], [0, 0, 0, 1, 1, 1], [0], [0]>} : vector<2x8x8xf32>, vector<2x8x8xf32>, vector<2x8x8xf32> -> vector<2x8x8xf32>
    "tpu.trace_stop"() : () -> ()
    %cst_262 = arith.constant 0.353553385 : f32
    %654 = vector.broadcast %cst_262 : f32 to vector<2x8x8xf32>
    %655 = arith.mulf %653, %654 : vector<2x8x8xf32>
    %656 = vector.broadcast %6 : vector<2x1x8xf32> to vector<2x8x8xf32>
    %657 = arith.addf %655, %656 : vector<2x8x8xf32>
    %cst_263 = arith.constant dense<0xFF800000> : vector<2x8xf32>
    %658 = vector.multi_reduction <maximumf>, %657, %cst_263 [2] : vector<2x8x8xf32> to vector<2x8xf32>
    %659 = vector.shape_cast %658 : vector<2x8xf32> to vector<2x8x1xf32>
    %660 = vector.broadcast %659 : vector<2x8x1xf32> to vector<2x8x8xf32>
    %661 = arith.subf %657, %660 : vector<2x8x8xf32>
    %662 = math.exp %661 : vector<2x8x8xf32>
    %cst_264 = arith.constant dense<0.000000e+00> : vector<2x8xf32>
    %663 = vector.multi_reduction <add>, %662, %cst_264 [2] : vector<2x8x8xf32> to vector<2x8xf32>
    %664 = vector.shape_cast %663 : vector<2x8xf32> to vector<2x8x1xf32>
    %665 = tpu.reciprocal %664 {approx = true} : vector<2x8x1xf32> -> vector<2x8x1xf32>
    %666 = vector.broadcast %665 : vector<2x8x1xf32> to vector<2x8x8xf32>
    %667 = arith.mulf %662, %666 : vector<2x8x8xf32>
    "tpu.trace_start"() <{level = 10 : i32, message = "bqk,bkd->bqd"}> : () -> ()
    %cst_265 = arith.constant dense<0.000000e+00> : vector<2x8x8xf32>
    %668 = tpu.matmul %667, %652, %cst_265 {dimension_numbers = #tpu.dot_dimension_numbers<[2], [1], [1], [2], [0, 0, 0, 1, 1, 2], [0], [0]>} : vector<2x8x8xf32>, vector<2x8x8xf32>, vector<2x8x8xf32> -> vector<2x8x8xf32>
    "tpu.trace_stop"() : () -> ()
    %669 = vector.extract_strided_slice %607 {offsets = [0, 0, 24], sizes = [2, 8, 8], strides = [1, 1, 1]} : vector<2x8x32xf32> to vector<2x8x8xf32>
    %670 = vector.extract_strided_slice %609 {offsets = [0, 0, 24], sizes = [2, 8, 8], strides = [1, 1, 1]} : vector<2x8x32xf32> to vector<2x8x8xf32>
    %671 = vector.extract_strided_slice %611 {offsets = [0, 0, 24], sizes = [2, 8, 8], strides = [1, 1, 1]} : vector<2x8x32xf32> to vector<2x8x8xf32>
    "tpu.trace_start"() <{level = 10 : i32, message = "bqd,bkd->bqk"}> : () -> ()
    %cst_266 = arith.constant dense<0.000000e+00> : vector<2x8x8xf32>
    %672 = tpu.matmul %669, %670, %cst_266 {dimension_numbers = #tpu.dot_dimension_numbers<[2], [2], [1], [1], [0, 0, 0, 1, 1, 1], [0], [0]>} : vector<2x8x8xf32>, vector<2x8x8xf32>, vector<2x8x8xf32> -> vector<2x8x8xf32>
    "tpu.trace_stop"() : () -> ()
    %cst_267 = arith.constant 0.353553385 : f32
    %673 = vector.broadcast %cst_267 : f32 to vector<2x8x8xf32>
    %674 = arith.mulf %672, %673 : vector<2x8x8xf32>
    %675 = vector.broadcast %6 : vector<2x1x8xf32> to vector<2x8x8xf32>
    %676 = arith.addf %674, %675 : vector<2x8x8xf32>
    %cst_268 = arith.constant dense<0xFF800000> : vector<2x8xf32>
    %677 = vector.multi_reduction <maximumf>, %676, %cst_268 [2] : vector<2x8x8xf32> to vector<2x8xf32>
    %678 = vector.shape_cast %677 : vector<2x8xf32> to vector<2x8x1xf32>
    %679 = vector.broadcast %678 : vector<2x8x1xf32> to vector<2x8x8xf32>
    %680 = arith.subf %676, %679 : vector<2x8x8xf32>
    %681 = math.exp %680 : vector<2x8x8xf32>
    %cst_269 = arith.constant dense<0.000000e+00> : vector<2x8xf32>
    %682 = vector.multi_reduction <add>, %681, %cst_269 [2] : vector<2x8x8xf32> to vector<2x8xf32>
    %683 = vector.shape_cast %682 : vector<2x8xf32> to vector<2x8x1xf32>
    %684 = tpu.reciprocal %683 {approx = true} : vector<2x8x1xf32> -> vector<2x8x1xf32>
    %685 = vector.broadcast %684 : vector<2x8x1xf32> to vector<2x8x8xf32>
    %686 = arith.mulf %681, %685 : vector<2x8x8xf32>
    "tpu.trace_start"() <{level = 10 : i32, message = "bqk,bkd->bqd"}> : () -> ()
    %cst_270 = arith.constant dense<0.000000e+00> : vector<2x8x8xf32>
    %687 = tpu.matmul %686, %671, %cst_270 {dimension_numbers = #tpu.dot_dimension_numbers<[2], [1], [1], [2], [0, 0, 0, 1, 1, 2], [0], [0]>} : vector<2x8x8xf32>, vector<2x8x8xf32>, vector<2x8x8xf32> -> vector<2x8x8xf32>
    "tpu.trace_stop"() : () -> ()
    %688 = tpu.concatenate %630, %649, %668, %687 in 2 : vector<2x8x8xf32>, vector<2x8x8xf32>, vector<2x8x8xf32>, vector<2x8x8xf32> -> vector<2x8x32xf32>
    %689 = vector.shape_cast %688 : vector<2x8x32xf32> to vector<16x32xf32>
    %c3_271 = arith.constant 3 : index
    %c0_272 = arith.constant 0 : index
    %c0_273 = arith.constant 0 : index
    %690 = vector.load %arg8[%c3_271, %c0_272, %c0_273] : memref<4x32x32xf32, #tpu.memory_space<vmem>>, vector<1x32x32xf32>
    %691 = vector.shape_cast %690 : vector<1x32x32xf32> to vector<32x32xf32>
    %cst_274 = arith.constant dense<0.000000e+00> : vector<16x32xf32>
    %692 = tpu.matmul %689, %691, %cst_274 {dimension_numbers = #tpu.dot_dimension_numbers<[1], [0], [0], [1], [0, 0, 1, 1], [], []>} : vector<16x32xf32>, vector<32x32xf32>, vector<16x32xf32> -> vector<16x32xf32>
    %c3_275 = arith.constant 3 : index
    %c0_276 = arith.constant 0 : index
    %c0_277 = arith.constant 0 : index
    %693 = vector.load %arg9[%c3_275, %c0_276, %c0_277] : memref<4x1x32xf32, #tpu.memory_space<vmem>>, vector<1x1x32xf32>
    %694 = vector.shape_cast %693 : vector<1x1x32xf32> to vector<1x32xf32>
    %695 = vector.broadcast %694 : vector<1x32xf32> to vector<16x32xf32>
    %696 = arith.addf %692, %695 : vector<16x32xf32>
    %697 = arith.addf %598, %696 : vector<16x32xf32>
    %c3_278 = arith.constant 3 : index
    %c0_279 = arith.constant 0 : index
    %c0_280 = arith.constant 0 : index
    %698 = vector.load %arg10[%c3_278, %c0_279, %c0_280] : memref<4x1x32xf32, #tpu.memory_space<vmem>>, vector<1x1x32xf32>
    %699 = vector.shape_cast %698 : vector<1x1x32xf32> to vector<1x32xf32>
    %c3_281 = arith.constant 3 : index
    %c0_282 = arith.constant 0 : index
    %c0_283 = arith.constant 0 : index
    %700 = vector.load %arg11[%c3_281, %c0_282, %c0_283] : memref<4x1x32xf32, #tpu.memory_space<vmem>>, vector<1x1x32xf32>
    %701 = vector.shape_cast %700 : vector<1x1x32xf32> to vector<1x32xf32>
    %cst_284 = arith.constant dense<0.000000e+00> : vector<16xf32>
    %702 = vector.multi_reduction <add>, %697, %cst_284 [1] : vector<16x32xf32> to vector<16xf32>
    %703 = vector.shape_cast %702 : vector<16xf32> to vector<16x1xf32>
    %cst_285 = arith.constant 3.200000e+01 : f32
    %704 = vector.broadcast %cst_285 : f32 to vector<16x1xf32>
    %705 = arith.divf %703, %704 : vector<16x1xf32>
    %706 = vector.broadcast %705 : vector<16x1xf32> to vector<16x32xf32>
    %707 = arith.subf %697, %706 : vector<16x32xf32>
    %708 = arith.mulf %707, %707 : vector<16x32xf32>
    %cst_286 = arith.constant dense<0.000000e+00> : vector<16xf32>
    %709 = vector.multi_reduction <add>, %708, %cst_286 [1] : vector<16x32xf32> to vector<16xf32>
    %710 = vector.shape_cast %709 : vector<16xf32> to vector<16x1xf32>
    %cst_287 = arith.constant 3.200000e+01 : f32
    %711 = vector.broadcast %cst_287 : f32 to vector<16x1xf32>
    %712 = arith.divf %710, %711 : vector<16x1xf32>
    %713 = vector.broadcast %705 : vector<16x1xf32> to vector<16x32xf32>
    %714 = arith.subf %697, %713 : vector<16x32xf32>
    %cst_288 = arith.constant 9.99999996E-13 : f32
    %715 = vector.broadcast %cst_288 : f32 to vector<16x1xf32>
    %716 = arith.addf %712, %715 : vector<16x1xf32>
    %717 = math.rsqrt %716 : vector<16x1xf32>
    %718 = vector.broadcast %717 : vector<16x1xf32> to vector<16x32xf32>
    %719 = arith.mulf %714, %718 : vector<16x32xf32>
    %720 = vector.broadcast %699 : vector<1x32xf32> to vector<16x32xf32>
    %721 = arith.mulf %719, %720 : vector<16x32xf32>
    %722 = vector.broadcast %701 : vector<1x32xf32> to vector<16x32xf32>
    %723 = arith.addf %721, %722 : vector<16x32xf32>
    %c3_289 = arith.constant 3 : index
    %c0_290 = arith.constant 0 : index
    %c0_291 = arith.constant 0 : index
    %724 = vector.load %arg12[%c3_289, %c0_290, %c0_291] : memref<4x32x128xf32, #tpu.memory_space<vmem>>, vector<1x32x128xf32>
    %725 = vector.shape_cast %724 : vector<1x32x128xf32> to vector<32x128xf32>
    %cst_292 = arith.constant dense<0.000000e+00> : vector<16x128xf32>
    %726 = tpu.matmul %723, %725, %cst_292 {dimension_numbers = #tpu.dot_dimension_numbers<[1], [0], [0], [1], [0, 0, 1, 1], [], []>} : vector<16x32xf32>, vector<32x128xf32>, vector<16x128xf32> -> vector<16x128xf32>
    %c3_293 = arith.constant 3 : index
    %c0_294 = arith.constant 0 : index
    %c0_295 = arith.constant 0 : index
    %727 = vector.load %arg13[%c3_293, %c0_294, %c0_295] : memref<4x1x128xf32, #tpu.memory_space<vmem>>, vector<1x1x128xf32>
    %728 = vector.shape_cast %727 : vector<1x1x128xf32> to vector<1x128xf32>
    %729 = vector.broadcast %728 : vector<1x128xf32> to vector<16x128xf32>
    %730 = arith.addf %726, %729 : vector<16x128xf32>
    %731 = arith.mulf %730, %730 : vector<16x128xf32>
    %732 = arith.mulf %730, %731 : vector<16x128xf32>
    %cst_296 = arith.constant 4.471500e-02 : f32
    %733 = vector.broadcast %cst_296 : f32 to vector<16x128xf32>
    %734 = arith.mulf %733, %732 : vector<16x128xf32>
    %735 = arith.addf %730, %734 : vector<16x128xf32>
    %cst_297 = arith.constant 0.797884583 : f32
    %736 = vector.broadcast %cst_297 : f32 to vector<16x128xf32>
    %737 = arith.mulf %736, %735 : vector<16x128xf32>
    %738 = math.tanh %737 : vector<16x128xf32>
    %cst_298 = arith.constant 1.000000e+00 : f32
    %739 = vector.broadcast %cst_298 : f32 to vector<16x128xf32>
    %740 = arith.addf %739, %738 : vector<16x128xf32>
    %cst_299 = arith.constant 5.000000e-01 : f32
    %741 = vector.broadcast %cst_299 : f32 to vector<16x128xf32>
    %742 = arith.mulf %741, %740 : vector<16x128xf32>
    %743 = arith.mulf %730, %742 : vector<16x128xf32>
    %c3_300 = arith.constant 3 : index
    %c0_301 = arith.constant 0 : index
    %c0_302 = arith.constant 0 : index
    %744 = vector.load %arg14[%c3_300, %c0_301, %c0_302] : memref<4x128x32xf32, #tpu.memory_space<vmem>>, vector<1x128x32xf32>
    %745 = vector.shape_cast %744 : vector<1x128x32xf32> to vector<128x32xf32>
    %cst_303 = arith.constant dense<0.000000e+00> : vector<16x32xf32>
    %746 = tpu.matmul %743, %745, %cst_303 {dimension_numbers = #tpu.dot_dimension_numbers<[1], [0], [0], [1], [0, 0, 1, 1], [], []>} : vector<16x128xf32>, vector<128x32xf32>, vector<16x32xf32> -> vector<16x32xf32>
    %c3_304 = arith.constant 3 : index
    %c0_305 = arith.constant 0 : index
    %c0_306 = arith.constant 0 : index
    %747 = vector.load %arg15[%c3_304, %c0_305, %c0_306] : memref<4x1x32xf32, #tpu.memory_space<vmem>>, vector<1x1x32xf32>
    %748 = vector.shape_cast %747 : vector<1x1x32xf32> to vector<1x32xf32>
    %749 = vector.broadcast %748 : vector<1x32xf32> to vector<16x32xf32>
    %750 = arith.addf %746, %749 : vector<16x32xf32>
    %751 = arith.addf %723, %750 : vector<16x32xf32>
    %c3_307 = arith.constant 3 : index
    %c0_308 = arith.constant 0 : index
    %c0_309 = arith.constant 0 : index
    %752 = vector.load %arg16[%c3_307, %c0_308, %c0_309] : memref<4x1x32xf32, #tpu.memory_space<vmem>>, vector<1x1x32xf32>
    %753 = vector.shape_cast %752 : vector<1x1x32xf32> to vector<1x32xf32>
    %c3_310 = arith.constant 3 : index
    %c0_311 = arith.constant 0 : index
    %c0_312 = arith.constant 0 : index
    %754 = vector.load %arg17[%c3_310, %c0_311, %c0_312] : memref<4x1x32xf32, #tpu.memory_space<vmem>>, vector<1x1x32xf32>
    %755 = vector.shape_cast %754 : vector<1x1x32xf32> to vector<1x32xf32>
    %cst_313 = arith.constant dense<0.000000e+00> : vector<16xf32>
    %756 = vector.multi_reduction <add>, %751, %cst_313 [1] : vector<16x32xf32> to vector<16xf32>
    %757 = vector.shape_cast %756 : vector<16xf32> to vector<16x1xf32>
    %cst_314 = arith.constant 3.200000e+01 : f32
    %758 = vector.broadcast %cst_314 : f32 to vector<16x1xf32>
    %759 = arith.divf %757, %758 : vector<16x1xf32>
    %760 = vector.broadcast %759 : vector<16x1xf32> to vector<16x32xf32>
    %761 = arith.subf %751, %760 : vector<16x32xf32>
    %762 = arith.mulf %761, %761 : vector<16x32xf32>
    %cst_315 = arith.constant dense<0.000000e+00> : vector<16xf32>
    %763 = vector.multi_reduction <add>, %762, %cst_315 [1] : vector<16x32xf32> to vector<16xf32>
    %764 = vector.shape_cast %763 : vector<16xf32> to vector<16x1xf32>
    %cst_316 = arith.constant 3.200000e+01 : f32
    %765 = vector.broadcast %cst_316 : f32 to vector<16x1xf32>
    %766 = arith.divf %764, %765 : vector<16x1xf32>
    %767 = vector.broadcast %759 : vector<16x1xf32> to vector<16x32xf32>
    %768 = arith.subf %751, %767 : vector<16x32xf32>
    %cst_317 = arith.constant 9.99999996E-13 : f32
    %769 = vector.broadcast %cst_317 : f32 to vector<16x1xf32>
    %770 = arith.addf %766, %769 : vector<16x1xf32>
    %771 = math.rsqrt %770 : vector<16x1xf32>
    %772 = vector.broadcast %771 : vector<16x1xf32> to vector<16x32xf32>
    %773 = arith.mulf %768, %772 : vector<16x32xf32>
    %774 = vector.broadcast %753 : vector<1x32xf32> to vector<16x32xf32>
    %775 = arith.mulf %773, %774 : vector<16x32xf32>
    %776 = vector.broadcast %755 : vector<1x32xf32> to vector<16x32xf32>
    %777 = arith.addf %775, %776 : vector<16x32xf32>
    %778 = vector.shape_cast %777 : vector<16x32xf32> to vector<2x8x32xf32>
    %cst_318 = arith.constant dense<0.000000e+00> : vector<2x32xf32>
    %779 = vector.multi_reduction <add>, %778, %cst_318 [1] : vector<2x8x32xf32> to vector<2x32xf32>
    %cst_319 = arith.constant 8.000000e+00 : f32
    %780 = vector.broadcast %cst_319 : f32 to vector<2x32xf32>
    %781 = arith.divf %779, %780 : vector<2x32xf32>
    %cst_320 = arith.constant 1.000000e+00 : f32
    %782 = vector.broadcast %cst_320 : f32 to vector<2x32xf32>
    %783 = arith.mulf %782, %781 : vector<2x32xf32>
    %784 = arith.addf %416, %783 : vector<2x32xf32>
    %cst_321 = arith.constant 0.333333343 : f32
    %785 = vector.broadcast %cst_321 : f32 to vector<2x32xf32>
    %786 = arith.mulf %784, %785 : vector<2x32xf32>
    %c0_322 = arith.constant 0 : index
    %c0_323 = arith.constant 0 : index
    %787 = vector.load %arg18[%c0_322, %c0_323] : memref<32x16xf32, #tpu.memory_space<vmem>>, vector<32x16xf32>
    %cst_324 = arith.constant dense<0.000000e+00> : vector<2x16xf32>
    %788 = tpu.matmul %786, %787, %cst_324 {dimension_numbers = #tpu.dot_dimension_numbers<[1], [0], [0], [1], [0, 0, 1, 1], [], []>} : vector<2x32xf32>, vector<32x16xf32>, vector<2x16xf32> -> vector<2x16xf32>
    %c0_325 = arith.constant 0 : index
    %c0_326 = arith.constant 0 : index
    %789 = vector.load %arg19[%c0_325, %c0_326] : memref<2x16xf32, #tpu.memory_space<vmem>>, vector<2x16xf32>
    tpu.vector_store %arg19[%c0_325, %c0_326], %788 {strides = array<i32>} : memref<2x16xf32, #tpu.memory_space<vmem>>, vector<2x16xf32>,
    return
  }
}

</mosaic_0001>

<llo_original>
// kernel: tpu_custom_call.1
$region0: #{tpu_custom_call.1}
  #allocation0 [shape = 'u32[]', space=smem, size = 0x4, offset = 0x4, fixed_abs, tag = 'smem constant byte address 0x4 - core index']
  #allocation1 [shape = 'u32[144,128]{1,0:T(1,128)}', space=vmem, size = 0x12000, scoped, tag = 'internal scratch']
  %s0 = inlined_call_operand.vmem [shape: f32[2,8,32], index: 0, kind: input, shape index: {}]
  %s1 = inlined_call_operand.vmem [shape: s32[2,8], index: 1, kind: input, shape index: {}]
  %s2 = inlined_call_operand.vmem [shape: f32[8,32], index: 2, kind: input, shape index: {}]
  %s3 = inlined_call_operand.vmem [shape: f32[1,32], index: 3, kind: input, shape index: {}]
  %s4 = inlined_call_operand.vmem [shape: f32[1,32], index: 4, kind: input, shape index: {}]
  %s5 = inlined_call_operand.vmem [shape: f32[1,32], index: 5, kind: input, shape index: {}]
  %s6 = inlined_call_operand.vmem [shape: f32[4,32,96], index: 6, kind: input, shape index: {}]
  %s7 = inlined_call_operand.vmem [shape: f32[4,1,96], index: 7, kind: input, shape index: {}]
  %s8 = inlined_call_operand.vmem [shape: f32[4,32,32], index: 8, kind: input, shape index: {}]
  %s9 = inlined_call_operand.vmem [shape: f32[4,1,32], index: 9, kind: input, shape index: {}]
  %s10 = inlined_call_operand.vmem [shape: f32[4,1,32], index: 10, kind: input, shape index: {}]
  %s11 = inlined_call_operand.vmem [shape: f32[4,1,32], index: 11, kind: input, shape index: {}]
  %s12 = inlined_call_operand.vmem [shape: f32[4,32,128], index: 12, kind: input, shape index: {}]
  %s13 = inlined_call_operand.vmem [shape: f32[4,1,128], index: 13, kind: input, shape index: {}]
  %s14 = inlined_call_operand.vmem [shape: f32[4,128,32], index: 14, kind: input, shape index: {}]
  %s15 = inlined_call_operand.vmem [shape: f32[4,1,32], index: 15, kind: input, shape index: {}]
  %s16 = inlined_call_operand.vmem [shape: f32[4,1,32], index: 16, kind: input, shape index: {}]
  %s17 = inlined_call_operand.vmem [shape: f32[4,1,32], index: 17, kind: input, shape index: {}]
  %s18 = inlined_call_operand.vmem [shape: f32[32,16], index: 18, kind: input, shape index: {}]
  %s19 = inlined_call_operand.hbm [shape: f32[2,16], index: 19, kind: output, shape index: {}]
  %s20 = sld [smem:[#allocation0]]
  $region86: #{tpu_custom_call.1} parent=0
    _
  %s22 = ssub.s32 1, %s20
  %s23 = scalar_select 0, %s22, %s20
  $region1: #{tpu_custom_call.1} parent=0
    #allocation2 [shape = 'u8[1024]{0}', space=vmem, size = 0x400, scoped, tag = 'output window, operand 0, single buffered']
    #allocation3 [shape = 's32[1]{0}', space=sflag, size = 0x4, scoped, tag = 'scoped memory for tpu_custom_call.1']
    %24 = vsyncpa [#allocation3], 0
    // Predicated region
    $region2: #{tpu_custom_call.1} parent=1 // pred_check
      _
    $region3: #{tpu_custom_call.1} parent=1 // pred_check_branch
      %26 = sbr.rel (0) target = $region5
    $region4: #{tpu_custom_call.1} parent=1 // pred_region
      _
    $region5: #{tpu_custom_call.1} parent=1 // pred_fallthru
      _
    // Predicated region
    $region6: #{tpu_custom_call.1} parent=1 // pred_check
      _
    $region7: #{tpu_custom_call.1} parent=1 // pred_check_branch
      %28 = sbr.rel (0) target = $region9
    $region8: #{tpu_custom_call.1} parent=1 // pred_region
      _
    $region9: #{tpu_custom_call.1} parent=1 // pred_fallthru
      _
    // Predicated region
    $region10: #{tpu_custom_call.1} parent=1 // pred_check
      _
    $region11: #{tpu_custom_call.1} parent=1 // pred_check_branch
      %30 = sbr.rel (0) target = $region13
    $region12: #{tpu_custom_call.1} parent=1 // pred_region
      _
    $region13: #{tpu_custom_call.1} parent=1 // pred_fallthru
      _
    // Predicated region
    $region14: #{tpu_custom_call.1} parent=1 // pred_check
      _
    $region15: #{tpu_custom_call.1} parent=1 // pred_check_branch
      %32 = sbr.rel (0) target = $region17
    $region16: #{tpu_custom_call.1} parent=1 // pred_region
      _
    $region17: #{tpu_custom_call.1} parent=1 // pred_fallthru
      _
    // Predicated region
    $region18: #{tpu_custom_call.1} parent=1 // pred_check
      _
    $region19: #{tpu_custom_call.1} parent=1 // pred_check_branch
      %34 = sbr.rel (0) target = $region21
    $region20: #{tpu_custom_call.1} parent=1 // pred_region
      _
    $region21: #{tpu_custom_call.1} parent=1 // pred_fallthru
      _
    // Predicated region
    $region22: #{tpu_custom_call.1} parent=1 // pred_check
      _
    $region23: #{tpu_custom_call.1} parent=1 // pred_check_branch
      %36 = sbr.rel (0) target = $region25
    $region24: #{tpu_custom_call.1} parent=1 // pred_region
      _
    $region25: #{tpu_custom_call.1} parent=1 // pred_fallthru
      _
    // Predicated region
    $region26: #{tpu_custom_call.1} parent=1 // pred_check
      _
    $region27: #{tpu_custom_call.1} parent=1 // pred_check_branch
      %38 = sbr.rel (0) target = $region29
    $region28: #{tpu_custom_call.1} parent=1 // pred_region
      _
    $region29: #{tpu_custom_call.1} parent=1 // pred_fallthru
      _
    // Predicated region
    $region30: #{tpu_custom_call.1} parent=1 // pred_check
      _
    $region31: #{tpu_custom_call.1} parent=1 // pred_check_branch
      %40 = sbr.rel (0) target = $region33
    $region32: #{tpu_custom_call.1} parent=1 // pred_region
      _
    $region33: #{tpu_custom_call.1} parent=1 // pred_fallthru
      _
    // Predicated region
    $region34: #{tpu_custom_call.1} parent=1 // pred_check
      _
    $region35: #{tpu_custom_call.1} parent=1 // pred_check_branch
      %42 = sbr.rel (0) target = $region37
    $region36: #{tpu_custom_call.1} parent=1 // pred_region
      _
    $region37: #{tpu_custom_call.1} parent=1 // pred_fallthru
      _
    // Predicated region
    $region38: #{tpu_custom_call.1} parent=1 // pred_check
      _
    $region39: #{tpu_custom_call.1} parent=1 // pred_check_branch
      %44 = sbr.rel (0) target = $region41
    $region40: #{tpu_custom_call.1} parent=1 // pred_region
      _
    $region41: #{tpu_custom_call.1} parent=1 // pred_fallthru
      _
    // Predicated region
    $region42: #{tpu_custom_call.1} parent=1 // pred_check
      _
    $region43: #{tpu_custom_call.1} parent=1 // pred_check_branch
      %46 = sbr.rel (0) target = $region45
    $region44: #{tpu_custom_call.1} parent=1 // pred_region
      _
    $region45: #{tpu_custom_call.1} parent=1 // pred_fallthru
      _
    // Predicated region
    $region46: #{tpu_custom_call.1} parent=1 // pred_check
      _
    $region47: #{tpu_custom_call.1} parent=1 // pred_check_branch
      %48 = sbr.rel (0) target = $region49
    $region48: #{tpu_custom_call.1} parent=1 // pred_region
      _
    $region49: #{tpu_custom_call.1} parent=1 // pred_fallthru
      _
    // Predicated region
    $region50: #{tpu_custom_call.1} parent=1 // pred_check
      _
    $region51: #{tpu_custom_call.1} parent=1 // pred_check_branch
      %50 = sbr.rel (0) target = $region53
    $region52: #{tpu_custom_call.1} parent=1 // pred_region
      _
    $region53: #{tpu_custom_call.1} parent=1 // pred_fallthru
      _
    // Predicated region
    $region54: #{tpu_custom_call.1} parent=1 // pred_check
      _
    $region55: #{tpu_custom_call.1} parent=1 // pred_check_branch
      %52 = sbr.rel (0) target = $region57
    $region56: #{tpu_custom_call.1} parent=1 // pred_region
      _
    $region57: #{tpu_custom_call.1} parent=1 // pred_fallthru
      _
    // Predicated region
    $region58: #{tpu_custom_call.1} parent=1 // pred_check
      _
    $region59: #{tpu_custom_call.1} parent=1 // pred_check_branch
      %54 = sbr.rel (0) target = $region61
    $region60: #{tpu_custom_call.1} parent=1 // pred_region
      _
    $region61: #{tpu_custom_call.1} parent=1 // pred_fallthru
      _
    // Predicated region
    $region62: #{tpu_custom_call.1} parent=1 // pred_check
      _
    $region63: #{tpu_custom_call.1} parent=1 // pred_check_branch
      %56 = sbr.rel (0) target = $region65
    $region64: #{tpu_custom_call.1} parent=1 // pred_region
      _
    $region65: #{tpu_custom_call.1} parent=1 // pred_fallthru
      _
    // Predicated region
    $region66: #{tpu_custom_call.1} parent=1 // pred_check
      _
    $region67: #{tpu_custom_call.1} parent=1 // pred_check_branch
      %58 = sbr.rel (0) target = $region69
    $region68: #{tpu_custom_call.1} parent=1 // pred_region
      _
    $region69: #{tpu_custom_call.1} parent=1 // pred_fallthru
      _
    // Predicated region
    $region70: #{tpu_custom_call.1} parent=1 // pred_check
      _
    $region71: #{tpu_custom_call.1} parent=1 // pred_check_branch
      %60 = sbr.rel (0) target = $region73
    $region72: #{tpu_custom_call.1} parent=1 // pred_region
      _
    $region73: #{tpu_custom_call.1} parent=1 // pred_fallthru
      _
    // Predicated region
    $region74: #{tpu_custom_call.1} parent=1 // pred_check
      _
    $region75: #{tpu_custom_call.1} parent=1 // pred_check_branch
      %62 = sbr.rel (0) target = $region77
    $region76: #{tpu_custom_call.1} parent=1 // pred_region
      _
    $region77: #{tpu_custom_call.1} parent=1 // pred_fallthru
      _
    %v63 = vld [vmem:[%s1] sm:$0x3]
    %v64 = vcvt.s32.f32 %v63
    %v65 = vsub.f32 1.0, %v64
    %v66 = vmul.f32 %v65, -1e+09
    %v69 = vunpack.c.l.s4 1966171168
    %v70 = vunpack.c.0.s8 %v69
    %v71 = vlaneseq
    %v72 = vshrl.u32 %v71, 7
    %v73 = vsub.s32 %v70, %v72
    %v74 = vrot.slane %v66, %v73
    %v75 = vcombine.high %v74, %v74
    %v77 = vunpack.c.l.s4 1966171168
    %v78 = vunpack.c.0.s8 %v77
    %v79 = vlaneseq
    %v80 = vshrl.u32 %v79, 7
    %v81 = vsub.s32 %v78, %v80
    %v82 = vrot.slane %v74, %v81
    %v84 = vunpack.c.l.s4 1966171168
    %v85 = vunpack.c.0.s8 %v84
    %v86 = vlaneseq
    %v87 = vshrl.u32 %v86, 7
    %v88 = vsub.s32 %v85, %v87
    %v89 = vrot.slane %v75, %v88
    %v90 = vld [vmem:[%s0] sm:$0xff]
    %v91 = vld [vmem:[%s0 + $0x8] sm:$0xff]
    %v92 = vld [vmem:[%s2] sm:$0xff]
    %v93 = vadd.f32 %v90, %v92
    %v94 = vadd.f32 %v91, %v92
    %v95 = vld [vmem:[%s3] sm:$0x1]
    %v97 = vlaneseq
    %v98 = vshrl.u32 %v97, 7
    %v99 = vsub.s32 0, %v98
    %v100 = vrot.slane %v95, %v99
    %v102 = vadd.f32 %v93, %v100
    %v103 = vadd.f32 %v94, %v100
    %v104 = vld [vmem:[%s4] sm:$0x1]
    %v105 = vld [vmem:[%s5] sm:$0x1]
    %vm106 = vcmask 261120
    %v107 = vsel %vm106, %v102, 0.0
    %108 = vadd.xlane.f32.xlu0 %v107
    %v109 = vpop.xlane.xlu0 %108
    %v110 = vsel %vm106, %v103, 0.0
    %111 = vadd.xlane.f32.xlu0 %v110
    %v112 = vpop.xlane.xlu0 %111
    %v113 = vrcp.pop 32.0
    %v114 = vmul.f32 %v109, %v113
    %v115 = vmul.f32 %v112, %v113
    %v116 = vsub.f32 %v102, %v114
    %v117 = vsub.f32 %v103, %v115
    %v118 = vmul.f32 %v116, %v116
    %v119 = vmul.f32 %v117, %v117
    %v120 = vsel %vm106, %v118, 0.0
    %121 = vadd.xlane.f32.xlu0 %v120
    %v122 = vpop.xlane.xlu0 %121
    %v123 = vsel %vm106, %v119, 0.0
    %124 = vadd.xlane.f32.xlu0 %v123
    %v125 = vpop.xlane.xlu0 %124
    %v126 = vmul.f32 %v122, %v113
    %v127 = vmul.f32 %v125, %v113
    %v128 = vadd.f32 %v126, 1e-12
    %v129 = vadd.f32 %v127, 1e-12
    %v130 = vrsqrt.pop %v128
    %v131 = vrsqrt.pop %v129
    %v132 = vmul.f32 %v116, %v130
    %v133 = vmul.f32 %v117, %v131
    %v135 = vlaneseq
    %v136 = vshrl.u32 %v135, 7
    %v137 = vsub.s32 0, %v136
    %v138 = vrot.slane %v104, %v137
    %v140 = vmul.f32 %v132, %v138
    %v141 = vmul.f32 %v133, %v138
    %v143 = vlaneseq
    %v144 = vshrl.u32 %v143, 7
    %v145 = vsub.s32 0, %v144
    %v146 = vrot.slane %v105, %v145
    %v148 = vadd.f32 %v140, %v146
    %v149 = vadd.f32 %v141, %v146
    %v150 = vld [vmem:[%s6] sm:$0xff]
    %v151 = vld [vmem:[%s6 + $0x8] sm:$0xff]
    %v152 = vld [vmem:[%s6 + $0x10] sm:$0xff]
    %v153 = vld [vmem:[%s6 + $0x18] sm:$0xff]
    %v154 = vld [vmem:[%s7] sm:$0x1]
    %v156 = vlaneseq
    %v157 = vshrl.u32 %v156, 7
    %v158 = vsub.s32 0, %v157
    %v159 = vrot.slane %v154, %v158
    %v162 = vsel %vm106, %v148, 0
    %v165 = vsel %vm106, %v149, 0
    %167 = vmatprep.subr.mxu0 0.0
    %168 = vmatpush1.msra.mxu0 %v150
    %169 = vmatprep.subr.mxu0 0.0
    %170 = vmatpush1.msra.mxu0 %v151
    %171 = vmatprep.subr.mxu0 0.0
    %172 = vmatpush1.msra.mxu0 %v152
    %173 = vmatprep.subr.mxu0 0.0
    %174 = vmatpush1.msra.mxu0 %v153
    %175 = vmatprep.subr.mxu0 0.0
    %176 = vmatpush1.msra.mxu0 0.0
    %177 = vmatprep.subr.mxu0 0.0
    %178 = vmatpush1.msra.mxu0 0.0
    %179 = vmatprep.subr.mxu0 0.0
    %180 = vmatpush1.msra.mxu0 0.0
    %181 = vmatprep.subr.mxu0 0.0
    %182 = vmatpush1.msra.mxu0 0.0
    %183 = vmatprep.subr.mxu0 0.0
    %184 = vmatpush1.msra.mxu0 0.0
    %185 = vmatprep.subr.mxu0 0.0
    %186 = vmatpush1.msra.mxu0 0.0
    %187 = vmatprep.subr.mxu0 0.0
    %188 = vmatpush1.msra.mxu0 0.0
    %189 = vmatprep.subr.mxu0 0.0
    %190 = vmatpush1.msra.mxu0 0.0
    %191 = vmatprep.subr.mxu0 0.0
    %192 = vmatpush1.msra.mxu0 0.0
    %193 = vmatprep.subr.mxu0 0.0
    %194 = vmatpush1.msra.mxu0 0.0
    %195 = vmatprep.subr.mxu0 0.0
    %196 = vmatpush1.msra.mxu0 0.0
    %197 = vmatprep.subr.mxu0 0.0
    %198 = vmatpush1.msra.mxu0 0.0
    %199 = vmatprep.subr.mxu0 0.0
    %200 = vmatpush1.msra.mxu0 0.0
    %201 = vmatprep.subr.mxu0 0.0
    %202 = vmatpush1.msra.mxu0 0.0
    %203 = vmatprep.subr.mxu0 0.0
    %204 = vmatpush1.msra.mxu0 0.0
    %205 = vmatprep.subr.mxu0 0.0
    %206 = vmatpush1.msra.mxu0 0.0
    %207 = vmatprep.subr.mxu0 0.0
    %208 = vmatpush1.msra.mxu0 0.0
    %209 = vmatprep.subr.mxu0 0.0
    %210 = vmatpush1.msra.mxu0 0.0
    %211 = vmatprep.subr.mxu0 0.0
    %212 = vmatpush1.msra.mxu0 0.0
    %213 = vmatprep.subr.mxu0 0.0
    %214 = vmatpush1.msra.mxu0 0.0
    %215 = vmatprep.subr.mxu0 0.0
    %216 = vmatpush1.msra.mxu0 0.0
    %217 = vmatprep.subr.mxu0 0.0
    %218 = vmatpush1.msra.mxu0 0.0
    %219 = vmatprep.subr.mxu0 0.0
    %220 = vmatpush1.msra.mxu0 0.0
    %221 = vmatprep.subr.mxu0 0.0
    %222 = vmatpush1.msra.mxu0 0.0
    %223 = vmatprep.subr.mxu0 0.0
    %224 = vmatpush1.msra.mxu0 0.0
    %225 = vmatprep.subr.mxu0 0.0
    %226 = vmatpush1.msra.mxu0 0.0
    %227 = vmatprep.subr.mxu0 0.0
    %228 = vmatpush1.msra.mxu0 0.0
    %229 = vmatprep.subr.mxu0 0.0
    %230 = vmatpush1.msra.mxu0 0.0
    %231 = vmatprep.mubr.f32.mxu0 0.0
    %232 = vmatmul.mubr.f32.gmra.mrb[0].mxu0 %v162
    %v233 = vpop.f32.mrb[0].mxu0
    %v234 = vadd.f32 %v159, %v233
    %v235 = vpop.f32.mrb[0].mxu0
    %236 = vmatprep.mubr.f32.mxu0 0.0
    %237 = vmatmul.mubr.f32.gmra.mrb[0].mxu0 %v165
    %v238 = vpop.f32.mrb[0].mxu0
    %v239 = vadd.f32 %v159, %v238
    %v240 = vpop.f32.mrb[0].mxu0
    %241 = vdwg.mxu0
    %243 = vrot.lane.b32.xlu0 %v234, 96
    %v244 = vpop.permute.xlu0 %243
    %vm245 = vcmask 64512
    %v246 = vsel %vm245, %v234, 0
    %v248 = vsel %vm245, %v244, 0
    %250 = vmatprep.subr.mxu0 0.0
    %251 = vmatpush1.xpose.msra.mxu0 %v248
    %252 = vmatprep.subr.mxu0 0.0
    %253 = vmatpush1.xpose.msra.mxu0 0.0
    %254 = vmatprep.subr.mxu0 0.0
    %255 = vmatpush1.xpose.msra.mxu0 0.0
    %256 = vmatprep.subr.mxu0 0.0
    %257 = vmatpush1.xpose.msra.mxu0 0.0
    %258 = vmatprep.subr.mxu0 0.0
    %259 = vmatpush1.xpose.msra.mxu0 0.0
    %260 = vmatprep.subr.mxu0 0.0
    %261 = vmatpush1.xpose.msra.mxu0 0.0
    %262 = vmatprep.subr.mxu0 0.0
    %263 = vmatpush1.xpose.msra.mxu0 0.0
    %264 = vmatprep.subr.mxu0 0.0
    %265 = vmatpush1.xpose.msra.mxu0 0.0
    %266 = vmatprep.subr.mxu0 0.0
    %267 = vmatpush1.xpose.msra.mxu0 0.0
    %268 = vmatprep.subr.mxu0 0.0
    %269 = vmatpush1.xpose.msra.mxu0 0.0
    %270 = vmatprep.subr.mxu0 0.0
    %271 = vmatpush1.xpose.msra.mxu0 0.0
    %272 = vmatprep.subr.mxu0 0.0
    %273 = vmatpush1.xpose.msra.mxu0 0.0
    %274 = vmatprep.subr.mxu0 0.0
    %275 = vmatpush1.xpose.msra.mxu0 0.0
    %276 = vmatprep.subr.mxu0 0.0
    %277 = vmatpush1.xpose.msra.mxu0 0.0
    %278 = vmatprep.subr.mxu0 0.0
    %279 = vmatpush1.xpose.msra.mxu0 0.0
    %280 = vmatprep.subr.mxu0 0.0
    %281 = vmatpush1.xpose.msra.mxu0 0.0
    %282 = vmatprep.subr.mxu0 0.0
    %283 = vmatpush1.xpose.msra.mxu0 0.0
    %284 = vmatprep.subr.mxu0 0.0
    %285 = vmatpush1.xpose.msra.mxu0 0.0
    %286 = vmatprep.subr.mxu0 0.0
    %287 = vmatpush1.xpose.msra.mxu0 0.0
    %288 = vmatprep.subr.mxu0 0.0
    %289 = vmatpush1.xpose.msra.mxu0 0.0
    %290 = vmatprep.subr.mxu0 0.0
    %291 = vmatpush1.xpose.msra.mxu0 0.0
    %292 = vmatprep.subr.mxu0 0.0
    %293 = vmatpush1.xpose.msra.mxu0 0.0
    %294 = vmatprep.subr.mxu0 0.0
    %295 = vmatpush1.xpose.msra.mxu0 0.0
    %296 = vmatprep.subr.mxu0 0.0
    %297 = vmatpush1.xpose.msra.mxu0 0.0
    %298 = vmatprep.subr.mxu0 0.0
    %299 = vmatpush1.xpose.msra.mxu0 0.0
    %300 = vmatprep.subr.mxu0 0.0
    %301 = vmatpush1.xpose.msra.mxu0 0.0
    %302 = vmatprep.subr.mxu0 0.0
    %303 = vmatpush1.xpose.msra.mxu0 0.0
    %304 = vmatprep.subr.mxu0 0.0
    %305 = vmatpush1.xpose.msra.mxu0 0.0
    %306 = vmatprep.subr.mxu0 0.0
    %307 = vmatpush1.xpose.msra.mxu0 0.0
    %308 = vmatprep.subr.mxu0 0.0
    %309 = vmatpush1.xpose.msra.mxu0 0.0
    %310 = vmatprep.subr.mxu0 0.0
    %311 = vmatpush1.xpose.msra.mxu0 0.0
    %312 = vmatprep.subr.mxu0 0.0
    %313 = vmatpush1.xpose.msra.mxu0 0.0
    %314 = vmatprep.mubr.f32.mxu0 0.0
    %315 = vmatmul.mubr.f32.gmra.mrb[0].mxu0 %v246
    %v316 = vpop.f32.mrb[0].mxu0
    %v317 = vadd.f32 0.0, %v316
    %v318 = vpop.f32.mrb[0].mxu0
    %319 = vdwg.mxu0
    %321 = vrot.lane.b32.xlu0 %v239, 96
    %v322 = vpop.permute.xlu0 %321
    %v323 = vsel %vm245, %v239, 0
    %v325 = vsel %vm245, %v322, 0
    %327 = vmatprep.subr.mxu0 0.0
    %328 = vmatpush1.xpose.msra.mxu0 %v325
    %329 = vmatprep.subr.mxu0 0.0
    %330 = vmatpush1.xpose.msra.mxu0 0.0
    %331 = vmatprep.subr.mxu0 0.0
    %332 = vmatpush1.xpose.msra.mxu0 0.0
    %333 = vmatprep.subr.mxu0 0.0
    %334 = vmatpush1.xpose.msra.mxu0 0.0
    %335 = vmatprep.subr.mxu0 0.0
    %336 = vmatpush1.xpose.msra.mxu0 0.0
    %337 = vmatprep.subr.mxu0 0.0
    %338 = vmatpush1.xpose.msra.mxu0 0.0
    %339 = vmatprep.subr.mxu0 0.0
    %340 = vmatpush1.xpose.msra.mxu0 0.0
    %341 = vmatprep.subr.mxu0 0.0
    %342 = vmatpush1.xpose.msra.mxu0 0.0
    %343 = vmatprep.subr.mxu0 0.0
    %344 = vmatpush1.xpose.msra.mxu0 0.0
    %345 = vmatprep.subr.mxu0 0.0
    %346 = vmatpush1.xpose.msra.mxu0 0.0
    %347 = vmatprep.subr.mxu0 0.0
    %348 = vmatpush1.xpose.msra.mxu0 0.0
    %349 = vmatprep.subr.mxu0 0.0
    %350 = vmatpush1.xpose.msra.mxu0 0.0
    %351 = vmatprep.subr.mxu0 0.0
    %352 = vmatpush1.xpose.msra.mxu0 0.0
    %353 = vmatprep.subr.mxu0 0.0
    %354 = vmatpush1.xpose.msra.mxu0 0.0
    %355 = vmatprep.subr.mxu0 0.0
    %356 = vmatpush1.xpose.msra.mxu0 0.0
    %357 = vmatprep.subr.mxu0 0.0
    %358 = vmatpush1.xpose.msra.mxu0 0.0
    %359 = vmatprep.subr.mxu0 0.0
    %360 = vmatpush1.xpose.msra.mxu0 0.0
    %361 = vmatprep.subr.mxu0 0.0
    %362 = vmatpush1.xpose.msra.mxu0 0.0
    %363 = vmatprep.subr.mxu0 0.0
    %364 = vmatpush1.xpose.msra.mxu0 0.0
    %365 = vmatprep.subr.mxu0 0.0
    %366 = vmatpush1.xpose.msra.mxu0 0.0
    %367 = vmatprep.subr.mxu0 0.0
    %368 = vmatpush1.xpose.msra.mxu0 0.0
    %369 = vmatprep.subr.mxu0 0.0
    %370 = vmatpush1.xpose.msra.mxu0 0.0
    %371 = vmatprep.subr.mxu0 0.0
    %372 = vmatpush1.xpose.msra.mxu0 0.0
    %373 = vmatprep.subr.mxu0 0.0
    %374 = vmatpush1.xpose.msra.mxu0 0.0
    %375 = vmatprep.subr.mxu0 0.0
    %376 = vmatpush1.xpose.msra.mxu0 0.0
    %377 = vmatprep.subr.mxu0 0.0
    %378 = vmatpush1.xpose.msra.mxu0 0.0
    %379 = vmatprep.subr.mxu0 0.0
    %380 = vmatpush1.xpose.msra.mxu0 0.0
    %381 = vmatprep.subr.mxu0 0.0
    %382 = vmatpush1.xpose.msra.mxu0 0.0
    %383 = vmatprep.subr.mxu0 0.0
    %384 = vmatpush1.xpose.msra.mxu0 0.0
    %385 = vmatprep.subr.mxu0 0.0
    %386 = vmatpush1.xpose.msra.mxu0 0.0
    %387 = vmatprep.subr.mxu0 0.0
    %388 = vmatpush1.xpose.msra.mxu0 0.0
    %389 = vmatprep.subr.mxu0 0.0
    %390 = vmatpush1.xpose.msra.mxu0 0.0
    %391 = vmatprep.mubr.f32.mxu0 0.0
    %392 = vmatmul.mubr.f32.gmra.mrb[0].mxu0 %v323
    %v393 = vpop.f32.mrb[0].mxu0
    %v394 = vadd.f32 0.0, %v393
    %v395 = vpop.f32.mrb[0].mxu0
    %396 = vdwg.mxu0
    %v397 = vmul.f32 %v317, 0.35355338
    %v398 = vmul.f32 %v394, 0.35355338
    %v399 = vlaneseq
    %v400 = vshrl.u32 %v399, 7
    %v401 = vsub.s32 0, %v400
    %v402 = vrot.slane %v82, %v401
    %v403 = vlaneseq
    %v404 = vshrl.u32 %v403, 7
    %v405 = vsub.s32 0, %v404
    %v406 = vrot.slane %v89, %v405
    %v409 = vadd.f32 %v397, %v402
    %v410 = vadd.f32 %v398, %v406
    %v411 = vsel %vm245, %v409, -inf
    %412 = vmax.xlane.f32.xlu0 %v411
    %v413 = vpop.xlane.xlu0 %412
    %v414 = vsel %vm245, %v410, -inf
    %415 = vmax.xlane.f32.xlu0 %v414
    %v416 = vpop.xlane.xlu0 %415
    %v417 = vsub.f32 %v409, %v413
    %v418 = vsub.f32 %v410, %v416
    %v419 = vmul.f32 %v417, 1.442695
    %v420 = vpow.pop %v419
    %v421 = vmul.f32 %v418, 1.442695
    %v422 = vpow.pop %v421
    %v423 = vsel %vm245, %v420, 0.0
    %424 = vadd.xlane.f32.xlu0 %v423
    %v425 = vpop.xlane.xlu0 %424
    %v426 = vsel %vm245, %v422, 0.0
    %427 = vadd.xlane.f32.xlu0 %v426
    %v428 = vpop.xlane.xlu0 %427
    %v429 = vrcp.pop %v425
    %v430 = vrcp.pop %v428
    %v431 = vmul.f32 %v420, %v429
    %v432 = vmul.f32 %v422, %v430
    %433 = vrot.lane.b32.xlu0 %v234, 64
    %v434 = vpop.permute.xlu0 %433
    %v437 = vsel %vm245, %v431, 0
    %439 = vmatprep.subr.mxu0 0.0
    %440 = vmatpush1.msra.mxu0 %v434
    %441 = vmatprep.subr.mxu0 0.0
    %442 = vmatpush1.msra.mxu0 0.0
    %443 = vmatprep.subr.mxu0 0.0
    %444 = vmatpush1.msra.mxu0 0.0
    %445 = vmatprep.subr.mxu0 0.0
    %446 = vmatpush1.msra.mxu0 0.0
    %447 = vmatprep.subr.mxu0 0.0
    %448 = vmatpush1.msra.mxu0 0.0
    %449 = vmatprep.subr.mxu0 0.0
    %450 = vmatpush1.msra.mxu0 0.0
    %451 = vmatprep.subr.mxu0 0.0
    %452 = vmatpush1.msra.mxu0 0.0
    %453 = vmatprep.subr.mxu0 0.0
    %454 = vmatpush1.msra.mxu0 0.0
    %455 = vmatprep.subr.mxu0 0.0
    %456 = vmatpush1.msra.mxu0 0.0
    %457 = vmatprep.subr.mxu0 0.0
    %458 = vmatpush1.msra.mxu0 0.0
    %459 = vmatprep.subr.mxu0 0.0
    %460 = vmatpush1.msra.mxu0 0.0
    %461 = vmatprep.subr.mxu0 0.0
    %462 = vmatpush1.msra.mxu0 0.0
    %463 = vmatprep.subr.mxu0 0.0
    %464 = vmatpush1.msra.mxu0 0.0
    %465 = vmatprep.subr.mxu0 0.0
    %466 = vmatpush1.msra.mxu0 0.0
    %467 = vmatprep.subr.mxu0 0.0
    %468 = vmatpush1.msra.mxu0 0.0
    %469 = vmatprep.subr.mxu0 0.0
    %470 = vmatpush1.msra.mxu0 0.0
    %471 = vmatprep.subr.mxu0 0.0
    %472 = vmatpush1.msra.mxu0 0.0
    %473 = vmatprep.subr.mxu0 0.0
    %474 = vmatpush1.msra.mxu0 0.0
    %475 = vmatprep.subr.mxu0 0.0
    %476 = vmatpush1.msra.mxu0 0.0
    %477 = vmatprep.subr.mxu0 0.0
    %478 = vmatpush1.msra.mxu0 0.0
    %479 = vmatprep.subr.mxu0 0.0
    %480 = vmatpush1.msra.mxu0 0.0
    %481 = vmatprep.subr.mxu0 0.0
    %482 = vmatpush1.msra.mxu0 0.0
    %483 = vmatprep.subr.mxu0 0.0
    %484 = vmatpush1.msra.mxu0 0.0
    %485 = vmatprep.subr.mxu0 0.0
    %486 = vmatpush1.msra.mxu0 0.0
    %487 = vmatprep.subr.mxu0 0.0
    %488 = vmatpush1.msra.mxu0 0.0
    %489 = vmatprep.subr.mxu0 0.0
    %490 = vmatpush1.msra.mxu0 0.0
    %491 = vmatprep.subr.mxu0 0.0
    %492 = vmatpush1.msra.mxu0 0.0
    %493 = vmatprep.subr.mxu0 0.0
    %494 = vmatpush1.msra.mxu0 0.0
    %495 = vmatprep.subr.mxu0 0.0
    %496 = vmatpush1.msra.mxu0 0.0
    %497 = vmatprep.subr.mxu0 0.0
    %498 = vmatpush1.msra.mxu0 0.0
    %499 = vmatprep.subr.mxu0 0.0
    %500 = vmatpush1.msra.mxu0 0.0
    %501 = vmatprep.subr.mxu0 0.0
    %502 = vmatpush1.msra.mxu0 0.0
    %503 = vmatprep.mubr.f32.mxu0 0.0
    %504 = vmatmul.mubr.f32.gmra.mrb[0].mxu0 %v437
    %v505 = vpop.f32.mrb[0].mxu0
    %v506 = vadd.f32 0.0, %v505
    %v507 = vpop.f32.mrb[0].mxu0
    %508 = vdwg.mxu0
    %509 = vrot.lane.b32.xlu0 %v239, 64
    %v510 = vpop.permute.xlu0 %509
    %v513 = vsel %vm245, %v432, 0
    %515 = vmatprep.subr.mxu0 0.0
    %516 = vmatpush1.msra.mxu0 %v510
    %517 = vmatprep.subr.mxu0 0.0
    %518 = vmatpush1.msra.mxu0 0.0
    %519 = vmatprep.subr.mxu0 0.0
    %520 = vmatpush1.msra.mxu0 0.0
    %521 = vmatprep.subr.mxu0 0.0
    %522 = vmatpush1.msra.mxu0 0.0
    %523 = vmatprep.subr.mxu0 0.0
    %524 = vmatpush1.msra.mxu0 0.0
    %525 = vmatprep.subr.mxu0 0.0
    %526 = vmatpush1.msra.mxu0 0.0
    %527 = vmatprep.subr.mxu0 0.0
    %528 = vmatpush1.msra.mxu0 0.0
    %529 = vmatprep.subr.mxu0 0.0
    %530 = vmatpush1.msra.mxu0 0.0
    %531 = vmatprep.subr.mxu0 0.0
    %532 = vmatpush1.msra.mxu0 0.0
    %533 = vmatprep.subr.mxu0 0.0
    %534 = vmatpush1.msra.mxu0 0.0
    %535 = vmatprep.subr.mxu0 0.0
    %536 = vmatpush1.msra.mxu0 0.0
    %537 = vmatprep.subr.mxu0 0.0
    %538 = vmatpush1.msra.mxu0 0.0
    %539 = vmatprep.subr.mxu0 0.0
    %540 = vmatpush1.msra.mxu0 0.0
    %541 = vmatprep.subr.mxu0 0.0
    %542 = vmatpush1.msra.mxu0 0.0
    %543 = vmatprep.subr.mxu0 0.0
    %544 = vmatpush1.msra.mxu0 0.0
    %545 = vmatprep.subr.mxu0 0.0
    %546 = vmatpush1.msra.mxu0 0.0
    %547 = vmatprep.subr.mxu0 0.0
    %548 = vmatpush1.msra.mxu0 0.0
    %549 = vmatprep.subr.mxu0 0.0
    %550 = vmatpush1.msra.mxu0 0.0
    %551 = vmatprep.subr.mxu0 0.0
    %552 = vmatpush1.msra.mxu0 0.0
    %553 = vmatprep.subr.mxu0 0.0
    %554 = vmatpush1.msra.mxu0 0.0
    %555 = vmatprep.subr.mxu0 0.0
    %556 = vmatpush1.msra.mxu0 0.0
    %557 = vmatprep.subr.mxu0 0.0
    %558 = vmatpush1.msra.mxu0 0.0
    %559 = vmatprep.subr.mxu0 0.0
    %560 = vmatpush1.msra.mxu0 0.0
    %561 = vmatprep.subr.mxu0 0.0
    %562 = vmatpush1.msra.mxu0 0.0
    %563 = vmatprep.subr.mxu0 0.0
    %564 = vmatpush1.msra.mxu0 0.0
    %565 = vmatprep.subr.mxu0 0.0
    %566 = vmatpush1.msra.mxu0 0.0
    %567 = vmatprep.subr.mxu0 0.0
    %568 = vmatpush1.msra.mxu0 0.0
    %569 = vmatprep.subr.mxu0 0.0
    %570 = vmatpush1.msra.mxu0 0.0
    %571 = vmatprep.subr.mxu0 0.0
    %572 = vmatpush1.msra.mxu0 0.0
    %573 = vmatprep.subr.mxu0 0.0
    %574 = vmatpush1.msra.mxu0 0.0
    %575 = vmatprep.subr.mxu0 0.0
    %576 = vmatpush1.msra.mxu0 0.0
    %577 = vmatprep.subr.mxu0 0.0
    %578 = vmatpush1.msra.mxu0 0.0
    %579 = vmatprep.mubr.f32.mxu0 0.0
    %580 = vmatmul.mubr.f32.gmra.mrb[0].mxu0 %v513
    %v581 = vpop.f32.mrb[0].mxu0
    %v582 = vadd.f32 0.0, %v581
    %v583 = vpop.f32.mrb[0].mxu0
    %584 = vdwg.mxu0
    %585 = vrot.lane.b32.xlu0 %v234, 120
    %v586 = vpop.permute.xlu0 %585
    %587 = vrot.lane.b32.xlu0 %v234, 88
    %v588 = vpop.permute.xlu0 %587
    %v589 = vsel %vm245, %v586, 0
    %v591 = vsel %vm245, %v588, 0
    %593 = vmatprep.subr.mxu0 0.0
    %594 = vmatpush1.xpose.msra.mxu0 %v591
    %595 = vmatprep.subr.mxu0 0.0
    %596 = vmatpush1.xpose.msra.mxu0 0.0
    %597 = vmatprep.subr.mxu0 0.0
    %598 = vmatpush1.xpose.msra.mxu0 0.0
    %599 = vmatprep.subr.mxu0 0.0
    %600 = vmatpush1.xpose.msra.mxu0 0.0
    %601 = vmatprep.subr.mxu0 0.0
    %602 = vmatpush1.xpose.msra.mxu0 0.0
    %603 = vmatprep.subr.mxu0 0.0
    %604 = vmatpush1.xpose.msra.mxu0 0.0
    %605 = vmatprep.subr.mxu0 0.0
    %606 = vmatpush1.xpose.msra.mxu0 0.0
    %607 = vmatprep.subr.mxu0 0.0
    %608 = vmatpush1.xpose.msra.mxu0 0.0
    %609 = vmatprep.subr.mxu0 0.0
    %610 = vmatpush1.xpose.msra.mxu0 0.0
    %611 = vmatprep.subr.mxu0 0.0
    %612 = vmatpush1.xpose.msra.mxu0 0.0
    %613 = vmatprep.subr.mxu0 0.0
    %614 = vmatpush1.xpose.msra.mxu0 0.0
    %615 = vmatprep.subr.mxu0 0.0
    %616 = vmatpush1.xpose.msra.mxu0 0.0
    %617 = vmatprep.subr.mxu0 0.0
    %618 = vmatpush1.xpose.msra.mxu0 0.0
    %619 = vmatprep.subr.mxu0 0.0
    %620 = vmatpush1.xpose.msra.mxu0 0.0
    %621 = vmatprep.subr.mxu0 0.0
    %622 = vmatpush1.xpose.msra.mxu0 0.0
    %623 = vmatprep.subr.mxu0 0.0
    %624 = vmatpush1.xpose.msra.mxu0 0.0
    %625 = vmatprep.subr.mxu0 0.0
    %626 = vmatpush1.xpose.msra.mxu0 0.0
    %627 = vmatprep.subr.mxu0 0.0
    %628 = vmatpush1.xpose.msra.mxu0 0.0
    %629 = vmatprep.subr.mxu0 0.0
    %630 = vmatpush1.xpose.msra.mxu0 0.0
    %631 = vmatprep.subr.mxu0 0.0
    %632 = vmatpush1.xpose.msra.mxu0 0.0
    %633 = vmatprep.subr.mxu0 0.0
    %634 = vmatpush1.xpose.msra.mxu0 0.0
    %635 = vmatprep.subr.mxu0 0.0
    %636 = vmatpush1.xpose.msra.mxu0 0.0
    %637 = vmatprep.subr.mxu0 0.0
    %638 = vmatpush1.xpose.msra.mxu0 0.0
    %639 = vmatprep.subr.mxu0 0.0
    %640 = vmatpush1.xpose.msra.mxu0 0.0
    %641 = vmatprep.subr.mxu0 0.0
    %642 = vmatpush1.xpose.msra.mxu0 0.0
    %643 = vmatprep.subr.mxu0 0.0
    %644 = vmatpush1.xpose.msra.mxu0 0.0
    %645 = vmatprep.subr.mxu0 0.0
    %646 = vmatpush1.xpose.msra.mxu0 0.0
    %647 = vmatprep.subr.mxu0 0.0
    %648 = vmatpush1.xpose.msra.mxu0 0.0
    %649 = vmatprep.subr.mxu0 0.0
    %650 = vmatpush1.xpose.msra.mxu0 0.0
    %651 = vmatprep.subr.mxu0 0.0
    %652 = vmatpush1.xpose.msra.mxu0 0.0
    %653 = vmatprep.subr.mxu0 0.0
    %654 = vmatpush1.xpose.msra.mxu0 0.0
    %655 = vmatprep.subr.mxu0 0.0
    %656 = vmatpush1.xpose.msra.mxu0 0.0
    %657 = vmatprep.mubr.f32.mxu0 0.0
    %658 = vmatmul.mubr.f32.gmra.mrb[0].mxu0 %v589
    %v659 = vpop.f32.mrb[0].mxu0
    %v660 = vadd.f32 0.0, %v659
    %v661 = vpop.f32.mrb[0].mxu0
    %662 = vdwg.mxu0
    %663 = vrot.lane.b32.xlu0 %v239, 120
    %v664 = vpop.permute.xlu0 %663
    %665 = vrot.lane.b32.xlu0 %v239, 88
    %v666 = vpop.permute.xlu0 %665
    %v667 = vsel %vm245, %v664, 0
    %v669 = vsel %vm245, %v666, 0
    %671 = vmatprep.subr.mxu0 0.0
    %672 = vmatpush1.xpose.msra.mxu0 %v669
    %673 = vmatprep.subr.mxu0 0.0
    %674 = vmatpush1.xpose.msra.mxu0 0.0
    %675 = vmatprep.subr.mxu0 0.0
    %676 = vmatpush1.xpose.msra.mxu0 0.0
    %677 = vmatprep.subr.mxu0 0.0
    %678 = vmatpush1.xpose.msra.mxu0 0.0
    %679 = vmatprep.subr.mxu0 0.0
    %680 = vmatpush1.xpose.msra.mxu0 0.0
    %681 = vmatprep.subr.mxu0 0.0
    %682 = vmatpush1.xpose.msra.mxu0 0.0
    %683 = vmatprep.subr.mxu0 0.0
    %684 = vmatpush1.xpose.msra.mxu0 0.0
    %685 = vmatprep.subr.mxu0 0.0
    %686 = vmatpush1.xpose.msra.mxu0 0.0
    %687 = vmatprep.subr.mxu0 0.0
    %688 = vmatpush1.xpose.msra.mxu0 0.0
    %689 = vmatprep.subr.mxu0 0.0
    %690 = vmatpush1.xpose.msra.mxu0 0.0
    %691 = vmatprep.subr.mxu0 0.0
    %692 = vmatpush1.xpose.msra.mxu0 0.0
    %693 = vmatprep.subr.mxu0 0.0
    %694 = vmatpush1.xpose.msra.mxu0 0.0
    %695 = vmatprep.subr.mxu0 0.0
    %696 = vmatpush1.xpose.msra.mxu0 0.0
    %697 = vmatprep.subr.mxu0 0.0
    %698 = vmatpush1.xpose.msra.mxu0 0.0
    %699 = vmatprep.subr.mxu0 0.0
    %700 = vmatpush1.xpose.msra.mxu0 0.0
    %701 = vmatprep.subr.mxu0 0.0
    %702 = vmatpush1.xpose.msra.mxu0 0.0
    %703 = vmatprep.subr.mxu0 0.0
    %704 = vmatpush1.xpose.msra.mxu0 0.0
    %705 = vmatprep.subr.mxu0 0.0
    %706 = vmatpush1.xpose.msra.mxu0 0.0
    %707 = vmatprep.subr.mxu0 0.0
    %708 = vmatpush1.xpose.msra.mxu0 0.0
    %709 = vmatprep.subr.mxu0 0.0
    %710 = vmatpush1.xpose.msra.mxu0 0.0
    %711 = vmatprep.subr.mxu0 0.0
    %712 = vmatpush1.xpose.msra.mxu0 0.0
    %713 = vmatprep.subr.mxu0 0.0
    %714 = vmatpush1.xpose.msra.mxu0 0.0
    %715 = vmatprep.subr.mxu0 0.0
    %716 = vmatpush1.xpose.msra.mxu0 0.0
    %717 = vmatprep.subr.mxu0 0.0
    %718 = vmatpush1.xpose.msra.mxu0 0.0
    %719 = vmatprep.subr.mxu0 0.0
    %720 = vmatpush1.xpose.msra.mxu0 0.0
    %721 = vmatprep.subr.mxu0 0.0
    %722 = vmatpush1.xpose.msra.mxu0 0.0
    %723 = vmatprep.subr.mxu0 0.0
    %724 = vmatpush1.xpose.msra.mxu0 0.0
    %725 = vmatprep.subr.mxu0 0.0
    %726 = vmatpush1.xpose.msra.mxu0 0.0
    %727 = vmatprep.subr.mxu0 0.0
    %728 = vmatpush1.xpose.msra.mxu0 0.0
    %729 = vmatprep.subr.mxu0 0.0
    %730 = vmatpush1.xpose.msra.mxu0 0.0
    %731 = vmatprep.subr.mxu0 0.0
    %732 = vmatpush1.xpose.msra.mxu0 0.0
    %733 = vmatprep.subr.mxu0 0.0
    %734 = vmatpush1.xpose.msra.mxu0 0.0
    %735 = vmatprep.mubr.f32.mxu0 0.0
    %736 = vmatmul.mubr.f32.gmra.mrb[0].mxu0 %v667
    %v737 = vpop.f32.mrb[0].mxu0
    %v738 = vadd.f32 0.0, %v737
    %v739 = vpop.f32.mrb[0].mxu0
    %740 = vdwg.mxu0
    %v741 = vmul.f32 %v660, 0.35355338
    %v742 = vmul.f32 %v738, 0.35355338
    %v743 = vadd.f32 %v741, %v402
    %v744 = vadd.f32 %v742, %v406
    %v745 = vsel %vm245, %v743, -inf
    %746 = vmax.xlane.f32.xlu0 %v745
    %v747 = vpop.xlane.xlu0 %746
    %v748 = vsel %vm245, %v744, -inf
    %749 = vmax.xlane.f32.xlu0 %v748
    %v750 = vpop.xlane.xlu0 %749
    %v751 = vsub.f32 %v743, %v747
    %v752 = vsub.f32 %v744, %v750
    %v753 = vmul.f32 %v751, 1.442695
    %v754 = vpow.pop %v753
    %v755 = vmul.f32 %v752, 1.442695
    %v756 = vpow.pop %v755
    %v757 = vsel %vm245, %v754, 0.0
    %758 = vadd.xlane.f32.xlu0 %v757
    %v759 = vpop.xlane.xlu0 %758
    %v760 = vsel %vm245, %v756, 0.0
    %761 = vadd.xlane.f32.xlu0 %v760
    %v762 = vpop.xlane.xlu0 %761
    %v763 = vrcp.pop %v759
    %v764 = vrcp.pop %v762
    %v765 = vmul.f32 %v754, %v763
    %v766 = vmul.f32 %v756, %v764
    %767 = vrot.lane.b32.xlu0 %v234, 56
    %v768 = vpop.permute.xlu0 %767
    %v771 = vsel %vm245, %v765, 0
    %773 = vmatprep.subr.mxu0 0.0
    %774 = vmatpush1.msra.mxu0 %v768
    %775 = vmatprep.subr.mxu0 0.0
    %776 = vmatpush1.msra.mxu0 0.0
    %777 = vmatprep.subr.mxu0 0.0
    %778 = vmatpush1.msra.mxu0 0.0
    %779 = vmatprep.subr.mxu0 0.0
    %780 = vmatpush1.msra.mxu0 0.0
    %781 = vmatprep.subr.mxu0 0.0
    %782 = vmatpush1.msra.mxu0 0.0
    %783 = vmatprep.subr.mxu0 0.0
    %784 = vmatpush1.msra.mxu0 0.0
    %785 = vmatprep.subr.mxu0 0.0
    %786 = vmatpush1.msra.mxu0 0.0
    %787 = vmatprep.subr.mxu0 0.0
    %788 = vmatpush1.msra.mxu0 0.0
    %789 = vmatprep.subr.mxu0 0.0
    %790 = vmatpush1.msra.mxu0 0.0
    %791 = vmatprep.subr.mxu0 0.0
    %792 = vmatpush1.msra.mxu0 0.0
    %793 = vmatprep.subr.mxu0 0.0
    %794 = vmatpush1.msra.mxu0 0.0
    %795 = vmatprep.subr.mxu0 0.0
    %796 = vmatpush1.msra.mxu0 0.0
    %797 = vmatprep.subr.mxu0 0.0
    %798 = vmatpush1.msra.mxu0 0.0
    %799 = vmatprep.subr.mxu0 0.0
    %800 = vmatpush1.msra.mxu0 0.0
    %801 = vmatprep.subr.mxu0 0.0
    %802 = vmatpush1.msra.mxu0 0.0
    %803 = vmatprep.subr.mxu0 0.0
    %804 = vmatpush1.msra.mxu0 0.0
    %805 = vmatprep.subr.mxu0 0.0
    %806 = vmatpush1.msra.mxu0 0.0
    %807 = vmatprep.subr.mxu0 0.0
    %808 = vmatpush1.msra.mxu0 0.0
    %809 = vmatprep.subr.mxu0 0.0
    %810 = vmatpush1.msra.mxu0 0.0
    %811 = vmatprep.subr.mxu0 0.0
    %812 = vmatpush1.msra.mxu0 0.0
    %813 = vmatprep.subr.mxu0 0.0
    %814 = vmatpush1.msra.mxu0 0.0
    %815 = vmatprep.subr.mxu0 0.0
    %816 = vmatpush1.msra.mxu0 0.0
    %817 = vmatprep.subr.mxu0 0.0
    %818 = vmatpush1.msra.mxu0 0.0
    %819 = vmatprep.subr.mxu0 0.0
    %820 = vmatpush1.msra.mxu0 0.0
    %821 = vmatprep.subr.mxu0 0.0
    %822 = vmatpush1.msra.mxu0 0.0
    %823 = vmatprep.subr.mxu0 0.0
    %824 = vmatpush1.msra.mxu0 0.0
    %825 = vmatprep.subr.mxu0 0.0
    %826 = vmatpush1.msra.mxu0 0.0
    %827 = vmatprep.subr.mxu0 0.0
    %828 = vmatpush1.msra.mxu0 0.0
    %829 = vmatprep.subr.mxu0 0.0
    %830 = vmatpush1.msra.mxu0 0.0
    %831 = vmatprep.subr.mxu0 0.0
    %832 = vmatpush1.msra.mxu0 0.0
    %833 = vmatprep.subr.mxu0 0.0
    %834 = vmatpush1.msra.mxu0 0.0
    %835 = vmatprep.subr.mxu0 0.0
    %836 = vmatpush1.msra.mxu0 0.0
    %837 = vmatprep.mubr.f32.mxu0 0.0
    %838 = vmatmul.mubr.f32.gmra.mrb[0].mxu0 %v771
    %v839 = vpop.f32.mrb[0].mxu0
    %v840 = vadd.f32 0.0, %v839
    %v841 = vpop.f32.mrb[0].mxu0
    %842 = vdwg.mxu0
    %843 = vrot.lane.b32.xlu0 %v239, 56
    %v844 = vpop.permute.xlu0 %843
    %v847 = vsel %vm245, %v766, 0
    %849 = vmatprep.subr.mxu0 0.0
    %850 = vmatpush1.msra.mxu0 %v844
    %851 = vmatprep.subr.mxu0 0.0
    %852 = vmatpush1.msra.mxu0 0.0
    %853 = vmatprep.subr.mxu0 0.0
    %854 = vmatpush1.msra.mxu0 0.0
    %855 = vmatprep.subr.mxu0 0.0
    %856 = vmatpush1.msra.mxu0 0.0
    %857 = vmatprep.subr.mxu0 0.0
    %858 = vmatpush1.msra.mxu0 0.0
    %859 = vmatprep.subr.mxu0 0.0
    %860 = vmatpush1.msra.mxu0 0.0
    %861 = vmatprep.subr.mxu0 0.0
    %862 = vmatpush1.msra.mxu0 0.0
    %863 = vmatprep.subr.mxu0 0.0
    %864 = vmatpush1.msra.mxu0 0.0
    %865 = vmatprep.subr.mxu0 0.0
    %866 = vmatpush1.msra.mxu0 0.0
    %867 = vmatprep.subr.mxu0 0.0
    %868 = vmatpush1.msra.mxu0 0.0
    %869 = vmatprep.subr.mxu0 0.0
    %870 = vmatpush1.msra.mxu0 0.0
    %871 = vmatprep.subr.mxu0 0.0
    %872 = vmatpush1.msra.mxu0 0.0
    %873 = vmatprep.subr.mxu0 0.0
    %874 = vmatpush1.msra.mxu0 0.0
    %875 = vmatprep.subr.mxu0 0.0
    %876 = vmatpush1.msra.mxu0 0.0
    %877 = vmatprep.subr.mxu0 0.0
    %878 = vmatpush1.msra.mxu0 0.0
    %879 = vmatprep.subr.mxu0 0.0
    %880 = vmatpush1.msra.mxu0 0.0
    %881 = vmatprep.subr.mxu0 0.0
    %882 = vmatpush1.msra.mxu0 0.0
    %883 = vmatprep.subr.mxu0 0.0
    %884 = vmatpush1.msra.mxu0 0.0
    %885 = vmatprep.subr.mxu0 0.0
    %886 = vmatpush1.msra.mxu0 0.0
    %887 = vmatprep.subr.mxu0 0.0
    %888 = vmatpush1.msra.mxu0 0.0
    %889 = vmatprep.subr.mxu0 0.0
    %890 = vmatpush1.msra.mxu0 0.0
    %891 = vmatprep.subr.mxu0 0.0
    %892 = vmatpush1.msra.mxu0 0.0
    %893 = vmatprep.subr.mxu0 0.0
    %894 = vmatpush1.msra.mxu0 0.0
    %895 = vmatprep.subr.mxu0 0.0
    %896 = vmatpush1.msra.mxu0 0.0
    %897 = vmatprep.subr.mxu0 0.0
    %898 = vmatpush1.msra.mxu0 0.0
    %899 = vmatprep.subr.mxu0 0.0
    %900 = vmatpush1.msra.mxu0 0.0
    %901 = vmatprep.subr.mxu0 0.0
    %902 = vmatpush1.msra.mxu0 0.0
    %903 = vmatprep.subr.mxu0 0.0
    %904 = vmatpush1.msra.mxu0 0.0
    %905 = vmatprep.subr.mxu0 0.0
    %906 = vmatpush1.msra.mxu0 0.0
    %907 = vmatprep.subr.mxu0 0.0
    %908 = vmatpush1.msra.mxu0 0.0
    %909 = vmatprep.subr.mxu0 0.0
    %910 = vmatpush1.msra.mxu0 0.0
    %911 = vmatprep.subr.mxu0 0.0
    %912 = vmatpush1.msra.mxu0 0.0
    %913 = vmatprep.mubr.f32.mxu0 0.0
    %914 = vmatmul.mubr.f32.gmra.mrb[0].mxu0 %v847
    %v915 = vpop.f32.mrb[0].mxu0
    %v916 = vadd.f32 0.0, %v915
    %v917 = vpop.f32.mrb[0].mxu0
    %918 = vdwg.mxu0
    %919 = vrot.lane.b32.xlu0 %v234, 112
    %v920 = vpop.permute.xlu0 %919
    %921 = vrot.lane.b32.xlu0 %v234, 80
    %v922 = vpop.permute.xlu0 %921
    %v923 = vsel %vm245, %v920, 0
    %v925 = vsel %vm245, %v922, 0
    %927 = vmatprep.subr.mxu0 0.0
    %928 = vmatpush1.xpose.msra.mxu0 %v925
    %929 = vmatprep.subr.mxu0 0.0
    %930 = vmatpush1.xpose.msra.mxu0 0.0
    %931 = vmatprep.subr.mxu0 0.0
    %932 = vmatpush1.xpose.msra.mxu0 0.0
    %933 = vmatprep.subr.mxu0 0.0
    %934 = vmatpush1.xpose.msra.mxu0 0.0
    %935 = vmatprep.subr.mxu0 0.0
    %936 = vmatpush1.xpose.msra.mxu0 0.0
    %937 = vmatprep.subr.mxu0 0.0
    %938 = vmatpush1.xpose.msra.mxu0 0.0
    %939 = vmatprep.subr.mxu0 0.0
    %940 = vmatpush1.xpose.msra.mxu0 0.0
    %941 = vmatprep.subr.mxu0 0.0
    %942 = vmatpush1.xpose.msra.mxu0 0.0
    %943 = vmatprep.subr.mxu0 0.0
    %944 = vmatpush1.xpose.msra.mxu0 0.0
    %945 = vmatprep.subr.mxu0 0.0
    %946 = vmatpush1.xpose.msra.mxu0 0.0
    %947 = vmatprep.subr.mxu0 0.0
    %948 = vmatpush1.xpose.msra.mxu0 0.0
    %949 = vmatprep.subr.mxu0 0.0
    %950 = vmatpush1.xpose.msra.mxu0 0.0
    %951 = vmatprep.subr.mxu0 0.0
    %952 = vmatpush1.xpose.msra.mxu0 0.0
    %953 = vmatprep.subr.mxu0 0.0
    %954 = vmatpush1.xpose.msra.mxu0 0.0
    %955 = vmatprep.subr.mxu0 0.0
    %956 = vmatpush1.xpose.msra.mxu0 0.0
    %957 = vmatprep.subr.mxu0 0.0
    %958 = vmatpush1.xpose.msra.mxu0 0.0
    %959 = vmatprep.subr.mxu0 0.0
    %960 = vmatpush1.xpose.msra.mxu0 0.0
    %961 = vmatprep.subr.mxu0 0.0
    %962 = vmatpush1.xpose.msra.mxu0 0.0
    %963 = vmatprep.subr.mxu0 0.0
    %964 = vmatpush1.xpose.msra.mxu0 0.0
    %965 = vmatprep.subr.mxu0 0.0
    %966 = vmatpush1.xpose.msra.mxu0 0.0
    %967 = vmatprep.subr.mxu0 0.0
    %968 = vmatpush1.xpose.msra.mxu0 0.0
    %969 = vmatprep.subr.mxu0 0.0
    %970 = vmatpush1.xpose.msra.mxu0 0.0
    %971 = vmatprep.subr.mxu0 0.0
    %972 = vmatpush1.xpose.msra.mxu0 0.0
    %973 = vmatprep.subr.mxu0 0.0
    %974 = vmatpush1.xpose.msra.mxu0 0.0
    %975 = vmatprep.subr.mxu0 0.0
    %976 = vmatpush1.xpose.msra.mxu0 0.0
    %977 = vmatprep.subr.mxu0 0.0
    %978 = vmatpush1.xpose.msra.mxu0 0.0
    %979 = vmatprep.subr.mxu0 0.0
    %980 = vmatpush1.xpose.msra.mxu0 0.0
    %981 = vmatprep.subr.mxu0 0.0
    %982 = vmatpush1.xpose.msra.mxu0 0.0
    %983 = vmatprep.subr.mxu0 0.0
    %984 = vmatpush1.xpose.msra.mxu0 0.0
    %985 = vmatprep.subr.mxu0 0.0
    %986 = vmatpush1.xpose.msra.mxu0 0.0
    %987 = vmatprep.subr.mxu0 0.0
    %988 = vmatpush1.xpose.msra.mxu0 0.0
    %989 = vmatprep.subr.mxu0 0.0
    %990 = vmatpush1.xpose.msra.mxu0 0.0
    %991 = vmatprep.mubr.f32.mxu0 0.0
    %992 = vmatmul.mubr.f32.gmra.mrb[0].mxu0 %v923
    %v993 = vpop.f32.mrb[0].mxu0
    %v994 = vadd.f32 0.0, %v993
    %v995 = vpop.f32.mrb[0].mxu0
    %996 = vdwg.mxu0
    %997 = vrot.lane.b32.xlu0 %v239, 112
    %v998 = vpop.permute.xlu0 %997
    %999 = vrot.lane.b32.xlu0 %v239, 80
    %v1000 = vpop.permute.xlu0 %999
    %v1001 = vsel %vm245, %v998, 0
    %v1003 = vsel %vm245, %v1000, 0
    %1005 = vmatprep.subr.mxu0 0.0
    %1006 = vmatpush1.xpose.msra.mxu0 %v1003
    %1007 = vmatprep.subr.mxu0 0.0
    %1008 = vmatpush1.xpose.msra.mxu0 0.0
    %1009 = vmatprep.subr.mxu0 0.0
    %1010 = vmatpush1.xpose.msra.mxu0 0.0
    %1011 = vmatprep.subr.mxu0 0.0
    %1012 = vmatpush1.xpose.msra.mxu0 0.0
    %1013 = vmatprep.subr.mxu0 0.0
    %1014 = vmatpush1.xpose.msra.mxu0 0.0
    %1015 = vmatprep.subr.mxu0 0.0
    %1016 = vmatpush1.xpose.msra.mxu0 0.0
    %1017 = vmatprep.subr.mxu0 0.0
    %1018 = vmatpush1.xpose.msra.mxu0 0.0
    %1019 = vmatprep.subr.mxu0 0.0
    %1020 = vmatpush1.xpose.msra.mxu0 0.0
    %1021 = vmatprep.subr.mxu0 0.0
    %1022 = vmatpush1.xpose.msra.mxu0 0.0
    %1023 = vmatprep.subr.mxu0 0.0
    %1024 = vmatpush1.xpose.msra.mxu0 0.0
    %1025 = vmatprep.subr.mxu0 0.0
    %1026 = vmatpush1.xpose.msra.mxu0 0.0
    %1027 = vmatprep.subr.mxu0 0.0
    %1028 = vmatpush1.xpose.msra.mxu0 0.0
    %1029 = vmatprep.subr.mxu0 0.0
    %1030 = vmatpush1.xpose.msra.mxu0 0.0
    %1031 = vmatprep.subr.mxu0 0.0
    %1032 = vmatpush1.xpose.msra.mxu0 0.0
    %1033 = vmatprep.subr.mxu0 0.0
    %1034 = vmatpush1.xpose.msra.mxu0 0.0
    %1035 = vmatprep.subr.mxu0 0.0
    %1036 = vmatpush1.xpose.msra.mxu0 0.0
    %1037 = vmatprep.subr.mxu0 0.0
    %1038 = vmatpush1.xpose.msra.mxu0 0.0
    %1039 = vmatprep.subr.mxu0 0.0
    %1040 = vmatpush1.xpose.msra.mxu0 0.0
    %1041 = vmatprep.subr.mxu0 0.0
    %1042 = vmatpush1.xpose.msra.mxu0 0.0
    %1043 = vmatprep.subr.mxu0 0.0
    %1044 = vmatpush1.xpose.msra.mxu0 0.0
    %1045 = vmatprep.subr.mxu0 0.0
    %1046 = vmatpush1.xpose.msra.mxu0 0.0
    %1047 = vmatprep.subr.mxu0 0.0
    %1048 = vmatpush1.xpose.msra.mxu0 0.0
    %1049 = vmatprep.subr.mxu0 0.0
    %1050 = vmatpush1.xpose.msra.mxu0 0.0
    %1051 = vmatprep.subr.mxu0 0.0
    %1052 = vmatpush1.xpose.msra.mxu0 0.0
    %1053 = vmatprep.subr.mxu0 0.0
    %1054 = vmatpush1.xpose.msra.mxu0 0.0
    %1055 = vmatprep.subr.mxu0 0.0
    %1056 = vmatpush1.xpose.msra.mxu0 0.0
    %1057 = vmatprep.subr.mxu0 0.0
    %1058 = vmatpush1.xpose.msra.mxu0 0.0
    %1059 = vmatprep.subr.mxu0 0.0
    %1060 = vmatpush1.xpose.msra.mxu0 0.0
    %1061 = vmatprep.subr.mxu0 0.0
    %1062 = vmatpush1.xpose.msra.mxu0 0.0
    %1063 = vmatprep.subr.mxu0 0.0
    %1064 = vmatpush1.xpose.msra.mxu0 0.0
    %1065 = vmatprep.subr.mxu0 0.0
    %1066 = vmatpush1.xpose.msra.mxu0 0.0
    %1067 = vmatprep.subr.mxu0 0.0
    %1068 = vmatpush1.xpose.msra.mxu0 0.0
    %1069 = vmatprep.mubr.f32.mxu0 0.0
    %1070 = vmatmul.mubr.f32.gmra.mrb[0].mxu0 %v1001
    %v1071 = vpop.f32.mrb[0].mxu0
    %v1072 = vadd.f32 0.0, %v1071
    %v1073 = vpop.f32.mrb[0].mxu0
    %1074 = vdwg.mxu0
    %v1075 = vmul.f32 %v994, 0.35355338
    %v1076 = vmul.f32 %v1072, 0.35355338
    %v1077 = vadd.f32 %v1075, %v402
    %v1078 = vadd.f32 %v1076, %v406
    %v1079 = vsel %vm245, %v1077, -inf
    %1080 = vmax.xlane.f32.xlu0 %v1079
    %v1081 = vpop.xlane.xlu0 %1080
    %v1082 = vsel %vm245, %v1078, -inf
    %1083 = vmax.xlane.f32.xlu0 %v1082
    %v1084 = vpop.xlane.xlu0 %1083
    %v1085 = vsub.f32 %v1077, %v1081
    %v1086 = vsub.f32 %v1078, %v1084
    %v1087 = vmul.f32 %v1085, 1.442695
    %v1088 = vpow.pop %v1087
    %v1089 = vmul.f32 %v1086, 1.442695
    %v1090 = vpow.pop %v1089
    %v1091 = vsel %vm245, %v1088, 0.0
    %1092 = vadd.xlane.f32.xlu0 %v1091
    %v1093 = vpop.xlane.xlu0 %1092
    %v1094 = vsel %vm245, %v1090, 0.0
    %1095 = vadd.xlane.f32.xlu0 %v1094
    %v1096 = vpop.xlane.xlu0 %1095
    %v1097 = vrcp.pop %v1093
    %v1098 = vrcp.pop %v1096
    %v1099 = vmul.f32 %v1088, %v1097
    %v1100 = vmul.f32 %v1090, %v1098
    %1101 = vrot.lane.b32.xlu0 %v234, 48
    %v1102 = vpop.permute.xlu0 %1101
    %v1105 = vsel %vm245, %v1099, 0
    %1107 = vmatprep.subr.mxu0 0.0
    %1108 = vmatpush1.msra.mxu0 %v1102
    %1109 = vmatprep.subr.mxu0 0.0
    %1110 = vmatpush1.msra.mxu0 0.0
    %1111 = vmatprep.subr.mxu0 0.0
    %1112 = vmatpush1.msra.mxu0 0.0
    %1113 = vmatprep.subr.mxu0 0.0
    %1114 = vmatpush1.msra.mxu0 0.0
    %1115 = vmatprep.subr.mxu0 0.0
    %1116 = vmatpush1.msra.mxu0 0.0
    %1117 = vmatprep.subr.mxu0 0.0
    %1118 = vmatpush1.msra.mxu0 0.0
    %1119 = vmatprep.subr.mxu0 0.0
    %1120 = vmatpush1.msra.mxu0 0.0
    %1121 = vmatprep.subr.mxu0 0.0
    %1122 = vmatpush1.msra.mxu0 0.0
    %1123 = vmatprep.subr.mxu0 0.0
    %1124 = vmatpush1.msra.mxu0 0.0
    %1125 = vmatprep.subr.mxu0 0.0
    %1126 = vmatpush1.msra.mxu0 0.0
    %1127 = vmatprep.subr.mxu0 0.0
    %1128 = vmatpush1.msra.mxu0 0.0
    %1129 = vmatprep.subr.mxu0 0.0
    %1130 = vmatpush1.msra.mxu0 0.0
    %1131 = vmatprep.subr.mxu0 0.0
    %1132 = vmatpush1.msra.mxu0 0.0
    %1133 = vmatprep.subr.mxu0 0.0
    %1134 = vmatpush1.msra.mxu0 0.0
    %1135 = vmatprep.subr.mxu0 0.0
    %1136 = vmatpush1.msra.mxu0 0.0
    %1137 = vmatprep.subr.mxu0 0.0
    %1138 = vmatpush1.msra.mxu0 0.0
    %1139 = vmatprep.subr.mxu0 0.0
    %1140 = vmatpush1.msra.mxu0 0.0
    %1141 = vmatprep.subr.mxu0 0.0
    %1142 = vmatpush1.msra.mxu0 0.0
    %1143 = vmatprep.subr.mxu0 0.0
    %1144 = vmatpush1.msra.mxu0 0.0
    %1145 = vmatprep.subr.mxu0 0.0
    %1146 = vmatpush1.msra.mxu0 0.0
    %1147 = vmatprep.subr.mxu0 0.0
    %1148 = vmatpush1.msra.mxu0 0.0
    %1149 = vmatprep.subr.mxu0 0.0
    %1150 = vmatpush1.msra.mxu0 0.0
    %1151 = vmatprep.subr.mxu0 0.0
    %1152 = vmatpush1.msra.mxu0 0.0
    %1153 = vmatprep.subr.mxu0 0.0
    %1154 = vmatpush1.msra.mxu0 0.0
    %1155 = vmatprep.subr.mxu0 0.0
    %1156 = vmatpush1.msra.mxu0 0.0
    %1157 = vmatprep.subr.mxu0 0.0
    %1158 = vmatpush1.msra.mxu0 0.0
    %1159 = vmatprep.subr.mxu0 0.0
    %1160 = vmatpush1.msra.mxu0 0.0
    %1161 = vmatprep.subr.mxu0 0.0
    %1162 = vmatpush1.msra.mxu0 0.0
    %1163 = vmatprep.subr.mxu0 0.0
    %1164 = vmatpush1.msra.mxu0 0.0
    %1165 = vmatprep.subr.mxu0 0.0
    %1166 = vmatpush1.msra.mxu0 0.0
    %1167 = vmatprep.subr.mxu0 0.0
    %1168 = vmatpush1.msra.mxu0 0.0
    %1169 = vmatprep.subr.mxu0 0.0
    %1170 = vmatpush1.msra.mxu0 0.0
    %1171 = vmatprep.mubr.f32.mxu0 0.0
    %1172 = vmatmul.mubr.f32.gmra.mrb[0].mxu0 %v1105
    %v1173 = vpop.f32.mrb[0].mxu0
    %v1174 = vadd.f32 0.0, %v1173
    %v1175 = vpop.f32.mrb[0].mxu0
    %1176 = vdwg.mxu0
    %1177 = vrot.lane.b32.xlu0 %v239, 48
    %v1178 = vpop.permute.xlu0 %1177
    %v1181 = vsel %vm245, %v1100, 0
    %1183 = vmatprep.subr.mxu0 0.0
    %1184 = vmatpush1.msra.mxu0 %v1178
    %1185 = vmatprep.subr.mxu0 0.0
    %1186 = vmatpush1.msra.mxu0 0.0
    %1187 = vmatprep.subr.mxu0 0.0
    %1188 = vmatpush1.msra.mxu0 0.0
    %1189 = vmatprep.subr.mxu0 0.0
    %1190 = vmatpush1.msra.mxu0 0.0
    %1191 = vmatprep.subr.mxu0 0.0
    %1192 = vmatpush1.msra.mxu0 0.0
    %1193 = vmatprep.subr.mxu0 0.0
    %1194 = vmatpush1.msra.mxu0 0.0
    %1195 = vmatprep.subr.mxu0 0.0
    %1196 = vmatpush1.msra.mxu0 0.0
    %1197 = vmatprep.subr.mxu0 0.0
    %1198 = vmatpush1.msra.mxu0 0.0
    %1199 = vmatprep.subr.mxu0 0.0
    %1200 = vmatpush1.msra.mxu0 0.0
    %1201 = vmatprep.subr.mxu0 0.0
    %1202 = vmatpush1.msra.mxu0 0.0
    %1203 = vmatprep.subr.mxu0 0.0
    %1204 = vmatpush1.msra.mxu0 0.0
    %1205 = vmatprep.subr.mxu0 0.0
    %1206 = vmatpush1.msra.mxu0 0.0
    %1207 = vmatprep.subr.mxu0 0.0
    %1208 = vmatpush1.msra.mxu0 0.0
    %1209 = vmatprep.subr.mxu0 0.0
    %1210 = vmatpush1.msra.mxu0 0.0
    %1211 = vmatprep.subr.mxu0 0.0
    %1212 = vmatpush1.msra.mxu0 0.0
    %1213 = vmatprep.subr.mxu0 0.0
    %1214 = vmatpush1.msra.mxu0 0.0
    %1215 = vmatprep.subr.mxu0 0.0
    %1216 = vmatpush1.msra.mxu0 0.0
    %1217 = vmatprep.subr.mxu0 0.0
    %1218 = vmatpush1.msra.mxu0 0.0
    %1219 = vmatprep.subr.mxu0 0.0
    %1220 = vmatpush1.msra.mxu0 0.0
    %1221 = vmatprep.subr.mxu0 0.0
    %1222 = vmatpush1.msra.mxu0 0.0
    %1223 = vmatprep.subr.mxu0 0.0
    %1224 = vmatpush1.msra.mxu0 0.0
    %1225 = vmatprep.subr.mxu0 0.0
    %1226 = vmatpush1.msra.mxu0 0.0
    %1227 = vmatprep.subr.mxu0 0.0
    %1228 = vmatpush1.msra.mxu0 0.0
    %1229 = vmatprep.subr.mxu0 0.0
    %1230 = vmatpush1.msra.mxu0 0.0
    %1231 = vmatprep.subr.mxu0 0.0
    %1232 = vmatpush1.msra.mxu0 0.0
    %1233 = vmatprep.subr.mxu0 0.0
    %1234 = vmatpush1.msra.mxu0 0.0
    %1235 = vmatprep.subr.mxu0 0.0
    %1236 = vmatpush1.msra.mxu0 0.0
    %1237 = vmatprep.subr.mxu0 0.0
    %1238 = vmatpush1.msra.mxu0 0.0
    %1239 = vmatprep.subr.mxu0 0.0
    %1240 = vmatpush1.msra.mxu0 0.0
    %1241 = vmatprep.subr.mxu0 0.0
    %1242 = vmatpush1.msra.mxu0 0.0
    %1243 = vmatprep.subr.mxu0 0.0
    %1244 = vmatpush1.msra.mxu0 0.0
    %1245 = vmatprep.subr.mxu0 0.0
    %1246 = vmatpush1.msra.mxu0 0.0
    %1247 = vmatprep.mubr.f32.mxu0 0.0
    %1248 = vmatmul.mubr.f32.gmra.mrb[0].mxu0 %v1181
    %v1249 = vpop.f32.mrb[0].mxu0
    %v1250 = vadd.f32 0.0, %v1249
    %v1251 = vpop.f32.mrb[0].mxu0
    %1252 = vdwg.mxu0
    %1253 = vrot.lane.b32.xlu0 %v234, 104
    %v1254 = vpop.permute.xlu0 %1253
    %1255 = vrot.lane.b32.xlu0 %v234, 72
    %v1256 = vpop.permute.xlu0 %1255
    %v1257 = vsel %vm245, %v1254, 0
    %v1259 = vsel %vm245, %v1256, 0
    %1261 = vmatprep.subr.mxu0 0.0
    %1262 = vmatpush1.xpose.msra.mxu0 %v1259
    %1263 = vmatprep.subr.mxu0 0.0
    %1264 = vmatpush1.xpose.msra.mxu0 0.0
    %1265 = vmatprep.subr.mxu0 0.0
    %1266 = vmatpush1.xpose.msra.mxu0 0.0
    %1267 = vmatprep.subr.mxu0 0.0
    %1268 = vmatpush1.xpose.msra.mxu0 0.0
    %1269 = vmatprep.subr.mxu0 0.0
    %1270 = vmatpush1.xpose.msra.mxu0 0.0
    %1271 = vmatprep.subr.mxu0 0.0
    %1272 = vmatpush1.xpose.msra.mxu0 0.0
    %1273 = vmatprep.subr.mxu0 0.0
    %1274 = vmatpush1.xpose.msra.mxu0 0.0
    %1275 = vmatprep.subr.mxu0 0.0
    %1276 = vmatpush1.xpose.msra.mxu0 0.0
    %1277 = vmatprep.subr.mxu0 0.0
    %1278 = vmatpush1.xpose.msra.mxu0 0.0
    %1279 = vmatprep.subr.mxu0 0.0
    %1280 = vmatpush1.xpose.msra.mxu0 0.0
    %1281 = vmatprep.subr.mxu0 0.0
    %1282 = vmatpush1.xpose.msra.mxu0 0.0
    %1283 = vmatprep.subr.mxu0 0.0
    %1284 = vmatpush1.xpose.msra.mxu0 0.0
    %1285 = vmatprep.subr.mxu0 0.0
    %1286 = vmatpush1.xpose.msra.mxu0 0.0
    %1287 = vmatprep.subr.mxu0 0.0
    %1288 = vmatpush1.xpose.msra.mxu0 0.0
    %1289 = vmatprep.subr.mxu0 0.0
    %1290 = vmatpush1.xpose.msra.mxu0 0.0
    %1291 = vmatprep.subr.mxu0 0.0
    %1292 = vmatpush1.xpose.msra.mxu0 0.0
    %1293 = vmatprep.subr.mxu0 0.0
    %1294 = vmatpush1.xpose.msra.mxu0 0.0
    %1295 = vmatprep.subr.mxu0 0.0
    %1296 = vmatpush1.xpose.msra.mxu0 0.0
    %1297 = vmatprep.subr.mxu0 0.0
    %1298 = vmatpush1.xpose.msra.mxu0 0.0
    %1299 = vmatprep.subr.mxu0 0.0
    %1300 = vmatpush1.xpose.msra.mxu0 0.0
    %1301 = vmatprep.subr.mxu0 0.0
    %1302 = vmatpush1.xpose.msra.mxu0 0.0
    %1303 = vmatprep.subr.mxu0 0.0
    %1304 = vmatpush1.xpose.msra.mxu0 0.0
    %1305 = vmatprep.subr.mxu0 0.0
    %1306 = vmatpush1.xpose.msra.mxu0 0.0
    %1307 = vmatprep.subr.mxu0 0.0
    %1308 = vmatpush1.xpose.msra.mxu0 0.0
    %1309 = vmatprep.subr.mxu0 0.0
    %1310 = vmatpush1.xpose.msra.mxu0 0.0
    %1311 = vmatprep.subr.mxu0 0.0
    %1312 = vmatpush1.xpose.msra.mxu0 0.0
    %1313 = vmatprep.subr.mxu0 0.0
    %1314 = vmatpush1.xpose.msra.mxu0 0.0
    %1315 = vmatprep.subr.mxu0 0.0
    %1316 = vmatpush1.xpose.msra.mxu0 0.0
    %1317 = vmatprep.subr.mxu0 0.0
    %1318 = vmatpush1.xpose.msra.mxu0 0.0
    %1319 = vmatprep.subr.mxu0 0.0
    %1320 = vmatpush1.xpose.msra.mxu0 0.0
    %1321 = vmatprep.subr.mxu0 0.0
    %1322 = vmatpush1.xpose.msra.mxu0 0.0
    %1323 = vmatprep.subr.mxu0 0.0
    %1324 = vmatpush1.xpose.msra.mxu0 0.0
    %1325 = vmatprep.mubr.f32.mxu0 0.0
    %1326 = vmatmul.mubr.f32.gmra.mrb[0].mxu0 %v1257
    %v1327 = vpop.f32.mrb[0].mxu0
    %v1328 = vadd.f32 0.0, %v1327
    %v1329 = vpop.f32.mrb[0].mxu0
    %1330 = vdwg.mxu0
    %1331 = vrot.lane.b32.xlu0 %v239, 104
    %v1332 = vpop.permute.xlu0 %1331
    %1333 = vrot.lane.b32.xlu0 %v239, 72
    %v1334 = vpop.permute.xlu0 %1333
    %v1335 = vsel %vm245, %v1332, 0
    %v1337 = vsel %vm245, %v1334, 0
    %1339 = vmatprep.subr.mxu0 0.0
    %1340 = vmatpush1.xpose.msra.mxu0 %v1337
    %1341 = vmatprep.subr.mxu0 0.0
    %1342 = vmatpush1.xpose.msra.mxu0 0.0
    %1343 = vmatprep.subr.mxu0 0.0
    %1344 = vmatpush1.xpose.msra.mxu0 0.0
    %1345 = vmatprep.subr.mxu0 0.0
    %1346 = vmatpush1.xpose.msra.mxu0 0.0
    %1347 = vmatprep.subr.mxu0 0.0
    %1348 = vmatpush1.xpose.msra.mxu0 0.0
    %1349 = vmatprep.subr.mxu0 0.0
    %1350 = vmatpush1.xpose.msra.mxu0 0.0
    %1351 = vmatprep.subr.mxu0 0.0
    %1352 = vmatpush1.xpose.msra.mxu0 0.0
    %1353 = vmatprep.subr.mxu0 0.0
    %1354 = vmatpush1.xpose.msra.mxu0 0.0
    %1355 = vmatprep.subr.mxu0 0.0
    %1356 = vmatpush1.xpose.msra.mxu0 0.0
    %1357 = vmatprep.subr.mxu0 0.0
    %1358 = vmatpush1.xpose.msra.mxu0 0.0
    %1359 = vmatprep.subr.mxu0 0.0
    %1360 = vmatpush1.xpose.msra.mxu0 0.0
    %1361 = vmatprep.subr.mxu0 0.0
    %1362 = vmatpush1.xpose.msra.mxu0 0.0
    %1363 = vmatprep.subr.mxu0 0.0
    %1364 = vmatpush1.xpose.msra.mxu0 0.0
    %1365 = vmatprep.subr.mxu0 0.0
    %1366 = vmatpush1.xpose.msra.mxu0 0.0
    %1367 = vmatprep.subr.mxu0 0.0
    %1368 = vmatpush1.xpose.msra.mxu0 0.0
    %1369 = vmatprep.subr.mxu0 0.0
    %1370 = vmatpush1.xpose.msra.mxu0 0.0
    %1371 = vmatprep.subr.mxu0 0.0
    %1372 = vmatpush1.xpose.msra.mxu0 0.0
    %1373 = vmatprep.subr.mxu0 0.0
    %1374 = vmatpush1.xpose.msra.mxu0 0.0
    %1375 = vmatprep.subr.mxu0 0.0
    %1376 = vmatpush1.xpose.msra.mxu0 0.0
    %1377 = vmatprep.subr.mxu0 0.0
    %1378 = vmatpush1.xpose.msra.mxu0 0.0
    %1379 = vmatprep.subr.mxu0 0.0
    %1380 = vmatpush1.xpose.msra.mxu0 0.0
    %1381 = vmatprep.subr.mxu0 0.0
    %1382 = vmatpush1.xpose.msra.mxu0 0.0
    %1383 = vmatprep.subr.mxu0 0.0
    %1384 = vmatpush1.xpose.msra.mxu0 0.0
    %1385 = vmatprep.subr.mxu0 0.0
    %1386 = vmatpush1.xpose.msra.mxu0 0.0
    %1387 = vmatprep.subr.mxu0 0.0
    %1388 = vmatpush1.xpose.msra.mxu0 0.0
    %1389 = vmatprep.subr.mxu0 0.0
    %1390 = vmatpush1.xpose.msra.mxu0 0.0
    %1391 = vmatprep.subr.mxu0 0.0
    %1392 = vmatpush1.xpose.msra.mxu0 0.0
    %1393 = vmatprep.subr.mxu0 0.0
    %1394 = vmatpush1.xpose.msra.mxu0 0.0
    %1395 = vmatprep.subr.mxu0 0.0
    %1396 = vmatpush1.xpose.msra.mxu0 0.0
    %1397 = vmatprep.subr.mxu0 0.0
    %1398 = vmatpush1.xpose.msra.mxu0 0.0
    %1399 = vmatprep.subr.mxu0 0.0
    %1400 = vmatpush1.xpose.msra.mxu0 0.0
    %1401 = vmatprep.subr.mxu0 0.0
    %1402 = vmatpush1.xpose.msra.mxu0 0.0
    %1403 = vmatprep.mubr.f32.mxu0 0.0
    %1404 = vmatmul.mubr.f32.gmra.mrb[0].mxu0 %v1335
    %v1405 = vpop.f32.mrb[0].mxu0
    %v1406 = vadd.f32 0.0, %v1405
    %v1407 = vpop.f32.mrb[0].mxu0
    %1408 = vdwg.mxu0
    %v1409 = vmul.f32 %v1328, 0.35355338
    %v1410 = vmul.f32 %v1406, 0.35355338
    %v1411 = vadd.f32 %v1409, %v402
    %v1412 = vadd.f32 %v1410, %v406
    %v1413 = vsel %vm245, %v1411, -inf
    %1414 = vmax.xlane.f32.xlu0 %v1413
    %v1415 = vpop.xlane.xlu0 %1414
    %v1416 = vsel %vm245, %v1412, -inf
    %1417 = vmax.xlane.f32.xlu0 %v1416
    %v1418 = vpop.xlane.xlu0 %1417
    %v1419 = vsub.f32 %v1411, %v1415
    %v1420 = vsub.f32 %v1412, %v1418
    %v1421 = vmul.f32 %v1419, 1.442695
    %v1422 = vpow.pop %v1421
    %v1423 = vmul.f32 %v1420, 1.442695
    %v1424 = vpow.pop %v1423
    %v1425 = vsel %vm245, %v1422, 0.0
    %1426 = vadd.xlane.f32.xlu0 %v1425
    %v1427 = vpop.xlane.xlu0 %1426
    %v1428 = vsel %vm245, %v1424, 0.0
    %1429 = vadd.xlane.f32.xlu0 %v1428
    %v1430 = vpop.xlane.xlu0 %1429
    %v1431 = vrcp.pop %v1427
    %v1432 = vrcp.pop %v1430
    %v1433 = vmul.f32 %v1422, %v1431
    %v1434 = vmul.f32 %v1424, %v1432
    %1435 = vrot.lane.b32.xlu0 %v234, 40
    %v1436 = vpop.permute.xlu0 %1435
    %v1439 = vsel %vm245, %v1433, 0
    %1441 = vmatprep.subr.mxu0 0.0
    %1442 = vmatpush1.msra.mxu0 %v1436
    %1443 = vmatprep.subr.mxu0 0.0
    %1444 = vmatpush1.msra.mxu0 0.0
    %1445 = vmatprep.subr.mxu0 0.0
    %1446 = vmatpush1.msra.mxu0 0.0
    %1447 = vmatprep.subr.mxu0 0.0
    %1448 = vmatpush1.msra.mxu0 0.0
    %1449 = vmatprep.subr.mxu0 0.0
    %1450 = vmatpush1.msra.mxu0 0.0
    %1451 = vmatprep.subr.mxu0 0.0
    %1452 = vmatpush1.msra.mxu0 0.0
    %1453 = vmatprep.subr.mxu0 0.0
    %1454 = vmatpush1.msra.mxu0 0.0
    %1455 = vmatprep.subr.mxu0 0.0
    %1456 = vmatpush1.msra.mxu0 0.0
    %1457 = vmatprep.subr.mxu0 0.0
    %1458 = vmatpush1.msra.mxu0 0.0
    %1459 = vmatprep.subr.mxu0 0.0
    %1460 = vmatpush1.msra.mxu0 0.0
    %1461 = vmatprep.subr.mxu0 0.0
    %1462 = vmatpush1.msra.mxu0 0.0
    %1463 = vmatprep.subr.mxu0 0.0
    %1464 = vmatpush1.msra.mxu0 0.0
    %1465 = vmatprep.subr.mxu0 0.0
    %1466 = vmatpush1.msra.mxu0 0.0
    %1467 = vmatprep.subr.mxu0 0.0
    %1468 = vmatpush1.msra.mxu0 0.0
    %1469 = vmatprep.subr.mxu0 0.0
    %1470 = vmatpush1.msra.mxu0 0.0
    %1471 = vmatprep.subr.mxu0 0.0
    %1472 = vmatpush1.msra.mxu0 0.0
    %1473 = vmatprep.subr.mxu0 0.0
    %1474 = vmatpush1.msra.mxu0 0.0
    %1475 = vmatprep.subr.mxu0 0.0
    %1476 = vmatpush1.msra.mxu0 0.0
    %1477 = vmatprep.subr.mxu0 0.0
    %1478 = vmatpush1.msra.mxu0 0.0
    %1479 = vmatprep.subr.mxu0 0.0
    %1480 = vmatpush1.msra.mxu0 0.0
    %1481 = vmatprep.subr.mxu0 0.0
    %1482 = vmatpush1.msra.mxu0 0.0
    %1483 = vmatprep.subr.mxu0 0.0
    %1484 = vmatpush1.msra.mxu0 0.0
    %1485 = vmatprep.subr.mxu0 0.0
    %1486 = vmatpush1.msra.mxu0 0.0
    %1487 = vmatprep.subr.mxu0 0.0
    %1488 = vmatpush1.msra.mxu0 0.0
    %1489 = vmatprep.subr.mxu0 0.0
    %1490 = vmatpush1.msra.mxu0 0.0
    %1491 = vmatprep.subr.mxu0 0.0
    %1492 = vmatpush1.msra.mxu0 0.0
    %1493 = vmatprep.subr.mxu0 0.0
    %1494 = vmatpush1.msra.mxu0 0.0
    %1495 = vmatprep.subr.mxu0 0.0
    %1496 = vmatpush1.msra.mxu0 0.0
    %1497 = vmatprep.subr.mxu0 0.0
    %1498 = vmatpush1.msra.mxu0 0.0
    %1499 = vmatprep.subr.mxu0 0.0
    %1500 = vmatpush1.msra.mxu0 0.0
    %1501 = vmatprep.subr.mxu0 0.0
    %1502 = vmatpush1.msra.mxu0 0.0
    %1503 = vmatprep.subr.mxu0 0.0
    %1504 = vmatpush1.msra.mxu0 0.0
    %1505 = vmatprep.mubr.f32.mxu0 0.0
    %1506 = vmatmul.mubr.f32.gmra.mrb[0].mxu0 %v1439
    %v1507 = vpop.f32.mrb[0].mxu0
    %v1508 = vadd.f32 0.0, %v1507
    %v1509 = vpop.f32.mrb[0].mxu0
    %1510 = vdwg.mxu0
    %1511 = vrot.lane.b32.xlu0 %v239, 40
    %v1512 = vpop.permute.xlu0 %1511
    %v1515 = vsel %vm245, %v1434, 0
    %1517 = vmatprep.subr.mxu0 0.0
    %1518 = vmatpush1.msra.mxu0 %v1512
    %1519 = vmatprep.subr.mxu0 0.0
    %1520 = vmatpush1.msra.mxu0 0.0
    %1521 = vmatprep.subr.mxu0 0.0
    %1522 = vmatpush1.msra.mxu0 0.0
    %1523 = vmatprep.subr.mxu0 0.0
    %1524 = vmatpush1.msra.mxu0 0.0
    %1525 = vmatprep.subr.mxu0 0.0
    %1526 = vmatpush1.msra.mxu0 0.0
    %1527 = vmatprep.subr.mxu0 0.0
    %1528 = vmatpush1.msra.mxu0 0.0
    %1529 = vmatprep.subr.mxu0 0.0
    %1530 = vmatpush1.msra.mxu0 0.0
    %1531 = vmatprep.subr.mxu0 0.0
    %1532 = vmatpush1.msra.mxu0 0.0
    %1533 = vmatprep.subr.mxu0 0.0
    %1534 = vmatpush1.msra.mxu0 0.0
    %1535 = vmatprep.subr.mxu0 0.0
    %1536 = vmatpush1.msra.mxu0 0.0
    %1537 = vmatprep.subr.mxu0 0.0
    %1538 = vmatpush1.msra.mxu0 0.0
    %1539 = vmatprep.subr.mxu0 0.0
    %1540 = vmatpush1.msra.mxu0 0.0
    %1541 = vmatprep.subr.mxu0 0.0
    %1542 = vmatpush1.msra.mxu0 0.0
    %1543 = vmatprep.subr.mxu0 0.0
    %1544 = vmatpush1.msra.mxu0 0.0
    %1545 = vmatprep.subr.mxu0 0.0
    %1546 = vmatpush1.msra.mxu0 0.0
    %1547 = vmatprep.subr.mxu0 0.0
    %1548 = vmatpush1.msra.mxu0 0.0
    %1549 = vmatprep.subr.mxu0 0.0
    %1550 = vmatpush1.msra.mxu0 0.0
    %1551 = vmatprep.subr.mxu0 0.0
    %1552 = vmatpush1.msra.mxu0 0.0
    %1553 = vmatprep.subr.mxu0 0.0
    %1554 = vmatpush1.msra.mxu0 0.0
    %1555 = vmatprep.subr.mxu0 0.0
    %1556 = vmatpush1.msra.mxu0 0.0
    %1557 = vmatprep.subr.mxu0 0.0
    %1558 = vmatpush1.msra.mxu0 0.0
    %1559 = vmatprep.subr.mxu0 0.0
    %1560 = vmatpush1.msra.mxu0 0.0
    %1561 = vmatprep.subr.mxu0 0.0
    %1562 = vmatpush1.msra.mxu0 0.0
    %1563 = vmatprep.subr.mxu0 0.0
    %1564 = vmatpush1.msra.mxu0 0.0
    %1565 = vmatprep.subr.mxu0 0.0
    %1566 = vmatpush1.msra.mxu0 0.0
    %1567 = vmatprep.subr.mxu0 0.0
    %1568 = vmatpush1.msra.mxu0 0.0
    %1569 = vmatprep.subr.mxu0 0.0
    %1570 = vmatpush1.msra.mxu0 0.0
    %1571 = vmatprep.subr.mxu0 0.0
    %1572 = vmatpush1.msra.mxu0 0.0
    %1573 = vmatprep.subr.mxu0 0.0
    %1574 = vmatpush1.msra.mxu0 0.0
    %1575 = vmatprep.subr.mxu0 0.0
    %1576 = vmatpush1.msra.mxu0 0.0
    %1577 = vmatprep.subr.mxu0 0.0
    %1578 = vmatpush1.msra.mxu0 0.0
    %1579 = vmatprep.subr.mxu0 0.0
    %1580 = vmatpush1.msra.mxu0 0.0
    %1581 = vmatprep.mubr.f32.mxu0 0.0
    %1582 = vmatmul.mubr.f32.gmra.mrb[0].mxu0 %v1515
    %v1583 = vpop.f32.mrb[0].mxu0
    %v1584 = vadd.f32 0.0, %v1583
    %v1585 = vpop.f32.mrb[0].mxu0
    %1586 = vdwg.mxu0
    %1589 = vrot.lane.b32.xlu0 %v840, 8
    %v1590 = vpop.permute.xlu0 %1589
    %1591 = vrot.lane.b32.xlu0 %v916, 8
    %v1592 = vpop.permute.xlu0 %1591
    %1597 = vrot.lane.b32.xlu0 %v1174, 16
    %v1598 = vpop.permute.xlu0 %1597
    %1599 = vrot.lane.b32.xlu0 %v1250, 16
    %v1600 = vpop.permute.xlu0 %1599
    %1605 = vrot.lane.b32.xlu0 %v1508, 24
    %v1606 = vpop.permute.xlu0 %1605
    %1607 = vrot.lane.b32.xlu0 %v1584, 24
    %v1608 = vpop.permute.xlu0 %1607
    %v1611 = vsel %vm245, %v506, %v1590
    %v1612 = vsel %vm245, %v582, %v1592
    %vm1613 = vcmask 130048
    %v1614 = vsel %vm1613, %v1611, %v1598
    %v1615 = vsel %vm1613, %v1612, %v1600
    %vm1616 = vcmask 195584
    %v1617 = vsel %vm1616, %v1614, %v1606
    %v1618 = vsel %vm1616, %v1615, %v1608
    %v1619 = vld [vmem:[%s8] sm:$0xff]
    %v1620 = vld [vmem:[%s8 + $0x8] sm:$0xff]
    %v1621 = vld [vmem:[%s8 + $0x10] sm:$0xff]
    %v1622 = vld [vmem:[%s8 + $0x18] sm:$0xff]
    %v1623 = vld [vmem:[%s9] sm:$0x1]
    %v1625 = vlaneseq
    %v1626 = vshrl.u32 %v1625, 7
    %v1627 = vsub.s32 0, %v1626
    %v1628 = vrot.slane %v1623, %v1627
    %v1631 = vsel %vm106, %v1617, 0
    %v1634 = vsel %vm106, %v1618, 0
    %1636 = vmatprep.subr.mxu0 0.0
    %1637 = vmatpush1.msra.mxu0 %v1619
    %1638 = vmatprep.subr.mxu0 0.0
    %1639 = vmatpush1.msra.mxu0 %v1620
    %1640 = vmatprep.subr.mxu0 0.0
    %1641 = vmatpush1.msra.mxu0 %v1621
    %1642 = vmatprep.subr.mxu0 0.0
    %1643 = vmatpush1.msra.mxu0 %v1622
    %1644 = vmatprep.subr.mxu0 0.0
    %1645 = vmatpush1.msra.mxu0 0.0
    %1646 = vmatprep.subr.mxu0 0.0
    %1647 = vmatpush1.msra.mxu0 0.0
    %1648 = vmatprep.subr.mxu0 0.0
    %1649 = vmatpush1.msra.mxu0 0.0
    %1650 = vmatprep.subr.mxu0 0.0
    %1651 = vmatpush1.msra.mxu0 0.0
    %1652 = vmatprep.subr.mxu0 0.0
    %1653 = vmatpush1.msra.mxu0 0.0
    %1654 = vmatprep.subr.mxu0 0.0
    %1655 = vmatpush1.msra.mxu0 0.0
    %1656 = vmatprep.subr.mxu0 0.0
    %1657 = vmatpush1.msra.mxu0 0.0
    %1658 = vmatprep.subr.mxu0 0.0
    %1659 = vmatpush1.msra.mxu0 0.0
    %1660 = vmatprep.subr.mxu0 0.0
    %1661 = vmatpush1.msra.mxu0 0.0
    %1662 = vmatprep.subr.mxu0 0.0
    %1663 = vmatpush1.msra.mxu0 0.0
    %1664 = vmatprep.subr.mxu0 0.0
    %1665 = vmatpush1.msra.mxu0 0.0
    %1666 = vmatprep.subr.mxu0 0.0
    %1667 = vmatpush1.msra.mxu0 0.0
    %1668 = vmatprep.subr.mxu0 0.0
    %1669 = vmatpush1.msra.mxu0 0.0
    %1670 = vmatprep.subr.mxu0 0.0
    %1671 = vmatpush1.msra.mxu0 0.0
    %1672 = vmatprep.subr.mxu0 0.0
    %1673 = vmatpush1.msra.mxu0 0.0
    %1674 = vmatprep.subr.mxu0 0.0
    %1675 = vmatpush1.msra.mxu0 0.0
    %1676 = vmatprep.subr.mxu0 0.0
    %1677 = vmatpush1.msra.mxu0 0.0
    %1678 = vmatprep.subr.mxu0 0.0
    %1679 = vmatpush1.msra.mxu0 0.0
    %1680 = vmatprep.subr.mxu0 0.0
    %1681 = vmatpush1.msra.mxu0 0.0
    %1682 = vmatprep.subr.mxu0 0.0
    %1683 = vmatpush1.msra.mxu0 0.0
    %1684 = vmatprep.subr.mxu0 0.0
    %1685 = vmatpush1.msra.mxu0 0.0
    %1686 = vmatprep.subr.mxu0 0.0
    %1687 = vmatpush1.msra.mxu0 0.0
    %1688 = vmatprep.subr.mxu0 0.0
    %1689 = vmatpush1.msra.mxu0 0.0
    %1690 = vmatprep.subr.mxu0 0.0
    %1691 = vmatpush1.msra.mxu0 0.0
    %1692 = vmatprep.subr.mxu0 0.0
    %1693 = vmatpush1.msra.mxu0 0.0
    %1694 = vmatprep.subr.mxu0 0.0
    %1695 = vmatpush1.msra.mxu0 0.0
    %1696 = vmatprep.subr.mxu0 0.0
    %1697 = vmatpush1.msra.mxu0 0.0
    %1698 = vmatprep.subr.mxu0 0.0
    %1699 = vmatpush1.msra.mxu0 0.0
    %1700 = vmatprep.mubr.f32.mxu0 0.0
    %1701 = vmatmul.mubr.f32.gmra.mrb[0].mxu0 %v1631
    %v1702 = vpop.f32.mrb[0].mxu0
    %v1703 = vadd.f32 %v1628, %v1702
    %v1704 = vpop.f32.mrb[0].mxu0
    %1705 = vmatprep.mubr.f32.mxu0 0.0
    %1706 = vmatmul.mubr.f32.gmra.mrb[0].mxu0 %v1634
    %v1707 = vpop.f32.mrb[0].mxu0
    %v1708 = vadd.f32 %v1628, %v1707
    %v1709 = vpop.f32.mrb[0].mxu0
    %1710 = vdwg.mxu0
    %v1711 = vadd.f32 %v148, %v1703
    %v1712 = vadd.f32 %v149, %v1708
    %v1713 = vld [vmem:[%s10] sm:$0x1]
    %v1714 = vld [vmem:[%s11] sm:$0x1]
    %v1715 = vsel %vm106, %v1711, 0.0
    %1716 = vadd.xlane.f32.xlu0 %v1715
    %v1717 = vpop.xlane.xlu0 %1716
    %v1718 = vsel %vm106, %v1712, 0.0
    %1719 = vadd.xlane.f32.xlu0 %v1718
    %v1720 = vpop.xlane.xlu0 %1719
    %v1721 = vmul.f32 %v1717, %v113
    %v1722 = vmul.f32 %v1720, %v113
    %v1723 = vsub.f32 %v1711, %v1721
    %v1724 = vsub.f32 %v1712, %v1722
    %v1725 = vmul.f32 %v1723, %v1723
    %v1726 = vmul.f32 %v1724, %v1724
    %v1727 = vsel %vm106, %v1725, 0.0
    %1728 = vadd.xlane.f32.xlu0 %v1727
    %v1729 = vpop.xlane.xlu0 %1728
    %v1730 = vsel %vm106, %v1726, 0.0
    %1731 = vadd.xlane.f32.xlu0 %v1730
    %v1732 = vpop.xlane.xlu0 %1731
    %v1733 = vmul.f32 %v1729, %v113
    %v1734 = vmul.f32 %v1732, %v113
    %v1735 = vadd.f32 %v1733, 1e-12
    %v1736 = vadd.f32 %v1734, 1e-12
    %v1737 = vrsqrt.pop %v1735
    %v1738 = vrsqrt.pop %v1736
    %v1739 = vmul.f32 %v1723, %v1737
    %v1740 = vmul.f32 %v1724, %v1738
    %v1742 = vlaneseq
    %v1743 = vshrl.u32 %v1742, 7
    %v1744 = vsub.s32 0, %v1743
    %v1745 = vrot.slane %v1713, %v1744
    %v1747 = vmul.f32 %v1739, %v1745
    %v1748 = vmul.f32 %v1740, %v1745
    %v1750 = vlaneseq
    %v1751 = vshrl.u32 %v1750, 7
    %v1752 = vsub.s32 0, %v1751
    %v1753 = vrot.slane %v1714, %v1752
    %v1755 = vadd.f32 %v1747, %v1753
    %v1756 = vadd.f32 %v1748, %v1753
    %v1757 = vld [vmem:[%s12] sm:$0xff]
    %v1758 = vld [vmem:[%s12 + $0x8] sm:$0xff]
    %v1759 = vld [vmem:[%s12 + $0x10] sm:$0xff]
    %v1760 = vld [vmem:[%s12 + $0x18] sm:$0xff]
    %v1761 = vld [vmem:[%s13] sm:$0x1]
    %v1763 = vlaneseq
    %v1764 = vshrl.u32 %v1763, 7
    %v1765 = vsub.s32 0, %v1764
    %v1766 = vrot.slane %v1761, %v1765
    %v1769 = vsel %vm106, %v1755, 0
    %v1772 = vsel %vm106, %v1756, 0
    %1774 = vmatprep.subr.mxu0 0.0
    %1775 = vmatpush1.msra.mxu0 %v1757
    %1776 = vmatprep.subr.mxu0 0.0
    %1777 = vmatpush1.msra.mxu0 %v1758
    %1778 = vmatprep.subr.mxu0 0.0
    %1779 = vmatpush1.msra.mxu0 %v1759
    %1780 = vmatprep.subr.mxu0 0.0
    %1781 = vmatpush1.msra.mxu0 %v1760
    %1782 = vmatprep.subr.mxu0 0.0
    %1783 = vmatpush1.msra.mxu0 0.0
    %1784 = vmatprep.subr.mxu0 0.0
    %1785 = vmatpush1.msra.mxu0 0.0
    %1786 = vmatprep.subr.mxu0 0.0
    %1787 = vmatpush1.msra.mxu0 0.0
    %1788 = vmatprep.subr.mxu0 0.0
    %1789 = vmatpush1.msra.mxu0 0.0
    %1790 = vmatprep.subr.mxu0 0.0
    %1791 = vmatpush1.msra.mxu0 0.0
    %1792 = vmatprep.subr.mxu0 0.0
    %1793 = vmatpush1.msra.mxu0 0.0
    %1794 = vmatprep.subr.mxu0 0.0
    %1795 = vmatpush1.msra.mxu0 0.0
    %1796 = vmatprep.subr.mxu0 0.0
    %1797 = vmatpush1.msra.mxu0 0.0
    %1798 = vmatprep.subr.mxu0 0.0
    %1799 = vmatpush1.msra.mxu0 0.0
    %1800 = vmatprep.subr.mxu0 0.0
    %1801 = vmatpush1.msra.mxu0 0.0
    %1802 = vmatprep.subr.mxu0 0.0
    %1803 = vmatpush1.msra.mxu0 0.0
    %1804 = vmatprep.subr.mxu0 0.0
    %1805 = vmatpush1.msra.mxu0 0.0
    %1806 = vmatprep.subr.mxu0 0.0
    %1807 = vmatpush1.msra.mxu0 0.0
    %1808 = vmatprep.subr.mxu0 0.0
    %1809 = vmatpush1.msra.mxu0 0.0
    %1810 = vmatprep.subr.mxu0 0.0
    %1811 = vmatpush1.msra.mxu0 0.0
    %1812 = vmatprep.subr.mxu0 0.0
    %1813 = vmatpush1.msra.mxu0 0.0
    %1814 = vmatprep.subr.mxu0 0.0
    %1815 = vmatpush1.msra.mxu0 0.0
    %1816 = vmatprep.subr.mxu0 0.0
    %1817 = vmatpush1.msra.mxu0 0.0
    %1818 = vmatprep.subr.mxu0 0.0
    %1819 = vmatpush1.msra.mxu0 0.0
    %1820 = vmatprep.subr.mxu0 0.0
    %1821 = vmatpush1.msra.mxu0 0.0
    %1822 = vmatprep.subr.mxu0 0.0
    %1823 = vmatpush1.msra.mxu0 0.0
    %1824 = vmatprep.subr.mxu0 0.0
    %1825 = vmatpush1.msra.mxu0 0.0
    %1826 = vmatprep.subr.mxu0 0.0
    %1827 = vmatpush1.msra.mxu0 0.0
    %1828 = vmatprep.subr.mxu0 0.0
    %1829 = vmatpush1.msra.mxu0 0.0
    %1830 = vmatprep.subr.mxu0 0.0
    %1831 = vmatpush1.msra.mxu0 0.0
    %1832 = vmatprep.subr.mxu0 0.0
    %1833 = vmatpush1.msra.mxu0 0.0
    %1834 = vmatprep.subr.mxu0 0.0
    %1835 = vmatpush1.msra.mxu0 0.0
    %1836 = vmatprep.subr.mxu0 0.0
    %1837 = vmatpush1.msra.mxu0 0.0
    %1838 = vmatprep.mubr.f32.mxu0 0.0
    %1839 = vmatmul.mubr.f32.gmra.mrb[0].mxu0 %v1769
    %v1840 = vpop.f32.mrb[0].mxu0
    %v1841 = vadd.f32 %v1766, %v1840
    %v1842 = vpop.f32.mrb[0].mxu0
    %1843 = vmatprep.mubr.f32.mxu0 0.0
    %1844 = vmatmul.mubr.f32.gmra.mrb[0].mxu0 %v1772
    %v1845 = vpop.f32.mrb[0].mxu0
    %v1846 = vadd.f32 %v1766, %v1845
    %v1847 = vpop.f32.mrb[0].mxu0
    %1848 = vdwg.mxu0
    %v1849 = vmul.f32 %v1841, %v1841
    %v1850 = vmul.f32 %v1846, %v1846
    %v1851 = vmul.f32 %v1841, %v1849
    %v1852 = vmul.f32 %v1846, %v1850
    %v1853 = vmul.f32 %v1851, 0.044715
    %v1854 = vmul.f32 %v1852, 0.044715
    %v1855 = vadd.f32 %v1841, %v1853
    %v1856 = vadd.f32 %v1846, %v1854
    %v1857 = vmul.f32 %v1855, 0.7978846
    %v1858 = vmul.f32 %v1856, 0.7978846
    %v1859 = vtanh.pop %v1857
    %v1860 = vtanh.pop %v1858
    %v1861 = vadd.f32 %v1859, 1.0
    %v1862 = vadd.f32 %v1860, 1.0
    %v1863 = vmul.f32 %v1861, 0.5
    %v1864 = vmul.f32 %v1862, 0.5
    %v1865 = vmul.f32 %v1841, %v1863
    %v1866 = vmul.f32 %v1846, %v1864
    %v1867 = vld [vmem:[%s14] sm:$0xff]
    %v1868 = vld [vmem:[%s14 + $0x8] sm:$0xff]
    %v1869 = vld [vmem:[%s14 + $0x10] sm:$0xff]
    %v1870 = vld [vmem:[%s14 + $0x18] sm:$0xff]
    %v1871 = vld [vmem:[%s14 + $0x20] sm:$0xff]
    %v1872 = vld [vmem:[%s14 + $0x28] sm:$0xff]
    %v1873 = vld [vmem:[%s14 + $0x30] sm:$0xff]
    %v1874 = vld [vmem:[%s14 + $0x38] sm:$0xff]
    %v1875 = vld [vmem:[%s14 + $0x40] sm:$0xff]
    %v1876 = vld [vmem:[%s14 + $0x48] sm:$0xff]
    %v1877 = vld [vmem:[%s14 + $0x50] sm:$0xff]
    %v1878 = vld [vmem:[%s14 + $0x58] sm:$0xff]
    %v1879 = vld [vmem:[%s14 + $0x60] sm:$0xff]
    %v1880 = vld [vmem:[%s14 + $0x68] sm:$0xff]
    %v1881 = vld [vmem:[%s14 + $0x70] sm:$0xff]
    %v1882 = vld [vmem:[%s14 + $0x78] sm:$0xff]
    %v1883 = vld [vmem:[%s15] sm:$0x1]
    %v1885 = vlaneseq
    %v1886 = vshrl.u32 %v1885, 7
    %v1887 = vsub.s32 0, %v1886
    %v1888 = vrot.slane %v1883, %v1887
    %1890 = vmatprep.subr.mxu0 0.0
    %1891 = vmatpush1.msra.mxu0 %v1867
    %1892 = vmatprep.subr.mxu0 0.0
    %1893 = vmatpush1.msra.mxu0 %v1868
    %1894 = vmatprep.subr.mxu0 0.0
    %1895 = vmatpush1.msra.mxu0 %v1869
    %1896 = vmatprep.subr.mxu0 0.0
    %1897 = vmatpush1.msra.mxu0 %v1870
    %1898 = vmatprep.subr.mxu0 0.0
    %1899 = vmatpush1.msra.mxu0 %v1871
    %1900 = vmatprep.subr.mxu0 0.0
    %1901 = vmatpush1.msra.mxu0 %v1872
    %1902 = vmatprep.subr.mxu0 0.0
    %1903 = vmatpush1.msra.mxu0 %v1873
    %1904 = vmatprep.subr.mxu0 0.0
    %1905 = vmatpush1.msra.mxu0 %v1874
    %1906 = vmatprep.subr.mxu0 0.0
    %1907 = vmatpush1.msra.mxu0 %v1875
    %1908 = vmatprep.subr.mxu0 0.0
    %1909 = vmatpush1.msra.mxu0 %v1876
    %1910 = vmatprep.subr.mxu0 0.0
    %1911 = vmatpush1.msra.mxu0 %v1877
    %1912 = vmatprep.subr.mxu0 0.0
    %1913 = vmatpush1.msra.mxu0 %v1878
    %1914 = vmatprep.subr.mxu0 0.0
    %1915 = vmatpush1.msra.mxu0 %v1879
    %1916 = vmatprep.subr.mxu0 0.0
    %1917 = vmatpush1.msra.mxu0 %v1880
    %1918 = vmatprep.subr.mxu0 0.0
    %1919 = vmatpush1.msra.mxu0 %v1881
    %1920 = vmatprep.subr.mxu0 0.0
    %1921 = vmatpush1.msra.mxu0 %v1882
    %1922 = vmatprep.subr.mxu0 0.0
    %1923 = vmatpush1.msra.mxu0 0.0
    %1924 = vmatprep.subr.mxu0 0.0
    %1925 = vmatpush1.msra.mxu0 0.0
    %1926 = vmatprep.subr.mxu0 0.0
    %1927 = vmatpush1.msra.mxu0 0.0
    %1928 = vmatprep.subr.mxu0 0.0
    %1929 = vmatpush1.msra.mxu0 0.0
    %1930 = vmatprep.subr.mxu0 0.0
    %1931 = vmatpush1.msra.mxu0 0.0
    %1932 = vmatprep.subr.mxu0 0.0
    %1933 = vmatpush1.msra.mxu0 0.0
    %1934 = vmatprep.subr.mxu0 0.0
    %1935 = vmatpush1.msra.mxu0 0.0
    %1936 = vmatprep.subr.mxu0 0.0
    %1937 = vmatpush1.msra.mxu0 0.0
    %1938 = vmatprep.subr.mxu0 0.0
    %1939 = vmatpush1.msra.mxu0 0.0
    %1940 = vmatprep.subr.mxu0 0.0
    %1941 = vmatpush1.msra.mxu0 0.0
    %1942 = vmatprep.subr.mxu0 0.0
    %1943 = vmatpush1.msra.mxu0 0.0
    %1944 = vmatprep.subr.mxu0 0.0
    %1945 = vmatpush1.msra.mxu0 0.0
    %1946 = vmatprep.subr.mxu0 0.0
    %1947 = vmatpush1.msra.mxu0 0.0
    %1948 = vmatprep.subr.mxu0 0.0
    %1949 = vmatpush1.msra.mxu0 0.0
    %1950 = vmatprep.subr.mxu0 0.0
    %1951 = vmatpush1.msra.mxu0 0.0
    %1952 = vmatprep.subr.mxu0 0.0
    %1953 = vmatpush1.msra.mxu0 0.0
    %1954 = vmatprep.mubr.f32.mxu0 0.0
    %1955 = vmatmul.mubr.f32.gmra.mrb[0].mxu0 %v1865
    %v1956 = vpop.f32.mrb[0].mxu0
    %v1957 = vadd.f32 %v1888, %v1956
    %v1958 = vpop.f32.mrb[0].mxu0
    %1959 = vmatprep.mubr.f32.mxu0 0.0
    %1960 = vmatmul.mubr.f32.gmra.mrb[0].mxu0 %v1866
    %v1961 = vpop.f32.mrb[0].mxu0
    %v1962 = vadd.f32 %v1888, %v1961
    %v1963 = vpop.f32.mrb[0].mxu0
    %1964 = vdwg.mxu0
    %v1965 = vadd.f32 %v1755, %v1957
    %v1966 = vadd.f32 %v1756, %v1962
    %v1967 = vld [vmem:[%s16] sm:$0x1]
    %v1968 = vld [vmem:[%s17] sm:$0x1]
    %v1969 = vsel %vm106, %v1965, 0.0
    %1970 = vadd.xlane.f32.xlu0 %v1969
    %v1971 = vpop.xlane.xlu0 %1970
    %v1972 = vsel %vm106, %v1966, 0.0
    %1973 = vadd.xlane.f32.xlu0 %v1972
    %v1974 = vpop.xlane.xlu0 %1973
    %v1975 = vmul.f32 %v1971, %v113
    %v1976 = vmul.f32 %v1974, %v113
    %v1977 = vsub.f32 %v1965, %v1975
    %v1978 = vsub.f32 %v1966, %v1976
    %v1979 = vmul.f32 %v1977, %v1977
    %v1980 = vmul.f32 %v1978, %v1978
    %v1981 = vsel %vm106, %v1979, 0.0
    %1982 = vadd.xlane.f32.xlu0 %v1981
    %v1983 = vpop.xlane.xlu0 %1982
    %v1984 = vsel %vm106, %v1980, 0.0
    %1985 = vadd.xlane.f32.xlu0 %v1984
    %v1986 = vpop.xlane.xlu0 %1985
    %v1987 = vmul.f32 %v1983, %v113
    %v1988 = vmul.f32 %v1986, %v113
    %v1989 = vadd.f32 %v1987, 1e-12
    %v1990 = vadd.f32 %v1988, 1e-12
    %v1991 = vrsqrt.pop %v1989
    %v1992 = vrsqrt.pop %v1990
    %v1993 = vmul.f32 %v1977, %v1991
    %v1994 = vmul.f32 %v1978, %v1992
    %v1996 = vlaneseq
    %v1997 = vshrl.u32 %v1996, 7
    %v1998 = vsub.s32 0, %v1997
    %v1999 = vrot.slane %v1967, %v1998
    %v2001 = vmul.f32 %v1993, %v1999
    %v2002 = vmul.f32 %v1994, %v1999
    %v2004 = vlaneseq
    %v2005 = vshrl.u32 %v2004, 7
    %v2006 = vsub.s32 0, %v2005
    %v2007 = vrot.slane %v1968, %v2006
    %v2009 = vadd.f32 %v2001, %v2007
    %v2010 = vadd.f32 %v2002, %v2007
    %v2011 = vsel %vm106, %v2009, 0.0
    %v2012 = vrot.slane %v2011, 4
    %v2013 = vadd.f32 %v2011, %v2012
    %v2014 = vrot.slane %v2013, 2
    %v2015 = vadd.f32 %v2013, %v2014
    %v2016 = vrot.slane %v2015, 1
    %v2017 = vadd.f32 %v2015, %v2016
    %v2018 = vsel %vm106, %v2010, 0.0
    %v2019 = vrot.slane %v2018, 4
    %v2020 = vadd.f32 %v2018, %v2019
    %v2021 = vrot.slane %v2020, 2
    %v2022 = vadd.f32 %v2020, %v2021
    %v2023 = vrot.slane %v2022, 1
    %v2024 = vadd.f32 %v2022, %v2023
    %v2025 = vrcp.pop 8.0
    %v2026 = vmul.f32 %v2017, %v2025
    %v2027 = vmul.f32 %v2024, %v2025
    %v2028 = vadd.f32 %v2026, 0.0
    %v2029 = vadd.f32 %v2027, 0.0
    %s2030 = scalar_lea.vmem %s6, 32
    %v2031 = vld [vmem:[%s2030] sm:$0xff]
    %v2032 = vld [vmem:[%s2030 + $0x8] sm:$0xff]
    %v2033 = vld [vmem:[%s2030 + $0x10] sm:$0xff]
    %v2034 = vld [vmem:[%s2030 + $0x18] sm:$0xff]
    %s2035 = scalar_lea.vmem %s7, 1
    %v2036 = vld [vmem:[%s2035] sm:$0x1]
    %v2038 = vlaneseq
    %v2039 = vshrl.u32 %v2038, 7
    %v2040 = vsub.s32 0, %v2039
    %v2041 = vrot.slane %v2036, %v2040
    %v2044 = vsel %vm106, %v2009, 0
    %v2047 = vsel %vm106, %v2010, 0
    %2049 = vmatprep.subr.mxu0 0.0
    %2050 = vmatpush1.msra.mxu0 %v2031
    %2051 = vmatprep.subr.mxu0 0.0
    %2052 = vmatpush1.msra.mxu0 %v2032
    %2053 = vmatprep.subr.mxu0 0.0
    %2054 = vmatpush1.msra.mxu0 %v2033
    %2055 = vmatprep.subr.mxu0 0.0
    %2056 = vmatpush1.msra.mxu0 %v2034
    %2057 = vmatprep.subr.mxu0 0.0
    %2058 = vmatpush1.msra.mxu0 0.0
    %2059 = vmatprep.subr.mxu0 0.0
    %2060 = vmatpush1.msra.mxu0 0.0
    %2061 = vmatprep.subr.mxu0 0.0
    %2062 = vmatpush1.msra.mxu0 0.0
    %2063 = vmatprep.subr.mxu0 0.0
    %2064 = vmatpush1.msra.mxu0 0.0
    %2065 = vmatprep.subr.mxu0 0.0
    %2066 = vmatpush1.msra.mxu0 0.0
    %2067 = vmatprep.subr.mxu0 0.0
    %2068 = vmatpush1.msra.mxu0 0.0
    %2069 = vmatprep.subr.mxu0 0.0
    %2070 = vmatpush1.msra.mxu0 0.0
    %2071 = vmatprep.subr.mxu0 0.0
    %2072 = vmatpush1.msra.mxu0 0.0
    %2073 = vmatprep.subr.mxu0 0.0
    %2074 = vmatpush1.msra.mxu0 0.0
    %2075 = vmatprep.subr.mxu0 0.0
    %2076 = vmatpush1.msra.mxu0 0.0
    %2077 = vmatprep.subr.mxu0 0.0
    %2078 = vmatpush1.msra.mxu0 0.0
    %2079 = vmatprep.subr.mxu0 0.0
    %2080 = vmatpush1.msra.mxu0 0.0
    %2081 = vmatprep.subr.mxu0 0.0
    %2082 = vmatpush1.msra.mxu0 0.0
    %2083 = vmatprep.subr.mxu0 0.0
    %2084 = vmatpush1.msra.mxu0 0.0
    %2085 = vmatprep.subr.mxu0 0.0
    %2086 = vmatpush1.msra.mxu0 0.0
    %2087 = vmatprep.subr.mxu0 0.0
    %2088 = vmatpush1.msra.mxu0 0.0
    %2089 = vmatprep.subr.mxu0 0.0
    %2090 = vmatpush1.msra.mxu0 0.0
    %2091 = vmatprep.subr.mxu0 0.0
    %2092 = vmatpush1.msra.mxu0 0.0
    %2093 = vmatprep.subr.mxu0 0.0
    %2094 = vmatpush1.msra.mxu0 0.0
    %2095 = vmatprep.subr.mxu0 0.0
    %2096 = vmatpush1.msra.mxu0 0.0
    %2097 = vmatprep.subr.mxu0 0.0
    %2098 = vmatpush1.msra.mxu0 0.0
    %2099 = vmatprep.subr.mxu0 0.0
    %2100 = vmatpush1.msra.mxu0 0.0
    %2101 = vmatprep.subr.mxu0 0.0
    %2102 = vmatpush1.msra.mxu0 0.0
    %2103 = vmatprep.subr.mxu0 0.0
    %2104 = vmatpush1.msra.mxu0 0.0
    %2105 = vmatprep.subr.mxu0 0.0
    %2106 = vmatpush1.msra.mxu0 0.0
    %2107 = vmatprep.subr.mxu0 0.0
    %2108 = vmatpush1.msra.mxu0 0.0
    %2109 = vmatprep.subr.mxu0 0.0
    %2110 = vmatpush1.msra.mxu0 0.0
    %2111 = vmatprep.subr.mxu0 0.0
    %2112 = vmatpush1.msra.mxu0 0.0
    %2113 = vmatprep.mubr.f32.mxu0 0.0
    %2114 = vmatmul.mubr.f32.gmra.mrb[0].mxu0 %v2044
    %v2115 = vpop.f32.mrb[0].mxu0
    %v2116 = vadd.f32 %v2041, %v2115
    %v2117 = vpop.f32.mrb[0].mxu0
    %2118 = vmatprep.mubr.f32.mxu0 0.0
    %2119 = vmatmul.mubr.f32.gmra.mrb[0].mxu0 %v2047
    %v2120 = vpop.f32.mrb[0].mxu0
    %v2121 = vadd.f32 %v2041, %v2120
    %v2122 = vpop.f32.mrb[0].mxu0
    %2123 = vdwg.mxu0
    %2125 = vrot.lane.b32.xlu0 %v2116, 96
    %v2126 = vpop.permute.xlu0 %2125
    %v2127 = vsel %vm245, %v2116, 0
    %v2129 = vsel %vm245, %v2126, 0
    %2131 = vmatprep.subr.mxu0 0.0
    %2132 = vmatpush1.xpose.msra.mxu0 %v2129
    %2133 = vmatprep.subr.mxu0 0.0
    %2134 = vmatpush1.xpose.msra.mxu0 0.0
    %2135 = vmatprep.subr.mxu0 0.0
    %2136 = vmatpush1.xpose.msra.mxu0 0.0
    %2137 = vmatprep.subr.mxu0 0.0
    %2138 = vmatpush1.xpose.msra.mxu0 0.0
    %2139 = vmatprep.subr.mxu0 0.0
    %2140 = vmatpush1.xpose.msra.mxu0 0.0
    %2141 = vmatprep.subr.mxu0 0.0
    %2142 = vmatpush1.xpose.msra.mxu0 0.0
    %2143 = vmatprep.subr.mxu0 0.0
    %2144 = vmatpush1.xpose.msra.mxu0 0.0
    %2145 = vmatprep.subr.mxu0 0.0
    %2146 = vmatpush1.xpose.msra.mxu0 0.0
    %2147 = vmatprep.subr.mxu0 0.0
    %2148 = vmatpush1.xpose.msra.mxu0 0.0
    %2149 = vmatprep.subr.mxu0 0.0
    %2150 = vmatpush1.xpose.msra.mxu0 0.0
    %2151 = vmatprep.subr.mxu0 0.0
    %2152 = vmatpush1.xpose.msra.mxu0 0.0
    %2153 = vmatprep.subr.mxu0 0.0
    %2154 = vmatpush1.xpose.msra.mxu0 0.0
    %2155 = vmatprep.subr.mxu0 0.0
    %2156 = vmatpush1.xpose.msra.mxu0 0.0
    %2157 = vmatprep.subr.mxu0 0.0
    %2158 = vmatpush1.xpose.msra.mxu0 0.0
    %2159 = vmatprep.subr.mxu0 0.0
    %2160 = vmatpush1.xpose.msra.mxu0 0.0
    %2161 = vmatprep.subr.mxu0 0.0
    %2162 = vmatpush1.xpose.msra.mxu0 0.0
    %2163 = vmatprep.subr.mxu0 0.0
    %2164 = vmatpush1.xpose.msra.mxu0 0.0
    %2165 = vmatprep.subr.mxu0 0.0
    %2166 = vmatpush1.xpose.msra.mxu0 0.0
    %2167 = vmatprep.subr.mxu0 0.0
    %2168 = vmatpush1.xpose.msra.mxu0 0.0
    %2169 = vmatprep.subr.mxu0 0.0
    %2170 = vmatpush1.xpose.msra.mxu0 0.0
    %2171 = vmatprep.subr.mxu0 0.0
    %2172 = vmatpush1.xpose.msra.mxu0 0.0
    %2173 = vmatprep.subr.mxu0 0.0
    %2174 = vmatpush1.xpose.msra.mxu0 0.0
    %2175 = vmatprep.subr.mxu0 0.0
    %2176 = vmatpush1.xpose.msra.mxu0 0.0
    %2177 = vmatprep.subr.mxu0 0.0
    %2178 = vmatpush1.xpose.msra.mxu0 0.0
    %2179 = vmatprep.subr.mxu0 0.0
    %2180 = vmatpush1.xpose.msra.mxu0 0.0
    %2181 = vmatprep.subr.mxu0 0.0
    %2182 = vmatpush1.xpose.msra.mxu0 0.0
    %2183 = vmatprep.subr.mxu0 0.0
    %2184 = vmatpush1.xpose.msra.mxu0 0.0
    %2185 = vmatprep.subr.mxu0 0.0
    %2186 = vmatpush1.xpose.msra.mxu0 0.0
    %2187 = vmatprep.subr.mxu0 0.0
    %2188 = vmatpush1.xpose.msra.mxu0 0.0
    %2189 = vmatprep.subr.mxu0 0.0
    %2190 = vmatpush1.xpose.msra.mxu0 0.0
    %2191 = vmatprep.subr.mxu0 0.0
    %2192 = vmatpush1.xpose.msra.mxu0 0.0
    %2193 = vmatprep.subr.mxu0 0.0
    %2194 = vmatpush1.xpose.msra.mxu0 0.0
    %2195 = vmatprep.mubr.f32.mxu0 0.0
    %2196 = vmatmul.mubr.f32.gmra.mrb[0].mxu0 %v2127
    %v2197 = vpop.f32.mrb[0].mxu0
    %v2198 = vadd.f32 0.0, %v2197
    %v2199 = vpop.f32.mrb[0].mxu0
    %2200 = vdwg.mxu0
    %2202 = vrot.lane.b32.xlu0 %v2121, 96
    %v2203 = vpop.permute.xlu0 %2202
    %v2204 = vsel %vm245, %v2121, 0
    %v2206 = vsel %vm245, %v2203, 0
    %2208 = vmatprep.subr.mxu0 0.0
    %2209 = vmatpush1.xpose.msra.mxu0 %v2206
    %2210 = vmatprep.subr.mxu0 0.0
    %2211 = vmatpush1.xpose.msra.mxu0 0.0
    %2212 = vmatprep.subr.mxu0 0.0
    %2213 = vmatpush1.xpose.msra.mxu0 0.0
    %2214 = vmatprep.subr.mxu0 0.0
    %2215 = vmatpush1.xpose.msra.mxu0 0.0
    %2216 = vmatprep.subr.mxu0 0.0
    %2217 = vmatpush1.xpose.msra.mxu0 0.0
    %2218 = vmatprep.subr.mxu0 0.0
    %2219 = vmatpush1.xpose.msra.mxu0 0.0
    %2220 = vmatprep.subr.mxu0 0.0
    %2221 = vmatpush1.xpose.msra.mxu0 0.0
    %2222 = vmatprep.subr.mxu0 0.0
    %2223 = vmatpush1.xpose.msra.mxu0 0.0
    %2224 = vmatprep.subr.mxu0 0.0
    %2225 = vmatpush1.xpose.msra.mxu0 0.0
    %2226 = vmatprep.subr.mxu0 0.0
    %2227 = vmatpush1.xpose.msra.mxu0 0.0
    %2228 = vmatprep.subr.mxu0 0.0
    %2229 = vmatpush1.xpose.msra.mxu0 0.0
    %2230 = vmatprep.subr.mxu0 0.0
    %2231 = vmatpush1.xpose.msra.mxu0 0.0
    %2232 = vmatprep.subr.mxu0 0.0
    %2233 = vmatpush1.xpose.msra.mxu0 0.0
    %2234 = vmatprep.subr.mxu0 0.0
    %2235 = vmatpush1.xpose.msra.mxu0 0.0
    %2236 = vmatprep.subr.mxu0 0.0
    %2237 = vmatpush1.xpose.msra.mxu0 0.0
    %2238 = vmatprep.subr.mxu0 0.0
    %2239 = vmatpush1.xpose.msra.mxu0 0.0
    %2240 = vmatprep.subr.mxu0 0.0
    %2241 = vmatpush1.xpose.msra.mxu0 0.0
    %2242 = vmatprep.subr.mxu0 0.0
    %2243 = vmatpush1.xpose.msra.mxu0 0.0
    %2244 = vmatprep.subr.mxu0 0.0
    %2245 = vmatpush1.xpose.msra.mxu0 0.0
    %2246 = vmatprep.subr.mxu0 0.0
    %2247 = vmatpush1.xpose.msra.mxu0 0.0
    %2248 = vmatprep.subr.mxu0 0.0
    %2249 = vmatpush1.xpose.msra.mxu0 0.0
    %2250 = vmatprep.subr.mxu0 0.0
    %2251 = vmatpush1.xpose.msra.mxu0 0.0
    %2252 = vmatprep.subr.mxu0 0.0
    %2253 = vmatpush1.xpose.msra.mxu0 0.0
    %2254 = vmatprep.subr.mxu0 0.0
    %2255 = vmatpush1.xpose.msra.mxu0 0.0
    %2256 = vmatprep.subr.mxu0 0.0
    %2257 = vmatpush1.xpose.msra.mxu0 0.0
    %2258 = vmatprep.subr.mxu0 0.0
    %2259 = vmatpush1.xpose.msra.mxu0 0.0
    %2260 = vmatprep.subr.mxu0 0.0
    %2261 = vmatpush1.xpose.msra.mxu0 0.0
    %2262 = vmatprep.subr.mxu0 0.0
    %2263 = vmatpush1.xpose.msra.mxu0 0.0
    %2264 = vmatprep.subr.mxu0 0.0
    %2265 = vmatpush1.xpose.msra.mxu0 0.0
    %2266 = vmatprep.subr.mxu0 0.0
    %2267 = vmatpush1.xpose.msra.mxu0 0.0
    %2268 = vmatprep.subr.mxu0 0.0
    %2269 = vmatpush1.xpose.msra.mxu0 0.0
    %2270 = vmatprep.subr.mxu0 0.0
    %2271 = vmatpush1.xpose.msra.mxu0 0.0
    %2272 = vmatprep.mubr.f32.mxu0 0.0
    %2273 = vmatmul.mubr.f32.gmra.mrb[0].mxu0 %v2204
    %v2274 = vpop.f32.mrb[0].mxu0
    %v2275 = vadd.f32 0.0, %v2274
    %v2276 = vpop.f32.mrb[0].mxu0
    %2277 = vdwg.mxu0
    %v2278 = vmul.f32 %v2198, 0.35355338
    %v2279 = vmul.f32 %v2275, 0.35355338
    %v2280 = vadd.f32 %v2278, %v402
    %v2281 = vadd.f32 %v2279, %v406
    %v2282 = vsel %vm245, %v2280, -inf
    %2283 = vmax.xlane.f32.xlu0 %v2282
    %v2284 = vpop.xlane.xlu0 %2283
    %v2285 = vsel %vm245, %v2281, -inf
    %2286 = vmax.xlane.f32.xlu0 %v2285
    %v2287 = vpop.xlane.xlu0 %2286
    %v2288 = vsub.f32 %v2280, %v2284
    %v2289 = vsub.f32 %v2281, %v2287
    %v2290 = vmul.f32 %v2288, 1.442695
    %v2291 = vpow.pop %v2290
    %v2292 = vmul.f32 %v2289, 1.442695
    %v2293 = vpow.pop %v2292
    %v2294 = vsel %vm245, %v2291, 0.0
    %2295 = vadd.xlane.f32.xlu0 %v2294
    %v2296 = vpop.xlane.xlu0 %2295
    %v2297 = vsel %vm245, %v2293, 0.0
    %2298 = vadd.xlane.f32.xlu0 %v2297
    %v2299 = vpop.xlane.xlu0 %2298
    %v2300 = vrcp.pop %v2296
    %v2301 = vrcp.pop %v2299
    %v2302 = vmul.f32 %v2291, %v2300
    %v2303 = vmul.f32 %v2293, %v2301
    %2304 = vrot.lane.b32.xlu0 %v2116, 64
    %v2305 = vpop.permute.xlu0 %2304
    %v2308 = vsel %vm245, %v2302, 0
    %2310 = vmatprep.subr.mxu0 0.0
    %2311 = vmatpush1.msra.mxu0 %v2305
    %2312 = vmatprep.subr.mxu0 0.0
    %2313 = vmatpush1.msra.mxu0 0.0
    %2314 = vmatprep.subr.mxu0 0.0
    %2315 = vmatpush1.msra.mxu0 0.0
    %2316 = vmatprep.subr.mxu0 0.0
    %2317 = vmatpush1.msra.mxu0 0.0
    %2318 = vmatprep.subr.mxu0 0.0
    %2319 = vmatpush1.msra.mxu0 0.0
    %2320 = vmatprep.subr.mxu0 0.0
    %2321 = vmatpush1.msra.mxu0 0.0
    %2322 = vmatprep.subr.mxu0 0.0
    %2323 = vmatpush1.msra.mxu0 0.0
    %2324 = vmatprep.subr.mxu0 0.0
    %2325 = vmatpush1.msra.mxu0 0.0
    %2326 = vmatprep.subr.mxu0 0.0
    %2327 = vmatpush1.msra.mxu0 0.0
    %2328 = vmatprep.subr.mxu0 0.0
    %2329 = vmatpush1.msra.mxu0 0.0
    %2330 = vmatprep.subr.mxu0 0.0
    %2331 = vmatpush1.msra.mxu0 0.0
    %2332 = vmatprep.subr.mxu0 0.0
    %2333 = vmatpush1.msra.mxu0 0.0
    %2334 = vmatprep.subr.mxu0 0.0
    %2335 = vmatpush1.msra.mxu0 0.0
    %2336 = vmatprep.subr.mxu0 0.0
    %2337 = vmatpush1.msra.mxu0 0.0
    %2338 = vmatprep.subr.mxu0 0.0
    %2339 = vmatpush1.msra.mxu0 0.0
    %2340 = vmatprep.subr.mxu0 0.0
    %2341 = vmatpush1.msra.mxu0 0.0
    %2342 = vmatprep.subr.mxu0 0.0
    %2343 = vmatpush1.msra.mxu0 0.0
    %2344 = vmatprep.subr.mxu0 0.0
    %2345 = vmatpush1.msra.mxu0 0.0
    %2346 = vmatprep.subr.mxu0 0.0
    %2347 = vmatpush1.msra.mxu0 0.0
    %2348 = vmatprep.subr.mxu0 0.0
    %2349 = vmatpush1.msra.mxu0 0.0
    %2350 = vmatprep.subr.mxu0 0.0
    %2351 = vmatpush1.msra.mxu0 0.0
    %2352 = vmatprep.subr.mxu0 0.0
    %2353 = vmatpush1.msra.mxu0 0.0
    %2354 = vmatprep.subr.mxu0 0.0
    %2355 = vmatpush1.msra.mxu0 0.0
    %2356 = vmatprep.subr.mxu0 0.0
    %2357 = vmatpush1.msra.mxu0 0.0
    %2358 = vmatprep.subr.mxu0 0.0
    %2359 = vmatpush1.msra.mxu0 0.0
    %2360 = vmatprep.subr.mxu0 0.0
    %2361 = vmatpush1.msra.mxu0 0.0
    %2362 = vmatprep.subr.mxu0 0.0
    %2363 = vmatpush1.msra.mxu0 0.0
    %2364 = vmatprep.subr.mxu0 0.0
    %2365 = vmatpush1.msra.mxu0 0.0
    %2366 = vmatprep.subr.mxu0 0.0
    %2367 = vmatpush1.msra.mxu0 0.0
    %2368 = vmatprep.subr.mxu0 0.0
    %2369 = vmatpush1.msra.mxu0 0.0
    %2370 = vmatprep.subr.mxu0 0.0
    %2371 = vmatpush1.msra.mxu0 0.0
    %2372 = vmatprep.subr.mxu0 0.0
    %2373 = vmatpush1.msra.mxu0 0.0
    %2374 = vmatprep.mubr.f32.mxu0 0.0
    %2375 = vmatmul.mubr.f32.gmra.mrb[0].mxu0 %v2308
    %v2376 = vpop.f32.mrb[0].mxu0
    %v2377 = vadd.f32 0.0, %v2376
    %v2378 = vpop.f32.mrb[0].mxu0
    %2379 = vdwg.mxu0
    %2380 = vrot.lane.b32.xlu0 %v2121, 64
    %v2381 = vpop.permute.xlu0 %2380
    %v2384 = vsel %vm245, %v2303, 0
    %2386 = vmatprep.subr.mxu0 0.0
    %2387 = vmatpush1.msra.mxu0 %v2381
    %2388 = vmatprep.subr.mxu0 0.0
    %2389 = vmatpush1.msra.mxu0 0.0
    %2390 = vmatprep.subr.mxu0 0.0
    %2391 = vmatpush1.msra.mxu0 0.0
    %2392 = vmatprep.subr.mxu0 0.0
    %2393 = vmatpush1.msra.mxu0 0.0
    %2394 = vmatprep.subr.mxu0 0.0
    %2395 = vmatpush1.msra.mxu0 0.0
    %2396 = vmatprep.subr.mxu0 0.0
    %2397 = vmatpush1.msra.mxu0 0.0
    %2398 = vmatprep.subr.mxu0 0.0
    %2399 = vmatpush1.msra.mxu0 0.0
    %2400 = vmatprep.subr.mxu0 0.0
    %2401 = vmatpush1.msra.mxu0 0.0
    %2402 = vmatprep.subr.mxu0 0.0
    %2403 = vmatpush1.msra.mxu0 0.0
    %2404 = vmatprep.subr.mxu0 0.0
    %2405 = vmatpush1.msra.mxu0 0.0
    %2406 = vmatprep.subr.mxu0 0.0
    %2407 = vmatpush1.msra.mxu0 0.0
    %2408 = vmatprep.subr.mxu0 0.0
    %2409 = vmatpush1.msra.mxu0 0.0
    %2410 = vmatprep.subr.mxu0 0.0
    %2411 = vmatpush1.msra.mxu0 0.0
    %2412 = vmatprep.subr.mxu0 0.0
    %2413 = vmatpush1.msra.mxu0 0.0
    %2414 = vmatprep.subr.mxu0 0.0
    %2415 = vmatpush1.msra.mxu0 0.0
    %2416 = vmatprep.subr.mxu0 0.0
    %2417 = vmatpush1.msra.mxu0 0.0
    %2418 = vmatprep.subr.mxu0 0.0
    %2419 = vmatpush1.msra.mxu0 0.0
    %2420 = vmatprep.subr.mxu0 0.0
    %2421 = vmatpush1.msra.mxu0 0.0
    %2422 = vmatprep.subr.mxu0 0.0
    %2423 = vmatpush1.msra.mxu0 0.0
    %2424 = vmatprep.subr.mxu0 0.0
    %2425 = vmatpush1.msra.mxu0 0.0
    %2426 = vmatprep.subr.mxu0 0.0
    %2427 = vmatpush1.msra.mxu0 0.0
    %2428 = vmatprep.subr.mxu0 0.0
    %2429 = vmatpush1.msra.mxu0 0.0
    %2430 = vmatprep.subr.mxu0 0.0
    %2431 = vmatpush1.msra.mxu0 0.0
    %2432 = vmatprep.subr.mxu0 0.0
    %2433 = vmatpush1.msra.mxu0 0.0
    %2434 = vmatprep.subr.mxu0 0.0
    %2435 = vmatpush1.msra.mxu0 0.0
    %2436 = vmatprep.subr.mxu0 0.0
    %2437 = vmatpush1.msra.mxu0 0.0
    %2438 = vmatprep.subr.mxu0 0.0
    %2439 = vmatpush1.msra.mxu0 0.0
    %2440 = vmatprep.subr.mxu0 0.0
    %2441 = vmatpush1.msra.mxu0 0.0
    %2442 = vmatprep.subr.mxu0 0.0
    %2443 = vmatpush1.msra.mxu0 0.0
    %2444 = vmatprep.subr.mxu0 0.0
    %2445 = vmatpush1.msra.mxu0 0.0
    %2446 = vmatprep.subr.mxu0 0.0
    %2447 = vmatpush1.msra.mxu0 0.0
    %2448 = vmatprep.subr.mxu0 0.0
    %2449 = vmatpush1.msra.mxu0 0.0
    %2450 = vmatprep.mubr.f32.mxu0 0.0
    %2451 = vmatmul.mubr.f32.gmra.mrb[0].mxu0 %v2384
    %v2452 = vpop.f32.mrb[0].mxu0
    %v2453 = vadd.f32 0.0, %v2452
    %v2454 = vpop.f32.mrb[0].mxu0
    %2455 = vdwg.mxu0
    %2456 = vrot.lane.b32.xlu0 %v2116, 120
    %v2457 = vpop.permute.xlu0 %2456
    %2458 = vrot.lane.b32.xlu0 %v2116, 88
    %v2459 = vpop.permute.xlu0 %2458
    %v2460 = vsel %vm245, %v2457, 0
    %v2462 = vsel %vm245, %v2459, 0
    %2464 = vmatprep.subr.mxu0 0.0
    %2465 = vmatpush1.xpose.msra.mxu0 %v2462
    %2466 = vmatprep.subr.mxu0 0.0
    %2467 = vmatpush1.xpose.msra.mxu0 0.0
    %2468 = vmatprep.subr.mxu0 0.0
    %2469 = vmatpush1.xpose.msra.mxu0 0.0
    %2470 = vmatprep.subr.mxu0 0.0
    %2471 = vmatpush1.xpose.msra.mxu0 0.0
    %2472 = vmatprep.subr.mxu0 0.0
    %2473 = vmatpush1.xpose.msra.mxu0 0.0
    %2474 = vmatprep.subr.mxu0 0.0
    %2475 = vmatpush1.xpose.msra.mxu0 0.0
    %2476 = vmatprep.subr.mxu0 0.0
    %2477 = vmatpush1.xpose.msra.mxu0 0.0
    %2478 = vmatprep.subr.mxu0 0.0
    %2479 = vmatpush1.xpose.msra.mxu0 0.0
    %2480 = vmatprep.subr.mxu0 0.0
    %2481 = vmatpush1.xpose.msra.mxu0 0.0
    %2482 = vmatprep.subr.mxu0 0.0
    %2483 = vmatpush1.xpose.msra.mxu0 0.0
    %2484 = vmatprep.subr.mxu0 0.0
    %2485 = vmatpush1.xpose.msra.mxu0 0.0
    %2486 = vmatprep.subr.mxu0 0.0
    %2487 = vmatpush1.xpose.msra.mxu0 0.0
    %2488 = vmatprep.subr.mxu0 0.0
    %2489 = vmatpush1.xpose.msra.mxu0 0.0
    %2490 = vmatprep.subr.mxu0 0.0
    %2491 = vmatpush1.xpose.msra.mxu0 0.0
    %2492 = vmatprep.subr.mxu0 0.0
    %2493 = vmatpush1.xpose.msra.mxu0 0.0
    %2494 = vmatprep.subr.mxu0 0.0
    %2495 = vmatpush1.xpose.msra.mxu0 0.0
    %2496 = vmatprep.subr.mxu0 0.0
    %2497 = vmatpush1.xpose.msra.mxu0 0.0
    %2498 = vmatprep.subr.mxu0 0.0
    %2499 = vmatpush1.xpose.msra.mxu0 0.0
    %2500 = vmatprep.subr.mxu0 0.0
    %2501 = vmatpush1.xpose.msra.mxu0 0.0
    %2502 = vmatprep.subr.mxu0 0.0
    %2503 = vmatpush1.xpose.msra.mxu0 0.0
    %2504 = vmatprep.subr.mxu0 0.0
    %2505 = vmatpush1.xpose.msra.mxu0 0.0
    %2506 = vmatprep.subr.mxu0 0.0
    %2507 = vmatpush1.xpose.msra.mxu0 0.0
    %2508 = vmatprep.subr.mxu0 0.0
    %2509 = vmatpush1.xpose.msra.mxu0 0.0
    %2510 = vmatprep.subr.mxu0 0.0
    %2511 = vmatpush1.xpose.msra.mxu0 0.0
    %2512 = vmatprep.subr.mxu0 0.0
    %2513 = vmatpush1.xpose.msra.mxu0 0.0
    %2514 = vmatprep.subr.mxu0 0.0
    %2515 = vmatpush1.xpose.msra.mxu0 0.0
    %2516 = vmatprep.subr.mxu0 0.0
    %2517 = vmatpush1.xpose.msra.mxu0 0.0
    %2518 = vmatprep.subr.mxu0 0.0
    %2519 = vmatpush1.xpose.msra.mxu0 0.0
    %2520 = vmatprep.subr.mxu0 0.0
    %2521 = vmatpush1.xpose.msra.mxu0 0.0
    %2522 = vmatprep.subr.mxu0 0.0
    %2523 = vmatpush1.xpose.msra.mxu0 0.0
    %2524 = vmatprep.subr.mxu0 0.0
    %2525 = vmatpush1.xpose.msra.mxu0 0.0
    %2526 = vmatprep.subr.mxu0 0.0
    %2527 = vmatpush1.xpose.msra.mxu0 0.0
    %2528 = vmatprep.mubr.f32.mxu0 0.0
    %2529 = vmatmul.mubr.f32.gmra.mrb[0].mxu0 %v2460
    %v2530 = vpop.f32.mrb[0].mxu0
    %v2531 = vadd.f32 0.0, %v2530
    %v2532 = vpop.f32.mrb[0].mxu0
    %2533 = vdwg.mxu0
    %2534 = vrot.lane.b32.xlu0 %v2121, 120
    %v2535 = vpop.permute.xlu0 %2534
    %2536 = vrot.lane.b32.xlu0 %v2121, 88
    %v2537 = vpop.permute.xlu0 %2536
    %v2538 = vsel %vm245, %v2535, 0
    %v2540 = vsel %vm245, %v2537, 0
    %2542 = vmatprep.subr.mxu0 0.0
    %2543 = vmatpush1.xpose.msra.mxu0 %v2540
    %2544 = vmatprep.subr.mxu0 0.0
    %2545 = vmatpush1.xpose.msra.mxu0 0.0
    %2546 = vmatprep.subr.mxu0 0.0
    %2547 = vmatpush1.xpose.msra.mxu0 0.0
    %2548 = vmatprep.subr.mxu0 0.0
    %2549 = vmatpush1.xpose.msra.mxu0 0.0
    %2550 = vmatprep.subr.mxu0 0.0
    %2551 = vmatpush1.xpose.msra.mxu0 0.0
    %2552 = vmatprep.subr.mxu0 0.0
    %2553 = vmatpush1.xpose.msra.mxu0 0.0
    %2554 = vmatprep.subr.mxu0 0.0
    %2555 = vmatpush1.xpose.msra.mxu0 0.0
    %2556 = vmatprep.subr.mxu0 0.0
    %2557 = vmatpush1.xpose.msra.mxu0 0.0
    %2558 = vmatprep.subr.mxu0 0.0
    %2559 = vmatpush1.xpose.msra.mxu0 0.0
    %2560 = vmatprep.subr.mxu0 0.0
    %2561 = vmatpush1.xpose.msra.mxu0 0.0
    %2562 = vmatprep.subr.mxu0 0.0
    %2563 = vmatpush1.xpose.msra.mxu0 0.0
    %2564 = vmatprep.subr.mxu0 0.0
    %2565 = vmatpush1.xpose.msra.mxu0 0.0
    %2566 = vmatprep.subr.mxu0 0.0
    %2567 = vmatpush1.xpose.msra.mxu0 0.0
    %2568 = vmatprep.subr.mxu0 0.0
    %2569 = vmatpush1.xpose.msra.mxu0 0.0
    %2570 = vmatprep.subr.mxu0 0.0
    %2571 = vmatpush1.xpose.msra.mxu0 0.0
    %2572 = vmatprep.subr.mxu0 0.0
    %2573 = vmatpush1.xpose.msra.mxu0 0.0
    %2574 = vmatprep.subr.mxu0 0.0
    %2575 = vmatpush1.xpose.msra.mxu0 0.0
    %2576 = vmatprep.subr.mxu0 0.0
    %2577 = vmatpush1.xpose.msra.mxu0 0.0
    %2578 = vmatprep.subr.mxu0 0.0
    %2579 = vmatpush1.xpose.msra.mxu0 0.0
    %2580 = vmatprep.subr.mxu0 0.0
    %2581 = vmatpush1.xpose.msra.mxu0 0.0
    %2582 = vmatprep.subr.mxu0 0.0
    %2583 = vmatpush1.xpose.msra.mxu0 0.0
    %2584 = vmatprep.subr.mxu0 0.0
    %2585 = vmatpush1.xpose.msra.mxu0 0.0
    %2586 = vmatprep.subr.mxu0 0.0
    %2587 = vmatpush1.xpose.msra.mxu0 0.0
    %2588 = vmatprep.subr.mxu0 0.0
    %2589 = vmatpush1.xpose.msra.mxu0 0.0
    %2590 = vmatprep.subr.mxu0 0.0
    %2591 = vmatpush1.xpose.msra.mxu0 0.0
    %2592 = vmatprep.subr.mxu0 0.0
    %2593 = vmatpush1.xpose.msra.mxu0 0.0
    %2594 = vmatprep.subr.mxu0 0.0
    %2595 = vmatpush1.xpose.msra.mxu0 0.0
    %2596 = vmatprep.subr.mxu0 0.0
    %2597 = vmatpush1.xpose.msra.mxu0 0.0
    %2598 = vmatprep.subr.mxu0 0.0
    %2599 = vmatpush1.xpose.msra.mxu0 0.0
    %2600 = vmatprep.subr.mxu0 0.0
    %2601 = vmatpush1.xpose.msra.mxu0 0.0
    %2602 = vmatprep.subr.mxu0 0.0
    %2603 = vmatpush1.xpose.msra.mxu0 0.0
    %2604 = vmatprep.subr.mxu0 0.0
    %2605 = vmatpush1.xpose.msra.mxu0 0.0
    %2606 = vmatprep.mubr.f32.mxu0 0.0
    %2607 = vmatmul.mubr.f32.gmra.mrb[0].mxu0 %v2538
    %v2608 = vpop.f32.mrb[0].mxu0
    %v2609 = vadd.f32 0.0, %v2608
    %v2610 = vpop.f32.mrb[0].mxu0
    %2611 = vdwg.mxu0
    %v2612 = vmul.f32 %v2531, 0.35355338
    %v2613 = vmul.f32 %v2609, 0.35355338
    %v2614 = vadd.f32 %v2612, %v402
    %v2615 = vadd.f32 %v2613, %v406
    %v2616 = vsel %vm245, %v2614, -inf
    %2617 = vmax.xlane.f32.xlu0 %v2616
    %v2618 = vpop.xlane.xlu0 %2617
    %v2619 = vsel %vm245, %v2615, -inf
    %2620 = vmax.xlane.f32.xlu0 %v2619
    %v2621 = vpop.xlane.xlu0 %2620
    %v2622 = vsub.f32 %v2614, %v2618
    %v2623 = vsub.f32 %v2615, %v2621
    %v2624 = vmul.f32 %v2622, 1.442695
    %v2625 = vpow.pop %v2624
    %v2626 = vmul.f32 %v2623, 1.442695
    %v2627 = vpow.pop %v2626
    %v2628 = vsel %vm245, %v2625, 0.0
    %2629 = vadd.xlane.f32.xlu0 %v2628
    %v2630 = vpop.xlane.xlu0 %2629
    %v2631 = vsel %vm245, %v2627, 0.0
    %2632 = vadd.xlane.f32.xlu0 %v2631
    %v2633 = vpop.xlane.xlu0 %2632
    %v2634 = vrcp.pop %v2630
    %v2635 = vrcp.pop %v2633
    %v2636 = vmul.f32 %v2625, %v2634
    %v2637 = vmul.f32 %v2627, %v2635
    %2638 = vrot.lane.b32.xlu0 %v2116, 56
    %v2639 = vpop.permute.xlu0 %2638
    %v2642 = vsel %vm245, %v2636, 0
    %2644 = vmatprep.subr.mxu0 0.0
    %2645 = vmatpush1.msra.mxu0 %v2639
    %2646 = vmatprep.subr.mxu0 0.0
    %2647 = vmatpush1.msra.mxu0 0.0
    %2648 = vmatprep.subr.mxu0 0.0
    %2649 = vmatpush1.msra.mxu0 0.0
    %2650 = vmatprep.subr.mxu0 0.0
    %2651 = vmatpush1.msra.mxu0 0.0
    %2652 = vmatprep.subr.mxu0 0.0
    %2653 = vmatpush1.msra.mxu0 0.0
    %2654 = vmatprep.subr.mxu0 0.0
    %2655 = vmatpush1.msra.mxu0 0.0
    %2656 = vmatprep.subr.mxu0 0.0
    %2657 = vmatpush1.msra.mxu0 0.0
    %2658 = vmatprep.subr.mxu0 0.0
    %2659 = vmatpush1.msra.mxu0 0.0
    %2660 = vmatprep.subr.mxu0 0.0
    %2661 = vmatpush1.msra.mxu0 0.0
    %2662 = vmatprep.subr.mxu0 0.0
    %2663 = vmatpush1.msra.mxu0 0.0
    %2664 = vmatprep.subr.mxu0 0.0
    %2665 = vmatpush1.msra.mxu0 0.0
    %2666 = vmatprep.subr.mxu0 0.0
    %2667 = vmatpush1.msra.mxu0 0.0
    %2668 = vmatprep.subr.mxu0 0.0
    %2669 = vmatpush1.msra.mxu0 0.0
    %2670 = vmatprep.subr.mxu0 0.0
    %2671 = vmatpush1.msra.mxu0 0.0
    %2672 = vmatprep.subr.mxu0 0.0
    %2673 = vmatpush1.msra.mxu0 0.0
    %2674 = vmatprep.subr.mxu0 0.0
    %2675 = vmatpush1.msra.mxu0 0.0
    %2676 = vmatprep.subr.mxu0 0.0
    %2677 = vmatpush1.msra.mxu0 0.0
    %2678 = vmatprep.subr.mxu0 0.0
    %2679 = vmatpush1.msra.mxu0 0.0
    %2680 = vmatprep.subr.mxu0 0.0
    %2681 = vmatpush1.msra.mxu0 0.0
    %2682 = vmatprep.subr.mxu0 0.0
    %2683 = vmatpush1.msra.mxu0 0.0
    %2684 = vmatprep.subr.mxu0 0.0
    %2685 = vmatpush1.msra.mxu0 0.0
    %2686 = vmatprep.subr.mxu0 0.0
    %2687 = vmatpush1.msra.mxu0 0.0
    %2688 = vmatprep.subr.mxu0 0.0
    %2689 = vmatpush1.msra.mxu0 0.0
    %2690 = vmatprep.subr.mxu0 0.0
    %2691 = vmatpush1.msra.mxu0 0.0
    %2692 = vmatprep.subr.mxu0 0.0
    %2693 = vmatpush1.msra.mxu0 0.0
    %2694 = vmatprep.subr.mxu0 0.0
    %2695 = vmatpush1.msra.mxu0 0.0
    %2696 = vmatprep.subr.mxu0 0.0
    %2697 = vmatpush1.msra.mxu0 0.0
    %2698 = vmatprep.subr.mxu0 0.0
    %2699 = vmatpush1.msra.mxu0 0.0
    %2700 = vmatprep.subr.mxu0 0.0
    %2701 = vmatpush1.msra.mxu0 0.0
    %2702 = vmatprep.subr.mxu0 0.0
    %2703 = vmatpush1.msra.mxu0 0.0
    %2704 = vmatprep.subr.mxu0 0.0
    %2705 = vmatpush1.msra.mxu0 0.0
    %2706 = vmatprep.subr.mxu0 0.0
    %2707 = vmatpush1.msra.mxu0 0.0
    %2708 = vmatprep.mubr.f32.mxu0 0.0
    %2709 = vmatmul.mubr.f32.gmra.mrb[0].mxu0 %v2642
    %v2710 = vpop.f32.mrb[0].mxu0
    %v2711 = vadd.f32 0.0, %v2710
    %v2712 = vpop.f32.mrb[0].mxu0
    %2713 = vdwg.mxu0
    %2714 = vrot.lane.b32.xlu0 %v2121, 56
    %v2715 = vpop.permute.xlu0 %2714
    %v2718 = vsel %vm245, %v2637, 0
    %2720 = vmatprep.subr.mxu0 0.0
    %2721 = vmatpush1.msra.mxu0 %v2715
    %2722 = vmatprep.subr.mxu0 0.0
    %2723 = vmatpush1.msra.mxu0 0.0
    %2724 = vmatprep.subr.mxu0 0.0
    %2725 = vmatpush1.msra.mxu0 0.0
    %2726 = vmatprep.subr.mxu0 0.0
    %2727 = vmatpush1.msra.mxu0 0.0
    %2728 = vmatprep.subr.mxu0 0.0
    %2729 = vmatpush1.msra.mxu0 0.0
    %2730 = vmatprep.subr.mxu0 0.0
    %2731 = vmatpush1.msra.mxu0 0.0
    %2732 = vmatprep.subr.mxu0 0.0
    %2733 = vmatpush1.msra.mxu0 0.0
    %2734 = vmatprep.subr.mxu0 0.0
    %2735 = vmatpush1.msra.mxu0 0.0
    %2736 = vmatprep.subr.mxu0 0.0
    %2737 = vmatpush1.msra.mxu0 0.0
    %2738 = vmatprep.subr.mxu0 0.0
    %2739 = vmatpush1.msra.mxu0 0.0
    %2740 = vmatprep.subr.mxu0 0.0
    %2741 = vmatpush1.msra.mxu0 0.0
    %2742 = vmatprep.subr.mxu0 0.0
    %2743 = vmatpush1.msra.mxu0 0.0
    %2744 = vmatprep.subr.mxu0 0.0
    %2745 = vmatpush1.msra.mxu0 0.0
    %2746 = vmatprep.subr.mxu0 0.0
    %2747 = vmatpush1.msra.mxu0 0.0
    %2748 = vmatprep.subr.mxu0 0.0
    %2749 = vmatpush1.msra.mxu0 0.0
    %2750 = vmatprep.subr.mxu0 0.0
    %2751 = vmatpush1.msra.mxu0 0.0
    %2752 = vmatprep.subr.mxu0 0.0
    %2753 = vmatpush1.msra.mxu0 0.0
    %2754 = vmatprep.subr.mxu0 0.0
    %2755 = vmatpush1.msra.mxu0 0.0
    %2756 = vmatprep.subr.mxu0 0.0
    %2757 = vmatpush1.msra.mxu0 0.0
    %2758 = vmatprep.subr.mxu0 0.0
    %2759 = vmatpush1.msra.mxu0 0.0
    %2760 = vmatprep.subr.mxu0 0.0
    %2761 = vmatpush1.msra.mxu0 0.0
    %2762 = vmatprep.subr.mxu0 0.0
    %2763 = vmatpush1.msra.mxu0 0.0
    %2764 = vmatprep.subr.mxu0 0.0
    %2765 = vmatpush1.msra.mxu0 0.0
    %2766 = vmatprep.subr.mxu0 0.0
    %2767 = vmatpush1.msra.mxu0 0.0
    %2768 = vmatprep.subr.mxu0 0.0
    %2769 = vmatpush1.msra.mxu0 0.0
    %2770 = vmatprep.subr.mxu0 0.0
    %2771 = vmatpush1.msra.mxu0 0.0
    %2772 = vmatprep.subr.mxu0 0.0
    %2773 = vmatpush1.msra.mxu0 0.0
    %2774 = vmatprep.subr.mxu0 0.0
    %2775 = vmatpush1.msra.mxu0 0.0
    %2776 = vmatprep.subr.mxu0 0.0
    %2777 = vmatpush1.msra.mxu0 0.0
    %2778 = vmatprep.subr.mxu0 0.0
    %2779 = vmatpush1.msra.mxu0 0.0
    %2780 = vmatprep.subr.mxu0 0.0
    %2781 = vmatpush1.msra.mxu0 0.0
    %2782 = vmatprep.subr.mxu0 0.0
    %2783 = vmatpush1.msra.mxu0 0.0
    %2784 = vmatprep.mubr.f32.mxu0 0.0
    %2785 = vmatmul.mubr.f32.gmra.mrb[0].mxu0 %v2718
    %v2786 = vpop.f32.mrb[0].mxu0
    %v2787 = vadd.f32 0.0, %v2786
    %v2788 = vpop.f32.mrb[0].mxu0
    %2789 = vdwg.mxu0
    %2790 = vrot.lane.b32.xlu0 %v2116, 112
    %v2791 = vpop.permute.xlu0 %2790
    %2792 = vrot.lane.b32.xlu0 %v2116, 80
    %v2793 = vpop.permute.xlu0 %2792
    %v2794 = vsel %vm245, %v2791, 0
    %v2796 = vsel %vm245, %v2793, 0
    %2798 = vmatprep.subr.mxu0 0.0
    %2799 = vmatpush1.xpose.msra.mxu0 %v2796
    %2800 = vmatprep.subr.mxu0 0.0
    %2801 = vmatpush1.xpose.msra.mxu0 0.0
    %2802 = vmatprep.subr.mxu0 0.0
    %2803 = vmatpush1.xpose.msra.mxu0 0.0
    %2804 = vmatprep.subr.mxu0 0.0
    %2805 = vmatpush1.xpose.msra.mxu0 0.0
    %2806 = vmatprep.subr.mxu0 0.0
    %2807 = vmatpush1.xpose.msra.mxu0 0.0
    %2808 = vmatprep.subr.mxu0 0.0
    %2809 = vmatpush1.xpose.msra.mxu0 0.0
    %2810 = vmatprep.subr.mxu0 0.0
    %2811 = vmatpush1.xpose.msra.mxu0 0.0
    %2812 = vmatprep.subr.mxu0 0.0
    %2813 = vmatpush1.xpose.msra.mxu0 0.0
    %2814 = vmatprep.subr.mxu0 0.0
    %2815 = vmatpush1.xpose.msra.mxu0 0.0
    %2816 = vmatprep.subr.mxu0 0.0
    %2817 = vmatpush1.xpose.msra.mxu0 0.0
    %2818 = vmatprep.subr.mxu0 0.0
    %2819 = vmatpush1.xpose.msra.mxu0 0.0
    %2820 = vmatprep.subr.mxu0 0.0
    %2821 = vmatpush1.xpose.msra.mxu0 0.0
    %2822 = vmatprep.subr.mxu0 0.0
    %2823 = vmatpush1.xpose.msra.mxu0 0.0
    %2824 = vmatprep.subr.mxu0 0.0
    %2825 = vmatpush1.xpose.msra.mxu0 0.0
    %2826 = vmatprep.subr.mxu0 0.0
    %2827 = vmatpush1.xpose.msra.mxu0 0.0
    %2828 = vmatprep.subr.mxu0 0.0
    %2829 = vmatpush1.xpose.msra.mxu0 0.0
    %2830 = vmatprep.subr.mxu0 0.0
    %2831 = vmatpush1.xpose.msra.mxu0 0.0
    %2832 = vmatprep.subr.mxu0 0.0
    %2833 = vmatpush1.xpose.msra.mxu0 0.0
    %2834 = vmatprep.subr.mxu0 0.0
    %2835 = vmatpush1.xpose.msra.mxu0 0.0
    %2836 = vmatprep.subr.mxu0 0.0
    %2837 = vmatpush1.xpose.msra.mxu0 0.0
    %2838 = vmatprep.subr.mxu0 0.0
    %2839 = vmatpush1.xpose.msra.mxu0 0.0
    %2840 = vmatprep.subr.mxu0 0.0
    %2841 = vmatpush1.xpose.msra.mxu0 0.0
    %2842 = vmatprep.subr.mxu0 0.0
    %2843 = vmatpush1.xpose.msra.mxu0 0.0
    %2844 = vmatprep.subr.mxu0 0.0
    %2845 = vmatpush1.xpose.msra.mxu0 0.0
    %2846 = vmatprep.subr.mxu0 0.0
    %2847 = vmatpush1.xpose.msra.mxu0 0.0
    %2848 = vmatprep.subr.mxu0 0.0
    %2849 = vmatpush1.xpose.msra.mxu0 0.0
    %2850 = vmatprep.subr.mxu0 0.0
    %2851 = vmatpush1.xpose.msra.mxu0 0.0
    %2852 = vmatprep.subr.mxu0 0.0
    %2853 = vmatpush1.xpose.msra.mxu0 0.0
    %2854 = vmatprep.subr.mxu0 0.0
    %2855 = vmatpush1.xpose.msra.mxu0 0.0
    %2856 = vmatprep.subr.mxu0 0.0
    %2857 = vmatpush1.xpose.msra.mxu0 0.0
    %2858 = vmatprep.subr.mxu0 0.0
    %2859 = vmatpush1.xpose.msra.mxu0 0.0
    %2860 = vmatprep.subr.mxu0 0.0
    %2861 = vmatpush1.xpose.msra.mxu0 0.0
    %2862 = vmatprep.mubr.f32.mxu0 0.0
    %2863 = vmatmul.mubr.f32.gmra.mrb[0].mxu0 %v2794
    %v2864 = vpop.f32.mrb[0].mxu0
    %v2865 = vadd.f32 0.0, %v2864
    %v2866 = vpop.f32.mrb[0].mxu0
    %2867 = vdwg.mxu0
    %2868 = vrot.lane.b32.xlu0 %v2121, 112
    %v2869 = vpop.permute.xlu0 %2868
    %2870 = vrot.lane.b32.xlu0 %v2121, 80
    %v2871 = vpop.permute.xlu0 %2870
    %v2872 = vsel %vm245, %v2869, 0
    %v2874 = vsel %vm245, %v2871, 0
    %2876 = vmatprep.subr.mxu0 0.0
    %2877 = vmatpush1.xpose.msra.mxu0 %v2874
    %2878 = vmatprep.subr.mxu0 0.0
    %2879 = vmatpush1.xpose.msra.mxu0 0.0
    %2880 = vmatprep.subr.mxu0 0.0
    %2881 = vmatpush1.xpose.msra.mxu0 0.0
    %2882 = vmatprep.subr.mxu0 0.0
    %2883 = vmatpush1.xpose.msra.mxu0 0.0
    %2884 = vmatprep.subr.mxu0 0.0
    %2885 = vmatpush1.xpose.msra.mxu0 0.0
    %2886 = vmatprep.subr.mxu0 0.0
    %2887 = vmatpush1.xpose.msra.mxu0 0.0
    %2888 = vmatprep.subr.mxu0 0.0
    %2889 = vmatpush1.xpose.msra.mxu0 0.0
    %2890 = vmatprep.subr.mxu0 0.0
    %2891 = vmatpush1.xpose.msra.mxu0 0.0
    %2892 = vmatprep.subr.mxu0 0.0
    %2893 = vmatpush1.xpose.msra.mxu0 0.0
    %2894 = vmatprep.subr.mxu0 0.0
    %2895 = vmatpush1.xpose.msra.mxu0 0.0
    %2896 = vmatprep.subr.mxu0 0.0
    %2897 = vmatpush1.xpose.msra.mxu0 0.0
    %2898 = vmatprep.subr.mxu0 0.0
    %2899 = vmatpush1.xpose.msra.mxu0 0.0
    %2900 = vmatprep.subr.mxu0 0.0
    %2901 = vmatpush1.xpose.msra.mxu0 0.0
    %2902 = vmatprep.subr.mxu0 0.0
    %2903 = vmatpush1.xpose.msra.mxu0 0.0
    %2904 = vmatprep.subr.mxu0 0.0
    %2905 = vmatpush1.xpose.msra.mxu0 0.0
    %2906 = vmatprep.subr.mxu0 0.0
    %2907 = vmatpush1.xpose.msra.mxu0 0.0
    %2908 = vmatprep.subr.mxu0 0.0
    %2909 = vmatpush1.xpose.msra.mxu0 0.0
    %2910 = vmatprep.subr.mxu0 0.0
    %2911 = vmatpush1.xpose.msra.mxu0 0.0
    %2912 = vmatprep.subr.mxu0 0.0
    %2913 = vmatpush1.xpose.msra.mxu0 0.0
    %2914 = vmatprep.subr.mxu0 0.0
    %2915 = vmatpush1.xpose.msra.mxu0 0.0
    %2916 = vmatprep.subr.mxu0 0.0
    %2917 = vmatpush1.xpose.msra.mxu0 0.0
    %2918 = vmatprep.subr.mxu0 0.0
    %2919 = vmatpush1.xpose.msra.mxu0 0.0
    %2920 = vmatprep.subr.mxu0 0.0
    %2921 = vmatpush1.xpose.msra.mxu0 0.0
    %2922 = vmatprep.subr.mxu0 0.0
    %2923 = vmatpush1.xpose.msra.mxu0 0.0
    %2924 = vmatprep.subr.mxu0 0.0
    %2925 = vmatpush1.xpose.msra.mxu0 0.0
    %2926 = vmatprep.subr.mxu0 0.0
    %2927 = vmatpush1.xpose.msra.mxu0 0.0
    %2928 = vmatprep.subr.mxu0 0.0
    %2929 = vmatpush1.xpose.msra.mxu0 0.0
    %2930 = vmatprep.subr.mxu0 0.0
    %2931 = vmatpush1.xpose.msra.mxu0 0.0
    %2932 = vmatprep.subr.mxu0 0.0
    %2933 = vmatpush1.xpose.msra.mxu0 0.0
    %2934 = vmatprep.subr.mxu0 0.0
    %2935 = vmatpush1.xpose.msra.mxu0 0.0
    %2936 = vmatprep.subr.mxu0 0.0
    %2937 = vmatpush1.xpose.msra.mxu0 0.0
    %2938 = vmatprep.subr.mxu0 0.0
    %2939 = vmatpush1.xpose.msra.mxu0 0.0
    %2940 = vmatprep.mubr.f32.mxu0 0.0
    %2941 = vmatmul.mubr.f32.gmra.mrb[0].mxu0 %v2872
    %v2942 = vpop.f32.mrb[0].mxu0
    %v2943 = vadd.f32 0.0, %v2942
    %v2944 = vpop.f32.mrb[0].mxu0
    %2945 = vdwg.mxu0
    %v2946 = vmul.f32 %v2865, 0.35355338
    %v2947 = vmul.f32 %v2943, 0.35355338
    %v2948 = vadd.f32 %v2946, %v402
    %v2949 = vadd.f32 %v2947, %v406
    %v2950 = vsel %vm245, %v2948, -inf
    %2951 = vmax.xlane.f32.xlu0 %v2950
    %v2952 = vpop.xlane.xlu0 %2951
    %v2953 = vsel %vm245, %v2949, -inf
    %2954 = vmax.xlane.f32.xlu0 %v2953
    %v2955 = vpop.xlane.xlu0 %2954
    %v2956 = vsub.f32 %v2948, %v2952
    %v2957 = vsub.f32 %v2949, %v2955
    %v2958 = vmul.f32 %v2956, 1.442695
    %v2959 = vpow.pop %v2958
    %v2960 = vmul.f32 %v2957, 1.442695
    %v2961 = vpow.pop %v2960
    %v2962 = vsel %vm245, %v2959, 0.0
    %2963 = vadd.xlane.f32.xlu0 %v2962
    %v2964 = vpop.xlane.xlu0 %2963
    %v2965 = vsel %vm245, %v2961, 0.0
    %2966 = vadd.xlane.f32.xlu0 %v2965
    %v2967 = vpop.xlane.xlu0 %2966
    %v2968 = vrcp.pop %v2964
    %v2969 = vrcp.pop %v2967
    %v2970 = vmul.f32 %v2959, %v2968
    %v2971 = vmul.f32 %v2961, %v2969
    %2972 = vrot.lane.b32.xlu0 %v2116, 48
    %v2973 = vpop.permute.xlu0 %2972
    %v2976 = vsel %vm245, %v2970, 0
    %2978 = vmatprep.subr.mxu0 0.0
    %2979 = vmatpush1.msra.mxu0 %v2973
    %2980 = vmatprep.subr.mxu0 0.0
    %2981 = vmatpush1.msra.mxu0 0.0
    %2982 = vmatprep.subr.mxu0 0.0
    %2983 = vmatpush1.msra.mxu0 0.0
    %2984 = vmatprep.subr.mxu0 0.0
    %2985 = vmatpush1.msra.mxu0 0.0
    %2986 = vmatprep.subr.mxu0 0.0
    %2987 = vmatpush1.msra.mxu0 0.0
    %2988 = vmatprep.subr.mxu0 0.0
    %2989 = vmatpush1.msra.mxu0 0.0
    %2990 = vmatprep.subr.mxu0 0.0
    %2991 = vmatpush1.msra.mxu0 0.0
    %2992 = vmatprep.subr.mxu0 0.0
    %2993 = vmatpush1.msra.mxu0 0.0
    %2994 = vmatprep.subr.mxu0 0.0
    %2995 = vmatpush1.msra.mxu0 0.0
    %2996 = vmatprep.subr.mxu0 0.0
    %2997 = vmatpush1.msra.mxu0 0.0
    %2998 = vmatprep.subr.mxu0 0.0
    %2999 = vmatpush1.msra.mxu0 0.0
    %3000 = vmatprep.subr.mxu0 0.0
    %3001 = vmatpush1.msra.mxu0 0.0
    %3002 = vmatprep.subr.mxu0 0.0
    %3003 = vmatpush1.msra.mxu0 0.0
    %3004 = vmatprep.subr.mxu0 0.0
    %3005 = vmatpush1.msra.mxu0 0.0
    %3006 = vmatprep.subr.mxu0 0.0
    %3007 = vmatpush1.msra.mxu0 0.0
    %3008 = vmatprep.subr.mxu0 0.0
    %3009 = vmatpush1.msra.mxu0 0.0
    %3010 = vmatprep.subr.mxu0 0.0
    %3011 = vmatpush1.msra.mxu0 0.0
    %3012 = vmatprep.subr.mxu0 0.0
    %3013 = vmatpush1.msra.mxu0 0.0
    %3014 = vmatprep.subr.mxu0 0.0
    %3015 = vmatpush1.msra.mxu0 0.0
    %3016 = vmatprep.subr.mxu0 0.0
    %3017 = vmatpush1.msra.mxu0 0.0
    %3018 = vmatprep.subr.mxu0 0.0
    %3019 = vmatpush1.msra.mxu0 0.0
    %3020 = vmatprep.subr.mxu0 0.0
    %3021 = vmatpush1.msra.mxu0 0.0
    %3022 = vmatprep.subr.mxu0 0.0
    %3023 = vmatpush1.msra.mxu0 0.0
    %3024 = vmatprep.subr.mxu0 0.0
    %3025 = vmatpush1.msra.mxu0 0.0
    %3026 = vmatprep.subr.mxu0 0.0
    %3027 = vmatpush1.msra.mxu0 0.0
    %3028 = vmatprep.subr.mxu0 0.0
    %3029 = vmatpush1.msra.mxu0 0.0
    %3030 = vmatprep.subr.mxu0 0.0
    %3031 = vmatpush1.msra.mxu0 0.0
    %3032 = vmatprep.subr.mxu0 0.0
    %3033 = vmatpush1.msra.mxu0 0.0
    %3034 = vmatprep.subr.mxu0 0.0
    %3035 = vmatpush1.msra.mxu0 0.0
    %3036 = vmatprep.subr.mxu0 0.0
    %3037 = vmatpush1.msra.mxu0 0.0
    %3038 = vmatprep.subr.mxu0 0.0
    %3039 = vmatpush1.msra.mxu0 0.0
    %3040 = vmatprep.subr.mxu0 0.0
    %3041 = vmatpush1.msra.mxu0 0.0
    %3042 = vmatprep.mubr.f32.mxu0 0.0
    %3043 = vmatmul.mubr.f32.gmra.mrb[0].mxu0 %v2976
    %v3044 = vpop.f32.mrb[0].mxu0
    %v3045 = vadd.f32 0.0, %v3044
    %v3046 = vpop.f32.mrb[0].mxu0
    %3047 = vdwg.mxu0
    %3048 = vrot.lane.b32.xlu0 %v2121, 48
    %v3049 = vpop.permute.xlu0 %3048
    %v3052 = vsel %vm245, %v2971, 0
    %3054 = vmatprep.subr.mxu0 0.0
    %3055 = vmatpush1.msra.mxu0 %v3049
    %3056 = vmatprep.subr.mxu0 0.0
    %3057 = vmatpush1.msra.mxu0 0.0
    %3058 = vmatprep.subr.mxu0 0.0
    %3059 = vmatpush1.msra.mxu0 0.0
    %3060 = vmatprep.subr.mxu0 0.0
    %3061 = vmatpush1.msra.mxu0 0.0
    %3062 = vmatprep.subr.mxu0 0.0
    %3063 = vmatpush1.msra.mxu0 0.0
    %3064 = vmatprep.subr.mxu0 0.0
    %3065 = vmatpush1.msra.mxu0 0.0
    %3066 = vmatprep.subr.mxu0 0.0
    %3067 = vmatpush1.msra.mxu0 0.0
    %3068 = vmatprep.subr.mxu0 0.0
    %3069 = vmatpush1.msra.mxu0 0.0
    %3070 = vmatprep.subr.mxu0 0.0
    %3071 = vmatpush1.msra.mxu0 0.0
    %3072 = vmatprep.subr.mxu0 0.0
    %3073 = vmatpush1.msra.mxu0 0.0
    %3074 = vmatprep.subr.mxu0 0.0
    %3075 = vmatpush1.msra.mxu0 0.0
    %3076 = vmatprep.subr.mxu0 0.0
    %3077 = vmatpush1.msra.mxu0 0.0
    %3078 = vmatprep.subr.mxu0 0.0
    %3079 = vmatpush1.msra.mxu0 0.0
    %3080 = vmatprep.subr.mxu0 0.0
    %3081 = vmatpush1.msra.mxu0 0.0
    %3082 = vmatprep.subr.mxu0 0.0
    %3083 = vmatpush1.msra.mxu0 0.0
    %3084 = vmatprep.subr.mxu0 0.0
    %3085 = vmatpush1.msra.mxu0 0.0
    %3086 = vmatprep.subr.mxu0 0.0
    %3087 = vmatpush1.msra.mxu0 0.0
    %3088 = vmatprep.subr.mxu0 0.0
    %3089 = vmatpush1.msra.mxu0 0.0
    %3090 = vmatprep.subr.mxu0 0.0
    %3091 = vmatpush1.msra.mxu0 0.0
    %3092 = vmatprep.subr.mxu0 0.0
    %3093 = vmatpush1.msra.mxu0 0.0
    %3094 = vmatprep.subr.mxu0 0.0
    %3095 = vmatpush1.msra.mxu0 0.0
    %3096 = vmatprep.subr.mxu0 0.0
    %3097 = vmatpush1.msra.mxu0 0.0
    %3098 = vmatprep.subr.mxu0 0.0
    %3099 = vmatpush1.msra.mxu0 0.0
    %3100 = vmatprep.subr.mxu0 0.0
    %3101 = vmatpush1.msra.mxu0 0.0
    %3102 = vmatprep.subr.mxu0 0.0
    %3103 = vmatpush1.msra.mxu0 0.0
    %3104 = vmatprep.subr.mxu0 0.0
    %3105 = vmatpush1.msra.mxu0 0.0
    %3106 = vmatprep.subr.mxu0 0.0
    %3107 = vmatpush1.msra.mxu0 0.0
    %3108 = vmatprep.subr.mxu0 0.0
    %3109 = vmatpush1.msra.mxu0 0.0
    %3110 = vmatprep.subr.mxu0 0.0
    %3111 = vmatpush1.msra.mxu0 0.0
    %3112 = vmatprep.subr.mxu0 0.0
    %3113 = vmatpush1.msra.mxu0 0.0
    %3114 = vmatprep.subr.mxu0 0.0
    %3115 = vmatpush1.msra.mxu0 0.0
    %3116 = vmatprep.subr.mxu0 0.0
    %3117 = vmatpush1.msra.mxu0 0.0
    %3118 = vmatprep.mubr.f32.mxu0 0.0
    %3119 = vmatmul.mubr.f32.gmra.mrb[0].mxu0 %v3052
    %v3120 = vpop.f32.mrb[0].mxu0
    %v3121 = vadd.f32 0.0, %v3120
    %v3122 = vpop.f32.mrb[0].mxu0
    %3123 = vdwg.mxu0
    %3124 = vrot.lane.b32.xlu0 %v2116, 104
    %v3125 = vpop.permute.xlu0 %3124
    %3126 = vrot.lane.b32.xlu0 %v2116, 72
    %v3127 = vpop.permute.xlu0 %3126
    %v3128 = vsel %vm245, %v3125, 0
    %v3130 = vsel %vm245, %v3127, 0
    %3132 = vmatprep.subr.mxu0 0.0
    %3133 = vmatpush1.xpose.msra.mxu0 %v3130
    %3134 = vmatprep.subr.mxu0 0.0
    %3135 = vmatpush1.xpose.msra.mxu0 0.0
    %3136 = vmatprep.subr.mxu0 0.0
    %3137 = vmatpush1.xpose.msra.mxu0 0.0
    %3138 = vmatprep.subr.mxu0 0.0
    %3139 = vmatpush1.xpose.msra.mxu0 0.0
    %3140 = vmatprep.subr.mxu0 0.0
    %3141 = vmatpush1.xpose.msra.mxu0 0.0
    %3142 = vmatprep.subr.mxu0 0.0
    %3143 = vmatpush1.xpose.msra.mxu0 0.0
    %3144 = vmatprep.subr.mxu0 0.0
    %3145 = vmatpush1.xpose.msra.mxu0 0.0
    %3146 = vmatprep.subr.mxu0 0.0
    %3147 = vmatpush1.xpose.msra.mxu0 0.0
    %3148 = vmatprep.subr.mxu0 0.0
    %3149 = vmatpush1.xpose.msra.mxu0 0.0
    %3150 = vmatprep.subr.mxu0 0.0
    %3151 = vmatpush1.xpose.msra.mxu0 0.0
    %3152 = vmatprep.subr.mxu0 0.0
    %3153 = vmatpush1.xpose.msra.mxu0 0.0
    %3154 = vmatprep.subr.mxu0 0.0
    %3155 = vmatpush1.xpose.msra.mxu0 0.0
    %3156 = vmatprep.subr.mxu0 0.0
    %3157 = vmatpush1.xpose.msra.mxu0 0.0
    %3158 = vmatprep.subr.mxu0 0.0
    %3159 = vmatpush1.xpose.msra.mxu0 0.0
    %3160 = vmatprep.subr.mxu0 0.0
    %3161 = vmatpush1.xpose.msra.mxu0 0.0
    %3162 = vmatprep.subr.mxu0 0.0
    %3163 = vmatpush1.xpose.msra.mxu0 0.0
    %3164 = vmatprep.subr.mxu0 0.0
    %3165 = vmatpush1.xpose.msra.mxu0 0.0
    %3166 = vmatprep.subr.mxu0 0.0
    %3167 = vmatpush1.xpose.msra.mxu0 0.0
    %3168 = vmatprep.subr.mxu0 0.0
    %3169 = vmatpush1.xpose.msra.mxu0 0.0
    %3170 = vmatprep.subr.mxu0 0.0
    %3171 = vmatpush1.xpose.msra.mxu0 0.0
    %3172 = vmatprep.subr.mxu0 0.0
    %3173 = vmatpush1.xpose.msra.mxu0 0.0
    %3174 = vmatprep.subr.mxu0 0.0
    %3175 = vmatpush1.xpose.msra.mxu0 0.0
    %3176 = vmatprep.subr.mxu0 0.0
    %3177 = vmatpush1.xpose.msra.mxu0 0.0
    %3178 = vmatprep.subr.mxu0 0.0
    %3179 = vmatpush1.xpose.msra.mxu0 0.0
    %3180 = vmatprep.subr.mxu0 0.0
    %3181 = vmatpush1.xpose.msra.mxu0 0.0
    %3182 = vmatprep.subr.mxu0 0.0
    %3183 = vmatpush1.xpose.msra.mxu0 0.0
    %3184 = vmatprep.subr.mxu0 0.0
    %3185 = vmatpush1.xpose.msra.mxu0 0.0
    %3186 = vmatprep.subr.mxu0 0.0
    %3187 = vmatpush1.xpose.msra.mxu0 0.0
    %3188 = vmatprep.subr.mxu0 0.0
    %3189 = vmatpush1.xpose.msra.mxu0 0.0
    %3190 = vmatprep.subr.mxu0 0.0
    %3191 = vmatpush1.xpose.msra.mxu0 0.0
    %3192 = vmatprep.subr.mxu0 0.0
    %3193 = vmatpush1.xpose.msra.mxu0 0.0
    %3194 = vmatprep.subr.mxu0 0.0
    %3195 = vmatpush1.xpose.msra.mxu0 0.0
    %3196 = vmatprep.mubr.f32.mxu0 0.0
    %3197 = vmatmul.mubr.f32.gmra.mrb[0].mxu0 %v3128
    %v3198 = vpop.f32.mrb[0].mxu0
    %v3199 = vadd.f32 0.0, %v3198
    %v3200 = vpop.f32.mrb[0].mxu0
    %3201 = vdwg.mxu0
    %3202 = vrot.lane.b32.xlu0 %v2121, 104
    %v3203 = vpop.permute.xlu0 %3202
    %3204 = vrot.lane.b32.xlu0 %v2121, 72
    %v3205 = vpop.permute.xlu0 %3204
    %v3206 = vsel %vm245, %v3203, 0
    %v3208 = vsel %vm245, %v3205, 0
    %3210 = vmatprep.subr.mxu0 0.0
    %3211 = vmatpush1.xpose.msra.mxu0 %v3208
    %3212 = vmatprep.subr.mxu0 0.0
    %3213 = vmatpush1.xpose.msra.mxu0 0.0
    %3214 = vmatprep.subr.mxu0 0.0
    %3215 = vmatpush1.xpose.msra.mxu0 0.0
    %3216 = vmatprep.subr.mxu0 0.0
    %3217 = vmatpush1.xpose.msra.mxu0 0.0
    %3218 = vmatprep.subr.mxu0 0.0
    %3219 = vmatpush1.xpose.msra.mxu0 0.0
    %3220 = vmatprep.subr.mxu0 0.0
    %3221 = vmatpush1.xpose.msra.mxu0 0.0
    %3222 = vmatprep.subr.mxu0 0.0
    %3223 = vmatpush1.xpose.msra.mxu0 0.0
    %3224 = vmatprep.subr.mxu0 0.0
    %3225 = vmatpush1.xpose.msra.mxu0 0.0
    %3226 = vmatprep.subr.mxu0 0.0
    %3227 = vmatpush1.xpose.msra.mxu0 0.0
    %3228 = vmatprep.subr.mxu0 0.0
    %3229 = vmatpush1.xpose.msra.mxu0 0.0
    %3230 = vmatprep.subr.mxu0 0.0
    %3231 = vmatpush1.xpose.msra.mxu0 0.0
    %3232 = vmatprep.subr.mxu0 0.0
    %3233 = vmatpush1.xpose.msra.mxu0 0.0
    %3234 = vmatprep.subr.mxu0 0.0
    %3235 = vmatpush1.xpose.msra.mxu0 0.0
    %3236 = vmatprep.subr.mxu0 0.0
    %3237 = vmatpush1.xpose.msra.mxu0 0.0
    %3238 = vmatprep.subr.mxu0 0.0
    %3239 = vmatpush1.xpose.msra.mxu0 0.0
    %3240 = vmatprep.subr.mxu0 0.0
    %3241 = vmatpush1.xpose.msra.mxu0 0.0
    %3242 = vmatprep.subr.mxu0 0.0
    %3243 = vmatpush1.xpose.msra.mxu0 0.0
    %3244 = vmatprep.subr.mxu0 0.0
    %3245 = vmatpush1.xpose.msra.mxu0 0.0
    %3246 = vmatprep.subr.mxu0 0.0
    %3247 = vmatpush1.xpose.msra.mxu0 0.0
    %3248 = vmatprep.subr.mxu0 0.0
    %3249 = vmatpush1.xpose.msra.mxu0 0.0
    %3250 = vmatprep.subr.mxu0 0.0
    %3251 = vmatpush1.xpose.msra.mxu0 0.0
    %3252 = vmatprep.subr.mxu0 0.0
    %3253 = vmatpush1.xpose.msra.mxu0 0.0
    %3254 = vmatprep.subr.mxu0 0.0
    %3255 = vmatpush1.xpose.msra.mxu0 0.0
    %3256 = vmatprep.subr.mxu0 0.0
    %3257 = vmatpush1.xpose.msra.mxu0 0.0
    %3258 = vmatprep.subr.mxu0 0.0
    %3259 = vmatpush1.xpose.msra.mxu0 0.0
    %3260 = vmatprep.subr.mxu0 0.0
    %3261 = vmatpush1.xpose.msra.mxu0 0.0
    %3262 = vmatprep.subr.mxu0 0.0
    %3263 = vmatpush1.xpose.msra.mxu0 0.0
    %3264 = vmatprep.subr.mxu0 0.0
    %3265 = vmatpush1.xpose.msra.mxu0 0.0
    %3266 = vmatprep.subr.mxu0 0.0
    %3267 = vmatpush1.xpose.msra.mxu0 0.0
    %3268 = vmatprep.subr.mxu0 0.0
    %3269 = vmatpush1.xpose.msra.mxu0 0.0
    %3270 = vmatprep.subr.mxu0 0.0
    %3271 = vmatpush1.xpose.msra.mxu0 0.0
    %3272 = vmatprep.subr.mxu0 0.0
    %3273 = vmatpush1.xpose.msra.mxu0 0.0
    %3274 = vmatprep.mubr.f32.mxu0 0.0
    %3275 = vmatmul.mubr.f32.gmra.mrb[0].mxu0 %v3206
    %v3276 = vpop.f32.mrb[0].mxu0
    %v3277 = vadd.f32 0.0, %v3276
    %v3278 = vpop.f32.mrb[0].mxu0
    %3279 = vdwg.mxu0
    %v3280 = vmul.f32 %v3199, 0.35355338
    %v3281 = vmul.f32 %v3277, 0.35355338
    %v3282 = vadd.f32 %v3280, %v402
    %v3283 = vadd.f32 %v3281, %v406
    %v3284 = vsel %vm245, %v3282, -inf
    %3285 = vmax.xlane.f32.xlu0 %v3284
    %v3286 = vpop.xlane.xlu0 %3285
    %v3287 = vsel %vm245, %v3283, -inf
    %3288 = vmax.xlane.f32.xlu0 %v3287
    %v3289 = vpop.xlane.xlu0 %3288
    %v3290 = vsub.f32 %v3282, %v3286
    %v3291 = vsub.f32 %v3283, %v3289
    %v3292 = vmul.f32 %v3290, 1.442695
    %v3293 = vpow.pop %v3292
    %v3294 = vmul.f32 %v3291, 1.442695
    %v3295 = vpow.pop %v3294
    %v3296 = vsel %vm245, %v3293, 0.0
    %3297 = vadd.xlane.f32.xlu0 %v3296
    %v3298 = vpop.xlane.xlu0 %3297
    %v3299 = vsel %vm245, %v3295, 0.0
    %3300 = vadd.xlane.f32.xlu0 %v3299
    %v3301 = vpop.xlane.xlu0 %3300
    %v3302 = vrcp.pop %v3298
    %v3303 = vrcp.pop %v3301
    %v3304 = vmul.f32 %v3293, %v3302
    %v3305 = vmul.f32 %v3295, %v3303
    %3306 = vrot.lane.b32.xlu0 %v2116, 40
    %v3307 = vpop.permute.xlu0 %3306
    %v3310 = vsel %vm245, %v3304, 0
    %3312 = vmatprep.subr.mxu0 0.0
    %3313 = vmatpush1.msra.mxu0 %v3307
    %3314 = vmatprep.subr.mxu0 0.0
    %3315 = vmatpush1.msra.mxu0 0.0
    %3316 = vmatprep.subr.mxu0 0.0
    %3317 = vmatpush1.msra.mxu0 0.0
    %3318 = vmatprep.subr.mxu0 0.0
    %3319 = vmatpush1.msra.mxu0 0.0
    %3320 = vmatprep.subr.mxu0 0.0
    %3321 = vmatpush1.msra.mxu0 0.0
    %3322 = vmatprep.subr.mxu0 0.0
    %3323 = vmatpush1.msra.mxu0 0.0
    %3324 = vmatprep.subr.mxu0 0.0
    %3325 = vmatpush1.msra.mxu0 0.0
    %3326 = vmatprep.subr.mxu0 0.0
    %3327 = vmatpush1.msra.mxu0 0.0
    %3328 = vmatprep.subr.mxu0 0.0
    %3329 = vmatpush1.msra.mxu0 0.0
    %3330 = vmatprep.subr.mxu0 0.0
    %3331 = vmatpush1.msra.mxu0 0.0
    %3332 = vmatprep.subr.mxu0 0.0
    %3333 = vmatpush1.msra.mxu0 0.0
    %3334 = vmatprep.subr.mxu0 0.0
    %3335 = vmatpush1.msra.mxu0 0.0
    %3336 = vmatprep.subr.mxu0 0.0
    %3337 = vmatpush1.msra.mxu0 0.0
    %3338 = vmatprep.subr.mxu0 0.0
    %3339 = vmatpush1.msra.mxu0 0.0
    %3340 = vmatprep.subr.mxu0 0.0
    %3341 = vmatpush1.msra.mxu0 0.0
    %3342 = vmatprep.subr.mxu0 0.0
    %3343 = vmatpush1.msra.mxu0 0.0
    %3344 = vmatprep.subr.mxu0 0.0
    %3345 = vmatpush1.msra.mxu0 0.0
    %3346 = vmatprep.subr.mxu0 0.0
    %3347 = vmatpush1.msra.mxu0 0.0
    %3348 = vmatprep.subr.mxu0 0.0
    %3349 = vmatpush1.msra.mxu0 0.0
    %3350 = vmatprep.subr.mxu0 0.0
    %3351 = vmatpush1.msra.mxu0 0.0
    %3352 = vmatprep.subr.mxu0 0.0
    %3353 = vmatpush1.msra.mxu0 0.0
    %3354 = vmatprep.subr.mxu0 0.0
    %3355 = vmatpush1.msra.mxu0 0.0
    %3356 = vmatprep.subr.mxu0 0.0
    %3357 = vmatpush1.msra.mxu0 0.0
    %3358 = vmatprep.subr.mxu0 0.0
    %3359 = vmatpush1.msra.mxu0 0.0
    %3360 = vmatprep.subr.mxu0 0.0
    %3361 = vmatpush1.msra.mxu0 0.0
    %3362 = vmatprep.subr.mxu0 0.0
    %3363 = vmatpush1.msra.mxu0 0.0
    %3364 = vmatprep.subr.mxu0 0.0
    %3365 = vmatpush1.msra.mxu0 0.0
    %3366 = vmatprep.subr.mxu0 0.0
    %3367 = vmatpush1.msra.mxu0 0.0
    %3368 = vmatprep.subr.mxu0 0.0
    %3369 = vmatpush1.msra.mxu0 0.0
    %3370 = vmatprep.subr.mxu0 0.0
    %3371 = vmatpush1.msra.mxu0 0.0
    %3372 = vmatprep.subr.mxu0 0.0
    %3373 = vmatpush1.msra.mxu0 0.0
    %3374 = vmatprep.subr.mxu0 0.0
    %3375 = vmatpush1.msra.mxu0 0.0
    %3376 = vmatprep.mubr.f32.mxu0 0.0
    %3377 = vmatmul.mubr.f32.gmra.mrb[0].mxu0 %v3310
    %v3378 = vpop.f32.mrb[0].mxu0
    %v3379 = vadd.f32 0.0, %v3378
    %v3380 = vpop.f32.mrb[0].mxu0
    %3381 = vdwg.mxu0
    %3382 = vrot.lane.b32.xlu0 %v2121, 40
    %v3383 = vpop.permute.xlu0 %3382
    %v3386 = vsel %vm245, %v3305, 0
    %3388 = vmatprep.subr.mxu0 0.0
    %3389 = vmatpush1.msra.mxu0 %v3383
    %3390 = vmatprep.subr.mxu0 0.0
    %3391 = vmatpush1.msra.mxu0 0.0
    %3392 = vmatprep.subr.mxu0 0.0
    %3393 = vmatpush1.msra.mxu0 0.0
    %3394 = vmatprep.subr.mxu0 0.0
    %3395 = vmatpush1.msra.mxu0 0.0
    %3396 = vmatprep.subr.mxu0 0.0
    %3397 = vmatpush1.msra.mxu0 0.0
    %3398 = vmatprep.subr.mxu0 0.0
    %3399 = vmatpush1.msra.mxu0 0.0
    %3400 = vmatprep.subr.mxu0 0.0
    %3401 = vmatpush1.msra.mxu0 0.0
    %3402 = vmatprep.subr.mxu0 0.0
    %3403 = vmatpush1.msra.mxu0 0.0
    %3404 = vmatprep.subr.mxu0 0.0
    %3405 = vmatpush1.msra.mxu0 0.0
    %3406 = vmatprep.subr.mxu0 0.0
    %3407 = vmatpush1.msra.mxu0 0.0
    %3408 = vmatprep.subr.mxu0 0.0
    %3409 = vmatpush1.msra.mxu0 0.0
    %3410 = vmatprep.subr.mxu0 0.0
    %3411 = vmatpush1.msra.mxu0 0.0
    %3412 = vmatprep.subr.mxu0 0.0
    %3413 = vmatpush1.msra.mxu0 0.0
    %3414 = vmatprep.subr.mxu0 0.0
    %3415 = vmatpush1.msra.mxu0 0.0
    %3416 = vmatprep.subr.mxu0 0.0
    %3417 = vmatpush1.msra.mxu0 0.0
    %3418 = vmatprep.subr.mxu0 0.0
    %3419 = vmatpush1.msra.mxu0 0.0
    %3420 = vmatprep.subr.mxu0 0.0
    %3421 = vmatpush1.msra.mxu0 0.0
    %3422 = vmatprep.subr.mxu0 0.0
    %3423 = vmatpush1.msra.mxu0 0.0
    %3424 = vmatprep.subr.mxu0 0.0
    %3425 = vmatpush1.msra.mxu0 0.0
    %3426 = vmatprep.subr.mxu0 0.0
    %3427 = vmatpush1.msra.mxu0 0.0
    %3428 = vmatprep.subr.mxu0 0.0
    %3429 = vmatpush1.msra.mxu0 0.0
    %3430 = vmatprep.subr.mxu0 0.0
    %3431 = vmatpush1.msra.mxu0 0.0
    %3432 = vmatprep.subr.mxu0 0.0
    %3433 = vmatpush1.msra.mxu0 0.0
    %3434 = vmatprep.subr.mxu0 0.0
    %3435 = vmatpush1.msra.mxu0 0.0
    %3436 = vmatprep.subr.mxu0 0.0
    %3437 = vmatpush1.msra.mxu0 0.0
    %3438 = vmatprep.subr.mxu0 0.0
    %3439 = vmatpush1.msra.mxu0 0.0
    %3440 = vmatprep.subr.mxu0 0.0
    %3441 = vmatpush1.msra.mxu0 0.0
    %3442 = vmatprep.subr.mxu0 0.0
    %3443 = vmatpush1.msra.mxu0 0.0
    %3444 = vmatprep.subr.mxu0 0.0
    %3445 = vmatpush1.msra.mxu0 0.0
    %3446 = vmatprep.subr.mxu0 0.0
    %3447 = vmatpush1.msra.mxu0 0.0
    %3448 = vmatprep.subr.mxu0 0.0
    %3449 = vmatpush1.msra.mxu0 0.0
    %3450 = vmatprep.subr.mxu0 0.0
    %3451 = vmatpush1.msra.mxu0 0.0
    %3452 = vmatprep.mubr.f32.mxu0 0.0
    %3453 = vmatmul.mubr.f32.gmra.mrb[0].mxu0 %v3386
    %v3454 = vpop.f32.mrb[0].mxu0
    %v3455 = vadd.f32 0.0, %v3454
    %v3456 = vpop.f32.mrb[0].mxu0
    %3457 = vdwg.mxu0
    %3460 = vrot.lane.b32.xlu0 %v2711, 8
    %v3461 = vpop.permute.xlu0 %3460
    %3462 = vrot.lane.b32.xlu0 %v2787, 8
    %v3463 = vpop.permute.xlu0 %3462
    %3468 = vrot.lane.b32.xlu0 %v3045, 16
    %v3469 = vpop.permute.xlu0 %3468
    %3470 = vrot.lane.b32.xlu0 %v3121, 16
    %v3471 = vpop.permute.xlu0 %3470
    %3476 = vrot.lane.b32.xlu0 %v3379, 24
    %v3477 = vpop.permute.xlu0 %3476
    %3478 = vrot.lane.b32.xlu0 %v3455, 24
    %v3479 = vpop.permute.xlu0 %3478
    %v3482 = vsel %vm245, %v2377, %v3461
    %v3483 = vsel %vm245, %v2453, %v3463
    %v3484 = vsel %vm1613, %v3482, %v3469
    %v3485 = vsel %vm1613, %v3483, %v3471
    %v3486 = vsel %vm1616, %v3484, %v3477
    %v3487 = vsel %vm1616, %v3485, %v3479
    %s3488 = scalar_lea.vmem %s8, 32
    %v3489 = vld [vmem:[%s3488] sm:$0xff]
    %v3490 = vld [vmem:[%s3488 + $0x8] sm:$0xff]
    %v3491 = vld [vmem:[%s3488 + $0x10] sm:$0xff]
    %v3492 = vld [vmem:[%s3488 + $0x18] sm:$0xff]
    %s3493 = scalar_lea.vmem %s9, 1
    %v3494 = vld [vmem:[%s3493] sm:$0x1]
    %v3496 = vlaneseq
    %v3497 = vshrl.u32 %v3496, 7
    %v3498 = vsub.s32 0, %v3497
    %v3499 = vrot.slane %v3494, %v3498
    %v3502 = vsel %vm106, %v3486, 0
    %v3505 = vsel %vm106, %v3487, 0
    %3507 = vmatprep.subr.mxu0 0.0
    %3508 = vmatpush1.msra.mxu0 %v3489
    %3509 = vmatprep.subr.mxu0 0.0
    %3510 = vmatpush1.msra.mxu0 %v3490
    %3511 = vmatprep.subr.mxu0 0.0
    %3512 = vmatpush1.msra.mxu0 %v3491
    %3513 = vmatprep.subr.mxu0 0.0
    %3514 = vmatpush1.msra.mxu0 %v3492
    %3515 = vmatprep.subr.mxu0 0.0
    %3516 = vmatpush1.msra.mxu0 0.0
    %3517 = vmatprep.subr.mxu0 0.0
    %3518 = vmatpush1.msra.mxu0 0.0
    %3519 = vmatprep.subr.mxu0 0.0
    %3520 = vmatpush1.msra.mxu0 0.0
    %3521 = vmatprep.subr.mxu0 0.0
    %3522 = vmatpush1.msra.mxu0 0.0
    %3523 = vmatprep.subr.mxu0 0.0
    %3524 = vmatpush1.msra.mxu0 0.0
    %3525 = vmatprep.subr.mxu0 0.0
    %3526 = vmatpush1.msra.mxu0 0.0
    %3527 = vmatprep.subr.mxu0 0.0
    %3528 = vmatpush1.msra.mxu0 0.0
    %3529 = vmatprep.subr.mxu0 0.0
    %3530 = vmatpush1.msra.mxu0 0.0
    %3531 = vmatprep.subr.mxu0 0.0
    %3532 = vmatpush1.msra.mxu0 0.0
    %3533 = vmatprep.subr.mxu0 0.0
    %3534 = vmatpush1.msra.mxu0 0.0
    %3535 = vmatprep.subr.mxu0 0.0
    %3536 = vmatpush1.msra.mxu0 0.0
    %3537 = vmatprep.subr.mxu0 0.0
    %3538 = vmatpush1.msra.mxu0 0.0
    %3539 = vmatprep.subr.mxu0 0.0
    %3540 = vmatpush1.msra.mxu0 0.0
    %3541 = vmatprep.subr.mxu0 0.0
    %3542 = vmatpush1.msra.mxu0 0.0
    %3543 = vmatprep.subr.mxu0 0.0
    %3544 = vmatpush1.msra.mxu0 0.0
    %3545 = vmatprep.subr.mxu0 0.0
    %3546 = vmatpush1.msra.mxu0 0.0
    %3547 = vmatprep.subr.mxu0 0.0
    %3548 = vmatpush1.msra.mxu0 0.0
    %3549 = vmatprep.subr.mxu0 0.0
    %3550 = vmatpush1.msra.mxu0 0.0
    %3551 = vmatprep.subr.mxu0 0.0
    %3552 = vmatpush1.msra.mxu0 0.0
    %3553 = vmatprep.subr.mxu0 0.0
    %3554 = vmatpush1.msra.mxu0 0.0
    %3555 = vmatprep.subr.mxu0 0.0
    %3556 = vmatpush1.msra.mxu0 0.0
    %3557 = vmatprep.subr.mxu0 0.0
    %3558 = vmatpush1.msra.mxu0 0.0
    %3559 = vmatprep.subr.mxu0 0.0
    %3560 = vmatpush1.msra.mxu0 0.0
    %3561 = vmatprep.subr.mxu0 0.0
    %3562 = vmatpush1.msra.mxu0 0.0
    %3563 = vmatprep.subr.mxu0 0.0
    %3564 = vmatpush1.msra.mxu0 0.0
    %3565 = vmatprep.subr.mxu0 0.0
    %3566 = vmatpush1.msra.mxu0 0.0
    %3567 = vmatprep.subr.mxu0 0.0
    %3568 = vmatpush1.msra.mxu0 0.0
    %3569 = vmatprep.subr.mxu0 0.0
    %3570 = vmatpush1.msra.mxu0 0.0
    %3571 = vmatprep.mubr.f32.mxu0 0.0
    %3572 = vmatmul.mubr.f32.gmra.mrb[0].mxu0 %v3502
    %v3573 = vpop.f32.mrb[0].mxu0
    %v3574 = vadd.f32 %v3499, %v3573
    %v3575 = vpop.f32.mrb[0].mxu0
    %3576 = vmatprep.mubr.f32.mxu0 0.0
    %3577 = vmatmul.mubr.f32.gmra.mrb[0].mxu0 %v3505
    %v3578 = vpop.f32.mrb[0].mxu0
    %v3579 = vadd.f32 %v3499, %v3578
    %v3580 = vpop.f32.mrb[0].mxu0
    %3581 = vdwg.mxu0
    %v3582 = vadd.f32 %v2009, %v3574
    %v3583 = vadd.f32 %v2010, %v3579
    %s3584 = scalar_lea.vmem %s10, 1
    %v3585 = vld [vmem:[%s3584] sm:$0x1]
    %s3586 = scalar_lea.vmem %s11, 1
    %v3587 = vld [vmem:[%s3586] sm:$0x1]
    %v3588 = vsel %vm106, %v3582, 0.0
    %3589 = vadd.xlane.f32.xlu0 %v3588
    %v3590 = vpop.xlane.xlu0 %3589
    %v3591 = vsel %vm106, %v3583, 0.0
    %3592 = vadd.xlane.f32.xlu0 %v3591
    %v3593 = vpop.xlane.xlu0 %3592
    %v3594 = vmul.f32 %v3590, %v113
    %v3595 = vmul.f32 %v3593, %v113
    %v3596 = vsub.f32 %v3582, %v3594
    %v3597 = vsub.f32 %v3583, %v3595
    %v3598 = vmul.f32 %v3596, %v3596
    %v3599 = vmul.f32 %v3597, %v3597
    %v3600 = vsel %vm106, %v3598, 0.0
    %3601 = vadd.xlane.f32.xlu0 %v3600
    %v3602 = vpop.xlane.xlu0 %3601
    %v3603 = vsel %vm106, %v3599, 0.0
    %3604 = vadd.xlane.f32.xlu0 %v3603
    %v3605 = vpop.xlane.xlu0 %3604
    %v3606 = vmul.f32 %v3602, %v113
    %v3607 = vmul.f32 %v3605, %v113
    %v3608 = vadd.f32 %v3606, 1e-12
    %v3609 = vadd.f32 %v3607, 1e-12
    %v3610 = vrsqrt.pop %v3608
    %v3611 = vrsqrt.pop %v3609
    %v3612 = vmul.f32 %v3596, %v3610
    %v3613 = vmul.f32 %v3597, %v3611
    %v3615 = vlaneseq
    %v3616 = vshrl.u32 %v3615, 7
    %v3617 = vsub.s32 0, %v3616
    %v3618 = vrot.slane %v3585, %v3617
    %v3620 = vmul.f32 %v3612, %v3618
    %v3621 = vmul.f32 %v3613, %v3618
    %v3623 = vlaneseq
    %v3624 = vshrl.u32 %v3623, 7
    %v3625 = vsub.s32 0, %v3624
    %v3626 = vrot.slane %v3587, %v3625
    %v3628 = vadd.f32 %v3620, %v3626
    %v3629 = vadd.f32 %v3621, %v3626
    %s3630 = scalar_lea.vmem %s12, 32
    %v3631 = vld [vmem:[%s3630] sm:$0xff]
    %v3632 = vld [vmem:[%s3630 + $0x8] sm:$0xff]
    %v3633 = vld [vmem:[%s3630 + $0x10] sm:$0xff]
    %v3634 = vld [vmem:[%s3630 + $0x18] sm:$0xff]
    %s3635 = scalar_lea.vmem %s13, 1
    %v3636 = vld [vmem:[%s3635] sm:$0x1]
    %v3638 = vlaneseq
    %v3639 = vshrl.u32 %v3638, 7
    %v3640 = vsub.s32 0, %v3639
    %v3641 = vrot.slane %v3636, %v3640
    %v3644 = vsel %vm106, %v3628, 0
    %v3647 = vsel %vm106, %v3629, 0
    %3649 = vmatprep.subr.mxu0 0.0
    %3650 = vmatpush1.msra.mxu0 %v3631
    %3651 = vmatprep.subr.mxu0 0.0
    %3652 = vmatpush1.msra.mxu0 %v3632
    %3653 = vmatprep.subr.mxu0 0.0
    %3654 = vmatpush1.msra.mxu0 %v3633
    %3655 = vmatprep.subr.mxu0 0.0
    %3656 = vmatpush1.msra.mxu0 %v3634
    %3657 = vmatprep.subr.mxu0 0.0
    %3658 = vmatpush1.msra.mxu0 0.0
    %3659 = vmatprep.subr.mxu0 0.0
    %3660 = vmatpush1.msra.mxu0 0.0
    %3661 = vmatprep.subr.mxu0 0.0
    %3662 = vmatpush1.msra.mxu0 0.0
    %3663 = vmatprep.subr.mxu0 0.0
    %3664 = vmatpush1.msra.mxu0 0.0
    %3665 = vmatprep.subr.mxu0 0.0
    %3666 = vmatpush1.msra.mxu0 0.0
    %3667 = vmatprep.subr.mxu0 0.0
    %3668 = vmatpush1.msra.mxu0 0.0
    %3669 = vmatprep.subr.mxu0 0.0
    %3670 = vmatpush1.msra.mxu0 0.0
    %3671 = vmatprep.subr.mxu0 0.0
    %3672 = vmatpush1.msra.mxu0 0.0
    %3673 = vmatprep.subr.mxu0 0.0
    %3674 = vmatpush1.msra.mxu0 0.0
    %3675 = vmatprep.subr.mxu0 0.0
    %3676 = vmatpush1.msra.mxu0 0.0
    %3677 = vmatprep.subr.mxu0 0.0
    %3678 = vmatpush1.msra.mxu0 0.0
    %3679 = vmatprep.subr.mxu0 0.0
    %3680 = vmatpush1.msra.mxu0 0.0
    %3681 = vmatprep.subr.mxu0 0.0
    %3682 = vmatpush1.msra.mxu0 0.0
    %3683 = vmatprep.subr.mxu0 0.0
    %3684 = vmatpush1.msra.mxu0 0.0
    %3685 = vmatprep.subr.mxu0 0.0
    %3686 = vmatpush1.msra.mxu0 0.0
    %3687 = vmatprep.subr.mxu0 0.0
    %3688 = vmatpush1.msra.mxu0 0.0
    %3689 = vmatprep.subr.mxu0 0.0
    %3690 = vmatpush1.msra.mxu0 0.0
    %3691 = vmatprep.subr.mxu0 0.0
    %3692 = vmatpush1.msra.mxu0 0.0
    %3693 = vmatprep.subr.mxu0 0.0
    %3694 = vmatpush1.msra.mxu0 0.0
    %3695 = vmatprep.subr.mxu0 0.0
    %3696 = vmatpush1.msra.mxu0 0.0
    %3697 = vmatprep.subr.mxu0 0.0
    %3698 = vmatpush1.msra.mxu0 0.0
    %3699 = vmatprep.subr.mxu0 0.0
    %3700 = vmatpush1.msra.mxu0 0.0
    %3701 = vmatprep.subr.mxu0 0.0
    %3702 = vmatpush1.msra.mxu0 0.0
    %3703 = vmatprep.subr.mxu0 0.0
    %3704 = vmatpush1.msra.mxu0 0.0
    %3705 = vmatprep.subr.mxu0 0.0
    %3706 = vmatpush1.msra.mxu0 0.0
    %3707 = vmatprep.subr.mxu0 0.0
    %3708 = vmatpush1.msra.mxu0 0.0
    %3709 = vmatprep.subr.mxu0 0.0
    %3710 = vmatpush1.msra.mxu0 0.0
    %3711 = vmatprep.subr.mxu0 0.0
    %3712 = vmatpush1.msra.mxu0 0.0
    %3713 = vmatprep.mubr.f32.mxu0 0.0
    %3714 = vmatmul.mubr.f32.gmra.mrb[0].mxu0 %v3644
    %v3715 = vpop.f32.mrb[0].mxu0
    %v3716 = vadd.f32 %v3641, %v3715
    %v3717 = vpop.f32.mrb[0].mxu0
    %3718 = vmatprep.mubr.f32.mxu0 0.0
    %3719 = vmatmul.mubr.f32.gmra.mrb[0].mxu0 %v3647
    %v3720 = vpop.f32.mrb[0].mxu0
    %v3721 = vadd.f32 %v3641, %v3720
    %v3722 = vpop.f32.mrb[0].mxu0
    %3723 = vdwg.mxu0
    %v3724 = vmul.f32 %v3716, %v3716
    %v3725 = vmul.f32 %v3721, %v3721
    %v3726 = vmul.f32 %v3716, %v3724
    %v3727 = vmul.f32 %v3721, %v3725
    %v3728 = vmul.f32 %v3726, 0.044715
    %v3729 = vmul.f32 %v3727, 0.044715
    %v3730 = vadd.f32 %v3716, %v3728
    %v3731 = vadd.f32 %v3721, %v3729
    %v3732 = vmul.f32 %v3730, 0.7978846
    %v3733 = vmul.f32 %v3731, 0.7978846
    %v3734 = vtanh.pop %v3732
    %v3735 = vtanh.pop %v3733
    %v3736 = vadd.f32 %v3734, 1.0
    %v3737 = vadd.f32 %v3735, 1.0
    %v3738 = vmul.f32 %v3736, 0.5
    %v3739 = vmul.f32 %v3737, 0.5
    %v3740 = vmul.f32 %v3716, %v3738
    %v3741 = vmul.f32 %v3721, %v3739
    %s3742 = scalar_lea.vmem %s14, 128
    %v3743 = vld [vmem:[%s3742] sm:$0xff]
    %v3744 = vld [vmem:[%s3742 + $0x8] sm:$0xff]
    %v3745 = vld [vmem:[%s3742 + $0x10] sm:$0xff]
    %v3746 = vld [vmem:[%s3742 + $0x18] sm:$0xff]
    %v3747 = vld [vmem:[%s3742 + $0x20] sm:$0xff]
    %v3748 = vld [vmem:[%s3742 + $0x28] sm:$0xff]
    %v3749 = vld [vmem:[%s3742 + $0x30] sm:$0xff]
    %v3750 = vld [vmem:[%s3742 + $0x38] sm:$0xff]
    %v3751 = vld [vmem:[%s3742 + $0x40] sm:$0xff]
    %v3752 = vld [vmem:[%s3742 + $0x48] sm:$0xff]
    %v3753 = vld [vmem:[%s3742 + $0x50] sm:$0xff]
    %v3754 = vld [vmem:[%s3742 + $0x58] sm:$0xff]
    %v3755 = vld [vmem:[%s3742 + $0x60] sm:$0xff]
    %v3756 = vld [vmem:[%s3742 + $0x68] sm:$0xff]
    %v3757 = vld [vmem:[%s3742 + $0x70] sm:$0xff]
    %v3758 = vld [vmem:[%s3742 + $0x78] sm:$0xff]
    %s3759 = scalar_lea.vmem %s15, 1
    %v3760 = vld [vmem:[%s3759] sm:$0x1]
    %v3762 = vlaneseq
    %v3763 = vshrl.u32 %v3762, 7
    %v3764 = vsub.s32 0, %v3763
    %v3765 = vrot.slane %v3760, %v3764
    %3767 = vmatprep.subr.mxu0 0.0
    %3768 = vmatpush1.msra.mxu0 %v3743
    %3769 = vmatprep.subr.mxu0 0.0
    %3770 = vmatpush1.msra.mxu0 %v3744
    %3771 = vmatprep.subr.mxu0 0.0
    %3772 = vmatpush1.msra.mxu0 %v3745
    %3773 = vmatprep.subr.mxu0 0.0
    %3774 = vmatpush1.msra.mxu0 %v3746
    %3775 = vmatprep.subr.mxu0 0.0
    %3776 = vmatpush1.msra.mxu0 %v3747
    %3777 = vmatprep.subr.mxu0 0.0
    %3778 = vmatpush1.msra.mxu0 %v3748
    %3779 = vmatprep.subr.mxu0 0.0
    %3780 = vmatpush1.msra.mxu0 %v3749
    %3781 = vmatprep.subr.mxu0 0.0
    %3782 = vmatpush1.msra.mxu0 %v3750
    %3783 = vmatprep.subr.mxu0 0.0
    %3784 = vmatpush1.msra.mxu0 %v3751
    %3785 = vmatprep.subr.mxu0 0.0
    %3786 = vmatpush1.msra.mxu0 %v3752
    %3787 = vmatprep.subr.mxu0 0.0
    %3788 = vmatpush1.msra.mxu0 %v3753
    %3789 = vmatprep.subr.mxu0 0.0
    %3790 = vmatpush1.msra.mxu0 %v3754
    %3791 = vmatprep.subr.mxu0 0.0
    %3792 = vmatpush1.msra.mxu0 %v3755
    %3793 = vmatprep.subr.mxu0 0.0
    %3794 = vmatpush1.msra.mxu0 %v3756
    %3795 = vmatprep.subr.mxu0 0.0
    %3796 = vmatpush1.msra.mxu0 %v3757
    %3797 = vmatprep.subr.mxu0 0.0
    %3798 = vmatpush1.msra.mxu0 %v3758
    %3799 = vmatprep.subr.mxu0 0.0
    %3800 = vmatpush1.msra.mxu0 0.0
    %3801 = vmatprep.subr.mxu0 0.0
    %3802 = vmatpush1.msra.mxu0 0.0
    %3803 = vmatprep.subr.mxu0 0.0
    %3804 = vmatpush1.msra.mxu0 0.0
    %3805 = vmatprep.subr.mxu0 0.0
    %3806 = vmatpush1.msra.mxu0 0.0
    %3807 = vmatprep.subr.mxu0 0.0
    %3808 = vmatpush1.msra.mxu0 0.0
    %3809 = vmatprep.subr.mxu0 0.0
    %3810 = vmatpush1.msra.mxu0 0.0
    %3811 = vmatprep.subr.mxu0 0.0
    %3812 = vmatpush1.msra.mxu0 0.0
    %3813 = vmatprep.subr.mxu0 0.0
    %3814 = vmatpush1.msra.mxu0 0.0
    %3815 = vmatprep.subr.mxu0 0.0
    %3816 = vmatpush1.msra.mxu0 0.0
    %3817 = vmatprep.subr.mxu0 0.0
    %3818 = vmatpush1.msra.mxu0 0.0
    %3819 = vmatprep.subr.mxu0 0.0
    %3820 = vmatpush1.msra.mxu0 0.0
    %3821 = vmatprep.subr.mxu0 0.0
    %3822 = vmatpush1.msra.mxu0 0.0
    %3823 = vmatprep.subr.mxu0 0.0
    %3824 = vmatpush1.msra.mxu0 0.0
    %3825 = vmatprep.subr.mxu0 0.0
    %3826 = vmatpush1.msra.mxu0 0.0
    %3827 = vmatprep.subr.mxu0 0.0
    %3828 = vmatpush1.msra.mxu0 0.0
    %3829 = vmatprep.subr.mxu0 0.0
    %3830 = vmatpush1.msra.mxu0 0.0
    %3831 = vmatprep.mubr.f32.mxu0 0.0
    %3832 = vmatmul.mubr.f32.gmra.mrb[0].mxu0 %v3740
    %v3833 = vpop.f32.mrb[0].mxu0
    %v3834 = vadd.f32 %v3765, %v3833
    %v3835 = vpop.f32.mrb[0].mxu0
    %3836 = vmatprep.mubr.f32.mxu0 0.0
    %3837 = vmatmul.mubr.f32.gmra.mrb[0].mxu0 %v3741
    %v3838 = vpop.f32.mrb[0].mxu0
    %v3839 = vadd.f32 %v3765, %v3838
    %v3840 = vpop.f32.mrb[0].mxu0
    %3841 = vdwg.mxu0
    %v3842 = vadd.f32 %v3628, %v3834
    %v3843 = vadd.f32 %v3629, %v3839
    %s3844 = scalar_lea.vmem %s16, 1
    %v3845 = vld [vmem:[%s3844] sm:$0x1]
    %s3846 = scalar_lea.vmem %s17, 1
    %v3847 = vld [vmem:[%s3846] sm:$0x1]
    %v3848 = vsel %vm106, %v3842, 0.0
    %3849 = vadd.xlane.f32.xlu0 %v3848
    %v3850 = vpop.xlane.xlu0 %3849
    %v3851 = vsel %vm106, %v3843, 0.0
    %3852 = vadd.xlane.f32.xlu0 %v3851
    %v3853 = vpop.xlane.xlu0 %3852
    %v3854 = vmul.f32 %v3850, %v113
    %v3855 = vmul.f32 %v3853, %v113
    %v3856 = vsub.f32 %v3842, %v3854
    %v3857 = vsub.f32 %v3843, %v3855
    %v3858 = vmul.f32 %v3856, %v3856
    %v3859 = vmul.f32 %v3857, %v3857
    %v3860 = vsel %vm106, %v3858, 0.0
    %3861 = vadd.xlane.f32.xlu0 %v3860
    %v3862 = vpop.xlane.xlu0 %3861
    %v3863 = vsel %vm106, %v3859, 0.0
    %3864 = vadd.xlane.f32.xlu0 %v3863
    %v3865 = vpop.xlane.xlu0 %3864
    %v3866 = vmul.f32 %v3862, %v113
    %v3867 = vmul.f32 %v3865, %v113
    %v3868 = vadd.f32 %v3866, 1e-12
    %v3869 = vadd.f32 %v3867, 1e-12
    %v3870 = vrsqrt.pop %v3868
    %v3871 = vrsqrt.pop %v3869
    %v3872 = vmul.f32 %v3856, %v3870
    %v3873 = vmul.f32 %v3857, %v3871
    %v3875 = vlaneseq
    %v3876 = vshrl.u32 %v3875, 7
    %v3877 = vsub.s32 0, %v3876
    %v3878 = vrot.slane %v3845, %v3877
    %v3880 = vmul.f32 %v3872, %v3878
    %v3881 = vmul.f32 %v3873, %v3878
    %v3883 = vlaneseq
    %v3884 = vshrl.u32 %v3883, 7
    %v3885 = vsub.s32 0, %v3884
    %v3886 = vrot.slane %v3847, %v3885
    %v3888 = vadd.f32 %v3880, %v3886
    %v3889 = vadd.f32 %v3881, %v3886
    %v3890 = vsel %vm106, %v3888, 0.0
    %v3891 = vrot.slane %v3890, 4
    %v3892 = vadd.f32 %v3890, %v3891
    %v3893 = vrot.slane %v3892, 2
    %v3894 = vadd.f32 %v3892, %v3893
    %v3895 = vrot.slane %v3894, 1
    %v3896 = vadd.f32 %v3894, %v3895
    %v3897 = vsel %vm106, %v3889, 0.0
    %v3898 = vrot.slane %v3897, 4
    %v3899 = vadd.f32 %v3897, %v3898
    %v3900 = vrot.slane %v3899, 2
    %v3901 = vadd.f32 %v3899, %v3900
    %v3902 = vrot.slane %v3901, 1
    %v3903 = vadd.f32 %v3901, %v3902
    %v3904 = vmul.f32 %v3896, %v2025
    %v3905 = vmul.f32 %v3903, %v2025
    %v3906 = vadd.f32 %v2028, %v3904
    %v3907 = vadd.f32 %v2029, %v3905
    %s3908 = scalar_lea.vmem %s6, 64
    %v3909 = vld [vmem:[%s3908] sm:$0xff]
    %v3910 = vld [vmem:[%s3908 + $0x8] sm:$0xff]
    %v3911 = vld [vmem:[%s3908 + $0x10] sm:$0xff]
    %v3912 = vld [vmem:[%s3908 + $0x18] sm:$0xff]
    %s3913 = scalar_lea.vmem %s7, 2
    %v3914 = vld [vmem:[%s3913] sm:$0x1]
    %v3916 = vlaneseq
    %v3917 = vshrl.u32 %v3916, 7
    %v3918 = vsub.s32 0, %v3917
    %v3919 = vrot.slane %v3914, %v3918
    %v3922 = vsel %vm106, %v3888, 0
    %v3925 = vsel %vm106, %v3889, 0
    %3927 = vmatprep.subr.mxu0 0.0
    %3928 = vmatpush1.msra.mxu0 %v3909
    %3929 = vmatprep.subr.mxu0 0.0
    %3930 = vmatpush1.msra.mxu0 %v3910
    %3931 = vmatprep.subr.mxu0 0.0
    %3932 = vmatpush1.msra.mxu0 %v3911
    %3933 = vmatprep.subr.mxu0 0.0
    %3934 = vmatpush1.msra.mxu0 %v3912
    %3935 = vmatprep.subr.mxu0 0.0
    %3936 = vmatpush1.msra.mxu0 0.0
    %3937 = vmatprep.subr.mxu0 0.0
    %3938 = vmatpush1.msra.mxu0 0.0
    %3939 = vmatprep.subr.mxu0 0.0
    %3940 = vmatpush1.msra.mxu0 0.0
    %3941 = vmatprep.subr.mxu0 0.0
    %3942 = vmatpush1.msra.mxu0 0.0
    %3943 = vmatprep.subr.mxu0 0.0
    %3944 = vmatpush1.msra.mxu0 0.0
    %3945 = vmatprep.subr.mxu0 0.0
    %3946 = vmatpush1.msra.mxu0 0.0
    %3947 = vmatprep.subr.mxu0 0.0
    %3948 = vmatpush1.msra.mxu0 0.0
    %3949 = vmatprep.subr.mxu0 0.0
    %3950 = vmatpush1.msra.mxu0 0.0
    %3951 = vmatprep.subr.mxu0 0.0
    %3952 = vmatpush1.msra.mxu0 0.0
    %3953 = vmatprep.subr.mxu0 0.0
    %3954 = vmatpush1.msra.mxu0 0.0
    %3955 = vmatprep.subr.mxu0 0.0
    %3956 = vmatpush1.msra.mxu0 0.0
    %3957 = vmatprep.subr.mxu0 0.0
    %3958 = vmatpush1.msra.mxu0 0.0
    %3959 = vmatprep.subr.mxu0 0.0
    %3960 = vmatpush1.msra.mxu0 0.0
    %3961 = vmatprep.subr.mxu0 0.0
    %3962 = vmatpush1.msra.mxu0 0.0
    %3963 = vmatprep.subr.mxu0 0.0
    %3964 = vmatpush1.msra.mxu0 0.0
    %3965 = vmatprep.subr.mxu0 0.0
    %3966 = vmatpush1.msra.mxu0 0.0
    %3967 = vmatprep.subr.mxu0 0.0
    %3968 = vmatpush1.msra.mxu0 0.0
    %3969 = vmatprep.subr.mxu0 0.0
    %3970 = vmatpush1.msra.mxu0 0.0
    %3971 = vmatprep.subr.mxu0 0.0
    %3972 = vmatpush1.msra.mxu0 0.0
    %3973 = vmatprep.subr.mxu0 0.0
    %3974 = vmatpush1.msra.mxu0 0.0
    %3975 = vmatprep.subr.mxu0 0.0
    %3976 = vmatpush1.msra.mxu0 0.0
    %3977 = vmatprep.subr.mxu0 0.0
    %3978 = vmatpush1.msra.mxu0 0.0
    %3979 = vmatprep.subr.mxu0 0.0
    %3980 = vmatpush1.msra.mxu0 0.0
    %3981 = vmatprep.subr.mxu0 0.0
    %3982 = vmatpush1.msra.mxu0 0.0
    %3983 = vmatprep.subr.mxu0 0.0
    %3984 = vmatpush1.msra.mxu0 0.0
    %3985 = vmatprep.subr.mxu0 0.0
    %3986 = vmatpush1.msra.mxu0 0.0
    %3987 = vmatprep.subr.mxu0 0.0
    %3988 = vmatpush1.msra.mxu0 0.0
    %3989 = vmatprep.subr.mxu0 0.0
    %3990 = vmatpush1.msra.mxu0 0.0
    %3991 = vmatprep.mubr.f32.mxu0 0.0
    %3992 = vmatmul.mubr.f32.gmra.mrb[0].mxu0 %v3922
    %v3993 = vpop.f32.mrb[0].mxu0
    %v3994 = vadd.f32 %v3919, %v3993
    %v3995 = vpop.f32.mrb[0].mxu0
    %3996 = vmatprep.mubr.f32.mxu0 0.0
    %3997 = vmatmul.mubr.f32.gmra.mrb[0].mxu0 %v3925
    %v3998 = vpop.f32.mrb[0].mxu0
    %v3999 = vadd.f32 %v3919, %v3998
    %v4000 = vpop.f32.mrb[0].mxu0
    %4001 = vdwg.mxu0
    %4003 = vrot.lane.b32.xlu0 %v3994, 96
    %v4004 = vpop.permute.xlu0 %4003
    %v4005 = vsel %vm245, %v3994, 0
    %v4007 = vsel %vm245, %v4004, 0
    %4009 = vmatprep.subr.mxu0 0.0
    %4010 = vmatpush1.xpose.msra.mxu0 %v4007
    %4011 = vmatprep.subr.mxu0 0.0
    %4012 = vmatpush1.xpose.msra.mxu0 0.0
    %4013 = vmatprep.subr.mxu0 0.0
    %4014 = vmatpush1.xpose.msra.mxu0 0.0
    %4015 = vmatprep.subr.mxu0 0.0
    %4016 = vmatpush1.xpose.msra.mxu0 0.0
    %4017 = vmatprep.subr.mxu0 0.0
    %4018 = vmatpush1.xpose.msra.mxu0 0.0
    %4019 = vmatprep.subr.mxu0 0.0
    %4020 = vmatpush1.xpose.msra.mxu0 0.0
    %4021 = vmatprep.subr.mxu0 0.0
    %4022 = vmatpush1.xpose.msra.mxu0 0.0
    %4023 = vmatprep.subr.mxu0 0.0
    %4024 = vmatpush1.xpose.msra.mxu0 0.0
    %4025 = vmatprep.subr.mxu0 0.0
    %4026 = vmatpush1.xpose.msra.mxu0 0.0
    %4027 = vmatprep.subr.mxu0 0.0
    %4028 = vmatpush1.xpose.msra.mxu0 0.0
    %4029 = vmatprep.subr.mxu0 0.0
    %4030 = vmatpush1.xpose.msra.mxu0 0.0
    %4031 = vmatprep.subr.mxu0 0.0
    %4032 = vmatpush1.xpose.msra.mxu0 0.0
    %4033 = vmatprep.subr.mxu0 0.0
    %4034 = vmatpush1.xpose.msra.mxu0 0.0
    %4035 = vmatprep.subr.mxu0 0.0
    %4036 = vmatpush1.xpose.msra.mxu0 0.0
    %4037 = vmatprep.subr.mxu0 0.0
    %4038 = vmatpush1.xpose.msra.mxu0 0.0
    %4039 = vmatprep.subr.mxu0 0.0
    %4040 = vmatpush1.xpose.msra.mxu0 0.0
    %4041 = vmatprep.subr.mxu0 0.0
    %4042 = vmatpush1.xpose.msra.mxu0 0.0
    %4043 = vmatprep.subr.mxu0 0.0
    %4044 = vmatpush1.xpose.msra.mxu0 0.0
    %4045 = vmatprep.subr.mxu0 0.0
    %4046 = vmatpush1.xpose.msra.mxu0 0.0
    %4047 = vmatprep.subr.mxu0 0.0
    %4048 = vmatpush1.xpose.msra.mxu0 0.0
    %4049 = vmatprep.subr.mxu0 0.0
    %4050 = vmatpush1.xpose.msra.mxu0 0.0
    %4051 = vmatprep.subr.mxu0 0.0
    %4052 = vmatpush1.xpose.msra.mxu0 0.0
    %4053 = vmatprep.subr.mxu0 0.0
    %4054 = vmatpush1.xpose.msra.mxu0 0.0
    %4055 = vmatprep.subr.mxu0 0.0
    %4056 = vmatpush1.xpose.msra.mxu0 0.0
    %4057 = vmatprep.subr.mxu0 0.0
    %4058 = vmatpush1.xpose.msra.mxu0 0.0
    %4059 = vmatprep.subr.mxu0 0.0
    %4060 = vmatpush1.xpose.msra.mxu0 0.0
    %4061 = vmatprep.subr.mxu0 0.0
    %4062 = vmatpush1.xpose.msra.mxu0 0.0
    %4063 = vmatprep.subr.mxu0 0.0
    %4064 = vmatpush1.xpose.msra.mxu0 0.0
    %4065 = vmatprep.subr.mxu0 0.0
    %4066 = vmatpush1.xpose.msra.mxu0 0.0
    %4067 = vmatprep.subr.mxu0 0.0
    %4068 = vmatpush1.xpose.msra.mxu0 0.0
    %4069 = vmatprep.subr.mxu0 0.0
    %4070 = vmatpush1.xpose.msra.mxu0 0.0
    %4071 = vmatprep.subr.mxu0 0.0
    %4072 = vmatpush1.xpose.msra.mxu0 0.0
    %4073 = vmatprep.mubr.f32.mxu0 0.0
    %4074 = vmatmul.mubr.f32.gmra.mrb[0].mxu0 %v4005
    %v4075 = vpop.f32.mrb[0].mxu0
    %v4076 = vadd.f32 0.0, %v4075
    %v4077 = vpop.f32.mrb[0].mxu0
    %4078 = vdwg.mxu0
    %4080 = vrot.lane.b32.xlu0 %v3999, 96
    %v4081 = vpop.permute.xlu0 %4080
    %v4082 = vsel %vm245, %v3999, 0
    %v4084 = vsel %vm245, %v4081, 0
    %4086 = vmatprep.subr.mxu0 0.0
    %4087 = vmatpush1.xpose.msra.mxu0 %v4084
    %4088 = vmatprep.subr.mxu0 0.0
    %4089 = vmatpush1.xpose.msra.mxu0 0.0
    %4090 = vmatprep.subr.mxu0 0.0
    %4091 = vmatpush1.xpose.msra.mxu0 0.0
    %4092 = vmatprep.subr.mxu0 0.0
    %4093 = vmatpush1.xpose.msra.mxu0 0.0
    %4094 = vmatprep.subr.mxu0 0.0
    %4095 = vmatpush1.xpose.msra.mxu0 0.0
    %4096 = vmatprep.subr.mxu0 0.0
    %4097 = vmatpush1.xpose.msra.mxu0 0.0
    %4098 = vmatprep.subr.mxu0 0.0
    %4099 = vmatpush1.xpose.msra.mxu0 0.0
    %4100 = vmatprep.subr.mxu0 0.0
    %4101 = vmatpush1.xpose.msra.mxu0 0.0
    %4102 = vmatprep.subr.mxu0 0.0
    %4103 = vmatpush1.xpose.msra.mxu0 0.0
    %4104 = vmatprep.subr.mxu0 0.0
    %4105 = vmatpush1.xpose.msra.mxu0 0.0
    %4106 = vmatprep.subr.mxu0 0.0
    %4107 = vmatpush1.xpose.msra.mxu0 0.0
    %4108 = vmatprep.subr.mxu0 0.0
    %4109 = vmatpush1.xpose.msra.mxu0 0.0
    %4110 = vmatprep.subr.mxu0 0.0
    %4111 = vmatpush1.xpose.msra.mxu0 0.0
    %4112 = vmatprep.subr.mxu0 0.0
    %4113 = vmatpush1.xpose.msra.mxu0 0.0
    %4114 = vmatprep.subr.mxu0 0.0
    %4115 = vmatpush1.xpose.msra.mxu0 0.0
    %4116 = vmatprep.subr.mxu0 0.0
    %4117 = vmatpush1.xpose.msra.mxu0 0.0
    %4118 = vmatprep.subr.mxu0 0.0
    %4119 = vmatpush1.xpose.msra.mxu0 0.0
    %4120 = vmatprep.subr.mxu0 0.0
    %4121 = vmatpush1.xpose.msra.mxu0 0.0
    %4122 = vmatprep.subr.mxu0 0.0
    %4123 = vmatpush1.xpose.msra.mxu0 0.0
    %4124 = vmatprep.subr.mxu0 0.0
    %4125 = vmatpush1.xpose.msra.mxu0 0.0
    %4126 = vmatprep.subr.mxu0 0.0
    %4127 = vmatpush1.xpose.msra.mxu0 0.0
    %4128 = vmatprep.subr.mxu0 0.0
    %4129 = vmatpush1.xpose.msra.mxu0 0.0
    %4130 = vmatprep.subr.mxu0 0.0
    %4131 = vmatpush1.xpose.msra.mxu0 0.0
    %4132 = vmatprep.subr.mxu0 0.0
    %4133 = vmatpush1.xpose.msra.mxu0 0.0
    %4134 = vmatprep.subr.mxu0 0.0
    %4135 = vmatpush1.xpose.msra.mxu0 0.0
    %4136 = vmatprep.subr.mxu0 0.0
    %4137 = vmatpush1.xpose.msra.mxu0 0.0
    %4138 = vmatprep.subr.mxu0 0.0
    %4139 = vmatpush1.xpose.msra.mxu0 0.0
    %4140 = vmatprep.subr.mxu0 0.0
    %4141 = vmatpush1.xpose.msra.mxu0 0.0
    %4142 = vmatprep.subr.mxu0 0.0
    %4143 = vmatpush1.xpose.msra.mxu0 0.0
    %4144 = vmatprep.subr.mxu0 0.0
    %4145 = vmatpush1.xpose.msra.mxu0 0.0
    %4146 = vmatprep.subr.mxu0 0.0
    %4147 = vmatpush1.xpose.msra.mxu0 0.0
    %4148 = vmatprep.subr.mxu0 0.0
    %4149 = vmatpush1.xpose.msra.mxu0 0.0
    %4150 = vmatprep.mubr.f32.mxu0 0.0
    %4151 = vmatmul.mubr.f32.gmra.mrb[0].mxu0 %v4082
    %v4152 = vpop.f32.mrb[0].mxu0
    %v4153 = vadd.f32 0.0, %v4152
    %v4154 = vpop.f32.mrb[0].mxu0
    %4155 = vdwg.mxu0
    %v4156 = vmul.f32 %v4076, 0.35355338
    %v4157 = vmul.f32 %v4153, 0.35355338
    %v4158 = vadd.f32 %v4156, %v402
    %v4159 = vadd.f32 %v4157, %v406
    %v4160 = vsel %vm245, %v4158, -inf
    %4161 = vmax.xlane.f32.xlu0 %v4160
    %v4162 = vpop.xlane.xlu0 %4161
    %v4163 = vsel %vm245, %v4159, -inf
    %4164 = vmax.xlane.f32.xlu0 %v4163
    %v4165 = vpop.xlane.xlu0 %4164
    %v4166 = vsub.f32 %v4158, %v4162
    %v4167 = vsub.f32 %v4159, %v4165
    %v4168 = vmul.f32 %v4166, 1.442695
    %v4169 = vpow.pop %v4168
    %v4170 = vmul.f32 %v4167, 1.442695
    %v4171 = vpow.pop %v4170
    %v4172 = vsel %vm245, %v4169, 0.0
    %4173 = vadd.xlane.f32.xlu0 %v4172
    %v4174 = vpop.xlane.xlu0 %4173
    %v4175 = vsel %vm245, %v4171, 0.0
    %4176 = vadd.xlane.f32.xlu0 %v4175
    %v4177 = vpop.xlane.xlu0 %4176
    %v4178 = vrcp.pop %v4174
    %v4179 = vrcp.pop %v4177
    %v4180 = vmul.f32 %v4169, %v4178
    %v4181 = vmul.f32 %v4171, %v4179
    %4182 = vrot.lane.b32.xlu0 %v3994, 64
    %v4183 = vpop.permute.xlu0 %4182
    %v4186 = vsel %vm245, %v4180, 0
    %4188 = vmatprep.subr.mxu0 0.0
    %4189 = vmatpush1.msra.mxu0 %v4183
    %4190 = vmatprep.subr.mxu0 0.0
    %4191 = vmatpush1.msra.mxu0 0.0
    %4192 = vmatprep.subr.mxu0 0.0
    %4193 = vmatpush1.msra.mxu0 0.0
    %4194 = vmatprep.subr.mxu0 0.0
    %4195 = vmatpush1.msra.mxu0 0.0
    %4196 = vmatprep.subr.mxu0 0.0
    %4197 = vmatpush1.msra.mxu0 0.0
    %4198 = vmatprep.subr.mxu0 0.0
    %4199 = vmatpush1.msra.mxu0 0.0
    %4200 = vmatprep.subr.mxu0 0.0
    %4201 = vmatpush1.msra.mxu0 0.0
    %4202 = vmatprep.subr.mxu0 0.0
    %4203 = vmatpush1.msra.mxu0 0.0
    %4204 = vmatprep.subr.mxu0 0.0
    %4205 = vmatpush1.msra.mxu0 0.0
    %4206 = vmatprep.subr.mxu0 0.0
    %4207 = vmatpush1.msra.mxu0 0.0
    %4208 = vmatprep.subr.mxu0 0.0
    %4209 = vmatpush1.msra.mxu0 0.0
    %4210 = vmatprep.subr.mxu0 0.0
    %4211 = vmatpush1.msra.mxu0 0.0
    %4212 = vmatprep.subr.mxu0 0.0
    %4213 = vmatpush1.msra.mxu0 0.0
    %4214 = vmatprep.subr.mxu0 0.0
    %4215 = vmatpush1.msra.mxu0 0.0
    %4216 = vmatprep.subr.mxu0 0.0
    %4217 = vmatpush1.msra.mxu0 0.0
    %4218 = vmatprep.subr.mxu0 0.0
    %4219 = vmatpush1.msra.mxu0 0.0
    %4220 = vmatprep.subr.mxu0 0.0
    %4221 = vmatpush1.msra.mxu0 0.0
    %4222 = vmatprep.subr.mxu0 0.0
    %4223 = vmatpush1.msra.mxu0 0.0
    %4224 = vmatprep.subr.mxu0 0.0
    %4225 = vmatpush1.msra.mxu0 0.0
    %4226 = vmatprep.subr.mxu0 0.0
    %4227 = vmatpush1.msra.mxu0 0.0
    %4228 = vmatprep.subr.mxu0 0.0
    %4229 = vmatpush1.msra.mxu0 0.0
    %4230 = vmatprep.subr.mxu0 0.0
    %4231 = vmatpush1.msra.mxu0 0.0
    %4232 = vmatprep.subr.mxu0 0.0
    %4233 = vmatpush1.msra.mxu0 0.0
    %4234 = vmatprep.subr.mxu0 0.0
    %4235 = vmatpush1.msra.mxu0 0.0
    %4236 = vmatprep.subr.mxu0 0.0
    %4237 = vmatpush1.msra.mxu0 0.0
    %4238 = vmatprep.subr.mxu0 0.0
    %4239 = vmatpush1.msra.mxu0 0.0
    %4240 = vmatprep.subr.mxu0 0.0
    %4241 = vmatpush1.msra.mxu0 0.0
    %4242 = vmatprep.subr.mxu0 0.0
    %4243 = vmatpush1.msra.mxu0 0.0
    %4244 = vmatprep.subr.mxu0 0.0
    %4245 = vmatpush1.msra.mxu0 0.0
    %4246 = vmatprep.subr.mxu0 0.0
    %4247 = vmatpush1.msra.mxu0 0.0
    %4248 = vmatprep.subr.mxu0 0.0
    %4249 = vmatpush1.msra.mxu0 0.0
    %4250 = vmatprep.subr.mxu0 0.0
    %4251 = vmatpush1.msra.mxu0 0.0
    %4252 = vmatprep.mubr.f32.mxu0 0.0
    %4253 = vmatmul.mubr.f32.gmra.mrb[0].mxu0 %v4186
    %v4254 = vpop.f32.mrb[0].mxu0
    %v4255 = vadd.f32 0.0, %v4254
    %v4256 = vpop.f32.mrb[0].mxu0
    %4257 = vdwg.mxu0
    %4258 = vrot.lane.b32.xlu0 %v3999, 64
    %v4259 = vpop.permute.xlu0 %4258
    %v4262 = vsel %vm245, %v4181, 0
    %4264 = vmatprep.subr.mxu0 0.0
    %4265 = vmatpush1.msra.mxu0 %v4259
    %4266 = vmatprep.subr.mxu0 0.0
    %4267 = vmatpush1.msra.mxu0 0.0
    %4268 = vmatprep.subr.mxu0 0.0
    %4269 = vmatpush1.msra.mxu0 0.0
    %4270 = vmatprep.subr.mxu0 0.0
    %4271 = vmatpush1.msra.mxu0 0.0
    %4272 = vmatprep.subr.mxu0 0.0
    %4273 = vmatpush1.msra.mxu0 0.0
    %4274 = vmatprep.subr.mxu0 0.0
    %4275 = vmatpush1.msra.mxu0 0.0
    %4276 = vmatprep.subr.mxu0 0.0
    %4277 = vmatpush1.msra.mxu0 0.0
    %4278 = vmatprep.subr.mxu0 0.0
    %4279 = vmatpush1.msra.mxu0 0.0
    %4280 = vmatprep.subr.mxu0 0.0
    %4281 = vmatpush1.msra.mxu0 0.0
    %4282 = vmatprep.subr.mxu0 0.0
    %4283 = vmatpush1.msra.mxu0 0.0
    %4284 = vmatprep.subr.mxu0 0.0
    %4285 = vmatpush1.msra.mxu0 0.0
    %4286 = vmatprep.subr.mxu0 0.0
    %4287 = vmatpush1.msra.mxu0 0.0
    %4288 = vmatprep.subr.mxu0 0.0
    %4289 = vmatpush1.msra.mxu0 0.0
    %4290 = vmatprep.subr.mxu0 0.0
    %4291 = vmatpush1.msra.mxu0 0.0
    %4292 = vmatprep.subr.mxu0 0.0
    %4293 = vmatpush1.msra.mxu0 0.0
    %4294 = vmatprep.subr.mxu0 0.0
    %4295 = vmatpush1.msra.mxu0 0.0
    %4296 = vmatprep.subr.mxu0 0.0
    %4297 = vmatpush1.msra.mxu0 0.0
    %4298 = vmatprep.subr.mxu0 0.0
    %4299 = vmatpush1.msra.mxu0 0.0
    %4300 = vmatprep.subr.mxu0 0.0
    %4301 = vmatpush1.msra.mxu0 0.0
    %4302 = vmatprep.subr.mxu0 0.0
    %4303 = vmatpush1.msra.mxu0 0.0
    %4304 = vmatprep.subr.mxu0 0.0
    %4305 = vmatpush1.msra.mxu0 0.0
    %4306 = vmatprep.subr.mxu0 0.0
    %4307 = vmatpush1.msra.mxu0 0.0
    %4308 = vmatprep.subr.mxu0 0.0
    %4309 = vmatpush1.msra.mxu0 0.0
    %4310 = vmatprep.subr.mxu0 0.0
    %4311 = vmatpush1.msra.mxu0 0.0
    %4312 = vmatprep.subr.mxu0 0.0
    %4313 = vmatpush1.msra.mxu0 0.0
    %4314 = vmatprep.subr.mxu0 0.0
    %4315 = vmatpush1.msra.mxu0 0.0
    %4316 = vmatprep.subr.mxu0 0.0
    %4317 = vmatpush1.msra.mxu0 0.0
    %4318 = vmatprep.subr.mxu0 0.0
    %4319 = vmatpush1.msra.mxu0 0.0
    %4320 = vmatprep.subr.mxu0 0.0
    %4321 = vmatpush1.msra.mxu0 0.0
    %4322 = vmatprep.subr.mxu0 0.0
    %4323 = vmatpush1.msra.mxu0 0.0
    %4324 = vmatprep.subr.mxu0 0.0
    %4325 = vmatpush1.msra.mxu0 0.0
    %4326 = vmatprep.subr.mxu0 0.0
    %4327 = vmatpush1.msra.mxu0 0.0
    %4328 = vmatprep.mubr.f32.mxu0 0.0
    %4329 = vmatmul.mubr.f32.gmra.mrb[0].mxu0 %v4262
    %v4330 = vpop.f32.mrb[0].mxu0
    %v4331 = vadd.f32 0.0, %v4330
    %v4332 = vpop.f32.mrb[0].mxu0
    %4333 = vdwg.mxu0
    %4334 = vrot.lane.b32.xlu0 %v3994, 120
    %v4335 = vpop.permute.xlu0 %4334
    %4336 = vrot.lane.b32.xlu0 %v3994, 88
    %v4337 = vpop.permute.xlu0 %4336
    %v4338 = vsel %vm245, %v4335, 0
    %v4340 = vsel %vm245, %v4337, 0
    %4342 = vmatprep.subr.mxu0 0.0
    %4343 = vmatpush1.xpose.msra.mxu0 %v4340
    %4344 = vmatprep.subr.mxu0 0.0
    %4345 = vmatpush1.xpose.msra.mxu0 0.0
    %4346 = vmatprep.subr.mxu0 0.0
    %4347 = vmatpush1.xpose.msra.mxu0 0.0
    %4348 = vmatprep.subr.mxu0 0.0
    %4349 = vmatpush1.xpose.msra.mxu0 0.0
    %4350 = vmatprep.subr.mxu0 0.0
    %4351 = vmatpush1.xpose.msra.mxu0 0.0
    %4352 = vmatprep.subr.mxu0 0.0
    %4353 = vmatpush1.xpose.msra.mxu0 0.0
    %4354 = vmatprep.subr.mxu0 0.0
    %4355 = vmatpush1.xpose.msra.mxu0 0.0
    %4356 = vmatprep.subr.mxu0 0.0
    %4357 = vmatpush1.xpose.msra.mxu0 0.0
    %4358 = vmatprep.subr.mxu0 0.0
    %4359 = vmatpush1.xpose.msra.mxu0 0.0
    %4360 = vmatprep.subr.mxu0 0.0
    %4361 = vmatpush1.xpose.msra.mxu0 0.0
    %4362 = vmatprep.subr.mxu0 0.0
    %4363 = vmatpush1.xpose.msra.mxu0 0.0
    %4364 = vmatprep.subr.mxu0 0.0
    %4365 = vmatpush1.xpose.msra.mxu0 0.0
    %4366 = vmatprep.subr.mxu0 0.0
    %4367 = vmatpush1.xpose.msra.mxu0 0.0
    %4368 = vmatprep.subr.mxu0 0.0
    %4369 = vmatpush1.xpose.msra.mxu0 0.0
    %4370 = vmatprep.subr.mxu0 0.0
    %4371 = vmatpush1.xpose.msra.mxu0 0.0
    %4372 = vmatprep.subr.mxu0 0.0
    %4373 = vmatpush1.xpose.msra.mxu0 0.0
    %4374 = vmatprep.subr.mxu0 0.0
    %4375 = vmatpush1.xpose.msra.mxu0 0.0
    %4376 = vmatprep.subr.mxu0 0.0
    %4377 = vmatpush1.xpose.msra.mxu0 0.0
    %4378 = vmatprep.subr.mxu0 0.0
    %4379 = vmatpush1.xpose.msra.mxu0 0.0
    %4380 = vmatprep.subr.mxu0 0.0
    %4381 = vmatpush1.xpose.msra.mxu0 0.0
    %4382 = vmatprep.subr.mxu0 0.0
    %4383 = vmatpush1.xpose.msra.mxu0 0.0
    %4384 = vmatprep.subr.mxu0 0.0
    %4385 = vmatpush1.xpose.msra.mxu0 0.0
    %4386 = vmatprep.subr.mxu0 0.0
    %4387 = vmatpush1.xpose.msra.mxu0 0.0
    %4388 = vmatprep.subr.mxu0 0.0
    %4389 = vmatpush1.xpose.msra.mxu0 0.0
    %4390 = vmatprep.subr.mxu0 0.0
    %4391 = vmatpush1.xpose.msra.mxu0 0.0
    %4392 = vmatprep.subr.mxu0 0.0
    %4393 = vmatpush1.xpose.msra.mxu0 0.0
    %4394 = vmatprep.subr.mxu0 0.0
    %4395 = vmatpush1.xpose.msra.mxu0 0.0
    %4396 = vmatprep.subr.mxu0 0.0
    %4397 = vmatpush1.xpose.msra.mxu0 0.0
    %4398 = vmatprep.subr.mxu0 0.0
    %4399 = vmatpush1.xpose.msra.mxu0 0.0
    %4400 = vmatprep.subr.mxu0 0.0
    %4401 = vmatpush1.xpose.msra.mxu0 0.0
    %4402 = vmatprep.subr.mxu0 0.0
    %4403 = vmatpush1.xpose.msra.mxu0 0.0
    %4404 = vmatprep.subr.mxu0 0.0
    %4405 = vmatpush1.xpose.msra.mxu0 0.0
    %4406 = vmatprep.mubr.f32.mxu0 0.0
    %4407 = vmatmul.mubr.f32.gmra.mrb[0].mxu0 %v4338
    %v4408 = vpop.f32.mrb[0].mxu0
    %v4409 = vadd.f32 0.0, %v4408
    %v4410 = vpop.f32.mrb[0].mxu0
    %4411 = vdwg.mxu0
    %4412 = vrot.lane.b32.xlu0 %v3999, 120
    %v4413 = vpop.permute.xlu0 %4412
    %4414 = vrot.lane.b32.xlu0 %v3999, 88
    %v4415 = vpop.permute.xlu0 %4414
    %v4416 = vsel %vm245, %v4413, 0
    %v4418 = vsel %vm245, %v4415, 0
    %4420 = vmatprep.subr.mxu0 0.0
    %4421 = vmatpush1.xpose.msra.mxu0 %v4418
    %4422 = vmatprep.subr.mxu0 0.0
    %4423 = vmatpush1.xpose.msra.mxu0 0.0
    %4424 = vmatprep.subr.mxu0 0.0
    %4425 = vmatpush1.xpose.msra.mxu0 0.0
    %4426 = vmatprep.subr.mxu0 0.0
    %4427 = vmatpush1.xpose.msra.mxu0 0.0
    %4428 = vmatprep.subr.mxu0 0.0
    %4429 = vmatpush1.xpose.msra.mxu0 0.0
    %4430 = vmatprep.subr.mxu0 0.0
    %4431 = vmatpush1.xpose.msra.mxu0 0.0
    %4432 = vmatprep.subr.mxu0 0.0
    %4433 = vmatpush1.xpose.msra.mxu0 0.0
    %4434 = vmatprep.subr.mxu0 0.0
    %4435 = vmatpush1.xpose.msra.mxu0 0.0
    %4436 = vmatprep.subr.mxu0 0.0
    %4437 = vmatpush1.xpose.msra.mxu0 0.0
    %4438 = vmatprep.subr.mxu0 0.0
    %4439 = vmatpush1.xpose.msra.mxu0 0.0
    %4440 = vmatprep.subr.mxu0 0.0
    %4441 = vmatpush1.xpose.msra.mxu0 0.0
    %4442 = vmatprep.subr.mxu0 0.0
    %4443 = vmatpush1.xpose.msra.mxu0 0.0
    %4444 = vmatprep.subr.mxu0 0.0
    %4445 = vmatpush1.xpose.msra.mxu0 0.0
    %4446 = vmatprep.subr.mxu0 0.0
    %4447 = vmatpush1.xpose.msra.mxu0 0.0
    %4448 = vmatprep.subr.mxu0 0.0
    %4449 = vmatpush1.xpose.msra.mxu0 0.0
    %4450 = vmatprep.subr.mxu0 0.0
    %4451 = vmatpush1.xpose.msra.mxu0 0.0
    %4452 = vmatprep.subr.mxu0 0.0
    %4453 = vmatpush1.xpose.msra.mxu0 0.0
    %4454 = vmatprep.subr.mxu0 0.0
    %4455 = vmatpush1.xpose.msra.mxu0 0.0
    %4456 = vmatprep.subr.mxu0 0.0
    %4457 = vmatpush1.xpose.msra.mxu0 0.0
    %4458 = vmatprep.subr.mxu0 0.0
    %4459 = vmatpush1.xpose.msra.mxu0 0.0
    %4460 = vmatprep.subr.mxu0 0.0
    %4461 = vmatpush1.xpose.msra.mxu0 0.0
    %4462 = vmatprep.subr.mxu0 0.0
    %4463 = vmatpush1.xpose.msra.mxu0 0.0
    %4464 = vmatprep.subr.mxu0 0.0
    %4465 = vmatpush1.xpose.msra.mxu0 0.0
    %4466 = vmatprep.subr.mxu0 0.0
    %4467 = vmatpush1.xpose.msra.mxu0 0.0
    %4468 = vmatprep.subr.mxu0 0.0
    %4469 = vmatpush1.xpose.msra.mxu0 0.0
    %4470 = vmatprep.subr.mxu0 0.0
    %4471 = vmatpush1.xpose.msra.mxu0 0.0
    %4472 = vmatprep.subr.mxu0 0.0
    %4473 = vmatpush1.xpose.msra.mxu0 0.0
    %4474 = vmatprep.subr.mxu0 0.0
    %4475 = vmatpush1.xpose.msra.mxu0 0.0
    %4476 = vmatprep.subr.mxu0 0.0
    %4477 = vmatpush1.xpose.msra.mxu0 0.0
    %4478 = vmatprep.subr.mxu0 0.0
    %4479 = vmatpush1.xpose.msra.mxu0 0.0
    %4480 = vmatprep.subr.mxu0 0.0
    %4481 = vmatpush1.xpose.msra.mxu0 0.0
    %4482 = vmatprep.subr.mxu0 0.0
    %4483 = vmatpush1.xpose.msra.mxu0 0.0
    %4484 = vmatprep.mubr.f32.mxu0 0.0
    %4485 = vmatmul.mubr.f32.gmra.mrb[0].mxu0 %v4416
    %v4486 = vpop.f32.mrb[0].mxu0
    %v4487 = vadd.f32 0.0, %v4486
    %v4488 = vpop.f32.mrb[0].mxu0
    %4489 = vdwg.mxu0
    %v4490 = vmul.f32 %v4409, 0.35355338
    %v4491 = vmul.f32 %v4487, 0.35355338
    %v4492 = vadd.f32 %v4490, %v402
    %v4493 = vadd.f32 %v4491, %v406
    %v4494 = vsel %vm245, %v4492, -inf
    %4495 = vmax.xlane.f32.xlu0 %v4494
    %v4496 = vpop.xlane.xlu0 %4495
    %v4497 = vsel %vm245, %v4493, -inf
    %4498 = vmax.xlane.f32.xlu0 %v4497
    %v4499 = vpop.xlane.xlu0 %4498
    %v4500 = vsub.f32 %v4492, %v4496
    %v4501 = vsub.f32 %v4493, %v4499
    %v4502 = vmul.f32 %v4500, 1.442695
    %v4503 = vpow.pop %v4502
    %v4504 = vmul.f32 %v4501, 1.442695
    %v4505 = vpow.pop %v4504
    %v4506 = vsel %vm245, %v4503, 0.0
    %4507 = vadd.xlane.f32.xlu0 %v4506
    %v4508 = vpop.xlane.xlu0 %4507
    %v4509 = vsel %vm245, %v4505, 0.0
    %4510 = vadd.xlane.f32.xlu0 %v4509
    %v4511 = vpop.xlane.xlu0 %4510
    %v4512 = vrcp.pop %v4508
    %v4513 = vrcp.pop %v4511
    %v4514 = vmul.f32 %v4503, %v4512
    %v4515 = vmul.f32 %v4505, %v4513
    %4516 = vrot.lane.b32.xlu0 %v3994, 56
    %v4517 = vpop.permute.xlu0 %4516
    %v4520 = vsel %vm245, %v4514, 0
    %4522 = vmatprep.subr.mxu0 0.0
    %4523 = vmatpush1.msra.mxu0 %v4517
    %4524 = vmatprep.subr.mxu0 0.0
    %4525 = vmatpush1.msra.mxu0 0.0
    %4526 = vmatprep.subr.mxu0 0.0
    %4527 = vmatpush1.msra.mxu0 0.0
    %4528 = vmatprep.subr.mxu0 0.0
    %4529 = vmatpush1.msra.mxu0 0.0
    %4530 = vmatprep.subr.mxu0 0.0
    %4531 = vmatpush1.msra.mxu0 0.0
    %4532 = vmatprep.subr.mxu0 0.0
    %4533 = vmatpush1.msra.mxu0 0.0
    %4534 = vmatprep.subr.mxu0 0.0
    %4535 = vmatpush1.msra.mxu0 0.0
    %4536 = vmatprep.subr.mxu0 0.0
    %4537 = vmatpush1.msra.mxu0 0.0
    %4538 = vmatprep.subr.mxu0 0.0
    %4539 = vmatpush1.msra.mxu0 0.0
    %4540 = vmatprep.subr.mxu0 0.0
    %4541 = vmatpush1.msra.mxu0 0.0
    %4542 = vmatprep.subr.mxu0 0.0
    %4543 = vmatpush1.msra.mxu0 0.0
    %4544 = vmatprep.subr.mxu0 0.0
    %4545 = vmatpush1.msra.mxu0 0.0
    %4546 = vmatprep.subr.mxu0 0.0
    %4547 = vmatpush1.msra.mxu0 0.0
    %4548 = vmatprep.subr.mxu0 0.0
    %4549 = vmatpush1.msra.mxu0 0.0
    %4550 = vmatprep.subr.mxu0 0.0
    %4551 = vmatpush1.msra.mxu0 0.0
    %4552 = vmatprep.subr.mxu0 0.0
    %4553 = vmatpush1.msra.mxu0 0.0
    %4554 = vmatprep.subr.mxu0 0.0
    %4555 = vmatpush1.msra.mxu0 0.0
    %4556 = vmatprep.subr.mxu0 0.0
    %4557 = vmatpush1.msra.mxu0 0.0
    %4558 = vmatprep.subr.mxu0 0.0
    %4559 = vmatpush1.msra.mxu0 0.0
    %4560 = vmatprep.subr.mxu0 0.0
    %4561 = vmatpush1.msra.mxu0 0.0
    %4562 = vmatprep.subr.mxu0 0.0
    %4563 = vmatpush1.msra.mxu0 0.0
    %4564 = vmatprep.subr.mxu0 0.0
    %4565 = vmatpush1.msra.mxu0 0.0
    %4566 = vmatprep.subr.mxu0 0.0
    %4567 = vmatpush1.msra.mxu0 0.0
    %4568 = vmatprep.subr.mxu0 0.0
    %4569 = vmatpush1.msra.mxu0 0.0
    %4570 = vmatprep.subr.mxu0 0.0
    %4571 = vmatpush1.msra.mxu0 0.0
    %4572 = vmatprep.subr.mxu0 0.0
    %4573 = vmatpush1.msra.mxu0 0.0
    %4574 = vmatprep.subr.mxu0 0.0
    %4575 = vmatpush1.msra.mxu0 0.0
    %4576 = vmatprep.subr.mxu0 0.0
    %4577 = vmatpush1.msra.mxu0 0.0
    %4578 = vmatprep.subr.mxu0 0.0
    %4579 = vmatpush1.msra.mxu0 0.0
    %4580 = vmatprep.subr.mxu0 0.0
    %4581 = vmatpush1.msra.mxu0 0.0
    %4582 = vmatprep.subr.mxu0 0.0
    %4583 = vmatpush1.msra.mxu0 0.0
    %4584 = vmatprep.subr.mxu0 0.0
    %4585 = vmatpush1.msra.mxu0 0.0
    %4586 = vmatprep.mubr.f32.mxu0 0.0
    %4587 = vmatmul.mubr.f32.gmra.mrb[0].mxu0 %v4520
    %v4588 = vpop.f32.mrb[0].mxu0
    %v4589 = vadd.f32 0.0, %v4588
    %v4590 = vpop.f32.mrb[0].mxu0
    %4591 = vdwg.mxu0
    %4592 = vrot.lane.b32.xlu0 %v3999, 56
    %v4593 = vpop.permute.xlu0 %4592
    %v4596 = vsel %vm245, %v4515, 0
    %4598 = vmatprep.subr.mxu0 0.0
    %4599 = vmatpush1.msra.mxu0 %v4593
    %4600 = vmatprep.subr.mxu0 0.0
    %4601 = vmatpush1.msra.mxu0 0.0
    %4602 = vmatprep.subr.mxu0 0.0
    %4603 = vmatpush1.msra.mxu0 0.0
    %4604 = vmatprep.subr.mxu0 0.0
    %4605 = vmatpush1.msra.mxu0 0.0
    %4606 = vmatprep.subr.mxu0 0.0
    %4607 = vmatpush1.msra.mxu0 0.0
    %4608 = vmatprep.subr.mxu0 0.0
    %4609 = vmatpush1.msra.mxu0 0.0
    %4610 = vmatprep.subr.mxu0 0.0
    %4611 = vmatpush1.msra.mxu0 0.0
    %4612 = vmatprep.subr.mxu0 0.0
    %4613 = vmatpush1.msra.mxu0 0.0
    %4614 = vmatprep.subr.mxu0 0.0
    %4615 = vmatpush1.msra.mxu0 0.0
    %4616 = vmatprep.subr.mxu0 0.0
    %4617 = vmatpush1.msra.mxu0 0.0
    %4618 = vmatprep.subr.mxu0 0.0
    %4619 = vmatpush1.msra.mxu0 0.0
    %4620 = vmatprep.subr.mxu0 0.0
    %4621 = vmatpush1.msra.mxu0 0.0
    %4622 = vmatprep.subr.mxu0 0.0
    %4623 = vmatpush1.msra.mxu0 0.0
    %4624 = vmatprep.subr.mxu0 0.0
    %4625 = vmatpush1.msra.mxu0 0.0
    %4626 = vmatprep.subr.mxu0 0.0
    %4627 = vmatpush1.msra.mxu0 0.0
    %4628 = vmatprep.subr.mxu0 0.0
    %4629 = vmatpush1.msra.mxu0 0.0
    %4630 = vmatprep.subr.mxu0 0.0
    %4631 = vmatpush1.msra.mxu0 0.0
    %4632 = vmatprep.subr.mxu0 0.0
    %4633 = vmatpush1.msra.mxu0 0.0
    %4634 = vmatprep.subr.mxu0 0.0
    %4635 = vmatpush1.msra.mxu0 0.0
    %4636 = vmatprep.subr.mxu0 0.0
    %4637 = vmatpush1.msra.mxu0 0.0
    %4638 = vmatprep.subr.mxu0 0.0
    %4639 = vmatpush1.msra.mxu0 0.0
    %4640 = vmatprep.subr.mxu0 0.0
    %4641 = vmatpush1.msra.mxu0 0.0
    %4642 = vmatprep.subr.mxu0 0.0
    %4643 = vmatpush1.msra.mxu0 0.0
    %4644 = vmatprep.subr.mxu0 0.0
    %4645 = vmatpush1.msra.mxu0 0.0
    %4646 = vmatprep.subr.mxu0 0.0
    %4647 = vmatpush1.msra.mxu0 0.0
    %4648 = vmatprep.subr.mxu0 0.0
    %4649 = vmatpush1.msra.mxu0 0.0
    %4650 = vmatprep.subr.mxu0 0.0
    %4651 = vmatpush1.msra.mxu0 0.0
    %4652 = vmatprep.subr.mxu0 0.0
    %4653 = vmatpush1.msra.mxu0 0.0
    %4654 = vmatprep.subr.mxu0 0.0
    %4655 = vmatpush1.msra.mxu0 0.0
    %4656 = vmatprep.subr.mxu0 0.0
    %4657 = vmatpush1.msra.mxu0 0.0
    %4658 = vmatprep.subr.mxu0 0.0
    %4659 = vmatpush1.msra.mxu0 0.0
    %4660 = vmatprep.subr.mxu0 0.0
    %4661 = vmatpush1.msra.mxu0 0.0
    %4662 = vmatprep.mubr.f32.mxu0 0.0
    %4663 = vmatmul.mubr.f32.gmra.mrb[0].mxu0 %v4596
    %v4664 = vpop.f32.mrb[0].mxu0
    %v4665 = vadd.f32 0.0, %v4664
    %v4666 = vpop.f32.mrb[0].mxu0
    %4667 = vdwg.mxu0
    %4668 = vrot.lane.b32.xlu0 %v3994, 112
    %v4669 = vpop.permute.xlu0 %4668
    %4670 = vrot.lane.b32.xlu0 %v3994, 80
    %v4671 = vpop.permute.xlu0 %4670
    %v4672 = vsel %vm245, %v4669, 0
    %v4674 = vsel %vm245, %v4671, 0
    %4676 = vmatprep.subr.mxu0 0.0
    %4677 = vmatpush1.xpose.msra.mxu0 %v4674
    %4678 = vmatprep.subr.mxu0 0.0
    %4679 = vmatpush1.xpose.msra.mxu0 0.0
    %4680 = vmatprep.subr.mxu0 0.0
    %4681 = vmatpush1.xpose.msra.mxu0 0.0
    %4682 = vmatprep.subr.mxu0 0.0
    %4683 = vmatpush1.xpose.msra.mxu0 0.0
    %4684 = vmatprep.subr.mxu0 0.0
    %4685 = vmatpush1.xpose.msra.mxu0 0.0
    %4686 = vmatprep.subr.mxu0 0.0
    %4687 = vmatpush1.xpose.msra.mxu0 0.0
    %4688 = vmatprep.subr.mxu0 0.0
    %4689 = vmatpush1.xpose.msra.mxu0 0.0
    %4690 = vmatprep.subr.mxu0 0.0
    %4691 = vmatpush1.xpose.msra.mxu0 0.0
    %4692 = vmatprep.subr.mxu0 0.0
    %4693 = vmatpush1.xpose.msra.mxu0 0.0
    %4694 = vmatprep.subr.mxu0 0.0
    %4695 = vmatpush1.xpose.msra.mxu0 0.0
    %4696 = vmatprep.subr.mxu0 0.0
    %4697 = vmatpush1.xpose.msra.mxu0 0.0
    %4698 = vmatprep.subr.mxu0 0.0
    %4699 = vmatpush1.xpose.msra.mxu0 0.0
    %4700 = vmatprep.subr.mxu0 0.0
    %4701 = vmatpush1.xpose.msra.mxu0 0.0
    %4702 = vmatprep.subr.mxu0 0.0
    %4703 = vmatpush1.xpose.msra.mxu0 0.0
    %4704 = vmatprep.subr.mxu0 0.0
    %4705 = vmatpush1.xpose.msra.mxu0 0.0
    %4706 = vmatprep.subr.mxu0 0.0
    %4707 = vmatpush1.xpose.msra.mxu0 0.0
    %4708 = vmatprep.subr.mxu0 0.0
    %4709 = vmatpush1.xpose.msra.mxu0 0.0
    %4710 = vmatprep.subr.mxu0 0.0
    %4711 = vmatpush1.xpose.msra.mxu0 0.0
    %4712 = vmatprep.subr.mxu0 0.0
    %4713 = vmatpush1.xpose.msra.mxu0 0.0
    %4714 = vmatprep.subr.mxu0 0.0
    %4715 = vmatpush1.xpose.msra.mxu0 0.0
    %4716 = vmatprep.subr.mxu0 0.0
    %4717 = vmatpush1.xpose.msra.mxu0 0.0
    %4718 = vmatprep.subr.mxu0 0.0
    %4719 = vmatpush1.xpose.msra.mxu0 0.0
    %4720 = vmatprep.subr.mxu0 0.0
    %4721 = vmatpush1.xpose.msra.mxu0 0.0
    %4722 = vmatprep.subr.mxu0 0.0
    %4723 = vmatpush1.xpose.msra.mxu0 0.0
    %4724 = vmatprep.subr.mxu0 0.0
    %4725 = vmatpush1.xpose.msra.mxu0 0.0
    %4726 = vmatprep.subr.mxu0 0.0
    %4727 = vmatpush1.xpose.msra.mxu0 0.0
    %4728 = vmatprep.subr.mxu0 0.0
    %4729 = vmatpush1.xpose.msra.mxu0 0.0
    %4730 = vmatprep.subr.mxu0 0.0
    %4731 = vmatpush1.xpose.msra.mxu0 0.0
    %4732 = vmatprep.subr.mxu0 0.0
    %4733 = vmatpush1.xpose.msra.mxu0 0.0
    %4734 = vmatprep.subr.mxu0 0.0
    %4735 = vmatpush1.xpose.msra.mxu0 0.0
    %4736 = vmatprep.subr.mxu0 0.0
    %4737 = vmatpush1.xpose.msra.mxu0 0.0
    %4738 = vmatprep.subr.mxu0 0.0
    %4739 = vmatpush1.xpose.msra.mxu0 0.0
    %4740 = vmatprep.mubr.f32.mxu0 0.0
    %4741 = vmatmul.mubr.f32.gmra.mrb[0].mxu0 %v4672
    %v4742 = vpop.f32.mrb[0].mxu0
    %v4743 = vadd.f32 0.0, %v4742
    %v4744 = vpop.f32.mrb[0].mxu0
    %4745 = vdwg.mxu0
    %4746 = vrot.lane.b32.xlu0 %v3999, 112
    %v4747 = vpop.permute.xlu0 %4746
    %4748 = vrot.lane.b32.xlu0 %v3999, 80
    %v4749 = vpop.permute.xlu0 %4748
    %v4750 = vsel %vm245, %v4747, 0
    %v4752 = vsel %vm245, %v4749, 0
    %4754 = vmatprep.subr.mxu0 0.0
    %4755 = vmatpush1.xpose.msra.mxu0 %v4752
    %4756 = vmatprep.subr.mxu0 0.0
    %4757 = vmatpush1.xpose.msra.mxu0 0.0
    %4758 = vmatprep.subr.mxu0 0.0
    %4759 = vmatpush1.xpose.msra.mxu0 0.0
    %4760 = vmatprep.subr.mxu0 0.0
    %4761 = vmatpush1.xpose.msra.mxu0 0.0
    %4762 = vmatprep.subr.mxu0 0.0
    %4763 = vmatpush1.xpose.msra.mxu0 0.0
    %4764 = vmatprep.subr.mxu0 0.0
    %4765 = vmatpush1.xpose.msra.mxu0 0.0
    %4766 = vmatprep.subr.mxu0 0.0
    %4767 = vmatpush1.xpose.msra.mxu0 0.0
    %4768 = vmatprep.subr.mxu0 0.0
    %4769 = vmatpush1.xpose.msra.mxu0 0.0
    %4770 = vmatprep.subr.mxu0 0.0
    %4771 = vmatpush1.xpose.msra.mxu0 0.0
    %4772 = vmatprep.subr.mxu0 0.0
    %4773 = vmatpush1.xpose.msra.mxu0 0.0
    %4774 = vmatprep.subr.mxu0 0.0
    %4775 = vmatpush1.xpose.msra.mxu0 0.0
    %4776 = vmatprep.subr.mxu0 0.0
    %4777 = vmatpush1.xpose.msra.mxu0 0.0
    %4778 = vmatprep.subr.mxu0 0.0
    %4779 = vmatpush1.xpose.msra.mxu0 0.0
    %4780 = vmatprep.subr.mxu0 0.0
    %4781 = vmatpush1.xpose.msra.mxu0 0.0
    %4782 = vmatprep.subr.mxu0 0.0
    %4783 = vmatpush1.xpose.msra.mxu0 0.0
    %4784 = vmatprep.subr.mxu0 0.0
    %4785 = vmatpush1.xpose.msra.mxu0 0.0
    %4786 = vmatprep.subr.mxu0 0.0
    %4787 = vmatpush1.xpose.msra.mxu0 0.0
    %4788 = vmatprep.subr.mxu0 0.0
    %4789 = vmatpush1.xpose.msra.mxu0 0.0
    %4790 = vmatprep.subr.mxu0 0.0
    %4791 = vmatpush1.xpose.msra.mxu0 0.0
    %4792 = vmatprep.subr.mxu0 0.0
    %4793 = vmatpush1.xpose.msra.mxu0 0.0
    %4794 = vmatprep.subr.mxu0 0.0
    %4795 = vmatpush1.xpose.msra.mxu0 0.0
    %4796 = vmatprep.subr.mxu0 0.0
    %4797 = vmatpush1.xpose.msra.mxu0 0.0
    %4798 = vmatprep.subr.mxu0 0.0
    %4799 = vmatpush1.xpose.msra.mxu0 0.0
    %4800 = vmatprep.subr.mxu0 0.0
    %4801 = vmatpush1.xpose.msra.mxu0 0.0
    %4802 = vmatprep.subr.mxu0 0.0
    %4803 = vmatpush1.xpose.msra.mxu0 0.0
    %4804 = vmatprep.subr.mxu0 0.0
    %4805 = vmatpush1.xpose.msra.mxu0 0.0
    %4806 = vmatprep.subr.mxu0 0.0
    %4807 = vmatpush1.xpose.msra.mxu0 0.0
    %4808 = vmatprep.subr.mxu0 0.0
    %4809 = vmatpush1.xpose.msra.mxu0 0.0
    %4810 = vmatprep.subr.mxu0 0.0
    %4811 = vmatpush1.xpose.msra.mxu0 0.0
    %4812 = vmatprep.subr.mxu0 0.0
    %4813 = vmatpush1.xpose.msra.mxu0 0.0
    %4814 = vmatprep.subr.mxu0 0.0
    %4815 = vmatpush1.xpose.msra.mxu0 0.0
    %4816 = vmatprep.subr.mxu0 0.0
    %4817 = vmatpush1.xpose.msra.mxu0 0.0
    %4818 = vmatprep.mubr.f32.mxu0 0.0
    %4819 = vmatmul.mubr.f32.gmra.mrb[0].mxu0 %v4750
    %v4820 = vpop.f32.mrb[0].mxu0
    %v4821 = vadd.f32 0.0, %v4820
    %v4822 = vpop.f32.mrb[0].mxu0
    %4823 = vdwg.mxu0
    %v4824 = vmul.f32 %v4743, 0.35355338
    %v4825 = vmul.f32 %v4821, 0.35355338
    %v4826 = vadd.f32 %v4824, %v402
    %v4827 = vadd.f32 %v4825, %v406
    %v4828 = vsel %vm245, %v4826, -inf
    %4829 = vmax.xlane.f32.xlu0 %v4828
    %v4830 = vpop.xlane.xlu0 %4829
    %v4831 = vsel %vm245, %v4827, -inf
    %4832 = vmax.xlane.f32.xlu0 %v4831
    %v4833 = vpop.xlane.xlu0 %4832
    %v4834 = vsub.f32 %v4826, %v4830
    %v4835 = vsub.f32 %v4827, %v4833
    %v4836 = vmul.f32 %v4834, 1.442695
    %v4837 = vpow.pop %v4836
    %v4838 = vmul.f32 %v4835, 1.442695
    %v4839 = vpow.pop %v4838
    %v4840 = vsel %vm245, %v4837, 0.0
    %4841 = vadd.xlane.f32.xlu0 %v4840
    %v4842 = vpop.xlane.xlu0 %4841
    %v4843 = vsel %vm245, %v4839, 0.0
    %4844 = vadd.xlane.f32.xlu0 %v4843
    %v4845 = vpop.xlane.xlu0 %4844
    %v4846 = vrcp.pop %v4842
    %v4847 = vrcp.pop %v4845
    %v4848 = vmul.f32 %v4837, %v4846
    %v4849 = vmul.f32 %v4839, %v4847
    %4850 = vrot.lane.b32.xlu0 %v3994, 48
    %v4851 = vpop.permute.xlu0 %4850
    %v4854 = vsel %vm245, %v4848, 0
    %4856 = vmatprep.subr.mxu0 0.0
    %4857 = vmatpush1.msra.mxu0 %v4851
    %4858 = vmatprep.subr.mxu0 0.0
    %4859 = vmatpush1.msra.mxu0 0.0
    %4860 = vmatprep.subr.mxu0 0.0
    %4861 = vmatpush1.msra.mxu0 0.0
    %4862 = vmatprep.subr.mxu0 0.0
    %4863 = vmatpush1.msra.mxu0 0.0
    %4864 = vmatprep.subr.mxu0 0.0
    %4865 = vmatpush1.msra.mxu0 0.0
    %4866 = vmatprep.subr.mxu0 0.0
    %4867 = vmatpush1.msra.mxu0 0.0
    %4868 = vmatprep.subr.mxu0 0.0
    %4869 = vmatpush1.msra.mxu0 0.0
    %4870 = vmatprep.subr.mxu0 0.0
    %4871 = vmatpush1.msra.mxu0 0.0
    %4872 = vmatprep.subr.mxu0 0.0
    %4873 = vmatpush1.msra.mxu0 0.0
    %4874 = vmatprep.subr.mxu0 0.0
    %4875 = vmatpush1.msra.mxu0 0.0
    %4876 = vmatprep.subr.mxu0 0.0
    %4877 = vmatpush1.msra.mxu0 0.0
    %4878 = vmatprep.subr.mxu0 0.0
    %4879 = vmatpush1.msra.mxu0 0.0
    %4880 = vmatprep.subr.mxu0 0.0
    %4881 = vmatpush1.msra.mxu0 0.0
    %4882 = vmatprep.subr.mxu0 0.0
    %4883 = vmatpush1.msra.mxu0 0.0
    %4884 = vmatprep.subr.mxu0 0.0
    %4885 = vmatpush1.msra.mxu0 0.0
    %4886 = vmatprep.subr.mxu0 0.0
    %4887 = vmatpush1.msra.mxu0 0.0
    %4888 = vmatprep.subr.mxu0 0.0
    %4889 = vmatpush1.msra.mxu0 0.0
    %4890 = vmatprep.subr.mxu0 0.0
    %4891 = vmatpush1.msra.mxu0 0.0
    %4892 = vmatprep.subr.mxu0 0.0
    %4893 = vmatpush1.msra.mxu0 0.0
    %4894 = vmatprep.subr.mxu0 0.0
    %4895 = vmatpush1.msra.mxu0 0.0
    %4896 = vmatprep.subr.mxu0 0.0
    %4897 = vmatpush1.msra.mxu0 0.0
    %4898 = vmatprep.subr.mxu0 0.0
    %4899 = vmatpush1.msra.mxu0 0.0
    %4900 = vmatprep.subr.mxu0 0.0
    %4901 = vmatpush1.msra.mxu0 0.0
    %4902 = vmatprep.subr.mxu0 0.0
    %4903 = vmatpush1.msra.mxu0 0.0
    %4904 = vmatprep.subr.mxu0 0.0
    %4905 = vmatpush1.msra.mxu0 0.0
    %4906 = vmatprep.subr.mxu0 0.0
    %4907 = vmatpush1.msra.mxu0 0.0
    %4908 = vmatprep.subr.mxu0 0.0
    %4909 = vmatpush1.msra.mxu0 0.0
    %4910 = vmatprep.subr.mxu0 0.0
    %4911 = vmatpush1.msra.mxu0 0.0
    %4912 = vmatprep.subr.mxu0 0.0
    %4913 = vmatpush1.msra.mxu0 0.0
    %4914 = vmatprep.subr.mxu0 0.0
    %4915 = vmatpush1.msra.mxu0 0.0
    %4916 = vmatprep.subr.mxu0 0.0
    %4917 = vmatpush1.msra.mxu0 0.0
    %4918 = vmatprep.subr.mxu0 0.0
    %4919 = vmatpush1.msra.mxu0 0.0
    %4920 = vmatprep.mubr.f32.mxu0 0.0
    %4921 = vmatmul.mubr.f32.gmra.mrb[0].mxu0 %v4854
    %v4922 = vpop.f32.mrb[0].mxu0
    %v4923 = vadd.f32 0.0, %v4922
    %v4924 = vpop.f32.mrb[0].mxu0
    %4925 = vdwg.mxu0
    %4926 = vrot.lane.b32.xlu0 %v3999, 48
    %v4927 = vpop.permute.xlu0 %4926
    %v4930 = vsel %vm245, %v4849, 0
    %4932 = vmatprep.subr.mxu0 0.0
    %4933 = vmatpush1.msra.mxu0 %v4927
    %4934 = vmatprep.subr.mxu0 0.0
    %4935 = vmatpush1.msra.mxu0 0.0
    %4936 = vmatprep.subr.mxu0 0.0
    %4937 = vmatpush1.msra.mxu0 0.0
    %4938 = vmatprep.subr.mxu0 0.0
    %4939 = vmatpush1.msra.mxu0 0.0
    %4940 = vmatprep.subr.mxu0 0.0
    %4941 = vmatpush1.msra.mxu0 0.0
    %4942 = vmatprep.subr.mxu0 0.0
    %4943 = vmatpush1.msra.mxu0 0.0
    %4944 = vmatprep.subr.mxu0 0.0
    %4945 = vmatpush1.msra.mxu0 0.0
    %4946 = vmatprep.subr.mxu0 0.0
    %4947 = vmatpush1.msra.mxu0 0.0
    %4948 = vmatprep.subr.mxu0 0.0
    %4949 = vmatpush1.msra.mxu0 0.0
    %4950 = vmatprep.subr.mxu0 0.0
    %4951 = vmatpush1.msra.mxu0 0.0
    %4952 = vmatprep.subr.mxu0 0.0
    %4953 = vmatpush1.msra.mxu0 0.0
    %4954 = vmatprep.subr.mxu0 0.0
    %4955 = vmatpush1.msra.mxu0 0.0
    %4956 = vmatprep.subr.mxu0 0.0
    %4957 = vmatpush1.msra.mxu0 0.0
    %4958 = vmatprep.subr.mxu0 0.0
    %4959 = vmatpush1.msra.mxu0 0.0
    %4960 = vmatprep.subr.mxu0 0.0
    %4961 = vmatpush1.msra.mxu0 0.0
    %4962 = vmatprep.subr.mxu0 0.0
    %4963 = vmatpush1.msra.mxu0 0.0
    %4964 = vmatprep.subr.mxu0 0.0
    %4965 = vmatpush1.msra.mxu0 0.0
    %4966 = vmatprep.subr.mxu0 0.0
    %4967 = vmatpush1.msra.mxu0 0.0
    %4968 = vmatprep.subr.mxu0 0.0
    %4969 = vmatpush1.msra.mxu0 0.0
    %4970 = vmatprep.subr.mxu0 0.0
    %4971 = vmatpush1.msra.mxu0 0.0
    %4972 = vmatprep.subr.mxu0 0.0
    %4973 = vmatpush1.msra.mxu0 0.0
    %4974 = vmatprep.subr.mxu0 0.0
    %4975 = vmatpush1.msra.mxu0 0.0
    %4976 = vmatprep.subr.mxu0 0.0
    %4977 = vmatpush1.msra.mxu0 0.0
    %4978 = vmatprep.subr.mxu0 0.0
    %4979 = vmatpush1.msra.mxu0 0.0
    %4980 = vmatprep.subr.mxu0 0.0
    %4981 = vmatpush1.msra.mxu0 0.0
    %4982 = vmatprep.subr.mxu0 0.0
    %4983 = vmatpush1.msra.mxu0 0.0
    %4984 = vmatprep.subr.mxu0 0.0
    %4985 = vmatpush1.msra.mxu0 0.0
    %4986 = vmatprep.subr.mxu0 0.0
    %4987 = vmatpush1.msra.mxu0 0.0
    %4988 = vmatprep.subr.mxu0 0.0
    %4989 = vmatpush1.msra.mxu0 0.0
    %4990 = vmatprep.subr.mxu0 0.0
    %4991 = vmatpush1.msra.mxu0 0.0
    %4992 = vmatprep.subr.mxu0 0.0
    %4993 = vmatpush1.msra.mxu0 0.0
    %4994 = vmatprep.subr.mxu0 0.0
    %4995 = vmatpush1.msra.mxu0 0.0
    %4996 = vmatprep.mubr.f32.mxu0 0.0
    %4997 = vmatmul.mubr.f32.gmra.mrb[0].mxu0 %v4930
    %v4998 = vpop.f32.mrb[0].mxu0
    %v4999 = vadd.f32 0.0, %v4998
    %v5000 = vpop.f32.mrb[0].mxu0
    %5001 = vdwg.mxu0
    %5002 = vrot.lane.b32.xlu0 %v3994, 104
    %v5003 = vpop.permute.xlu0 %5002
    %5004 = vrot.lane.b32.xlu0 %v3994, 72
    %v5005 = vpop.permute.xlu0 %5004
    %v5006 = vsel %vm245, %v5003, 0
    %v5008 = vsel %vm245, %v5005, 0
    %5010 = vmatprep.subr.mxu0 0.0
    %5011 = vmatpush1.xpose.msra.mxu0 %v5008
    %5012 = vmatprep.subr.mxu0 0.0
    %5013 = vmatpush1.xpose.msra.mxu0 0.0
    %5014 = vmatprep.subr.mxu0 0.0
    %5015 = vmatpush1.xpose.msra.mxu0 0.0
    %5016 = vmatprep.subr.mxu0 0.0
    %5017 = vmatpush1.xpose.msra.mxu0 0.0
    %5018 = vmatprep.subr.mxu0 0.0
    %5019 = vmatpush1.xpose.msra.mxu0 0.0
    %5020 = vmatprep.subr.mxu0 0.0
    %5021 = vmatpush1.xpose.msra.mxu0 0.0
    %5022 = vmatprep.subr.mxu0 0.0
    %5023 = vmatpush1.xpose.msra.mxu0 0.0
    %5024 = vmatprep.subr.mxu0 0.0
    %5025 = vmatpush1.xpose.msra.mxu0 0.0
    %5026 = vmatprep.subr.mxu0 0.0
    %5027 = vmatpush1.xpose.msra.mxu0 0.0
    %5028 = vmatprep.subr.mxu0 0.0
    %5029 = vmatpush1.xpose.msra.mxu0 0.0
    %5030 = vmatprep.subr.mxu0 0.0
    %5031 = vmatpush1.xpose.msra.mxu0 0.0
    %5032 = vmatprep.subr.mxu0 0.0
    %5033 = vmatpush1.xpose.msra.mxu0 0.0
    %5034 = vmatprep.subr.mxu0 0.0
    %5035 = vmatpush1.xpose.msra.mxu0 0.0
    %5036 = vmatprep.subr.mxu0 0.0
    %5037 = vmatpush1.xpose.msra.mxu0 0.0
    %5038 = vmatprep.subr.mxu0 0.0
    %5039 = vmatpush1.xpose.msra.mxu0 0.0
    %5040 = vmatprep.subr.mxu0 0.0
    %5041 = vmatpush1.xpose.msra.mxu0 0.0
    %5042 = vmatprep.subr.mxu0 0.0
    %5043 = vmatpush1.xpose.msra.mxu0 0.0
    %5044 = vmatprep.subr.mxu0 0.0
    %5045 = vmatpush1.xpose.msra.mxu0 0.0
    %5046 = vmatprep.subr.mxu0 0.0
    %5047 = vmatpush1.xpose.msra.mxu0 0.0
    %5048 = vmatprep.subr.mxu0 0.0
    %5049 = vmatpush1.xpose.msra.mxu0 0.0
    %5050 = vmatprep.subr.mxu0 0.0
    %5051 = vmatpush1.xpose.msra.mxu0 0.0
    %5052 = vmatprep.subr.mxu0 0.0
    %5053 = vmatpush1.xpose.msra.mxu0 0.0
    %5054 = vmatprep.subr.mxu0 0.0
    %5055 = vmatpush1.xpose.msra.mxu0 0.0
    %5056 = vmatprep.subr.mxu0 0.0
    %5057 = vmatpush1.xpose.msra.mxu0 0.0
    %5058 = vmatprep.subr.mxu0 0.0
    %5059 = vmatpush1.xpose.msra.mxu0 0.0
    %5060 = vmatprep.subr.mxu0 0.0
    %5061 = vmatpush1.xpose.msra.mxu0 0.0
    %5062 = vmatprep.subr.mxu0 0.0
    %5063 = vmatpush1.xpose.msra.mxu0 0.0
    %5064 = vmatprep.subr.mxu0 0.0
    %5065 = vmatpush1.xpose.msra.mxu0 0.0
    %5066 = vmatprep.subr.mxu0 0.0
    %5067 = vmatpush1.xpose.msra.mxu0 0.0
    %5068 = vmatprep.subr.mxu0 0.0
    %5069 = vmatpush1.xpose.msra.mxu0 0.0
    %5070 = vmatprep.subr.mxu0 0.0
    %5071 = vmatpush1.xpose.msra.mxu0 0.0
    %5072 = vmatprep.subr.mxu0 0.0
    %5073 = vmatpush1.xpose.msra.mxu0 0.0
    %5074 = vmatprep.mubr.f32.mxu0 0.0
    %5075 = vmatmul.mubr.f32.gmra.mrb[0].mxu0 %v5006
    %v5076 = vpop.f32.mrb[0].mxu0
    %v5077 = vadd.f32 0.0, %v5076
    %v5078 = vpop.f32.mrb[0].mxu0
    %5079 = vdwg.mxu0
    %5080 = vrot.lane.b32.xlu0 %v3999, 104
    %v5081 = vpop.permute.xlu0 %5080
    %5082 = vrot.lane.b32.xlu0 %v3999, 72
    %v5083 = vpop.permute.xlu0 %5082
    %v5084 = vsel %vm245, %v5081, 0
    %v5086 = vsel %vm245, %v5083, 0
    %5088 = vmatprep.subr.mxu0 0.0
    %5089 = vmatpush1.xpose.msra.mxu0 %v5086
    %5090 = vmatprep.subr.mxu0 0.0
    %5091 = vmatpush1.xpose.msra.mxu0 0.0
    %5092 = vmatprep.subr.mxu0 0.0
    %5093 = vmatpush1.xpose.msra.mxu0 0.0
    %5094 = vmatprep.subr.mxu0 0.0
    %5095 = vmatpush1.xpose.msra.mxu0 0.0
    %5096 = vmatprep.subr.mxu0 0.0
    %5097 = vmatpush1.xpose.msra.mxu0 0.0
    %5098 = vmatprep.subr.mxu0 0.0
    %5099 = vmatpush1.xpose.msra.mxu0 0.0
    %5100 = vmatprep.subr.mxu0 0.0
    %5101 = vmatpush1.xpose.msra.mxu0 0.0
    %5102 = vmatprep.subr.mxu0 0.0
    %5103 = vmatpush1.xpose.msra.mxu0 0.0
    %5104 = vmatprep.subr.mxu0 0.0
    %5105 = vmatpush1.xpose.msra.mxu0 0.0
    %5106 = vmatprep.subr.mxu0 0.0
    %5107 = vmatpush1.xpose.msra.mxu0 0.0
    %5108 = vmatprep.subr.mxu0 0.0
    %5109 = vmatpush1.xpose.msra.mxu0 0.0
    %5110 = vmatprep.subr.mxu0 0.0
    %5111 = vmatpush1.xpose.msra.mxu0 0.0
    %5112 = vmatprep.subr.mxu0 0.0
    %5113 = vmatpush1.xpose.msra.mxu0 0.0
    %5114 = vmatprep.subr.mxu0 0.0
    %5115 = vmatpush1.xpose.msra.mxu0 0.0
    %5116 = vmatprep.subr.mxu0 0.0
    %5117 = vmatpush1.xpose.msra.mxu0 0.0
    %5118 = vmatprep.subr.mxu0 0.0
    %5119 = vmatpush1.xpose.msra.mxu0 0.0
    %5120 = vmatprep.subr.mxu0 0.0
    %5121 = vmatpush1.xpose.msra.mxu0 0.0
    %5122 = vmatprep.subr.mxu0 0.0
    %5123 = vmatpush1.xpose.msra.mxu0 0.0
    %5124 = vmatprep.subr.mxu0 0.0
    %5125 = vmatpush1.xpose.msra.mxu0 0.0
    %5126 = vmatprep.subr.mxu0 0.0
    %5127 = vmatpush1.xpose.msra.mxu0 0.0
    %5128 = vmatprep.subr.mxu0 0.0
    %5129 = vmatpush1.xpose.msra.mxu0 0.0
    %5130 = vmatprep.subr.mxu0 0.0
    %5131 = vmatpush1.xpose.msra.mxu0 0.0
    %5132 = vmatprep.subr.mxu0 0.0
    %5133 = vmatpush1.xpose.msra.mxu0 0.0
    %5134 = vmatprep.subr.mxu0 0.0
    %5135 = vmatpush1.xpose.msra.mxu0 0.0
    %5136 = vmatprep.subr.mxu0 0.0
    %5137 = vmatpush1.xpose.msra.mxu0 0.0
    %5138 = vmatprep.subr.mxu0 0.0
    %5139 = vmatpush1.xpose.msra.mxu0 0.0
    %5140 = vmatprep.subr.mxu0 0.0
    %5141 = vmatpush1.xpose.msra.mxu0 0.0
    %5142 = vmatprep.subr.mxu0 0.0
    %5143 = vmatpush1.xpose.msra.mxu0 0.0
    %5144 = vmatprep.subr.mxu0 0.0
    %5145 = vmatpush1.xpose.msra.mxu0 0.0
    %5146 = vmatprep.subr.mxu0 0.0
    %5147 = vmatpush1.xpose.msra.mxu0 0.0
    %5148 = vmatprep.subr.mxu0 0.0
    %5149 = vmatpush1.xpose.msra.mxu0 0.0
    %5150 = vmatprep.subr.mxu0 0.0
    %5151 = vmatpush1.xpose.msra.mxu0 0.0
    %5152 = vmatprep.mubr.f32.mxu0 0.0
    %5153 = vmatmul.mubr.f32.gmra.mrb[0].mxu0 %v5084
    %v5154 = vpop.f32.mrb[0].mxu0
    %v5155 = vadd.f32 0.0, %v5154
    %v5156 = vpop.f32.mrb[0].mxu0
    %5157 = vdwg.mxu0
    %v5158 = vmul.f32 %v5077, 0.35355338
    %v5159 = vmul.f32 %v5155, 0.35355338
    %v5160 = vadd.f32 %v5158, %v402
    %v5161 = vadd.f32 %v5159, %v406
    %v5162 = vsel %vm245, %v5160, -inf
    %5163 = vmax.xlane.f32.xlu0 %v5162
    %v5164 = vpop.xlane.xlu0 %5163
    %v5165 = vsel %vm245, %v5161, -inf
    %5166 = vmax.xlane.f32.xlu0 %v5165
    %v5167 = vpop.xlane.xlu0 %5166
    %v5168 = vsub.f32 %v5160, %v5164
    %v5169 = vsub.f32 %v5161, %v5167
    %v5170 = vmul.f32 %v5168, 1.442695
    %v5171 = vpow.pop %v5170
    %v5172 = vmul.f32 %v5169, 1.442695
    %v5173 = vpow.pop %v5172
    %v5174 = vsel %vm245, %v5171, 0.0
    %5175 = vadd.xlane.f32.xlu0 %v5174
    %v5176 = vpop.xlane.xlu0 %5175
    %v5177 = vsel %vm245, %v5173, 0.0
    %5178 = vadd.xlane.f32.xlu0 %v5177
    %v5179 = vpop.xlane.xlu0 %5178
    %v5180 = vrcp.pop %v5176
    %v5181 = vrcp.pop %v5179
    %v5182 = vmul.f32 %v5171, %v5180
    %v5183 = vmul.f32 %v5173, %v5181
    %5184 = vrot.lane.b32.xlu0 %v3994, 40
    %v5185 = vpop.permute.xlu0 %5184
    %v5188 = vsel %vm245, %v5182, 0
    %5190 = vmatprep.subr.mxu0 0.0
    %5191 = vmatpush1.msra.mxu0 %v5185
    %5192 = vmatprep.subr.mxu0 0.0
    %5193 = vmatpush1.msra.mxu0 0.0
    %5194 = vmatprep.subr.mxu0 0.0
    %5195 = vmatpush1.msra.mxu0 0.0
    %5196 = vmatprep.subr.mxu0 0.0
    %5197 = vmatpush1.msra.mxu0 0.0
    %5198 = vmatprep.subr.mxu0 0.0
    %5199 = vmatpush1.msra.mxu0 0.0
    %5200 = vmatprep.subr.mxu0 0.0
    %5201 = vmatpush1.msra.mxu0 0.0
    %5202 = vmatprep.subr.mxu0 0.0
    %5203 = vmatpush1.msra.mxu0 0.0
    %5204 = vmatprep.subr.mxu0 0.0
    %5205 = vmatpush1.msra.mxu0 0.0
    %5206 = vmatprep.subr.mxu0 0.0
    %5207 = vmatpush1.msra.mxu0 0.0
    %5208 = vmatprep.subr.mxu0 0.0
    %5209 = vmatpush1.msra.mxu0 0.0
    %5210 = vmatprep.subr.mxu0 0.0
    %5211 = vmatpush1.msra.mxu0 0.0
    %5212 = vmatprep.subr.mxu0 0.0
    %5213 = vmatpush1.msra.mxu0 0.0
    %5214 = vmatprep.subr.mxu0 0.0
    %5215 = vmatpush1.msra.mxu0 0.0
    %5216 = vmatprep.subr.mxu0 0.0
    %5217 = vmatpush1.msra.mxu0 0.0
    %5218 = vmatprep.subr.mxu0 0.0
    %5219 = vmatpush1.msra.mxu0 0.0
    %5220 = vmatprep.subr.mxu0 0.0
    %5221 = vmatpush1.msra.mxu0 0.0
    %5222 = vmatprep.subr.mxu0 0.0
    %5223 = vmatpush1.msra.mxu0 0.0
    %5224 = vmatprep.subr.mxu0 0.0
    %5225 = vmatpush1.msra.mxu0 0.0
    %5226 = vmatprep.subr.mxu0 0.0
    %5227 = vmatpush1.msra.mxu0 0.0
    %5228 = vmatprep.subr.mxu0 0.0
    %5229 = vmatpush1.msra.mxu0 0.0
    %5230 = vmatprep.subr.mxu0 0.0
    %5231 = vmatpush1.msra.mxu0 0.0
    %5232 = vmatprep.subr.mxu0 0.0
    %5233 = vmatpush1.msra.mxu0 0.0
    %5234 = vmatprep.subr.mxu0 0.0
    %5235 = vmatpush1.msra.mxu0 0.0
    %5236 = vmatprep.subr.mxu0 0.0
    %5237 = vmatpush1.msra.mxu0 0.0
    %5238 = vmatprep.subr.mxu0 0.0
    %5239 = vmatpush1.msra.mxu0 0.0
    %5240 = vmatprep.subr.mxu0 0.0
    %5241 = vmatpush1.msra.mxu0 0.0
    %5242 = vmatprep.subr.mxu0 0.0
    %5243 = vmatpush1.msra.mxu0 0.0
    %5244 = vmatprep.subr.mxu0 0.0
    %5245 = vmatpush1.msra.mxu0 0.0
    %5246 = vmatprep.subr.mxu0 0.0
    %5247 = vmatpush1.msra.mxu0 0.0
    %5248 = vmatprep.subr.mxu0 0.0
    %5249 = vmatpush1.msra.mxu0 0.0
    %5250 = vmatprep.subr.mxu0 0.0
    %5251 = vmatpush1.msra.mxu0 0.0
    %5252 = vmatprep.subr.mxu0 0.0
    %5253 = vmatpush1.msra.mxu0 0.0
    %5254 = vmatprep.mubr.f32.mxu0 0.0
    %5255 = vmatmul.mubr.f32.gmra.mrb[0].mxu0 %v5188
    %v5256 = vpop.f32.mrb[0].mxu0
    %v5257 = vadd.f32 0.0, %v5256
    %v5258 = vpop.f32.mrb[0].mxu0
    %5259 = vdwg.mxu0
    %5260 = vrot.lane.b32.xlu0 %v3999, 40
    %v5261 = vpop.permute.xlu0 %5260
    %v5264 = vsel %vm245, %v5183, 0
    %5266 = vmatprep.subr.mxu0 0.0
    %5267 = vmatpush1.msra.mxu0 %v5261
    %5268 = vmatprep.subr.mxu0 0.0
    %5269 = vmatpush1.msra.mxu0 0.0
    %5270 = vmatprep.subr.mxu0 0.0
    %5271 = vmatpush1.msra.mxu0 0.0
    %5272 = vmatprep.subr.mxu0 0.0
    %5273 = vmatpush1.msra.mxu0 0.0
    %5274 = vmatprep.subr.mxu0 0.0
    %5275 = vmatpush1.msra.mxu0 0.0
    %5276 = vmatprep.subr.mxu0 0.0
    %5277 = vmatpush1.msra.mxu0 0.0
    %5278 = vmatprep.subr.mxu0 0.0
    %5279 = vmatpush1.msra.mxu0 0.0
    %5280 = vmatprep.subr.mxu0 0.0
    %5281 = vmatpush1.msra.mxu0 0.0
    %5282 = vmatprep.subr.mxu0 0.0
    %5283 = vmatpush1.msra.mxu0 0.0
    %5284 = vmatprep.subr.mxu0 0.0
    %5285 = vmatpush1.msra.mxu0 0.0
    %5286 = vmatprep.subr.mxu0 0.0
    %5287 = vmatpush1.msra.mxu0 0.0
    %5288 = vmatprep.subr.mxu0 0.0
    %5289 = vmatpush1.msra.mxu0 0.0
    %5290 = vmatprep.subr.mxu0 0.0
    %5291 = vmatpush1.msra.mxu0 0.0
    %5292 = vmatprep.subr.mxu0 0.0
    %5293 = vmatpush1.msra.mxu0 0.0
    %5294 = vmatprep.subr.mxu0 0.0
    %5295 = vmatpush1.msra.mxu0 0.0
    %5296 = vmatprep.subr.mxu0 0.0
    %5297 = vmatpush1.msra.mxu0 0.0
    %5298 = vmatprep.subr.mxu0 0.0
    %5299 = vmatpush1.msra.mxu0 0.0
    %5300 = vmatprep.subr.mxu0 0.0
    %5301 = vmatpush1.msra.mxu0 0.0
    %5302 = vmatprep.subr.mxu0 0.0
    %5303 = vmatpush1.msra.mxu0 0.0
    %5304 = vmatprep.subr.mxu0 0.0
    %5305 = vmatpush1.msra.mxu0 0.0
    %5306 = vmatprep.subr.mxu0 0.0
    %5307 = vmatpush1.msra.mxu0 0.0
    %5308 = vmatprep.subr.mxu0 0.0
    %5309 = vmatpush1.msra.mxu0 0.0
    %5310 = vmatprep.subr.mxu0 0.0
    %5311 = vmatpush1.msra.mxu0 0.0
    %5312 = vmatprep.subr.mxu0 0.0
    %5313 = vmatpush1.msra.mxu0 0.0
    %5314 = vmatprep.subr.mxu0 0.0
    %5315 = vmatpush1.msra.mxu0 0.0
    %5316 = vmatprep.subr.mxu0 0.0
    %5317 = vmatpush1.msra.mxu0 0.0
    %5318 = vmatprep.subr.mxu0 0.0
    %5319 = vmatpush1.msra.mxu0 0.0
    %5320 = vmatprep.subr.mxu0 0.0
    %5321 = vmatpush1.msra.mxu0 0.0
    %5322 = vmatprep.subr.mxu0 0.0
    %5323 = vmatpush1.msra.mxu0 0.0
    %5324 = vmatprep.subr.mxu0 0.0
    %5325 = vmatpush1.msra.mxu0 0.0
    %5326 = vmatprep.subr.mxu0 0.0
    %5327 = vmatpush1.msra.mxu0 0.0
    %5328 = vmatprep.subr.mxu0 0.0
    %5329 = vmatpush1.msra.mxu0 0.0
    %5330 = vmatprep.mubr.f32.mxu0 0.0
    %5331 = vmatmul.mubr.f32.gmra.mrb[0].mxu0 %v5264
    %v5332 = vpop.f32.mrb[0].mxu0
    %v5333 = vadd.f32 0.0, %v5332
    %v5334 = vpop.f32.mrb[0].mxu0
    %5335 = vdwg.mxu0
    %5338 = vrot.lane.b32.xlu0 %v4589, 8
    %v5339 = vpop.permute.xlu0 %5338
    %5340 = vrot.lane.b32.xlu0 %v4665, 8
    %v5341 = vpop.permute.xlu0 %5340
    %5346 = vrot.lane.b32.xlu0 %v4923, 16
    %v5347 = vpop.permute.xlu0 %5346
    %5348 = vrot.lane.b32.xlu0 %v4999, 16
    %v5349 = vpop.permute.xlu0 %5348
    %5354 = vrot.lane.b32.xlu0 %v5257, 24
    %v5355 = vpop.permute.xlu0 %5354
    %5356 = vrot.lane.b32.xlu0 %v5333, 24
    %v5357 = vpop.permute.xlu0 %5356
    %v5360 = vsel %vm245, %v4255, %v5339
    %v5361 = vsel %vm245, %v4331, %v5341
    %v5362 = vsel %vm1613, %v5360, %v5347
    %v5363 = vsel %vm1613, %v5361, %v5349
    %v5364 = vsel %vm1616, %v5362, %v5355
    %v5365 = vsel %vm1616, %v5363, %v5357
    %s5366 = scalar_lea.vmem %s8, 64
    %v5367 = vld [vmem:[%s5366] sm:$0xff]
    %v5368 = vld [vmem:[%s5366 + $0x8] sm:$0xff]
    %v5369 = vld [vmem:[%s5366 + $0x10] sm:$0xff]
    %v5370 = vld [vmem:[%s5366 + $0x18] sm:$0xff]
    %s5371 = scalar_lea.vmem %s9, 2
    %v5372 = vld [vmem:[%s5371] sm:$0x1]
    %v5374 = vlaneseq
    %v5375 = vshrl.u32 %v5374, 7
    %v5376 = vsub.s32 0, %v5375
    %v5377 = vrot.slane %v5372, %v5376
    %v5380 = vsel %vm106, %v5364, 0
    %v5383 = vsel %vm106, %v5365, 0
    %5385 = vmatprep.subr.mxu0 0.0
    %5386 = vmatpush1.msra.mxu0 %v5367
    %5387 = vmatprep.subr.mxu0 0.0
    %5388 = vmatpush1.msra.mxu0 %v5368
    %5389 = vmatprep.subr.mxu0 0.0
    %5390 = vmatpush1.msra.mxu0 %v5369
    %5391 = vmatprep.subr.mxu0 0.0
    %5392 = vmatpush1.msra.mxu0 %v5370
    %5393 = vmatprep.subr.mxu0 0.0
    %5394 = vmatpush1.msra.mxu0 0.0
    %5395 = vmatprep.subr.mxu0 0.0
    %5396 = vmatpush1.msra.mxu0 0.0
    %5397 = vmatprep.subr.mxu0 0.0
    %5398 = vmatpush1.msra.mxu0 0.0
    %5399 = vmatprep.subr.mxu0 0.0
    %5400 = vmatpush1.msra.mxu0 0.0
    %5401 = vmatprep.subr.mxu0 0.0
    %5402 = vmatpush1.msra.mxu0 0.0
    %5403 = vmatprep.subr.mxu0 0.0
    %5404 = vmatpush1.msra.mxu0 0.0
    %5405 = vmatprep.subr.mxu0 0.0
    %5406 = vmatpush1.msra.mxu0 0.0
    %5407 = vmatprep.subr.mxu0 0.0
    %5408 = vmatpush1.msra.mxu0 0.0
    %5409 = vmatprep.subr.mxu0 0.0
    %5410 = vmatpush1.msra.mxu0 0.0
    %5411 = vmatprep.subr.mxu0 0.0
    %5412 = vmatpush1.msra.mxu0 0.0
    %5413 = vmatprep.subr.mxu0 0.0
    %5414 = vmatpush1.msra.mxu0 0.0
    %5415 = vmatprep.subr.mxu0 0.0
    %5416 = vmatpush1.msra.mxu0 0.0
    %5417 = vmatprep.subr.mxu0 0.0
    %5418 = vmatpush1.msra.mxu0 0.0
    %5419 = vmatprep.subr.mxu0 0.0
    %5420 = vmatpush1.msra.mxu0 0.0
    %5421 = vmatprep.subr.mxu0 0.0
    %5422 = vmatpush1.msra.mxu0 0.0
    %5423 = vmatprep.subr.mxu0 0.0
    %5424 = vmatpush1.msra.mxu0 0.0
    %5425 = vmatprep.subr.mxu0 0.0
    %5426 = vmatpush1.msra.mxu0 0.0
    %5427 = vmatprep.subr.mxu0 0.0
    %5428 = vmatpush1.msra.mxu0 0.0
    %5429 = vmatprep.subr.mxu0 0.0
    %5430 = vmatpush1.msra.mxu0 0.0
    %5431 = vmatprep.subr.mxu0 0.0
    %5432 = vmatpush1.msra.mxu0 0.0
    %5433 = vmatprep.subr.mxu0 0.0
    %5434 = vmatpush1.msra.mxu0 0.0
    %5435 = vmatprep.subr.mxu0 0.0
    %5436 = vmatpush1.msra.mxu0 0.0
    %5437 = vmatprep.subr.mxu0 0.0
    %5438 = vmatpush1.msra.mxu0 0.0
    %5439 = vmatprep.subr.mxu0 0.0
    %5440 = vmatpush1.msra.mxu0 0.0
    %5441 = vmatprep.subr.mxu0 0.0
    %5442 = vmatpush1.msra.mxu0 0.0
    %5443 = vmatprep.subr.mxu0 0.0
    %5444 = vmatpush1.msra.mxu0 0.0
    %5445 = vmatprep.subr.mxu0 0.0
    %5446 = vmatpush1.msra.mxu0 0.0
    %5447 = vmatprep.subr.mxu0 0.0
    %5448 = vmatpush1.msra.mxu0 0.0
    %5449 = vmatprep.mubr.f32.mxu0 0.0
    %5450 = vmatmul.mubr.f32.gmra.mrb[0].mxu0 %v5380
    %v5451 = vpop.f32.mrb[0].mxu0
    %v5452 = vadd.f32 %v5377, %v5451
    %v5453 = vpop.f32.mrb[0].mxu0
    %5454 = vmatprep.mubr.f32.mxu0 0.0
    %5455 = vmatmul.mubr.f32.gmra.mrb[0].mxu0 %v5383
    %v5456 = vpop.f32.mrb[0].mxu0
    %v5457 = vadd.f32 %v5377, %v5456
    %v5458 = vpop.f32.mrb[0].mxu0
    %5459 = vdwg.mxu0
    %v5460 = vadd.f32 %v3888, %v5452
    %v5461 = vadd.f32 %v3889, %v5457
    %s5462 = scalar_lea.vmem %s10, 2
    %v5463 = vld [vmem:[%s5462] sm:$0x1]
    %s5464 = scalar_lea.vmem %s11, 2
    %v5465 = vld [vmem:[%s5464] sm:$0x1]
    %v5466 = vsel %vm106, %v5460, 0.0
    %5467 = vadd.xlane.f32.xlu0 %v5466
    %v5468 = vpop.xlane.xlu0 %5467
    %v5469 = vsel %vm106, %v5461, 0.0
    %5470 = vadd.xlane.f32.xlu0 %v5469
    %v5471 = vpop.xlane.xlu0 %5470
    %v5472 = vmul.f32 %v5468, %v113
    %v5473 = vmul.f32 %v5471, %v113
    %v5474 = vsub.f32 %v5460, %v5472
    %v5475 = vsub.f32 %v5461, %v5473
    %v5476 = vmul.f32 %v5474, %v5474
    %v5477 = vmul.f32 %v5475, %v5475
    %v5478 = vsel %vm106, %v5476, 0.0
    %5479 = vadd.xlane.f32.xlu0 %v5478
    %v5480 = vpop.xlane.xlu0 %5479
    %v5481 = vsel %vm106, %v5477, 0.0
    %5482 = vadd.xlane.f32.xlu0 %v5481
    %v5483 = vpop.xlane.xlu0 %5482
    %v5484 = vmul.f32 %v5480, %v113
    %v5485 = vmul.f32 %v5483, %v113
    %v5486 = vadd.f32 %v5484, 1e-12
    %v5487 = vadd.f32 %v5485, 1e-12
    %v5488 = vrsqrt.pop %v5486
    %v5489 = vrsqrt.pop %v5487
    %v5490 = vmul.f32 %v5474, %v5488
    %v5491 = vmul.f32 %v5475, %v5489
    %v5493 = vlaneseq
    %v5494 = vshrl.u32 %v5493, 7
    %v5495 = vsub.s32 0, %v5494
    %v5496 = vrot.slane %v5463, %v5495
    %v5498 = vmul.f32 %v5490, %v5496
    %v5499 = vmul.f32 %v5491, %v5496
    %v5501 = vlaneseq
    %v5502 = vshrl.u32 %v5501, 7
    %v5503 = vsub.s32 0, %v5502
    %v5504 = vrot.slane %v5465, %v5503
    %v5506 = vadd.f32 %v5498, %v5504
    %v5507 = vadd.f32 %v5499, %v5504
    %s5508 = scalar_lea.vmem %s12, 64
    %v5509 = vld [vmem:[%s5508] sm:$0xff]
    %v5510 = vld [vmem:[%s5508 + $0x8] sm:$0xff]
    %v5511 = vld [vmem:[%s5508 + $0x10] sm:$0xff]
    %v5512 = vld [vmem:[%s5508 + $0x18] sm:$0xff]
    %s5513 = scalar_lea.vmem %s13, 2
    %v5514 = vld [vmem:[%s5513] sm:$0x1]
    %v5516 = vlaneseq
    %v5517 = vshrl.u32 %v5516, 7
    %v5518 = vsub.s32 0, %v5517
    %v5519 = vrot.slane %v5514, %v5518
    %v5522 = vsel %vm106, %v5506, 0
    %v5525 = vsel %vm106, %v5507, 0
    %5527 = vmatprep.subr.mxu0 0.0
    %5528 = vmatpush1.msra.mxu0 %v5509
    %5529 = vmatprep.subr.mxu0 0.0
    %5530 = vmatpush1.msra.mxu0 %v5510
    %5531 = vmatprep.subr.mxu0 0.0
    %5532 = vmatpush1.msra.mxu0 %v5511
    %5533 = vmatprep.subr.mxu0 0.0
    %5534 = vmatpush1.msra.mxu0 %v5512
    %5535 = vmatprep.subr.mxu0 0.0
    %5536 = vmatpush1.msra.mxu0 0.0
    %5537 = vmatprep.subr.mxu0 0.0
    %5538 = vmatpush1.msra.mxu0 0.0
    %5539 = vmatprep.subr.mxu0 0.0
    %5540 = vmatpush1.msra.mxu0 0.0
    %5541 = vmatprep.subr.mxu0 0.0
    %5542 = vmatpush1.msra.mxu0 0.0
    %5543 = vmatprep.subr.mxu0 0.0
    %5544 = vmatpush1.msra.mxu0 0.0
    %5545 = vmatprep.subr.mxu0 0.0
    %5546 = vmatpush1.msra.mxu0 0.0
    %5547 = vmatprep.subr.mxu0 0.0
    %5548 = vmatpush1.msra.mxu0 0.0
    %5549 = vmatprep.subr.mxu0 0.0
    %5550 = vmatpush1.msra.mxu0 0.0
    %5551 = vmatprep.subr.mxu0 0.0
    %5552 = vmatpush1.msra.mxu0 0.0
    %5553 = vmatprep.subr.mxu0 0.0
    %5554 = vmatpush1.msra.mxu0 0.0
    %5555 = vmatprep.subr.mxu0 0.0
    %5556 = vmatpush1.msra.mxu0 0.0
    %5557 = vmatprep.subr.mxu0 0.0
    %5558 = vmatpush1.msra.mxu0 0.0
    %5559 = vmatprep.subr.mxu0 0.0
    %5560 = vmatpush1.msra.mxu0 0.0
    %5561 = vmatprep.subr.mxu0 0.0
    %5562 = vmatpush1.msra.mxu0 0.0
    %5563 = vmatprep.subr.mxu0 0.0
    %5564 = vmatpush1.msra.mxu0 0.0
    %5565 = vmatprep.subr.mxu0 0.0
    %5566 = vmatpush1.msra.mxu0 0.0
    %5567 = vmatprep.subr.mxu0 0.0
    %5568 = vmatpush1.msra.mxu0 0.0
    %5569 = vmatprep.subr.mxu0 0.0
    %5570 = vmatpush1.msra.mxu0 0.0
    %5571 = vmatprep.subr.mxu0 0.0
    %5572 = vmatpush1.msra.mxu0 0.0
    %5573 = vmatprep.subr.mxu0 0.0
    %5574 = vmatpush1.msra.mxu0 0.0
    %5575 = vmatprep.subr.mxu0 0.0
    %5576 = vmatpush1.msra.mxu0 0.0
    %5577 = vmatprep.subr.mxu0 0.0
    %5578 = vmatpush1.msra.mxu0 0.0
    %5579 = vmatprep.subr.mxu0 0.0
    %5580 = vmatpush1.msra.mxu0 0.0
    %5581 = vmatprep.subr.mxu0 0.0
    %5582 = vmatpush1.msra.mxu0 0.0
    %5583 = vmatprep.subr.mxu0 0.0
    %5584 = vmatpush1.msra.mxu0 0.0
    %5585 = vmatprep.subr.mxu0 0.0
    %5586 = vmatpush1.msra.mxu0 0.0
    %5587 = vmatprep.subr.mxu0 0.0
    %5588 = vmatpush1.msra.mxu0 0.0
    %5589 = vmatprep.subr.mxu0 0.0
    %5590 = vmatpush1.msra.mxu0 0.0
    %5591 = vmatprep.mubr.f32.mxu0 0.0
    %5592 = vmatmul.mubr.f32.gmra.mrb[0].mxu0 %v5522
    %v5593 = vpop.f32.mrb[0].mxu0
    %v5594 = vadd.f32 %v5519, %v5593
    %v5595 = vpop.f32.mrb[0].mxu0
    %5596 = vmatprep.mubr.f32.mxu0 0.0
    %5597 = vmatmul.mubr.f32.gmra.mrb[0].mxu0 %v5525
    %v5598 = vpop.f32.mrb[0].mxu0
    %v5599 = vadd.f32 %v5519, %v5598
    %v5600 = vpop.f32.mrb[0].mxu0
    %5601 = vdwg.mxu0
    %v5602 = vmul.f32 %v5594, %v5594
    %v5603 = vmul.f32 %v5599, %v5599
    %v5604 = vmul.f32 %v5594, %v5602
    %v5605 = vmul.f32 %v5599, %v5603
    %v5606 = vmul.f32 %v5604, 0.044715
    %v5607 = vmul.f32 %v5605, 0.044715
    %v5608 = vadd.f32 %v5594, %v5606
    %v5609 = vadd.f32 %v5599, %v5607
    %v5610 = vmul.f32 %v5608, 0.7978846
    %v5611 = vmul.f32 %v5609, 0.7978846
    %v5612 = vtanh.pop %v5610
    %v5613 = vtanh.pop %v5611
    %v5614 = vadd.f32 %v5612, 1.0
    %v5615 = vadd.f32 %v5613, 1.0
    %v5616 = vmul.f32 %v5614, 0.5
    %v5617 = vmul.f32 %v5615, 0.5
    %v5618 = vmul.f32 %v5594, %v5616
    %v5619 = vmul.f32 %v5599, %v5617
    %s5620 = scalar_lea.vmem %s14, 256
    %v5621 = vld [vmem:[%s5620] sm:$0xff]
    %v5622 = vld [vmem:[%s5620 + $0x8] sm:$0xff]
    %v5623 = vld [vmem:[%s5620 + $0x10] sm:$0xff]
    %v5624 = vld [vmem:[%s5620 + $0x18] sm:$0xff]
    %v5625 = vld [vmem:[%s5620 + $0x20] sm:$0xff]
    %v5626 = vld [vmem:[%s5620 + $0x28] sm:$0xff]
    %v5627 = vld [vmem:[%s5620 + $0x30] sm:$0xff]
    %v5628 = vld [vmem:[%s5620 + $0x38] sm:$0xff]
    %v5629 = vld [vmem:[%s5620 + $0x40] sm:$0xff]
    %v5630 = vld [vmem:[%s5620 + $0x48] sm:$0xff]
    %v5631 = vld [vmem:[%s5620 + $0x50] sm:$0xff]
    %v5632 = vld [vmem:[%s5620 + $0x58] sm:$0xff]
    %v5633 = vld [vmem:[%s5620 + $0x60] sm:$0xff]
    %v5634 = vld [vmem:[%s5620 + $0x68] sm:$0xff]
    %v5635 = vld [vmem:[%s5620 + $0x70] sm:$0xff]
    %v5636 = vld [vmem:[%s5620 + $0x78] sm:$0xff]
    %s5637 = scalar_lea.vmem %s15, 2
    %v5638 = vld [vmem:[%s5637] sm:$0x1]
    %v5640 = vlaneseq
    %v5641 = vshrl.u32 %v5640, 7
    %v5642 = vsub.s32 0, %v5641
    %v5643 = vrot.slane %v5638, %v5642
    %5645 = vmatprep.subr.mxu0 0.0
    %5646 = vmatpush1.msra.mxu0 %v5621
    %5647 = vmatprep.subr.mxu0 0.0
    %5648 = vmatpush1.msra.mxu0 %v5622
    %5649 = vmatprep.subr.mxu0 0.0
    %5650 = vmatpush1.msra.mxu0 %v5623
    %5651 = vmatprep.subr.mxu0 0.0
    %5652 = vmatpush1.msra.mxu0 %v5624
    %5653 = vmatprep.subr.mxu0 0.0
    %5654 = vmatpush1.msra.mxu0 %v5625
    %5655 = vmatprep.subr.mxu0 0.0
    %5656 = vmatpush1.msra.mxu0 %v5626
    %5657 = vmatprep.subr.mxu0 0.0
    %5658 = vmatpush1.msra.mxu0 %v5627
    %5659 = vmatprep.subr.mxu0 0.0
    %5660 = vmatpush1.msra.mxu0 %v5628
    %5661 = vmatprep.subr.mxu0 0.0
    %5662 = vmatpush1.msra.mxu0 %v5629
    %5663 = vmatprep.subr.mxu0 0.0
    %5664 = vmatpush1.msra.mxu0 %v5630
    %5665 = vmatprep.subr.mxu0 0.0
    %5666 = vmatpush1.msra.mxu0 %v5631
    %5667 = vmatprep.subr.mxu0 0.0
    %5668 = vmatpush1.msra.mxu0 %v5632
    %5669 = vmatprep.subr.mxu0 0.0
    %5670 = vmatpush1.msra.mxu0 %v5633
    %5671 = vmatprep.subr.mxu0 0.0
    %5672 = vmatpush1.msra.mxu0 %v5634
    %5673 = vmatprep.subr.mxu0 0.0
    %5674 = vmatpush1.msra.mxu0 %v5635
    %5675 = vmatprep.subr.mxu0 0.0
    %5676 = vmatpush1.msra.mxu0 %v5636
    %5677 = vmatprep.subr.mxu0 0.0
    %5678 = vmatpush1.msra.mxu0 0.0
    %5679 = vmatprep.subr.mxu0 0.0
    %5680 = vmatpush1.msra.mxu0 0.0
    %5681 = vmatprep.subr.mxu0 0.0
    %5682 = vmatpush1.msra.mxu0 0.0
    %5683 = vmatprep.subr.mxu0 0.0
    %5684 = vmatpush1.msra.mxu0 0.0
    %5685 = vmatprep.subr.mxu0 0.0
    %5686 = vmatpush1.msra.mxu0 0.0
    %5687 = vmatprep.subr.mxu0 0.0
    %5688 = vmatpush1.msra.mxu0 0.0
    %5689 = vmatprep.subr.mxu0 0.0
    %5690 = vmatpush1.msra.mxu0 0.0
    %5691 = vmatprep.subr.mxu0 0.0
    %5692 = vmatpush1.msra.mxu0 0.0
    %5693 = vmatprep.subr.mxu0 0.0
    %5694 = vmatpush1.msra.mxu0 0.0
    %5695 = vmatprep.subr.mxu0 0.0
    %5696 = vmatpush1.msra.mxu0 0.0
    %5697 = vmatprep.subr.mxu0 0.0
    %5698 = vmatpush1.msra.mxu0 0.0
    %5699 = vmatprep.subr.mxu0 0.0
    %5700 = vmatpush1.msra.mxu0 0.0
    %5701 = vmatprep.subr.mxu0 0.0
    %5702 = vmatpush1.msra.mxu0 0.0
    %5703 = vmatprep.subr.mxu0 0.0
    %5704 = vmatpush1.msra.mxu0 0.0
    %5705 = vmatprep.subr.mxu0 0.0
    %5706 = vmatpush1.msra.mxu0 0.0
    %5707 = vmatprep.subr.mxu0 0.0
    %5708 = vmatpush1.msra.mxu0 0.0
    %5709 = vmatprep.mubr.f32.mxu0 0.0
    %5710 = vmatmul.mubr.f32.gmra.mrb[0].mxu0 %v5618
    %v5711 = vpop.f32.mrb[0].mxu0
    %v5712 = vadd.f32 %v5643, %v5711
    %v5713 = vpop.f32.mrb[0].mxu0
    %5714 = vmatprep.mubr.f32.mxu0 0.0
    %5715 = vmatmul.mubr.f32.gmra.mrb[0].mxu0 %v5619
    %v5716 = vpop.f32.mrb[0].mxu0
    %v5717 = vadd.f32 %v5643, %v5716
    %v5718 = vpop.f32.mrb[0].mxu0
    %5719 = vdwg.mxu0
    %v5720 = vadd.f32 %v5506, %v5712
    %v5721 = vadd.f32 %v5507, %v5717
    %s5722 = scalar_lea.vmem %s16, 2
    %v5723 = vld [vmem:[%s5722] sm:$0x1]
    %s5724 = scalar_lea.vmem %s17, 2
    %v5725 = vld [vmem:[%s5724] sm:$0x1]
    %v5726 = vsel %vm106, %v5720, 0.0
    %5727 = vadd.xlane.f32.xlu0 %v5726
    %v5728 = vpop.xlane.xlu0 %5727
    %v5729 = vsel %vm106, %v5721, 0.0
    %5730 = vadd.xlane.f32.xlu0 %v5729
    %v5731 = vpop.xlane.xlu0 %5730
    %v5732 = vmul.f32 %v5728, %v113
    %v5733 = vmul.f32 %v5731, %v113
    %v5734 = vsub.f32 %v5720, %v5732
    %v5735 = vsub.f32 %v5721, %v5733
    %v5736 = vmul.f32 %v5734, %v5734
    %v5737 = vmul.f32 %v5735, %v5735
    %v5738 = vsel %vm106, %v5736, 0.0
    %5739 = vadd.xlane.f32.xlu0 %v5738
    %v5740 = vpop.xlane.xlu0 %5739
    %v5741 = vsel %vm106, %v5737, 0.0
    %5742 = vadd.xlane.f32.xlu0 %v5741
    %v5743 = vpop.xlane.xlu0 %5742
    %v5744 = vmul.f32 %v5740, %v113
    %v5745 = vmul.f32 %v5743, %v113
    %v5746 = vadd.f32 %v5744, 1e-12
    %v5747 = vadd.f32 %v5745, 1e-12
    %v5748 = vrsqrt.pop %v5746
    %v5749 = vrsqrt.pop %v5747
    %v5750 = vmul.f32 %v5734, %v5748
    %v5751 = vmul.f32 %v5735, %v5749
    %v5753 = vlaneseq
    %v5754 = vshrl.u32 %v5753, 7
    %v5755 = vsub.s32 0, %v5754
    %v5756 = vrot.slane %v5723, %v5755
    %v5758 = vmul.f32 %v5750, %v5756
    %v5759 = vmul.f32 %v5751, %v5756
    %v5761 = vlaneseq
    %v5762 = vshrl.u32 %v5761, 7
    %v5763 = vsub.s32 0, %v5762
    %v5764 = vrot.slane %v5725, %v5763
    %v5766 = vadd.f32 %v5758, %v5764
    %v5767 = vadd.f32 %v5759, %v5764
    %s5768 = scalar_lea.vmem %s6, 96
    %v5769 = vld [vmem:[%s5768] sm:$0xff]
    %v5770 = vld [vmem:[%s5768 + $0x8] sm:$0xff]
    %v5771 = vld [vmem:[%s5768 + $0x10] sm:$0xff]
    %v5772 = vld [vmem:[%s5768 + $0x18] sm:$0xff]
    %s5773 = scalar_lea.vmem %s7, 3
    %v5774 = vld [vmem:[%s5773] sm:$0x1]
    %v5776 = vlaneseq
    %v5777 = vshrl.u32 %v5776, 7
    %v5778 = vsub.s32 0, %v5777
    %v5779 = vrot.slane %v5774, %v5778
    %v5782 = vsel %vm106, %v5766, 0
    %v5785 = vsel %vm106, %v5767, 0
    %5787 = vmatprep.subr.mxu0 0.0
    %5788 = vmatpush1.msra.mxu0 %v5769
    %5789 = vmatprep.subr.mxu0 0.0
    %5790 = vmatpush1.msra.mxu0 %v5770
    %5791 = vmatprep.subr.mxu0 0.0
    %5792 = vmatpush1.msra.mxu0 %v5771
    %5793 = vmatprep.subr.mxu0 0.0
    %5794 = vmatpush1.msra.mxu0 %v5772
    %5795 = vmatprep.subr.mxu0 0.0
    %5796 = vmatpush1.msra.mxu0 0.0
    %5797 = vmatprep.subr.mxu0 0.0
    %5798 = vmatpush1.msra.mxu0 0.0
    %5799 = vmatprep.subr.mxu0 0.0
    %5800 = vmatpush1.msra.mxu0 0.0
    %5801 = vmatprep.subr.mxu0 0.0
    %5802 = vmatpush1.msra.mxu0 0.0
    %5803 = vmatprep.subr.mxu0 0.0
    %5804 = vmatpush1.msra.mxu0 0.0
    %5805 = vmatprep.subr.mxu0 0.0
    %5806 = vmatpush1.msra.mxu0 0.0
    %5807 = vmatprep.subr.mxu0 0.0
    %5808 = vmatpush1.msra.mxu0 0.0
    %5809 = vmatprep.subr.mxu0 0.0
    %5810 = vmatpush1.msra.mxu0 0.0
    %5811 = vmatprep.subr.mxu0 0.0
    %5812 = vmatpush1.msra.mxu0 0.0
    %5813 = vmatprep.subr.mxu0 0.0
    %5814 = vmatpush1.msra.mxu0 0.0
    %5815 = vmatprep.subr.mxu0 0.0
    %5816 = vmatpush1.msra.mxu0 0.0
    %5817 = vmatprep.subr.mxu0 0.0
    %5818 = vmatpush1.msra.mxu0 0.0
    %5819 = vmatprep.subr.mxu0 0.0
    %5820 = vmatpush1.msra.mxu0 0.0
    %5821 = vmatprep.subr.mxu0 0.0
    %5822 = vmatpush1.msra.mxu0 0.0
    %5823 = vmatprep.subr.mxu0 0.0
    %5824 = vmatpush1.msra.mxu0 0.0
    %5825 = vmatprep.subr.mxu0 0.0
    %5826 = vmatpush1.msra.mxu0 0.0
    %5827 = vmatprep.subr.mxu0 0.0
    %5828 = vmatpush1.msra.mxu0 0.0
    %5829 = vmatprep.subr.mxu0 0.0
    %5830 = vmatpush1.msra.mxu0 0.0
    %5831 = vmatprep.subr.mxu0 0.0
    %5832 = vmatpush1.msra.mxu0 0.0
    %5833 = vmatprep.subr.mxu0 0.0
    %5834 = vmatpush1.msra.mxu0 0.0
    %5835 = vmatprep.subr.mxu0 0.0
    %5836 = vmatpush1.msra.mxu0 0.0
    %5837 = vmatprep.subr.mxu0 0.0
    %5838 = vmatpush1.msra.mxu0 0.0
    %5839 = vmatprep.subr.mxu0 0.0
    %5840 = vmatpush1.msra.mxu0 0.0
    %5841 = vmatprep.subr.mxu0 0.0
    %5842 = vmatpush1.msra.mxu0 0.0
    %5843 = vmatprep.subr.mxu0 0.0
    %5844 = vmatpush1.msra.mxu0 0.0
    %5845 = vmatprep.subr.mxu0 0.0
    %5846 = vmatpush1.msra.mxu0 0.0
    %5847 = vmatprep.subr.mxu0 0.0
    %5848 = vmatpush1.msra.mxu0 0.0
    %5849 = vmatprep.subr.mxu0 0.0
    %5850 = vmatpush1.msra.mxu0 0.0
    %5851 = vmatprep.mubr.f32.mxu0 0.0
    %5852 = vmatmul.mubr.f32.gmra.mrb[0].mxu0 %v5782
    %v5853 = vpop.f32.mrb[0].mxu0
    %v5854 = vadd.f32 %v5779, %v5853
    %v5855 = vpop.f32.mrb[0].mxu0
    %5856 = vmatprep.mubr.f32.mxu0 0.0
    %5857 = vmatmul.mubr.f32.gmra.mrb[0].mxu0 %v5785
    %v5858 = vpop.f32.mrb[0].mxu0
    %v5859 = vadd.f32 %v5779, %v5858
    %v5860 = vpop.f32.mrb[0].mxu0
    %5861 = vdwg.mxu0
    %5863 = vrot.lane.b32.xlu0 %v5854, 96
    %v5864 = vpop.permute.xlu0 %5863
    %v5865 = vsel %vm245, %v5854, 0
    %v5867 = vsel %vm245, %v5864, 0
    %5869 = vmatprep.subr.mxu0 0.0
    %5870 = vmatpush1.xpose.msra.mxu0 %v5867
    %5871 = vmatprep.subr.mxu0 0.0
    %5872 = vmatpush1.xpose.msra.mxu0 0.0
    %5873 = vmatprep.subr.mxu0 0.0
    %5874 = vmatpush1.xpose.msra.mxu0 0.0
    %5875 = vmatprep.subr.mxu0 0.0
    %5876 = vmatpush1.xpose.msra.mxu0 0.0
    %5877 = vmatprep.subr.mxu0 0.0
    %5878 = vmatpush1.xpose.msra.mxu0 0.0
    %5879 = vmatprep.subr.mxu0 0.0
    %5880 = vmatpush1.xpose.msra.mxu0 0.0
    %5881 = vmatprep.subr.mxu0 0.0
    %5882 = vmatpush1.xpose.msra.mxu0 0.0
    %5883 = vmatprep.subr.mxu0 0.0
    %5884 = vmatpush1.xpose.msra.mxu0 0.0
    %5885 = vmatprep.subr.mxu0 0.0
    %5886 = vmatpush1.xpose.msra.mxu0 0.0
    %5887 = vmatprep.subr.mxu0 0.0
    %5888 = vmatpush1.xpose.msra.mxu0 0.0
    %5889 = vmatprep.subr.mxu0 0.0
    %5890 = vmatpush1.xpose.msra.mxu0 0.0
    %5891 = vmatprep.subr.mxu0 0.0
    %5892 = vmatpush1.xpose.msra.mxu0 0.0
    %5893 = vmatprep.subr.mxu0 0.0
    %5894 = vmatpush1.xpose.msra.mxu0 0.0
    %5895 = vmatprep.subr.mxu0 0.0
    %5896 = vmatpush1.xpose.msra.mxu0 0.0
    %5897 = vmatprep.subr.mxu0 0.0
    %5898 = vmatpush1.xpose.msra.mxu0 0.0
    %5899 = vmatprep.subr.mxu0 0.0
    %5900 = vmatpush1.xpose.msra.mxu0 0.0
    %5901 = vmatprep.subr.mxu0 0.0
    %5902 = vmatpush1.xpose.msra.mxu0 0.0
    %5903 = vmatprep.subr.mxu0 0.0
    %5904 = vmatpush1.xpose.msra.mxu0 0.0
    %5905 = vmatprep.subr.mxu0 0.0
    %5906 = vmatpush1.xpose.msra.mxu0 0.0
    %5907 = vmatprep.subr.mxu0 0.0
    %5908 = vmatpush1.xpose.msra.mxu0 0.0
    %5909 = vmatprep.subr.mxu0 0.0
    %5910 = vmatpush1.xpose.msra.mxu0 0.0
    %5911 = vmatprep.subr.mxu0 0.0
    %5912 = vmatpush1.xpose.msra.mxu0 0.0
    %5913 = vmatprep.subr.mxu0 0.0
    %5914 = vmatpush1.xpose.msra.mxu0 0.0
    %5915 = vmatprep.subr.mxu0 0.0
    %5916 = vmatpush1.xpose.msra.mxu0 0.0
    %5917 = vmatprep.subr.mxu0 0.0
    %5918 = vmatpush1.xpose.msra.mxu0 0.0
    %5919 = vmatprep.subr.mxu0 0.0
    %5920 = vmatpush1.xpose.msra.mxu0 0.0
    %5921 = vmatprep.subr.mxu0 0.0
    %5922 = vmatpush1.xpose.msra.mxu0 0.0
    %5923 = vmatprep.subr.mxu0 0.0
    %5924 = vmatpush1.xpose.msra.mxu0 0.0
    %5925 = vmatprep.subr.mxu0 0.0
    %5926 = vmatpush1.xpose.msra.mxu0 0.0
    %5927 = vmatprep.subr.mxu0 0.0
    %5928 = vmatpush1.xpose.msra.mxu0 0.0
    %5929 = vmatprep.subr.mxu0 0.0
    %5930 = vmatpush1.xpose.msra.mxu0 0.0
    %5931 = vmatprep.subr.mxu0 0.0
    %5932 = vmatpush1.xpose.msra.mxu0 0.0
    %5933 = vmatprep.mubr.f32.mxu0 0.0
    %5934 = vmatmul.mubr.f32.gmra.mrb[0].mxu0 %v5865
    %v5935 = vpop.f32.mrb[0].mxu0
    %v5936 = vadd.f32 0.0, %v5935
    %v5937 = vpop.f32.mrb[0].mxu0
    %5938 = vdwg.mxu0
    %5940 = vrot.lane.b32.xlu0 %v5859, 96
    %v5941 = vpop.permute.xlu0 %5940
    %v5942 = vsel %vm245, %v5859, 0
    %v5944 = vsel %vm245, %v5941, 0
    %5946 = vmatprep.subr.mxu0 0.0
    %5947 = vmatpush1.xpose.msra.mxu0 %v5944
    %5948 = vmatprep.subr.mxu0 0.0
    %5949 = vmatpush1.xpose.msra.mxu0 0.0
    %5950 = vmatprep.subr.mxu0 0.0
    %5951 = vmatpush1.xpose.msra.mxu0 0.0
    %5952 = vmatprep.subr.mxu0 0.0
    %5953 = vmatpush1.xpose.msra.mxu0 0.0
    %5954 = vmatprep.subr.mxu0 0.0
    %5955 = vmatpush1.xpose.msra.mxu0 0.0
    %5956 = vmatprep.subr.mxu0 0.0
    %5957 = vmatpush1.xpose.msra.mxu0 0.0
    %5958 = vmatprep.subr.mxu0 0.0
    %5959 = vmatpush1.xpose.msra.mxu0 0.0
    %5960 = vmatprep.subr.mxu0 0.0
    %5961 = vmatpush1.xpose.msra.mxu0 0.0
    %5962 = vmatprep.subr.mxu0 0.0
    %5963 = vmatpush1.xpose.msra.mxu0 0.0
    %5964 = vmatprep.subr.mxu0 0.0
    %5965 = vmatpush1.xpose.msra.mxu0 0.0
    %5966 = vmatprep.subr.mxu0 0.0
    %5967 = vmatpush1.xpose.msra.mxu0 0.0
    %5968 = vmatprep.subr.mxu0 0.0
    %5969 = vmatpush1.xpose.msra.mxu0 0.0
    %5970 = vmatprep.subr.mxu0 0.0
    %5971 = vmatpush1.xpose.msra.mxu0 0.0
    %5972 = vmatprep.subr.mxu0 0.0
    %5973 = vmatpush1.xpose.msra.mxu0 0.0
    %5974 = vmatprep.subr.mxu0 0.0
    %5975 = vmatpush1.xpose.msra.mxu0 0.0
    %5976 = vmatprep.subr.mxu0 0.0
    %5977 = vmatpush1.xpose.msra.mxu0 0.0
    %5978 = vmatprep.subr.mxu0 0.0
    %5979 = vmatpush1.xpose.msra.mxu0 0.0
    %5980 = vmatprep.subr.mxu0 0.0
    %5981 = vmatpush1.xpose.msra.mxu0 0.0
    %5982 = vmatprep.subr.mxu0 0.0
    %5983 = vmatpush1.xpose.msra.mxu0 0.0
    %5984 = vmatprep.subr.mxu0 0.0
    %5985 = vmatpush1.xpose.msra.mxu0 0.0
    %5986 = vmatprep.subr.mxu0 0.0
    %5987 = vmatpush1.xpose.msra.mxu0 0.0
    %5988 = vmatprep.subr.mxu0 0.0
    %5989 = vmatpush1.xpose.msra.mxu0 0.0
    %5990 = vmatprep.subr.mxu0 0.0
    %5991 = vmatpush1.xpose.msra.mxu0 0.0
    %5992 = vmatprep.subr.mxu0 0.0
    %5993 = vmatpush1.xpose.msra.mxu0 0.0
    %5994 = vmatprep.subr.mxu0 0.0
    %5995 = vmatpush1.xpose.msra.mxu0 0.0
    %5996 = vmatprep.subr.mxu0 0.0
    %5997 = vmatpush1.xpose.msra.mxu0 0.0
    %5998 = vmatprep.subr.mxu0 0.0
    %5999 = vmatpush1.xpose.msra.mxu0 0.0
    %6000 = vmatprep.subr.mxu0 0.0
    %6001 = vmatpush1.xpose.msra.mxu0 0.0
    %6002 = vmatprep.subr.mxu0 0.0
    %6003 = vmatpush1.xpose.msra.mxu0 0.0
    %6004 = vmatprep.subr.mxu0 0.0
    %6005 = vmatpush1.xpose.msra.mxu0 0.0
    %6006 = vmatprep.subr.mxu0 0.0
    %6007 = vmatpush1.xpose.msra.mxu0 0.0
    %6008 = vmatprep.subr.mxu0 0.0
    %6009 = vmatpush1.xpose.msra.mxu0 0.0
    %6010 = vmatprep.mubr.f32.mxu0 0.0
    %6011 = vmatmul.mubr.f32.gmra.mrb[0].mxu0 %v5942
    %v6012 = vpop.f32.mrb[0].mxu0
    %v6013 = vadd.f32 0.0, %v6012
    %v6014 = vpop.f32.mrb[0].mxu0
    %6015 = vdwg.mxu0
    %v6016 = vmul.f32 %v5936, 0.35355338
    %v6017 = vmul.f32 %v6013, 0.35355338
    %v6018 = vadd.f32 %v6016, %v402
    %v6019 = vadd.f32 %v6017, %v406
    %v6020 = vsel %vm245, %v6018, -inf
    %6021 = vmax.xlane.f32.xlu0 %v6020
    %v6022 = vpop.xlane.xlu0 %6021
    %v6023 = vsel %vm245, %v6019, -inf
    %6024 = vmax.xlane.f32.xlu0 %v6023
    %v6025 = vpop.xlane.xlu0 %6024
    %v6026 = vsub.f32 %v6018, %v6022
    %v6027 = vsub.f32 %v6019, %v6025
    %v6028 = vmul.f32 %v6026, 1.442695
    %v6029 = vpow.pop %v6028
    %v6030 = vmul.f32 %v6027, 1.442695
    %v6031 = vpow.pop %v6030
    %v6032 = vsel %vm245, %v6029, 0.0
    %6033 = vadd.xlane.f32.xlu0 %v6032
    %v6034 = vpop.xlane.xlu0 %6033
    %v6035 = vsel %vm245, %v6031, 0.0
    %6036 = vadd.xlane.f32.xlu0 %v6035
    %v6037 = vpop.xlane.xlu0 %6036
    %v6038 = vrcp.pop %v6034
    %v6039 = vrcp.pop %v6037
    %v6040 = vmul.f32 %v6029, %v6038
    %v6041 = vmul.f32 %v6031, %v6039
    %6042 = vrot.lane.b32.xlu0 %v5854, 64
    %v6043 = vpop.permute.xlu0 %6042
    %v6046 = vsel %vm245, %v6040, 0
    %6048 = vmatprep.subr.mxu0 0.0
    %6049 = vmatpush1.msra.mxu0 %v6043
    %6050 = vmatprep.subr.mxu0 0.0
    %6051 = vmatpush1.msra.mxu0 0.0
    %6052 = vmatprep.subr.mxu0 0.0
    %6053 = vmatpush1.msra.mxu0 0.0
    %6054 = vmatprep.subr.mxu0 0.0
    %6055 = vmatpush1.msra.mxu0 0.0
    %6056 = vmatprep.subr.mxu0 0.0
    %6057 = vmatpush1.msra.mxu0 0.0
    %6058 = vmatprep.subr.mxu0 0.0
    %6059 = vmatpush1.msra.mxu0 0.0
    %6060 = vmatprep.subr.mxu0 0.0
    %6061 = vmatpush1.msra.mxu0 0.0
    %6062 = vmatprep.subr.mxu0 0.0
    %6063 = vmatpush1.msra.mxu0 0.0
    %6064 = vmatprep.subr.mxu0 0.0
    %6065 = vmatpush1.msra.mxu0 0.0
    %6066 = vmatprep.subr.mxu0 0.0
    %6067 = vmatpush1.msra.mxu0 0.0
    %6068 = vmatprep.subr.mxu0 0.0
    %6069 = vmatpush1.msra.mxu0 0.0
    %6070 = vmatprep.subr.mxu0 0.0
    %6071 = vmatpush1.msra.mxu0 0.0
    %6072 = vmatprep.subr.mxu0 0.0
    %6073 = vmatpush1.msra.mxu0 0.0
    %6074 = vmatprep.subr.mxu0 0.0
    %6075 = vmatpush1.msra.mxu0 0.0
    %6076 = vmatprep.subr.mxu0 0.0
    %6077 = vmatpush1.msra.mxu0 0.0
    %6078 = vmatprep.subr.mxu0 0.0
    %6079 = vmatpush1.msra.mxu0 0.0
    %6080 = vmatprep.subr.mxu0 0.0
    %6081 = vmatpush1.msra.mxu0 0.0
    %6082 = vmatprep.subr.mxu0 0.0
    %6083 = vmatpush1.msra.mxu0 0.0
    %6084 = vmatprep.subr.mxu0 0.0
    %6085 = vmatpush1.msra.mxu0 0.0
    %6086 = vmatprep.subr.mxu0 0.0
    %6087 = vmatpush1.msra.mxu0 0.0
    %6088 = vmatprep.subr.mxu0 0.0
    %6089 = vmatpush1.msra.mxu0 0.0
    %6090 = vmatprep.subr.mxu0 0.0
    %6091 = vmatpush1.msra.mxu0 0.0
    %6092 = vmatprep.subr.mxu0 0.0
    %6093 = vmatpush1.msra.mxu0 0.0
    %6094 = vmatprep.subr.mxu0 0.0
    %6095 = vmatpush1.msra.mxu0 0.0
    %6096 = vmatprep.subr.mxu0 0.0
    %6097 = vmatpush1.msra.mxu0 0.0
    %6098 = vmatprep.subr.mxu0 0.0
    %6099 = vmatpush1.msra.mxu0 0.0
    %6100 = vmatprep.subr.mxu0 0.0
    %6101 = vmatpush1.msra.mxu0 0.0
    %6102 = vmatprep.subr.mxu0 0.0
    %6103 = vmatpush1.msra.mxu0 0.0
    %6104 = vmatprep.subr.mxu0 0.0
    %6105 = vmatpush1.msra.mxu0 0.0
    %6106 = vmatprep.subr.mxu0 0.0
    %6107 = vmatpush1.msra.mxu0 0.0
    %6108 = vmatprep.subr.mxu0 0.0
    %6109 = vmatpush1.msra.mxu0 0.0
    %6110 = vmatprep.subr.mxu0 0.0
    %6111 = vmatpush1.msra.mxu0 0.0
    %6112 = vmatprep.mubr.f32.mxu0 0.0
    %6113 = vmatmul.mubr.f32.gmra.mrb[0].mxu0 %v6046
    %v6114 = vpop.f32.mrb[0].mxu0
    %v6115 = vadd.f32 0.0, %v6114
    %v6116 = vpop.f32.mrb[0].mxu0
    %6117 = vdwg.mxu0
    %6118 = vrot.lane.b32.xlu0 %v5859, 64
    %v6119 = vpop.permute.xlu0 %6118
    %v6122 = vsel %vm245, %v6041, 0
    %6124 = vmatprep.subr.mxu0 0.0
    %6125 = vmatpush1.msra.mxu0 %v6119
    %6126 = vmatprep.subr.mxu0 0.0
    %6127 = vmatpush1.msra.mxu0 0.0
    %6128 = vmatprep.subr.mxu0 0.0
    %6129 = vmatpush1.msra.mxu0 0.0
    %6130 = vmatprep.subr.mxu0 0.0
    %6131 = vmatpush1.msra.mxu0 0.0
    %6132 = vmatprep.subr.mxu0 0.0
    %6133 = vmatpush1.msra.mxu0 0.0
    %6134 = vmatprep.subr.mxu0 0.0
    %6135 = vmatpush1.msra.mxu0 0.0
    %6136 = vmatprep.subr.mxu0 0.0
    %6137 = vmatpush1.msra.mxu0 0.0
    %6138 = vmatprep.subr.mxu0 0.0
    %6139 = vmatpush1.msra.mxu0 0.0
    %6140 = vmatprep.subr.mxu0 0.0
    %6141 = vmatpush1.msra.mxu0 0.0
    %6142 = vmatprep.subr.mxu0 0.0
    %6143 = vmatpush1.msra.mxu0 0.0
    %6144 = vmatprep.subr.mxu0 0.0
    %6145 = vmatpush1.msra.mxu0 0.0
    %6146 = vmatprep.subr.mxu0 0.0
    %6147 = vmatpush1.msra.mxu0 0.0
    %6148 = vmatprep.subr.mxu0 0.0
    %6149 = vmatpush1.msra.mxu0 0.0
    %6150 = vmatprep.subr.mxu0 0.0
    %6151 = vmatpush1.msra.mxu0 0.0
    %6152 = vmatprep.subr.mxu0 0.0
    %6153 = vmatpush1.msra.mxu0 0.0
    %6154 = vmatprep.subr.mxu0 0.0
    %6155 = vmatpush1.msra.mxu0 0.0
    %6156 = vmatprep.subr.mxu0 0.0
    %6157 = vmatpush1.msra.mxu0 0.0
    %6158 = vmatprep.subr.mxu0 0.0
    %6159 = vmatpush1.msra.mxu0 0.0
    %6160 = vmatprep.subr.mxu0 0.0
    %6161 = vmatpush1.msra.mxu0 0.0
    %6162 = vmatprep.subr.mxu0 0.0
    %6163 = vmatpush1.msra.mxu0 0.0
    %6164 = vmatprep.subr.mxu0 0.0
    %6165 = vmatpush1.msra.mxu0 0.0
    %6166 = vmatprep.subr.mxu0 0.0
    %6167 = vmatpush1.msra.mxu0 0.0
    %6168 = vmatprep.subr.mxu0 0.0
    %6169 = vmatpush1.msra.mxu0 0.0
    %6170 = vmatprep.subr.mxu0 0.0
    %6171 = vmatpush1.msra.mxu0 0.0
    %6172 = vmatprep.subr.mxu0 0.0
    %6173 = vmatpush1.msra.mxu0 0.0
    %6174 = vmatprep.subr.mxu0 0.0
    %6175 = vmatpush1.msra.mxu0 0.0
    %6176 = vmatprep.subr.mxu0 0.0
    %6177 = vmatpush1.msra.mxu0 0.0
    %6178 = vmatprep.subr.mxu0 0.0
    %6179 = vmatpush1.msra.mxu0 0.0
    %6180 = vmatprep.subr.mxu0 0.0
    %6181 = vmatpush1.msra.mxu0 0.0
    %6182 = vmatprep.subr.mxu0 0.0
    %6183 = vmatpush1.msra.mxu0 0.0
    %6184 = vmatprep.subr.mxu0 0.0
    %6185 = vmatpush1.msra.mxu0 0.0
    %6186 = vmatprep.subr.mxu0 0.0
    %6187 = vmatpush1.msra.mxu0 0.0
    %6188 = vmatprep.mubr.f32.mxu0 0.0
    %6189 = vmatmul.mubr.f32.gmra.mrb[0].mxu0 %v6122
    %v6190 = vpop.f32.mrb[0].mxu0
    %v6191 = vadd.f32 0.0, %v6190
    %v6192 = vpop.f32.mrb[0].mxu0
    %6193 = vdwg.mxu0
    %6194 = vrot.lane.b32.xlu0 %v5854, 120
    %v6195 = vpop.permute.xlu0 %6194
    %6196 = vrot.lane.b32.xlu0 %v5854, 88
    %v6197 = vpop.permute.xlu0 %6196
    %v6198 = vsel %vm245, %v6195, 0
    %v6200 = vsel %vm245, %v6197, 0
    %6202 = vmatprep.subr.mxu0 0.0
    %6203 = vmatpush1.xpose.msra.mxu0 %v6200
    %6204 = vmatprep.subr.mxu0 0.0
    %6205 = vmatpush1.xpose.msra.mxu0 0.0
    %6206 = vmatprep.subr.mxu0 0.0
    %6207 = vmatpush1.xpose.msra.mxu0 0.0
    %6208 = vmatprep.subr.mxu0 0.0
    %6209 = vmatpush1.xpose.msra.mxu0 0.0
    %6210 = vmatprep.subr.mxu0 0.0
    %6211 = vmatpush1.xpose.msra.mxu0 0.0
    %6212 = vmatprep.subr.mxu0 0.0
    %6213 = vmatpush1.xpose.msra.mxu0 0.0
    %6214 = vmatprep.subr.mxu0 0.0
    %6215 = vmatpush1.xpose.msra.mxu0 0.0
    %6216 = vmatprep.subr.mxu0 0.0
    %6217 = vmatpush1.xpose.msra.mxu0 0.0
    %6218 = vmatprep.subr.mxu0 0.0
    %6219 = vmatpush1.xpose.msra.mxu0 0.0
    %6220 = vmatprep.subr.mxu0 0.0
    %6221 = vmatpush1.xpose.msra.mxu0 0.0
    %6222 = vmatprep.subr.mxu0 0.0
    %6223 = vmatpush1.xpose.msra.mxu0 0.0
    %6224 = vmatprep.subr.mxu0 0.0
    %6225 = vmatpush1.xpose.msra.mxu0 0.0
    %6226 = vmatprep.subr.mxu0 0.0
    %6227 = vmatpush1.xpose.msra.mxu0 0.0
    %6228 = vmatprep.subr.mxu0 0.0
    %6229 = vmatpush1.xpose.msra.mxu0 0.0
    %6230 = vmatprep.subr.mxu0 0.0
    %6231 = vmatpush1.xpose.msra.mxu0 0.0
    %6232 = vmatprep.subr.mxu0 0.0
    %6233 = vmatpush1.xpose.msra.mxu0 0.0
    %6234 = vmatprep.subr.mxu0 0.0
    %6235 = vmatpush1.xpose.msra.mxu0 0.0
    %6236 = vmatprep.subr.mxu0 0.0
    %6237 = vmatpush1.xpose.msra.mxu0 0.0
    %6238 = vmatprep.subr.mxu0 0.0
    %6239 = vmatpush1.xpose.msra.mxu0 0.0
    %6240 = vmatprep.subr.mxu0 0.0
    %6241 = vmatpush1.xpose.msra.mxu0 0.0
    %6242 = vmatprep.subr.mxu0 0.0
    %6243 = vmatpush1.xpose.msra.mxu0 0.0
    %6244 = vmatprep.subr.mxu0 0.0
    %6245 = vmatpush1.xpose.msra.mxu0 0.0
    %6246 = vmatprep.subr.mxu0 0.0
    %6247 = vmatpush1.xpose.msra.mxu0 0.0
    %6248 = vmatprep.subr.mxu0 0.0
    %6249 = vmatpush1.xpose.msra.mxu0 0.0
    %6250 = vmatprep.subr.mxu0 0.0
    %6251 = vmatpush1.xpose.msra.mxu0 0.0
    %6252 = vmatprep.subr.mxu0 0.0
    %6253 = vmatpush1.xpose.msra.mxu0 0.0
    %6254 = vmatprep.subr.mxu0 0.0
    %6255 = vmatpush1.xpose.msra.mxu0 0.0
    %6256 = vmatprep.subr.mxu0 0.0
    %6257 = vmatpush1.xpose.msra.mxu0 0.0
    %6258 = vmatprep.subr.mxu0 0.0
    %6259 = vmatpush1.xpose.msra.mxu0 0.0
    %6260 = vmatprep.subr.mxu0 0.0
    %6261 = vmatpush1.xpose.msra.mxu0 0.0
    %6262 = vmatprep.subr.mxu0 0.0
    %6263 = vmatpush1.xpose.msra.mxu0 0.0
    %6264 = vmatprep.subr.mxu0 0.0
    %6265 = vmatpush1.xpose.msra.mxu0 0.0
    %6266 = vmatprep.mubr.f32.mxu0 0.0
    %6267 = vmatmul.mubr.f32.gmra.mrb[0].mxu0 %v6198
    %v6268 = vpop.f32.mrb[0].mxu0
    %v6269 = vadd.f32 0.0, %v6268
    %v6270 = vpop.f32.mrb[0].mxu0
    %6271 = vdwg.mxu0
    %6272 = vrot.lane.b32.xlu0 %v5859, 120
    %v6273 = vpop.permute.xlu0 %6272
    %6274 = vrot.lane.b32.xlu0 %v5859, 88
    %v6275 = vpop.permute.xlu0 %6274
    %v6276 = vsel %vm245, %v6273, 0
    %v6278 = vsel %vm245, %v6275, 0
    %6280 = vmatprep.subr.mxu0 0.0
    %6281 = vmatpush1.xpose.msra.mxu0 %v6278
    %6282 = vmatprep.subr.mxu0 0.0
    %6283 = vmatpush1.xpose.msra.mxu0 0.0
    %6284 = vmatprep.subr.mxu0 0.0
    %6285 = vmatpush1.xpose.msra.mxu0 0.0
    %6286 = vmatprep.subr.mxu0 0.0
    %6287 = vmatpush1.xpose.msra.mxu0 0.0
    %6288 = vmatprep.subr.mxu0 0.0
    %6289 = vmatpush1.xpose.msra.mxu0 0.0
    %6290 = vmatprep.subr.mxu0 0.0
    %6291 = vmatpush1.xpose.msra.mxu0 0.0
    %6292 = vmatprep.subr.mxu0 0.0
    %6293 = vmatpush1.xpose.msra.mxu0 0.0
    %6294 = vmatprep.subr.mxu0 0.0
    %6295 = vmatpush1.xpose.msra.mxu0 0.0
    %6296 = vmatprep.subr.mxu0 0.0
    %6297 = vmatpush1.xpose.msra.mxu0 0.0
    %6298 = vmatprep.subr.mxu0 0.0
    %6299 = vmatpush1.xpose.msra.mxu0 0.0
    %6300 = vmatprep.subr.mxu0 0.0
    %6301 = vmatpush1.xpose.msra.mxu0 0.0
    %6302 = vmatprep.subr.mxu0 0.0
    %6303 = vmatpush1.xpose.msra.mxu0 0.0
    %6304 = vmatprep.subr.mxu0 0.0
    %6305 = vmatpush1.xpose.msra.mxu0 0.0
    %6306 = vmatprep.subr.mxu0 0.0
    %6307 = vmatpush1.xpose.msra.mxu0 0.0
    %6308 = vmatprep.subr.mxu0 0.0
    %6309 = vmatpush1.xpose.msra.mxu0 0.0
    %6310 = vmatprep.subr.mxu0 0.0
    %6311 = vmatpush1.xpose.msra.mxu0 0.0
    %6312 = vmatprep.subr.mxu0 0.0
    %6313 = vmatpush1.xpose.msra.mxu0 0.0
    %6314 = vmatprep.subr.mxu0 0.0
    %6315 = vmatpush1.xpose.msra.mxu0 0.0
    %6316 = vmatprep.subr.mxu0 0.0
    %6317 = vmatpush1.xpose.msra.mxu0 0.0
    %6318 = vmatprep.subr.mxu0 0.0
    %6319 = vmatpush1.xpose.msra.mxu0 0.0
    %6320 = vmatprep.subr.mxu0 0.0
    %6321 = vmatpush1.xpose.msra.mxu0 0.0
    %6322 = vmatprep.subr.mxu0 0.0
    %6323 = vmatpush1.xpose.msra.mxu0 0.0
    %6324 = vmatprep.subr.mxu0 0.0
    %6325 = vmatpush1.xpose.msra.mxu0 0.0
    %6326 = vmatprep.subr.mxu0 0.0
    %6327 = vmatpush1.xpose.msra.mxu0 0.0
    %6328 = vmatprep.subr.mxu0 0.0
    %6329 = vmatpush1.xpose.msra.mxu0 0.0
    %6330 = vmatprep.subr.mxu0 0.0
    %6331 = vmatpush1.xpose.msra.mxu0 0.0
    %6332 = vmatprep.subr.mxu0 0.0
    %6333 = vmatpush1.xpose.msra.mxu0 0.0
    %6334 = vmatprep.subr.mxu0 0.0
    %6335 = vmatpush1.xpose.msra.mxu0 0.0
    %6336 = vmatprep.subr.mxu0 0.0
    %6337 = vmatpush1.xpose.msra.mxu0 0.0
    %6338 = vmatprep.subr.mxu0 0.0
    %6339 = vmatpush1.xpose.msra.mxu0 0.0
    %6340 = vmatprep.subr.mxu0 0.0
    %6341 = vmatpush1.xpose.msra.mxu0 0.0
    %6342 = vmatprep.subr.mxu0 0.0
    %6343 = vmatpush1.xpose.msra.mxu0 0.0
    %6344 = vmatprep.mubr.f32.mxu0 0.0
    %6345 = vmatmul.mubr.f32.gmra.mrb[0].mxu0 %v6276
    %v6346 = vpop.f32.mrb[0].mxu0
    %v6347 = vadd.f32 0.0, %v6346
    %v6348 = vpop.f32.mrb[0].mxu0
    %6349 = vdwg.mxu0
    %v6350 = vmul.f32 %v6269, 0.35355338
    %v6351 = vmul.f32 %v6347, 0.35355338
    %v6352 = vadd.f32 %v6350, %v402
    %v6353 = vadd.f32 %v6351, %v406
    %v6354 = vsel %vm245, %v6352, -inf
    %6355 = vmax.xlane.f32.xlu0 %v6354
    %v6356 = vpop.xlane.xlu0 %6355
    %v6357 = vsel %vm245, %v6353, -inf
    %6358 = vmax.xlane.f32.xlu0 %v6357
    %v6359 = vpop.xlane.xlu0 %6358
    %v6360 = vsub.f32 %v6352, %v6356
    %v6361 = vsub.f32 %v6353, %v6359
    %v6362 = vmul.f32 %v6360, 1.442695
    %v6363 = vpow.pop %v6362
    %v6364 = vmul.f32 %v6361, 1.442695
    %v6365 = vpow.pop %v6364
    %v6366 = vsel %vm245, %v6363, 0.0
    %6367 = vadd.xlane.f32.xlu0 %v6366
    %v6368 = vpop.xlane.xlu0 %6367
    %v6369 = vsel %vm245, %v6365, 0.0
    %6370 = vadd.xlane.f32.xlu0 %v6369
    %v6371 = vpop.xlane.xlu0 %6370
    %v6372 = vrcp.pop %v6368
    %v6373 = vrcp.pop %v6371
    %v6374 = vmul.f32 %v6363, %v6372
    %v6375 = vmul.f32 %v6365, %v6373
    %6376 = vrot.lane.b32.xlu0 %v5854, 56
    %v6377 = vpop.permute.xlu0 %6376
    %v6380 = vsel %vm245, %v6374, 0
    %6382 = vmatprep.subr.mxu0 0.0
    %6383 = vmatpush1.msra.mxu0 %v6377
    %6384 = vmatprep.subr.mxu0 0.0
    %6385 = vmatpush1.msra.mxu0 0.0
    %6386 = vmatprep.subr.mxu0 0.0
    %6387 = vmatpush1.msra.mxu0 0.0
    %6388 = vmatprep.subr.mxu0 0.0
    %6389 = vmatpush1.msra.mxu0 0.0
    %6390 = vmatprep.subr.mxu0 0.0
    %6391 = vmatpush1.msra.mxu0 0.0
    %6392 = vmatprep.subr.mxu0 0.0
    %6393 = vmatpush1.msra.mxu0 0.0
    %6394 = vmatprep.subr.mxu0 0.0
    %6395 = vmatpush1.msra.mxu0 0.0
    %6396 = vmatprep.subr.mxu0 0.0
    %6397 = vmatpush1.msra.mxu0 0.0
    %6398 = vmatprep.subr.mxu0 0.0
    %6399 = vmatpush1.msra.mxu0 0.0
    %6400 = vmatprep.subr.mxu0 0.0
    %6401 = vmatpush1.msra.mxu0 0.0
    %6402 = vmatprep.subr.mxu0 0.0
    %6403 = vmatpush1.msra.mxu0 0.0
    %6404 = vmatprep.subr.mxu0 0.0
    %6405 = vmatpush1.msra.mxu0 0.0
    %6406 = vmatprep.subr.mxu0 0.0
    %6407 = vmatpush1.msra.mxu0 0.0
    %6408 = vmatprep.subr.mxu0 0.0
    %6409 = vmatpush1.msra.mxu0 0.0
    %6410 = vmatprep.subr.mxu0 0.0
    %6411 = vmatpush1.msra.mxu0 0.0
    %6412 = vmatprep.subr.mxu0 0.0
    %6413 = vmatpush1.msra.mxu0 0.0
    %6414 = vmatprep.subr.mxu0 0.0
    %6415 = vmatpush1.msra.mxu0 0.0
    %6416 = vmatprep.subr.mxu0 0.0
    %6417 = vmatpush1.msra.mxu0 0.0
    %6418 = vmatprep.subr.mxu0 0.0
    %6419 = vmatpush1.msra.mxu0 0.0
    %6420 = vmatprep.subr.mxu0 0.0
    %6421 = vmatpush1.msra.mxu0 0.0
    %6422 = vmatprep.subr.mxu0 0.0
    %6423 = vmatpush1.msra.mxu0 0.0
    %6424 = vmatprep.subr.mxu0 0.0
    %6425 = vmatpush1.msra.mxu0 0.0
    %6426 = vmatprep.subr.mxu0 0.0
    %6427 = vmatpush1.msra.mxu0 0.0
    %6428 = vmatprep.subr.mxu0 0.0
    %6429 = vmatpush1.msra.mxu0 0.0
    %6430 = vmatprep.subr.mxu0 0.0
    %6431 = vmatpush1.msra.mxu0 0.0
    %6432 = vmatprep.subr.mxu0 0.0
    %6433 = vmatpush1.msra.mxu0 0.0
    %6434 = vmatprep.subr.mxu0 0.0
    %6435 = vmatpush1.msra.mxu0 0.0
    %6436 = vmatprep.subr.mxu0 0.0
    %6437 = vmatpush1.msra.mxu0 0.0
    %6438 = vmatprep.subr.mxu0 0.0
    %6439 = vmatpush1.msra.mxu0 0.0
    %6440 = vmatprep.subr.mxu0 0.0
    %6441 = vmatpush1.msra.mxu0 0.0
    %6442 = vmatprep.subr.mxu0 0.0
    %6443 = vmatpush1.msra.mxu0 0.0
    %6444 = vmatprep.subr.mxu0 0.0
    %6445 = vmatpush1.msra.mxu0 0.0
    %6446 = vmatprep.mubr.f32.mxu0 0.0
    %6447 = vmatmul.mubr.f32.gmra.mrb[0].mxu0 %v6380
    %v6448 = vpop.f32.mrb[0].mxu0
    %v6449 = vadd.f32 0.0, %v6448
    %v6450 = vpop.f32.mrb[0].mxu0
    %6451 = vdwg.mxu0
    %6452 = vrot.lane.b32.xlu0 %v5859, 56
    %v6453 = vpop.permute.xlu0 %6452
    %v6456 = vsel %vm245, %v6375, 0
    %6458 = vmatprep.subr.mxu0 0.0
    %6459 = vmatpush1.msra.mxu0 %v6453
    %6460 = vmatprep.subr.mxu0 0.0
    %6461 = vmatpush1.msra.mxu0 0.0
    %6462 = vmatprep.subr.mxu0 0.0
    %6463 = vmatpush1.msra.mxu0 0.0
    %6464 = vmatprep.subr.mxu0 0.0
    %6465 = vmatpush1.msra.mxu0 0.0
    %6466 = vmatprep.subr.mxu0 0.0
    %6467 = vmatpush1.msra.mxu0 0.0
    %6468 = vmatprep.subr.mxu0 0.0
    %6469 = vmatpush1.msra.mxu0 0.0
    %6470 = vmatprep.subr.mxu0 0.0
    %6471 = vmatpush1.msra.mxu0 0.0
    %6472 = vmatprep.subr.mxu0 0.0
    %6473 = vmatpush1.msra.mxu0 0.0
    %6474 = vmatprep.subr.mxu0 0.0
    %6475 = vmatpush1.msra.mxu0 0.0
    %6476 = vmatprep.subr.mxu0 0.0
    %6477 = vmatpush1.msra.mxu0 0.0
    %6478 = vmatprep.subr.mxu0 0.0
    %6479 = vmatpush1.msra.mxu0 0.0
    %6480 = vmatprep.subr.mxu0 0.0
    %6481 = vmatpush1.msra.mxu0 0.0
    %6482 = vmatprep.subr.mxu0 0.0
    %6483 = vmatpush1.msra.mxu0 0.0
    %6484 = vmatprep.subr.mxu0 0.0
    %6485 = vmatpush1.msra.mxu0 0.0
    %6486 = vmatprep.subr.mxu0 0.0
    %6487 = vmatpush1.msra.mxu0 0.0
    %6488 = vmatprep.subr.mxu0 0.0
    %6489 = vmatpush1.msra.mxu0 0.0
    %6490 = vmatprep.subr.mxu0 0.0
    %6491 = vmatpush1.msra.mxu0 0.0
    %6492 = vmatprep.subr.mxu0 0.0
    %6493 = vmatpush1.msra.mxu0 0.0
    %6494 = vmatprep.subr.mxu0 0.0
    %6495 = vmatpush1.msra.mxu0 0.0
    %6496 = vmatprep.subr.mxu0 0.0
    %6497 = vmatpush1.msra.mxu0 0.0
    %6498 = vmatprep.subr.mxu0 0.0
    %6499 = vmatpush1.msra.mxu0 0.0
    %6500 = vmatprep.subr.mxu0 0.0
    %6501 = vmatpush1.msra.mxu0 0.0
    %6502 = vmatprep.subr.mxu0 0.0
    %6503 = vmatpush1.msra.mxu0 0.0
    %6504 = vmatprep.subr.mxu0 0.0
    %6505 = vmatpush1.msra.mxu0 0.0
    %6506 = vmatprep.subr.mxu0 0.0
    %6507 = vmatpush1.msra.mxu0 0.0
    %6508 = vmatprep.subr.mxu0 0.0
    %6509 = vmatpush1.msra.mxu0 0.0
    %6510 = vmatprep.subr.mxu0 0.0
    %6511 = vmatpush1.msra.mxu0 0.0
    %6512 = vmatprep.subr.mxu0 0.0
    %6513 = vmatpush1.msra.mxu0 0.0
    %6514 = vmatprep.subr.mxu0 0.0
    %6515 = vmatpush1.msra.mxu0 0.0
    %6516 = vmatprep.subr.mxu0 0.0
    %6517 = vmatpush1.msra.mxu0 0.0
    %6518 = vmatprep.subr.mxu0 0.0
    %6519 = vmatpush1.msra.mxu0 0.0
    %6520 = vmatprep.subr.mxu0 0.0
    %6521 = vmatpush1.msra.mxu0 0.0
    %6522 = vmatprep.mubr.f32.mxu0 0.0
    %6523 = vmatmul.mubr.f32.gmra.mrb[0].mxu0 %v6456
    %v6524 = vpop.f32.mrb[0].mxu0
    %v6525 = vadd.f32 0.0, %v6524
    %v6526 = vpop.f32.mrb[0].mxu0
    %6527 = vdwg.mxu0
    %6528 = vrot.lane.b32.xlu0 %v5854, 112
    %v6529 = vpop.permute.xlu0 %6528
    %6530 = vrot.lane.b32.xlu0 %v5854, 80
    %v6531 = vpop.permute.xlu0 %6530
    %v6532 = vsel %vm245, %v6529, 0
    %v6534 = vsel %vm245, %v6531, 0
    %6536 = vmatprep.subr.mxu0 0.0
    %6537 = vmatpush1.xpose.msra.mxu0 %v6534
    %6538 = vmatprep.subr.mxu0 0.0
    %6539 = vmatpush1.xpose.msra.mxu0 0.0
    %6540 = vmatprep.subr.mxu0 0.0
    %6541 = vmatpush1.xpose.msra.mxu0 0.0
    %6542 = vmatprep.subr.mxu0 0.0
    %6543 = vmatpush1.xpose.msra.mxu0 0.0
    %6544 = vmatprep.subr.mxu0 0.0
    %6545 = vmatpush1.xpose.msra.mxu0 0.0
    %6546 = vmatprep.subr.mxu0 0.0
    %6547 = vmatpush1.xpose.msra.mxu0 0.0
    %6548 = vmatprep.subr.mxu0 0.0
    %6549 = vmatpush1.xpose.msra.mxu0 0.0
    %6550 = vmatprep.subr.mxu0 0.0
    %6551 = vmatpush1.xpose.msra.mxu0 0.0
    %6552 = vmatprep.subr.mxu0 0.0
    %6553 = vmatpush1.xpose.msra.mxu0 0.0
    %6554 = vmatprep.subr.mxu0 0.0
    %6555 = vmatpush1.xpose.msra.mxu0 0.0
    %6556 = vmatprep.subr.mxu0 0.0
    %6557 = vmatpush1.xpose.msra.mxu0 0.0
    %6558 = vmatprep.subr.mxu0 0.0
    %6559 = vmatpush1.xpose.msra.mxu0 0.0
    %6560 = vmatprep.subr.mxu0 0.0
    %6561 = vmatpush1.xpose.msra.mxu0 0.0
    %6562 = vmatprep.subr.mxu0 0.0
    %6563 = vmatpush1.xpose.msra.mxu0 0.0
    %6564 = vmatprep.subr.mxu0 0.0
    %6565 = vmatpush1.xpose.msra.mxu0 0.0
    %6566 = vmatprep.subr.mxu0 0.0
    %6567 = vmatpush1.xpose.msra.mxu0 0.0
    %6568 = vmatprep.subr.mxu0 0.0
    %6569 = vmatpush1.xpose.msra.mxu0 0.0
    %6570 = vmatprep.subr.mxu0 0.0
    %6571 = vmatpush1.xpose.msra.mxu0 0.0
    %6572 = vmatprep.subr.mxu0 0.0
    %6573 = vmatpush1.xpose.msra.mxu0 0.0
    %6574 = vmatprep.subr.mxu0 0.0
    %6575 = vmatpush1.xpose.msra.mxu0 0.0
    %6576 = vmatprep.subr.mxu0 0.0
    %6577 = vmatpush1.xpose.msra.mxu0 0.0
    %6578 = vmatprep.subr.mxu0 0.0
    %6579 = vmatpush1.xpose.msra.mxu0 0.0
    %6580 = vmatprep.subr.mxu0 0.0
    %6581 = vmatpush1.xpose.msra.mxu0 0.0
    %6582 = vmatprep.subr.mxu0 0.0
    %6583 = vmatpush1.xpose.msra.mxu0 0.0
    %6584 = vmatprep.subr.mxu0 0.0
    %6585 = vmatpush1.xpose.msra.mxu0 0.0
    %6586 = vmatprep.subr.mxu0 0.0
    %6587 = vmatpush1.xpose.msra.mxu0 0.0
    %6588 = vmatprep.subr.mxu0 0.0
    %6589 = vmatpush1.xpose.msra.mxu0 0.0
    %6590 = vmatprep.subr.mxu0 0.0
    %6591 = vmatpush1.xpose.msra.mxu0 0.0
    %6592 = vmatprep.subr.mxu0 0.0
    %6593 = vmatpush1.xpose.msra.mxu0 0.0
    %6594 = vmatprep.subr.mxu0 0.0
    %6595 = vmatpush1.xpose.msra.mxu0 0.0
    %6596 = vmatprep.subr.mxu0 0.0
    %6597 = vmatpush1.xpose.msra.mxu0 0.0
    %6598 = vmatprep.subr.mxu0 0.0
    %6599 = vmatpush1.xpose.msra.mxu0 0.0
    %6600 = vmatprep.mubr.f32.mxu0 0.0
    %6601 = vmatmul.mubr.f32.gmra.mrb[0].mxu0 %v6532
    %v6602 = vpop.f32.mrb[0].mxu0
    %v6603 = vadd.f32 0.0, %v6602
    %v6604 = vpop.f32.mrb[0].mxu0
    %6605 = vdwg.mxu0
    %6606 = vrot.lane.b32.xlu0 %v5859, 112
    %v6607 = vpop.permute.xlu0 %6606
    %6608 = vrot.lane.b32.xlu0 %v5859, 80
    %v6609 = vpop.permute.xlu0 %6608
    %v6610 = vsel %vm245, %v6607, 0
    %v6612 = vsel %vm245, %v6609, 0
    %6614 = vmatprep.subr.mxu0 0.0
    %6615 = vmatpush1.xpose.msra.mxu0 %v6612
    %6616 = vmatprep.subr.mxu0 0.0
    %6617 = vmatpush1.xpose.msra.mxu0 0.0
    %6618 = vmatprep.subr.mxu0 0.0
    %6619 = vmatpush1.xpose.msra.mxu0 0.0
    %6620 = vmatprep.subr.mxu0 0.0
    %6621 = vmatpush1.xpose.msra.mxu0 0.0
    %6622 = vmatprep.subr.mxu0 0.0
    %6623 = vmatpush1.xpose.msra.mxu0 0.0
    %6624 = vmatprep.subr.mxu0 0.0
    %6625 = vmatpush1.xpose.msra.mxu0 0.0
    %6626 = vmatprep.subr.mxu0 0.0
    %6627 = vmatpush1.xpose.msra.mxu0 0.0
    %6628 = vmatprep.subr.mxu0 0.0
    %6629 = vmatpush1.xpose.msra.mxu0 0.0
    %6630 = vmatprep.subr.mxu0 0.0
    %6631 = vmatpush1.xpose.msra.mxu0 0.0
    %6632 = vmatprep.subr.mxu0 0.0
    %6633 = vmatpush1.xpose.msra.mxu0 0.0
    %6634 = vmatprep.subr.mxu0 0.0
    %6635 = vmatpush1.xpose.msra.mxu0 0.0
    %6636 = vmatprep.subr.mxu0 0.0
    %6637 = vmatpush1.xpose.msra.mxu0 0.0
    %6638 = vmatprep.subr.mxu0 0.0
    %6639 = vmatpush1.xpose.msra.mxu0 0.0
    %6640 = vmatprep.subr.mxu0 0.0
    %6641 = vmatpush1.xpose.msra.mxu0 0.0
    %6642 = vmatprep.subr.mxu0 0.0
    %6643 = vmatpush1.xpose.msra.mxu0 0.0
    %6644 = vmatprep.subr.mxu0 0.0
    %6645 = vmatpush1.xpose.msra.mxu0 0.0
    %6646 = vmatprep.subr.mxu0 0.0
    %6647 = vmatpush1.xpose.msra.mxu0 0.0
    %6648 = vmatprep.subr.mxu0 0.0
    %6649 = vmatpush1.xpose.msra.mxu0 0.0
    %6650 = vmatprep.subr.mxu0 0.0
    %6651 = vmatpush1.xpose.msra.mxu0 0.0
    %6652 = vmatprep.subr.mxu0 0.0
    %6653 = vmatpush1.xpose.msra.mxu0 0.0
    %6654 = vmatprep.subr.mxu0 0.0
    %6655 = vmatpush1.xpose.msra.mxu0 0.0
    %6656 = vmatprep.subr.mxu0 0.0
    %6657 = vmatpush1.xpose.msra.mxu0 0.0
    %6658 = vmatprep.subr.mxu0 0.0
    %6659 = vmatpush1.xpose.msra.mxu0 0.0
    %6660 = vmatprep.subr.mxu0 0.0
    %6661 = vmatpush1.xpose.msra.mxu0 0.0
    %6662 = vmatprep.subr.mxu0 0.0
    %6663 = vmatpush1.xpose.msra.mxu0 0.0
    %6664 = vmatprep.subr.mxu0 0.0
    %6665 = vmatpush1.xpose.msra.mxu0 0.0
    %6666 = vmatprep.subr.mxu0 0.0
    %6667 = vmatpush1.xpose.msra.mxu0 0.0
    %6668 = vmatprep.subr.mxu0 0.0
    %6669 = vmatpush1.xpose.msra.mxu0 0.0
    %6670 = vmatprep.subr.mxu0 0.0
    %6671 = vmatpush1.xpose.msra.mxu0 0.0
    %6672 = vmatprep.subr.mxu0 0.0
    %6673 = vmatpush1.xpose.msra.mxu0 0.0
    %6674 = vmatprep.subr.mxu0 0.0
    %6675 = vmatpush1.xpose.msra.mxu0 0.0
    %6676 = vmatprep.subr.mxu0 0.0
    %6677 = vmatpush1.xpose.msra.mxu0 0.0
    %6678 = vmatprep.mubr.f32.mxu0 0.0
    %6679 = vmatmul.mubr.f32.gmra.mrb[0].mxu0 %v6610
    %v6680 = vpop.f32.mrb[0].mxu0
    %v6681 = vadd.f32 0.0, %v6680
    %v6682 = vpop.f32.mrb[0].mxu0
    %6683 = vdwg.mxu0
    %v6684 = vmul.f32 %v6603, 0.35355338
    %v6685 = vmul.f32 %v6681, 0.35355338
    %v6686 = vadd.f32 %v6684, %v402
    %v6687 = vadd.f32 %v6685, %v406
    %v6688 = vsel %vm245, %v6686, -inf
    %6689 = vmax.xlane.f32.xlu0 %v6688
    %v6690 = vpop.xlane.xlu0 %6689
    %v6691 = vsel %vm245, %v6687, -inf
    %6692 = vmax.xlane.f32.xlu0 %v6691
    %v6693 = vpop.xlane.xlu0 %6692
    %v6694 = vsub.f32 %v6686, %v6690
    %v6695 = vsub.f32 %v6687, %v6693
    %v6696 = vmul.f32 %v6694, 1.442695
    %v6697 = vpow.pop %v6696
    %v6698 = vmul.f32 %v6695, 1.442695
    %v6699 = vpow.pop %v6698
    %v6700 = vsel %vm245, %v6697, 0.0
    %6701 = vadd.xlane.f32.xlu0 %v6700
    %v6702 = vpop.xlane.xlu0 %6701
    %v6703 = vsel %vm245, %v6699, 0.0
    %6704 = vadd.xlane.f32.xlu0 %v6703
    %v6705 = vpop.xlane.xlu0 %6704
    %v6706 = vrcp.pop %v6702
    %v6707 = vrcp.pop %v6705
    %v6708 = vmul.f32 %v6697, %v6706
    %v6709 = vmul.f32 %v6699, %v6707
    %6710 = vrot.lane.b32.xlu0 %v5854, 48
    %v6711 = vpop.permute.xlu0 %6710
    %v6714 = vsel %vm245, %v6708, 0
    %6716 = vmatprep.subr.mxu0 0.0
    %6717 = vmatpush1.msra.mxu0 %v6711
    %6718 = vmatprep.subr.mxu0 0.0
    %6719 = vmatpush1.msra.mxu0 0.0
    %6720 = vmatprep.subr.mxu0 0.0
    %6721 = vmatpush1.msra.mxu0 0.0
    %6722 = vmatprep.subr.mxu0 0.0
    %6723 = vmatpush1.msra.mxu0 0.0
    %6724 = vmatprep.subr.mxu0 0.0
    %6725 = vmatpush1.msra.mxu0 0.0
    %6726 = vmatprep.subr.mxu0 0.0
    %6727 = vmatpush1.msra.mxu0 0.0
    %6728 = vmatprep.subr.mxu0 0.0
    %6729 = vmatpush1.msra.mxu0 0.0
    %6730 = vmatprep.subr.mxu0 0.0
    %6731 = vmatpush1.msra.mxu0 0.0
    %6732 = vmatprep.subr.mxu0 0.0
    %6733 = vmatpush1.msra.mxu0 0.0
    %6734 = vmatprep.subr.mxu0 0.0
    %6735 = vmatpush1.msra.mxu0 0.0
    %6736 = vmatprep.subr.mxu0 0.0
    %6737 = vmatpush1.msra.mxu0 0.0
    %6738 = vmatprep.subr.mxu0 0.0
    %6739 = vmatpush1.msra.mxu0 0.0
    %6740 = vmatprep.subr.mxu0 0.0
    %6741 = vmatpush1.msra.mxu0 0.0
    %6742 = vmatprep.subr.mxu0 0.0
    %6743 = vmatpush1.msra.mxu0 0.0
    %6744 = vmatprep.subr.mxu0 0.0
    %6745 = vmatpush1.msra.mxu0 0.0
    %6746 = vmatprep.subr.mxu0 0.0
    %6747 = vmatpush1.msra.mxu0 0.0
    %6748 = vmatprep.subr.mxu0 0.0
    %6749 = vmatpush1.msra.mxu0 0.0
    %6750 = vmatprep.subr.mxu0 0.0
    %6751 = vmatpush1.msra.mxu0 0.0
    %6752 = vmatprep.subr.mxu0 0.0
    %6753 = vmatpush1.msra.mxu0 0.0
    %6754 = vmatprep.subr.mxu0 0.0
    %6755 = vmatpush1.msra.mxu0 0.0
    %6756 = vmatprep.subr.mxu0 0.0
    %6757 = vmatpush1.msra.mxu0 0.0
    %6758 = vmatprep.subr.mxu0 0.0
    %6759 = vmatpush1.msra.mxu0 0.0
    %6760 = vmatprep.subr.mxu0 0.0
    %6761 = vmatpush1.msra.mxu0 0.0
    %6762 = vmatprep.subr.mxu0 0.0
    %6763 = vmatpush1.msra.mxu0 0.0
    %6764 = vmatprep.subr.mxu0 0.0
    %6765 = vmatpush1.msra.mxu0 0.0
    %6766 = vmatprep.subr.mxu0 0.0
    %6767 = vmatpush1.msra.mxu0 0.0
    %6768 = vmatprep.subr.mxu0 0.0
    %6769 = vmatpush1.msra.mxu0 0.0
    %6770 = vmatprep.subr.mxu0 0.0
    %6771 = vmatpush1.msra.mxu0 0.0
    %6772 = vmatprep.subr.mxu0 0.0
    %6773 = vmatpush1.msra.mxu0 0.0
    %6774 = vmatprep.subr.mxu0 0.0
    %6775 = vmatpush1.msra.mxu0 0.0
    %6776 = vmatprep.subr.mxu0 0.0
    %6777 = vmatpush1.msra.mxu0 0.0
    %6778 = vmatprep.subr.mxu0 0.0
    %6779 = vmatpush1.msra.mxu0 0.0
    %6780 = vmatprep.mubr.f32.mxu0 0.0
    %6781 = vmatmul.mubr.f32.gmra.mrb[0].mxu0 %v6714
    %v6782 = vpop.f32.mrb[0].mxu0
    %v6783 = vadd.f32 0.0, %v6782
    %v6784 = vpop.f32.mrb[0].mxu0
    %6785 = vdwg.mxu0
    %6786 = vrot.lane.b32.xlu0 %v5859, 48
    %v6787 = vpop.permute.xlu0 %6786
    %v6790 = vsel %vm245, %v6709, 0
    %6792 = vmatprep.subr.mxu0 0.0
    %6793 = vmatpush1.msra.mxu0 %v6787
    %6794 = vmatprep.subr.mxu0 0.0
    %6795 = vmatpush1.msra.mxu0 0.0
    %6796 = vmatprep.subr.mxu0 0.0
    %6797 = vmatpush1.msra.mxu0 0.0
    %6798 = vmatprep.subr.mxu0 0.0
    %6799 = vmatpush1.msra.mxu0 0.0
    %6800 = vmatprep.subr.mxu0 0.0
    %6801 = vmatpush1.msra.mxu0 0.0
    %6802 = vmatprep.subr.mxu0 0.0
    %6803 = vmatpush1.msra.mxu0 0.0
    %6804 = vmatprep.subr.mxu0 0.0
    %6805 = vmatpush1.msra.mxu0 0.0
    %6806 = vmatprep.subr.mxu0 0.0
    %6807 = vmatpush1.msra.mxu0 0.0
    %6808 = vmatprep.subr.mxu0 0.0
    %6809 = vmatpush1.msra.mxu0 0.0
    %6810 = vmatprep.subr.mxu0 0.0
    %6811 = vmatpush1.msra.mxu0 0.0
    %6812 = vmatprep.subr.mxu0 0.0
    %6813 = vmatpush1.msra.mxu0 0.0
    %6814 = vmatprep.subr.mxu0 0.0
    %6815 = vmatpush1.msra.mxu0 0.0
    %6816 = vmatprep.subr.mxu0 0.0
    %6817 = vmatpush1.msra.mxu0 0.0
    %6818 = vmatprep.subr.mxu0 0.0
    %6819 = vmatpush1.msra.mxu0 0.0
    %6820 = vmatprep.subr.mxu0 0.0
    %6821 = vmatpush1.msra.mxu0 0.0
    %6822 = vmatprep.subr.mxu0 0.0
    %6823 = vmatpush1.msra.mxu0 0.0
    %6824 = vmatprep.subr.mxu0 0.0
    %6825 = vmatpush1.msra.mxu0 0.0
    %6826 = vmatprep.subr.mxu0 0.0
    %6827 = vmatpush1.msra.mxu0 0.0
    %6828 = vmatprep.subr.mxu0 0.0
    %6829 = vmatpush1.msra.mxu0 0.0
    %6830 = vmatprep.subr.mxu0 0.0
    %6831 = vmatpush1.msra.mxu0 0.0
    %6832 = vmatprep.subr.mxu0 0.0
    %6833 = vmatpush1.msra.mxu0 0.0
    %6834 = vmatprep.subr.mxu0 0.0
    %6835 = vmatpush1.msra.mxu0 0.0
    %6836 = vmatprep.subr.mxu0 0.0
    %6837 = vmatpush1.msra.mxu0 0.0
    %6838 = vmatprep.subr.mxu0 0.0
    %6839 = vmatpush1.msra.mxu0 0.0
    %6840 = vmatprep.subr.mxu0 0.0
    %6841 = vmatpush1.msra.mxu0 0.0
    %6842 = vmatprep.subr.mxu0 0.0
    %6843 = vmatpush1.msra.mxu0 0.0
    %6844 = vmatprep.subr.mxu0 0.0
    %6845 = vmatpush1.msra.mxu0 0.0
    %6846 = vmatprep.subr.mxu0 0.0
    %6847 = vmatpush1.msra.mxu0 0.0
    %6848 = vmatprep.subr.mxu0 0.0
    %6849 = vmatpush1.msra.mxu0 0.0
    %6850 = vmatprep.subr.mxu0 0.0
    %6851 = vmatpush1.msra.mxu0 0.0
    %6852 = vmatprep.subr.mxu0 0.0
    %6853 = vmatpush1.msra.mxu0 0.0
    %6854 = vmatprep.subr.mxu0 0.0
    %6855 = vmatpush1.msra.mxu0 0.0
    %6856 = vmatprep.mubr.f32.mxu0 0.0
    %6857 = vmatmul.mubr.f32.gmra.mrb[0].mxu0 %v6790
    %v6858 = vpop.f32.mrb[0].mxu0
    %v6859 = vadd.f32 0.0, %v6858
    %v6860 = vpop.f32.mrb[0].mxu0
    %6861 = vdwg.mxu0
    %6862 = vrot.lane.b32.xlu0 %v5854, 104
    %v6863 = vpop.permute.xlu0 %6862
    %6864 = vrot.lane.b32.xlu0 %v5854, 72
    %v6865 = vpop.permute.xlu0 %6864
    %v6866 = vsel %vm245, %v6863, 0
    %v6868 = vsel %vm245, %v6865, 0
    %6870 = vmatprep.subr.mxu0 0.0
    %6871 = vmatpush1.xpose.msra.mxu0 %v6868
    %6872 = vmatprep.subr.mxu0 0.0
    %6873 = vmatpush1.xpose.msra.mxu0 0.0
    %6874 = vmatprep.subr.mxu0 0.0
    %6875 = vmatpush1.xpose.msra.mxu0 0.0
    %6876 = vmatprep.subr.mxu0 0.0
    %6877 = vmatpush1.xpose.msra.mxu0 0.0
    %6878 = vmatprep.subr.mxu0 0.0
    %6879 = vmatpush1.xpose.msra.mxu0 0.0
    %6880 = vmatprep.subr.mxu0 0.0
    %6881 = vmatpush1.xpose.msra.mxu0 0.0
    %6882 = vmatprep.subr.mxu0 0.0
    %6883 = vmatpush1.xpose.msra.mxu0 0.0
    %6884 = vmatprep.subr.mxu0 0.0
    %6885 = vmatpush1.xpose.msra.mxu0 0.0
    %6886 = vmatprep.subr.mxu0 0.0
    %6887 = vmatpush1.xpose.msra.mxu0 0.0
    %6888 = vmatprep.subr.mxu0 0.0
    %6889 = vmatpush1.xpose.msra.mxu0 0.0
    %6890 = vmatprep.subr.mxu0 0.0
    %6891 = vmatpush1.xpose.msra.mxu0 0.0
    %6892 = vmatprep.subr.mxu0 0.0
    %6893 = vmatpush1.xpose.msra.mxu0 0.0
    %6894 = vmatprep.subr.mxu0 0.0
    %6895 = vmatpush1.xpose.msra.mxu0 0.0
    %6896 = vmatprep.subr.mxu0 0.0
    %6897 = vmatpush1.xpose.msra.mxu0 0.0
    %6898 = vmatprep.subr.mxu0 0.0
    %6899 = vmatpush1.xpose.msra.mxu0 0.0
    %6900 = vmatprep.subr.mxu0 0.0
    %6901 = vmatpush1.xpose.msra.mxu0 0.0
    %6902 = vmatprep.subr.mxu0 0.0
    %6903 = vmatpush1.xpose.msra.mxu0 0.0
    %6904 = vmatprep.subr.mxu0 0.0
    %6905 = vmatpush1.xpose.msra.mxu0 0.0
    %6906 = vmatprep.subr.mxu0 0.0
    %6907 = vmatpush1.xpose.msra.mxu0 0.0
    %6908 = vmatprep.subr.mxu0 0.0
    %6909 = vmatpush1.xpose.msra.mxu0 0.0
    %6910 = vmatprep.subr.mxu0 0.0
    %6911 = vmatpush1.xpose.msra.mxu0 0.0
    %6912 = vmatprep.subr.mxu0 0.0
    %6913 = vmatpush1.xpose.msra.mxu0 0.0
    %6914 = vmatprep.subr.mxu0 0.0
    %6915 = vmatpush1.xpose.msra.mxu0 0.0
    %6916 = vmatprep.subr.mxu0 0.0
    %6917 = vmatpush1.xpose.msra.mxu0 0.0
    %6918 = vmatprep.subr.mxu0 0.0
    %6919 = vmatpush1.xpose.msra.mxu0 0.0
    %6920 = vmatprep.subr.mxu0 0.0
    %6921 = vmatpush1.xpose.msra.mxu0 0.0
    %6922 = vmatprep.subr.mxu0 0.0
    %6923 = vmatpush1.xpose.msra.mxu0 0.0
    %6924 = vmatprep.subr.mxu0 0.0
    %6925 = vmatpush1.xpose.msra.mxu0 0.0
    %6926 = vmatprep.subr.mxu0 0.0
    %6927 = vmatpush1.xpose.msra.mxu0 0.0
    %6928 = vmatprep.subr.mxu0 0.0
    %6929 = vmatpush1.xpose.msra.mxu0 0.0
    %6930 = vmatprep.subr.mxu0 0.0
    %6931 = vmatpush1.xpose.msra.mxu0 0.0
    %6932 = vmatprep.subr.mxu0 0.0
    %6933 = vmatpush1.xpose.msra.mxu0 0.0
    %6934 = vmatprep.mubr.f32.mxu0 0.0
    %6935 = vmatmul.mubr.f32.gmra.mrb[0].mxu0 %v6866
    %v6936 = vpop.f32.mrb[0].mxu0
    %v6937 = vadd.f32 0.0, %v6936
    %v6938 = vpop.f32.mrb[0].mxu0
    %6939 = vdwg.mxu0
    %6940 = vrot.lane.b32.xlu0 %v5859, 104
    %v6941 = vpop.permute.xlu0 %6940
    %6942 = vrot.lane.b32.xlu0 %v5859, 72
    %v6943 = vpop.permute.xlu0 %6942
    %v6944 = vsel %vm245, %v6941, 0
    %v6946 = vsel %vm245, %v6943, 0
    %6948 = vmatprep.subr.mxu0 0.0
    %6949 = vmatpush1.xpose.msra.mxu0 %v6946
    %6950 = vmatprep.subr.mxu0 0.0
    %6951 = vmatpush1.xpose.msra.mxu0 0.0
    %6952 = vmatprep.subr.mxu0 0.0
    %6953 = vmatpush1.xpose.msra.mxu0 0.0
    %6954 = vmatprep.subr.mxu0 0.0
    %6955 = vmatpush1.xpose.msra.mxu0 0.0
    %6956 = vmatprep.subr.mxu0 0.0
    %6957 = vmatpush1.xpose.msra.mxu0 0.0
    %6958 = vmatprep.subr.mxu0 0.0
    %6959 = vmatpush1.xpose.msra.mxu0 0.0
    %6960 = vmatprep.subr.mxu0 0.0
    %6961 = vmatpush1.xpose.msra.mxu0 0.0
    %6962 = vmatprep.subr.mxu0 0.0
    %6963 = vmatpush1.xpose.msra.mxu0 0.0
    %6964 = vmatprep.subr.mxu0 0.0
    %6965 = vmatpush1.xpose.msra.mxu0 0.0
    %6966 = vmatprep.subr.mxu0 0.0
    %6967 = vmatpush1.xpose.msra.mxu0 0.0
    %6968 = vmatprep.subr.mxu0 0.0
    %6969 = vmatpush1.xpose.msra.mxu0 0.0
    %6970 = vmatprep.subr.mxu0 0.0
    %6971 = vmatpush1.xpose.msra.mxu0 0.0
    %6972 = vmatprep.subr.mxu0 0.0
    %6973 = vmatpush1.xpose.msra.mxu0 0.0
    %6974 = vmatprep.subr.mxu0 0.0
    %6975 = vmatpush1.xpose.msra.mxu0 0.0
    %6976 = vmatprep.subr.mxu0 0.0
    %6977 = vmatpush1.xpose.msra.mxu0 0.0
    %6978 = vmatprep.subr.mxu0 0.0
    %6979 = vmatpush1.xpose.msra.mxu0 0.0
    %6980 = vmatprep.subr.mxu0 0.0
    %6981 = vmatpush1.xpose.msra.mxu0 0.0
    %6982 = vmatprep.subr.mxu0 0.0
    %6983 = vmatpush1.xpose.msra.mxu0 0.0
    %6984 = vmatprep.subr.mxu0 0.0
    %6985 = vmatpush1.xpose.msra.mxu0 0.0
    %6986 = vmatprep.subr.mxu0 0.0
    %6987 = vmatpush1.xpose.msra.mxu0 0.0
    %6988 = vmatprep.subr.mxu0 0.0
    %6989 = vmatpush1.xpose.msra.mxu0 0.0
    %6990 = vmatprep.subr.mxu0 0.0
    %6991 = vmatpush1.xpose.msra.mxu0 0.0
    %6992 = vmatprep.subr.mxu0 0.0
    %6993 = vmatpush1.xpose.msra.mxu0 0.0
    %6994 = vmatprep.subr.mxu0 0.0
    %6995 = vmatpush1.xpose.msra.mxu0 0.0
    %6996 = vmatprep.subr.mxu0 0.0
    %6997 = vmatpush1.xpose.msra.mxu0 0.0
    %6998 = vmatprep.subr.mxu0 0.0
    %6999 = vmatpush1.xpose.msra.mxu0 0.0
    %7000 = vmatprep.subr.mxu0 0.0
    %7001 = vmatpush1.xpose.msra.mxu0 0.0
    %7002 = vmatprep.subr.mxu0 0.0
    %7003 = vmatpush1.xpose.msra.mxu0 0.0
    %7004 = vmatprep.subr.mxu0 0.0
    %7005 = vmatpush1.xpose.msra.mxu0 0.0
    %7006 = vmatprep.subr.mxu0 0.0
    %7007 = vmatpush1.xpose.msra.mxu0 0.0
    %7008 = vmatprep.subr.mxu0 0.0
    %7009 = vmatpush1.xpose.msra.mxu0 0.0
    %7010 = vmatprep.subr.mxu0 0.0
    %7011 = vmatpush1.xpose.msra.mxu0 0.0
    %7012 = vmatprep.mubr.f32.mxu0 0.0
    %7013 = vmatmul.mubr.f32.gmra.mrb[0].mxu0 %v6944
    %v7014 = vpop.f32.mrb[0].mxu0
    %v7015 = vadd.f32 0.0, %v7014
    %v7016 = vpop.f32.mrb[0].mxu0
    %7017 = vdwg.mxu0
    %v7018 = vmul.f32 %v6937, 0.35355338
    %v7019 = vmul.f32 %v7015, 0.35355338
    %v7020 = vadd.f32 %v7018, %v402
    %v7021 = vadd.f32 %v7019, %v406
    %v7022 = vsel %vm245, %v7020, -inf
    %7023 = vmax.xlane.f32.xlu0 %v7022
    %v7024 = vpop.xlane.xlu0 %7023
    %v7025 = vsel %vm245, %v7021, -inf
    %7026 = vmax.xlane.f32.xlu0 %v7025
    %v7027 = vpop.xlane.xlu0 %7026
    %v7028 = vsub.f32 %v7020, %v7024
    %v7029 = vsub.f32 %v7021, %v7027
    %v7030 = vmul.f32 %v7028, 1.442695
    %v7031 = vpow.pop %v7030
    %v7032 = vmul.f32 %v7029, 1.442695
    %v7033 = vpow.pop %v7032
    %v7034 = vsel %vm245, %v7031, 0.0
    %7035 = vadd.xlane.f32.xlu0 %v7034
    %v7036 = vpop.xlane.xlu0 %7035
    %v7037 = vsel %vm245, %v7033, 0.0
    %7038 = vadd.xlane.f32.xlu0 %v7037
    %v7039 = vpop.xlane.xlu0 %7038
    %v7040 = vrcp.pop %v7036
    %v7041 = vrcp.pop %v7039
    %v7042 = vmul.f32 %v7031, %v7040
    %v7043 = vmul.f32 %v7033, %v7041
    %7044 = vrot.lane.b32.xlu0 %v5854, 40
    %v7045 = vpop.permute.xlu0 %7044
    %v7048 = vsel %vm245, %v7042, 0
    %7050 = vmatprep.subr.mxu0 0.0
    %7051 = vmatpush1.msra.mxu0 %v7045
    %7052 = vmatprep.subr.mxu0 0.0
    %7053 = vmatpush1.msra.mxu0 0.0
    %7054 = vmatprep.subr.mxu0 0.0
    %7055 = vmatpush1.msra.mxu0 0.0
    %7056 = vmatprep.subr.mxu0 0.0
    %7057 = vmatpush1.msra.mxu0 0.0
    %7058 = vmatprep.subr.mxu0 0.0
    %7059 = vmatpush1.msra.mxu0 0.0
    %7060 = vmatprep.subr.mxu0 0.0
    %7061 = vmatpush1.msra.mxu0 0.0
    %7062 = vmatprep.subr.mxu0 0.0
    %7063 = vmatpush1.msra.mxu0 0.0
    %7064 = vmatprep.subr.mxu0 0.0
    %7065 = vmatpush1.msra.mxu0 0.0
    %7066 = vmatprep.subr.mxu0 0.0
    %7067 = vmatpush1.msra.mxu0 0.0
    %7068 = vmatprep.subr.mxu0 0.0
    %7069 = vmatpush1.msra.mxu0 0.0
    %7070 = vmatprep.subr.mxu0 0.0
    %7071 = vmatpush1.msra.mxu0 0.0
    %7072 = vmatprep.subr.mxu0 0.0
    %7073 = vmatpush1.msra.mxu0 0.0
    %7074 = vmatprep.subr.mxu0 0.0
    %7075 = vmatpush1.msra.mxu0 0.0
    %7076 = vmatprep.subr.mxu0 0.0
    %7077 = vmatpush1.msra.mxu0 0.0
    %7078 = vmatprep.subr.mxu0 0.0
    %7079 = vmatpush1.msra.mxu0 0.0
    %7080 = vmatprep.subr.mxu0 0.0
    %7081 = vmatpush1.msra.mxu0 0.0
    %7082 = vmatprep.subr.mxu0 0.0
    %7083 = vmatpush1.msra.mxu0 0.0
    %7084 = vmatprep.subr.mxu0 0.0
    %7085 = vmatpush1.msra.mxu0 0.0
    %7086 = vmatprep.subr.mxu0 0.0
    %7087 = vmatpush1.msra.mxu0 0.0
    %7088 = vmatprep.subr.mxu0 0.0
    %7089 = vmatpush1.msra.mxu0 0.0
    %7090 = vmatprep.subr.mxu0 0.0
    %7091 = vmatpush1.msra.mxu0 0.0
    %7092 = vmatprep.subr.mxu0 0.0
    %7093 = vmatpush1.msra.mxu0 0.0
    %7094 = vmatprep.subr.mxu0 0.0
    %7095 = vmatpush1.msra.mxu0 0.0
    %7096 = vmatprep.subr.mxu0 0.0
    %7097 = vmatpush1.msra.mxu0 0.0
    %7098 = vmatprep.subr.mxu0 0.0
    %7099 = vmatpush1.msra.mxu0 0.0
    %7100 = vmatprep.subr.mxu0 0.0
    %7101 = vmatpush1.msra.mxu0 0.0
    %7102 = vmatprep.subr.mxu0 0.0
    %7103 = vmatpush1.msra.mxu0 0.0
    %7104 = vmatprep.subr.mxu0 0.0
    %7105 = vmatpush1.msra.mxu0 0.0
    %7106 = vmatprep.subr.mxu0 0.0
    %7107 = vmatpush1.msra.mxu0 0.0
    %7108 = vmatprep.subr.mxu0 0.0
    %7109 = vmatpush1.msra.mxu0 0.0
    %7110 = vmatprep.subr.mxu0 0.0
    %7111 = vmatpush1.msra.mxu0 0.0
    %7112 = vmatprep.subr.mxu0 0.0
    %7113 = vmatpush1.msra.mxu0 0.0
    %7114 = vmatprep.mubr.f32.mxu0 0.0
    %7115 = vmatmul.mubr.f32.gmra.mrb[0].mxu0 %v7048
    %v7116 = vpop.f32.mrb[0].mxu0
    %v7117 = vadd.f32 0.0, %v7116
    %v7118 = vpop.f32.mrb[0].mxu0
    %7119 = vdwg.mxu0
    %7120 = vrot.lane.b32.xlu0 %v5859, 40
    %v7121 = vpop.permute.xlu0 %7120
    %v7124 = vsel %vm245, %v7043, 0
    %7126 = vmatprep.subr.mxu0 0.0
    %7127 = vmatpush1.msra.mxu0 %v7121
    %7128 = vmatprep.subr.mxu0 0.0
    %7129 = vmatpush1.msra.mxu0 0.0
    %7130 = vmatprep.subr.mxu0 0.0
    %7131 = vmatpush1.msra.mxu0 0.0
    %7132 = vmatprep.subr.mxu0 0.0
    %7133 = vmatpush1.msra.mxu0 0.0
    %7134 = vmatprep.subr.mxu0 0.0
    %7135 = vmatpush1.msra.mxu0 0.0
    %7136 = vmatprep.subr.mxu0 0.0
    %7137 = vmatpush1.msra.mxu0 0.0
    %7138 = vmatprep.subr.mxu0 0.0
    %7139 = vmatpush1.msra.mxu0 0.0
    %7140 = vmatprep.subr.mxu0 0.0
    %7141 = vmatpush1.msra.mxu0 0.0
    %7142 = vmatprep.subr.mxu0 0.0
    %7143 = vmatpush1.msra.mxu0 0.0
    %7144 = vmatprep.subr.mxu0 0.0
    %7145 = vmatpush1.msra.mxu0 0.0
    %7146 = vmatprep.subr.mxu0 0.0
    %7147 = vmatpush1.msra.mxu0 0.0
    %7148 = vmatprep.subr.mxu0 0.0
    %7149 = vmatpush1.msra.mxu0 0.0
    %7150 = vmatprep.subr.mxu0 0.0
    %7151 = vmatpush1.msra.mxu0 0.0
    %7152 = vmatprep.subr.mxu0 0.0
    %7153 = vmatpush1.msra.mxu0 0.0
    %7154 = vmatprep.subr.mxu0 0.0
    %7155 = vmatpush1.msra.mxu0 0.0
    %7156 = vmatprep.subr.mxu0 0.0
    %7157 = vmatpush1.msra.mxu0 0.0
    %7158 = vmatprep.subr.mxu0 0.0
    %7159 = vmatpush1.msra.mxu0 0.0
    %7160 = vmatprep.subr.mxu0 0.0
    %7161 = vmatpush1.msra.mxu0 0.0
    %7162 = vmatprep.subr.mxu0 0.0
    %7163 = vmatpush1.msra.mxu0 0.0
    %7164 = vmatprep.subr.mxu0 0.0
    %7165 = vmatpush1.msra.mxu0 0.0
    %7166 = vmatprep.subr.mxu0 0.0
    %7167 = vmatpush1.msra.mxu0 0.0
    %7168 = vmatprep.subr.mxu0 0.0
    %7169 = vmatpush1.msra.mxu0 0.0
    %7170 = vmatprep.subr.mxu0 0.0
    %7171 = vmatpush1.msra.mxu0 0.0
    %7172 = vmatprep.subr.mxu0 0.0
    %7173 = vmatpush1.msra.mxu0 0.0
    %7174 = vmatprep.subr.mxu0 0.0
    %7175 = vmatpush1.msra.mxu0 0.0
    %7176 = vmatprep.subr.mxu0 0.0
    %7177 = vmatpush1.msra.mxu0 0.0
    %7178 = vmatprep.subr.mxu0 0.0
    %7179 = vmatpush1.msra.mxu0 0.0
    %7180 = vmatprep.subr.mxu0 0.0
    %7181 = vmatpush1.msra.mxu0 0.0
    %7182 = vmatprep.subr.mxu0 0.0
    %7183 = vmatpush1.msra.mxu0 0.0
    %7184 = vmatprep.subr.mxu0 0.0
    %7185 = vmatpush1.msra.mxu0 0.0
    %7186 = vmatprep.subr.mxu0 0.0
    %7187 = vmatpush1.msra.mxu0 0.0
    %7188 = vmatprep.subr.mxu0 0.0
    %7189 = vmatpush1.msra.mxu0 0.0
    %7190 = vmatprep.mubr.f32.mxu0 0.0
    %7191 = vmatmul.mubr.f32.gmra.mrb[0].mxu0 %v7124
    %v7192 = vpop.f32.mrb[0].mxu0
    %v7193 = vadd.f32 0.0, %v7192
    %v7194 = vpop.f32.mrb[0].mxu0
    %7195 = vdwg.mxu0
    %7198 = vrot.lane.b32.xlu0 %v6449, 8
    %v7199 = vpop.permute.xlu0 %7198
    %7200 = vrot.lane.b32.xlu0 %v6525, 8
    %v7201 = vpop.permute.xlu0 %7200
    %7206 = vrot.lane.b32.xlu0 %v6783, 16
    %v7207 = vpop.permute.xlu0 %7206
    %7208 = vrot.lane.b32.xlu0 %v6859, 16
    %v7209 = vpop.permute.xlu0 %7208
    %7214 = vrot.lane.b32.xlu0 %v7117, 24
    %v7215 = vpop.permute.xlu0 %7214
    %7216 = vrot.lane.b32.xlu0 %v7193, 24
    %v7217 = vpop.permute.xlu0 %7216
    %v7220 = vsel %vm245, %v6115, %v7199
    %v7221 = vsel %vm245, %v6191, %v7201
    %v7222 = vsel %vm1613, %v7220, %v7207
    %v7223 = vsel %vm1613, %v7221, %v7209
    %v7224 = vsel %vm1616, %v7222, %v7215
    %v7225 = vsel %vm1616, %v7223, %v7217
    %s7226 = scalar_lea.vmem %s8, 96
    %v7227 = vld [vmem:[%s7226] sm:$0xff]
    %v7228 = vld [vmem:[%s7226 + $0x8] sm:$0xff]
    %v7229 = vld [vmem:[%s7226 + $0x10] sm:$0xff]
    %v7230 = vld [vmem:[%s7226 + $0x18] sm:$0xff]
    %s7231 = scalar_lea.vmem %s9, 3
    %v7232 = vld [vmem:[%s7231] sm:$0x1]
    %v7234 = vlaneseq
    %v7235 = vshrl.u32 %v7234, 7
    %v7236 = vsub.s32 0, %v7235
    %v7237 = vrot.slane %v7232, %v7236
    %v7240 = vsel %vm106, %v7224, 0
    %v7243 = vsel %vm106, %v7225, 0
    %7245 = vmatprep.subr.mxu0 0.0
    %7246 = vmatpush1.msra.mxu0 %v7227
    %7247 = vmatprep.subr.mxu0 0.0
    %7248 = vmatpush1.msra.mxu0 %v7228
    %7249 = vmatprep.subr.mxu0 0.0
    %7250 = vmatpush1.msra.mxu0 %v7229
    %7251 = vmatprep.subr.mxu0 0.0
    %7252 = vmatpush1.msra.mxu0 %v7230
    %7253 = vmatprep.subr.mxu0 0.0
    %7254 = vmatpush1.msra.mxu0 0.0
    %7255 = vmatprep.subr.mxu0 0.0
    %7256 = vmatpush1.msra.mxu0 0.0
    %7257 = vmatprep.subr.mxu0 0.0
    %7258 = vmatpush1.msra.mxu0 0.0
    %7259 = vmatprep.subr.mxu0 0.0
    %7260 = vmatpush1.msra.mxu0 0.0
    %7261 = vmatprep.subr.mxu0 0.0
    %7262 = vmatpush1.msra.mxu0 0.0
    %7263 = vmatprep.subr.mxu0 0.0
    %7264 = vmatpush1.msra.mxu0 0.0
    %7265 = vmatprep.subr.mxu0 0.0
    %7266 = vmatpush1.msra.mxu0 0.0
    %7267 = vmatprep.subr.mxu0 0.0
    %7268 = vmatpush1.msra.mxu0 0.0
    %7269 = vmatprep.subr.mxu0 0.0
    %7270 = vmatpush1.msra.mxu0 0.0
    %7271 = vmatprep.subr.mxu0 0.0
    %7272 = vmatpush1.msra.mxu0 0.0
    %7273 = vmatprep.subr.mxu0 0.0
    %7274 = vmatpush1.msra.mxu0 0.0
    %7275 = vmatprep.subr.mxu0 0.0
    %7276 = vmatpush1.msra.mxu0 0.0
    %7277 = vmatprep.subr.mxu0 0.0
    %7278 = vmatpush1.msra.mxu0 0.0
    %7279 = vmatprep.subr.mxu0 0.0
    %7280 = vmatpush1.msra.mxu0 0.0
    %7281 = vmatprep.subr.mxu0 0.0
    %7282 = vmatpush1.msra.mxu0 0.0
    %7283 = vmatprep.subr.mxu0 0.0
    %7284 = vmatpush1.msra.mxu0 0.0
    %7285 = vmatprep.subr.mxu0 0.0
    %7286 = vmatpush1.msra.mxu0 0.0
    %7287 = vmatprep.subr.mxu0 0.0
    %7288 = vmatpush1.msra.mxu0 0.0
    %7289 = vmatprep.subr.mxu0 0.0
    %7290 = vmatpush1.msra.mxu0 0.0
    %7291 = vmatprep.subr.mxu0 0.0
    %7292 = vmatpush1.msra.mxu0 0.0
    %7293 = vmatprep.subr.mxu0 0.0
    %7294 = vmatpush1.msra.mxu0 0.0
    %7295 = vmatprep.subr.mxu0 0.0
    %7296 = vmatpush1.msra.mxu0 0.0
    %7297 = vmatprep.subr.mxu0 0.0
    %7298 = vmatpush1.msra.mxu0 0.0
    %7299 = vmatprep.subr.mxu0 0.0
    %7300 = vmatpush1.msra.mxu0 0.0
    %7301 = vmatprep.subr.mxu0 0.0
    %7302 = vmatpush1.msra.mxu0 0.0
    %7303 = vmatprep.subr.mxu0 0.0
    %7304 = vmatpush1.msra.mxu0 0.0
    %7305 = vmatprep.subr.mxu0 0.0
    %7306 = vmatpush1.msra.mxu0 0.0
    %7307 = vmatprep.subr.mxu0 0.0
    %7308 = vmatpush1.msra.mxu0 0.0
    %7309 = vmatprep.mubr.f32.mxu0 0.0
    %7310 = vmatmul.mubr.f32.gmra.mrb[0].mxu0 %v7240
    %v7311 = vpop.f32.mrb[0].mxu0
    %v7312 = vadd.f32 %v7237, %v7311
    %v7313 = vpop.f32.mrb[0].mxu0
    %7314 = vmatprep.mubr.f32.mxu0 0.0
    %7315 = vmatmul.mubr.f32.gmra.mrb[0].mxu0 %v7243
    %v7316 = vpop.f32.mrb[0].mxu0
    %v7317 = vadd.f32 %v7237, %v7316
    %v7318 = vpop.f32.mrb[0].mxu0
    %7319 = vdwg.mxu0
    %v7320 = vadd.f32 %v5766, %v7312
    %v7321 = vadd.f32 %v5767, %v7317
    %s7322 = scalar_lea.vmem %s10, 3
    %v7323 = vld [vmem:[%s7322] sm:$0x1]
    %s7324 = scalar_lea.vmem %s11, 3
    %v7325 = vld [vmem:[%s7324] sm:$0x1]
    %v7326 = vsel %vm106, %v7320, 0.0
    %7327 = vadd.xlane.f32.xlu0 %v7326
    %v7328 = vpop.xlane.xlu0 %7327
    %v7329 = vsel %vm106, %v7321, 0.0
    %7330 = vadd.xlane.f32.xlu0 %v7329
    %v7331 = vpop.xlane.xlu0 %7330
    %v7332 = vmul.f32 %v7328, %v113
    %v7333 = vmul.f32 %v7331, %v113
    %v7334 = vsub.f32 %v7320, %v7332
    %v7335 = vsub.f32 %v7321, %v7333
    %v7336 = vmul.f32 %v7334, %v7334
    %v7337 = vmul.f32 %v7335, %v7335
    %v7338 = vsel %vm106, %v7336, 0.0
    %7339 = vadd.xlane.f32.xlu0 %v7338
    %v7340 = vpop.xlane.xlu0 %7339
    %v7341 = vsel %vm106, %v7337, 0.0
    %7342 = vadd.xlane.f32.xlu0 %v7341
    %v7343 = vpop.xlane.xlu0 %7342
    %v7344 = vmul.f32 %v7340, %v113
    %v7345 = vmul.f32 %v7343, %v113
    %v7346 = vadd.f32 %v7344, 1e-12
    %v7347 = vadd.f32 %v7345, 1e-12
    %v7348 = vrsqrt.pop %v7346
    %v7349 = vrsqrt.pop %v7347
    %v7350 = vmul.f32 %v7334, %v7348
    %v7351 = vmul.f32 %v7335, %v7349
    %v7353 = vlaneseq
    %v7354 = vshrl.u32 %v7353, 7
    %v7355 = vsub.s32 0, %v7354
    %v7356 = vrot.slane %v7323, %v7355
    %v7358 = vmul.f32 %v7350, %v7356
    %v7359 = vmul.f32 %v7351, %v7356
    %v7361 = vlaneseq
    %v7362 = vshrl.u32 %v7361, 7
    %v7363 = vsub.s32 0, %v7362
    %v7364 = vrot.slane %v7325, %v7363
    %v7366 = vadd.f32 %v7358, %v7364
    %v7367 = vadd.f32 %v7359, %v7364
    %s7368 = scalar_lea.vmem %s12, 96
    %v7369 = vld [vmem:[%s7368] sm:$0xff]
    %v7370 = vld [vmem:[%s7368 + $0x8] sm:$0xff]
    %v7371 = vld [vmem:[%s7368 + $0x10] sm:$0xff]
    %v7372 = vld [vmem:[%s7368 + $0x18] sm:$0xff]
    %s7373 = scalar_lea.vmem %s13, 3
    %v7374 = vld [vmem:[%s7373] sm:$0x1]
    %v7376 = vlaneseq
    %v7377 = vshrl.u32 %v7376, 7
    %v7378 = vsub.s32 0, %v7377
    %v7379 = vrot.slane %v7374, %v7378
    %v7382 = vsel %vm106, %v7366, 0
    %v7385 = vsel %vm106, %v7367, 0
    %7387 = vmatprep.subr.mxu0 0.0
    %7388 = vmatpush1.msra.mxu0 %v7369
    %7389 = vmatprep.subr.mxu0 0.0
    %7390 = vmatpush1.msra.mxu0 %v7370
    %7391 = vmatprep.subr.mxu0 0.0
    %7392 = vmatpush1.msra.mxu0 %v7371
    %7393 = vmatprep.subr.mxu0 0.0
    %7394 = vmatpush1.msra.mxu0 %v7372
    %7395 = vmatprep.subr.mxu0 0.0
    %7396 = vmatpush1.msra.mxu0 0.0
    %7397 = vmatprep.subr.mxu0 0.0
    %7398 = vmatpush1.msra.mxu0 0.0
    %7399 = vmatprep.subr.mxu0 0.0
    %7400 = vmatpush1.msra.mxu0 0.0
    %7401 = vmatprep.subr.mxu0 0.0
    %7402 = vmatpush1.msra.mxu0 0.0
    %7403 = vmatprep.subr.mxu0 0.0
    %7404 = vmatpush1.msra.mxu0 0.0
    %7405 = vmatprep.subr.mxu0 0.0
    %7406 = vmatpush1.msra.mxu0 0.0
    %7407 = vmatprep.subr.mxu0 0.0
    %7408 = vmatpush1.msra.mxu0 0.0
    %7409 = vmatprep.subr.mxu0 0.0
    %7410 = vmatpush1.msra.mxu0 0.0
    %7411 = vmatprep.subr.mxu0 0.0
    %7412 = vmatpush1.msra.mxu0 0.0
    %7413 = vmatprep.subr.mxu0 0.0
    %7414 = vmatpush1.msra.mxu0 0.0
    %7415 = vmatprep.subr.mxu0 0.0
    %7416 = vmatpush1.msra.mxu0 0.0
    %7417 = vmatprep.subr.mxu0 0.0
    %7418 = vmatpush1.msra.mxu0 0.0
    %7419 = vmatprep.subr.mxu0 0.0
    %7420 = vmatpush1.msra.mxu0 0.0
    %7421 = vmatprep.subr.mxu0 0.0
    %7422 = vmatpush1.msra.mxu0 0.0
    %7423 = vmatprep.subr.mxu0 0.0
    %7424 = vmatpush1.msra.mxu0 0.0
    %7425 = vmatprep.subr.mxu0 0.0
    %7426 = vmatpush1.msra.mxu0 0.0
    %7427 = vmatprep.subr.mxu0 0.0
    %7428 = vmatpush1.msra.mxu0 0.0
    %7429 = vmatprep.subr.mxu0 0.0
    %7430 = vmatpush1.msra.mxu0 0.0
    %7431 = vmatprep.subr.mxu0 0.0
    %7432 = vmatpush1.msra.mxu0 0.0
    %7433 = vmatprep.subr.mxu0 0.0
    %7434 = vmatpush1.msra.mxu0 0.0
    %7435 = vmatprep.subr.mxu0 0.0
    %7436 = vmatpush1.msra.mxu0 0.0
    %7437 = vmatprep.subr.mxu0 0.0
    %7438 = vmatpush1.msra.mxu0 0.0
    %7439 = vmatprep.subr.mxu0 0.0
    %7440 = vmatpush1.msra.mxu0 0.0
    %7441 = vmatprep.subr.mxu0 0.0
    %7442 = vmatpush1.msra.mxu0 0.0
    %7443 = vmatprep.subr.mxu0 0.0
    %7444 = vmatpush1.msra.mxu0 0.0
    %7445 = vmatprep.subr.mxu0 0.0
    %7446 = vmatpush1.msra.mxu0 0.0
    %7447 = vmatprep.subr.mxu0 0.0
    %7448 = vmatpush1.msra.mxu0 0.0
    %7449 = vmatprep.subr.mxu0 0.0
    %7450 = vmatpush1.msra.mxu0 0.0
    %7451 = vmatprep.mubr.f32.mxu0 0.0
    %7452 = vmatmul.mubr.f32.gmra.mrb[0].mxu0 %v7382
    %v7453 = vpop.f32.mrb[0].mxu0
    %v7454 = vadd.f32 %v7379, %v7453
    %v7455 = vpop.f32.mrb[0].mxu0
    %7456 = vmatprep.mubr.f32.mxu0 0.0
    %7457 = vmatmul.mubr.f32.gmra.mrb[0].mxu0 %v7385
    %v7458 = vpop.f32.mrb[0].mxu0
    %v7459 = vadd.f32 %v7379, %v7458
    %v7460 = vpop.f32.mrb[0].mxu0
    %7461 = vdwg.mxu0
    %v7462 = vmul.f32 %v7454, %v7454
    %v7463 = vmul.f32 %v7459, %v7459
    %v7464 = vmul.f32 %v7454, %v7462
    %v7465 = vmul.f32 %v7459, %v7463
    %v7466 = vmul.f32 %v7464, 0.044715
    %v7467 = vmul.f32 %v7465, 0.044715
    %v7468 = vadd.f32 %v7454, %v7466
    %v7469 = vadd.f32 %v7459, %v7467
    %v7470 = vmul.f32 %v7468, 0.7978846
    %v7471 = vmul.f32 %v7469, 0.7978846
    %v7472 = vtanh.pop %v7470
    %v7473 = vtanh.pop %v7471
    %v7474 = vadd.f32 %v7472, 1.0
    %v7475 = vadd.f32 %v7473, 1.0
    %v7476 = vmul.f32 %v7474, 0.5
    %v7477 = vmul.f32 %v7475, 0.5
    %v7478 = vmul.f32 %v7454, %v7476
    %v7479 = vmul.f32 %v7459, %v7477
    %s7480 = scalar_lea.vmem %s14, 384
    %v7481 = vld [vmem:[%s7480] sm:$0xff]
    %v7482 = vld [vmem:[%s7480 + $0x8] sm:$0xff]
    %v7483 = vld [vmem:[%s7480 + $0x10] sm:$0xff]
    %v7484 = vld [vmem:[%s7480 + $0x18] sm:$0xff]
    %v7485 = vld [vmem:[%s7480 + $0x20] sm:$0xff]
    %v7486 = vld [vmem:[%s7480 + $0x28] sm:$0xff]
    %v7487 = vld [vmem:[%s7480 + $0x30] sm:$0xff]
    %v7488 = vld [vmem:[%s7480 + $0x38] sm:$0xff]
    %v7489 = vld [vmem:[%s7480 + $0x40] sm:$0xff]
    %v7490 = vld [vmem:[%s7480 + $0x48] sm:$0xff]
    %v7491 = vld [vmem:[%s7480 + $0x50] sm:$0xff]
    %v7492 = vld [vmem:[%s7480 + $0x58] sm:$0xff]
    %v7493 = vld [vmem:[%s7480 + $0x60] sm:$0xff]
    %v7494 = vld [vmem:[%s7480 + $0x68] sm:$0xff]
    %v7495 = vld [vmem:[%s7480 + $0x70] sm:$0xff]
    %v7496 = vld [vmem:[%s7480 + $0x78] sm:$0xff]
    %s7497 = scalar_lea.vmem %s15, 3
    %v7498 = vld [vmem:[%s7497] sm:$0x1]
    %v7500 = vlaneseq
    %v7501 = vshrl.u32 %v7500, 7
    %v7502 = vsub.s32 0, %v7501
    %v7503 = vrot.slane %v7498, %v7502
    %7505 = vmatprep.subr.mxu0 0.0
    %7506 = vmatpush1.msra.mxu0 %v7481
    %7507 = vmatprep.subr.mxu0 0.0
    %7508 = vmatpush1.msra.mxu0 %v7482
    %7509 = vmatprep.subr.mxu0 0.0
    %7510 = vmatpush1.msra.mxu0 %v7483
    %7511 = vmatprep.subr.mxu0 0.0
    %7512 = vmatpush1.msra.mxu0 %v7484
    %7513 = vmatprep.subr.mxu0 0.0
    %7514 = vmatpush1.msra.mxu0 %v7485
    %7515 = vmatprep.subr.mxu0 0.0
    %7516 = vmatpush1.msra.mxu0 %v7486
    %7517 = vmatprep.subr.mxu0 0.0
    %7518 = vmatpush1.msra.mxu0 %v7487
    %7519 = vmatprep.subr.mxu0 0.0
    %7520 = vmatpush1.msra.mxu0 %v7488
    %7521 = vmatprep.subr.mxu0 0.0
    %7522 = vmatpush1.msra.mxu0 %v7489
    %7523 = vmatprep.subr.mxu0 0.0
    %7524 = vmatpush1.msra.mxu0 %v7490
    %7525 = vmatprep.subr.mxu0 0.0
    %7526 = vmatpush1.msra.mxu0 %v7491
    %7527 = vmatprep.subr.mxu0 0.0
    %7528 = vmatpush1.msra.mxu0 %v7492
    %7529 = vmatprep.subr.mxu0 0.0
    %7530 = vmatpush1.msra.mxu0 %v7493
    %7531 = vmatprep.subr.mxu0 0.0
    %7532 = vmatpush1.msra.mxu0 %v7494
    %7533 = vmatprep.subr.mxu0 0.0
    %7534 = vmatpush1.msra.mxu0 %v7495
    %7535 = vmatprep.subr.mxu0 0.0
    %7536 = vmatpush1.msra.mxu0 %v7496
    %7537 = vmatprep.subr.mxu0 0.0
    %7538 = vmatpush1.msra.mxu0 0.0
    %7539 = vmatprep.subr.mxu0 0.0
    %7540 = vmatpush1.msra.mxu0 0.0
    %7541 = vmatprep.subr.mxu0 0.0
    %7542 = vmatpush1.msra.mxu0 0.0
    %7543 = vmatprep.subr.mxu0 0.0
    %7544 = vmatpush1.msra.mxu0 0.0
    %7545 = vmatprep.subr.mxu0 0.0
    %7546 = vmatpush1.msra.mxu0 0.0
    %7547 = vmatprep.subr.mxu0 0.0
    %7548 = vmatpush1.msra.mxu0 0.0
    %7549 = vmatprep.subr.mxu0 0.0
    %7550 = vmatpush1.msra.mxu0 0.0
    %7551 = vmatprep.subr.mxu0 0.0
    %7552 = vmatpush1.msra.mxu0 0.0
    %7553 = vmatprep.subr.mxu0 0.0
    %7554 = vmatpush1.msra.mxu0 0.0
    %7555 = vmatprep.subr.mxu0 0.0
    %7556 = vmatpush1.msra.mxu0 0.0
    %7557 = vmatprep.subr.mxu0 0.0
    %7558 = vmatpush1.msra.mxu0 0.0
    %7559 = vmatprep.subr.mxu0 0.0
    %7560 = vmatpush1.msra.mxu0 0.0
    %7561 = vmatprep.subr.mxu0 0.0
    %7562 = vmatpush1.msra.mxu0 0.0
    %7563 = vmatprep.subr.mxu0 0.0
    %7564 = vmatpush1.msra.mxu0 0.0
    %7565 = vmatprep.subr.mxu0 0.0
    %7566 = vmatpush1.msra.mxu0 0.0
    %7567 = vmatprep.subr.mxu0 0.0
    %7568 = vmatpush1.msra.mxu0 0.0
    %7569 = vmatprep.mubr.f32.mxu0 0.0
    %7570 = vmatmul.mubr.f32.gmra.mrb[0].mxu0 %v7478
    %v7571 = vpop.f32.mrb[0].mxu0
    %v7572 = vadd.f32 %v7503, %v7571
    %v7573 = vpop.f32.mrb[0].mxu0
    %7574 = vmatprep.mubr.f32.mxu0 0.0
    %7575 = vmatmul.mubr.f32.gmra.mrb[0].mxu0 %v7479
    %v7576 = vpop.f32.mrb[0].mxu0
    %v7577 = vadd.f32 %v7503, %v7576
    %v7578 = vpop.f32.mrb[0].mxu0
    %7579 = vdwg.mxu0
    %v7580 = vadd.f32 %v7366, %v7572
    %v7581 = vadd.f32 %v7367, %v7577
    %s7582 = scalar_lea.vmem %s16, 3
    %v7583 = vld [vmem:[%s7582] sm:$0x1]
    %s7584 = scalar_lea.vmem %s17, 3
    %v7585 = vld [vmem:[%s7584] sm:$0x1]
    %v7586 = vsel %vm106, %v7580, 0.0
    %7587 = vadd.xlane.f32.xlu0 %v7586
    %v7588 = vpop.xlane.xlu0 %7587
    %v7589 = vsel %vm106, %v7581, 0.0
    %7590 = vadd.xlane.f32.xlu0 %v7589
    %v7591 = vpop.xlane.xlu0 %7590
    %v7592 = vmul.f32 %v7588, %v113
    %v7593 = vmul.f32 %v7591, %v113
    %v7594 = vsub.f32 %v7580, %v7592
    %v7595 = vsub.f32 %v7581, %v7593
    %v7596 = vmul.f32 %v7594, %v7594
    %v7597 = vmul.f32 %v7595, %v7595
    %v7598 = vsel %vm106, %v7596, 0.0
    %7599 = vadd.xlane.f32.xlu0 %v7598
    %v7600 = vpop.xlane.xlu0 %7599
    %v7601 = vsel %vm106, %v7597, 0.0
    %7602 = vadd.xlane.f32.xlu0 %v7601
    %v7603 = vpop.xlane.xlu0 %7602
    %v7604 = vmul.f32 %v7600, %v113
    %v7605 = vmul.f32 %v7603, %v113
    %v7606 = vadd.f32 %v7604, 1e-12
    %v7607 = vadd.f32 %v7605, 1e-12
    %v7608 = vrsqrt.pop %v7606
    %v7609 = vrsqrt.pop %v7607
    %v7610 = vmul.f32 %v7594, %v7608
    %v7611 = vmul.f32 %v7595, %v7609
    %v7613 = vlaneseq
    %v7614 = vshrl.u32 %v7613, 7
    %v7615 = vsub.s32 0, %v7614
    %v7616 = vrot.slane %v7583, %v7615
    %v7618 = vmul.f32 %v7610, %v7616
    %v7619 = vmul.f32 %v7611, %v7616
    %v7621 = vlaneseq
    %v7622 = vshrl.u32 %v7621, 7
    %v7623 = vsub.s32 0, %v7622
    %v7624 = vrot.slane %v7585, %v7623
    %v7626 = vadd.f32 %v7618, %v7624
    %v7627 = vadd.f32 %v7619, %v7624
    %v7628 = vsel %vm106, %v7626, 0.0
    %v7629 = vrot.slane %v7628, 4
    %v7630 = vadd.f32 %v7628, %v7629
    %v7631 = vrot.slane %v7630, 2
    %v7632 = vadd.f32 %v7630, %v7631
    %v7633 = vrot.slane %v7632, 1
    %v7634 = vadd.f32 %v7632, %v7633
    %v7635 = vsel %vm106, %v7627, 0.0
    %v7636 = vrot.slane %v7635, 4
    %v7637 = vadd.f32 %v7635, %v7636
    %v7638 = vrot.slane %v7637, 2
    %v7639 = vadd.f32 %v7637, %v7638
    %v7640 = vrot.slane %v7639, 1
    %v7641 = vadd.f32 %v7639, %v7640
    %v7642 = vmul.f32 %v7634, %v2025
    %v7643 = vmul.f32 %v7641, %v2025
    %v7644 = vadd.f32 %v3906, %v7642
    %v7645 = vadd.f32 %v3907, %v7643
    %v7646 = vmul.f32 %v7644, 0.33333334
    %v7647 = vmul.f32 %v7645, 0.33333334
    %v7648 = vld [vmem:[%s18] sm:$0xff]
    %v7649 = vld [vmem:[%s18 + $0x8] sm:$0xff]
    %v7650 = vld [vmem:[%s18 + $0x10] sm:$0xff]
    %v7651 = vld [vmem:[%s18 + $0x18] sm:$0xff]
    %vm7654 = vcmask 1041409
    %v7655 = vsel %vm7654, %v7647, %v7646
    %v7656 = vsel %vm106, %v7655, 0
    %7658 = vmatprep.subr.mxu0 0.0
    %7659 = vmatpush1.msra.mxu0 %v7648
    %7660 = vmatprep.subr.mxu0 0.0
    %7661 = vmatpush1.msra.mxu0 %v7649
    %7662 = vmatprep.subr.mxu0 0.0
    %7663 = vmatpush1.msra.mxu0 %v7650
    %7664 = vmatprep.subr.mxu0 0.0
    %7665 = vmatpush1.msra.mxu0 %v7651
    %7666 = vmatprep.subr.mxu0 0.0
    %7667 = vmatpush1.msra.mxu0 0.0
    %7668 = vmatprep.subr.mxu0 0.0
    %7669 = vmatpush1.msra.mxu0 0.0
    %7670 = vmatprep.subr.mxu0 0.0
    %7671 = vmatpush1.msra.mxu0 0.0
    %7672 = vmatprep.subr.mxu0 0.0
    %7673 = vmatpush1.msra.mxu0 0.0
    %7674 = vmatprep.subr.mxu0 0.0
    %7675 = vmatpush1.msra.mxu0 0.0
    %7676 = vmatprep.subr.mxu0 0.0
    %7677 = vmatpush1.msra.mxu0 0.0
    %7678 = vmatprep.subr.mxu0 0.0
    %7679 = vmatpush1.msra.mxu0 0.0
    %7680 = vmatprep.subr.mxu0 0.0
    %7681 = vmatpush1.msra.mxu0 0.0
    %7682 = vmatprep.subr.mxu0 0.0
    %7683 = vmatpush1.msra.mxu0 0.0
    %7684 = vmatprep.subr.mxu0 0.0
    %7685 = vmatpush1.msra.mxu0 0.0
    %7686 = vmatprep.subr.mxu0 0.0
    %7687 = vmatpush1.msra.mxu0 0.0
    %7688 = vmatprep.subr.mxu0 0.0
    %7689 = vmatpush1.msra.mxu0 0.0
    %7690 = vmatprep.subr.mxu0 0.0
    %7691 = vmatpush1.msra.mxu0 0.0
    %7692 = vmatprep.subr.mxu0 0.0
    %7693 = vmatpush1.msra.mxu0 0.0
    %7694 = vmatprep.subr.mxu0 0.0
    %7695 = vmatpush1.msra.mxu0 0.0
    %7696 = vmatprep.subr.mxu0 0.0
    %7697 = vmatpush1.msra.mxu0 0.0
    %7698 = vmatprep.subr.mxu0 0.0
    %7699 = vmatpush1.msra.mxu0 0.0
    %7700 = vmatprep.subr.mxu0 0.0
    %7701 = vmatpush1.msra.mxu0 0.0
    %7702 = vmatprep.subr.mxu0 0.0
    %7703 = vmatpush1.msra.mxu0 0.0
    %7704 = vmatprep.subr.mxu0 0.0
    %7705 = vmatpush1.msra.mxu0 0.0
    %7706 = vmatprep.subr.mxu0 0.0
    %7707 = vmatpush1.msra.mxu0 0.0
    %7708 = vmatprep.subr.mxu0 0.0
    %7709 = vmatpush1.msra.mxu0 0.0
    %7710 = vmatprep.subr.mxu0 0.0
    %7711 = vmatpush1.msra.mxu0 0.0
    %7712 = vmatprep.subr.mxu0 0.0
    %7713 = vmatpush1.msra.mxu0 0.0
    %7714 = vmatprep.subr.mxu0 0.0
    %7715 = vmatpush1.msra.mxu0 0.0
    %7716 = vmatprep.subr.mxu0 0.0
    %7717 = vmatpush1.msra.mxu0 0.0
    %7718 = vmatprep.subr.mxu0 0.0
    %7719 = vmatpush1.msra.mxu0 0.0
    %7720 = vmatprep.subr.mxu0 0.0
    %7721 = vmatpush1.msra.mxu0 0.0
    %7722 = vmatprep.mubr.f32.mxu0 0.0
    %7723 = vmatmul.mubr.f32.gmra.mrb[0].mxu0 %v7656
    %v7724 = vpop.f32.mrb[0].mxu0
    %v7725 = vadd.f32 0.0, %v7724
    %v7726 = vpop.f32.mrb[0].mxu0
    %7727 = vdwg.mxu0
    %vm7728 = vcmask 123904
    %7729 = vst.msk [vmem:[#allocation2] sm:$0x3] %vm7728, %v7725
    // Predicated region
    $region78: #{tpu_custom_call.1} parent=1 // pred_check
      _
    $region79: #{tpu_custom_call.1} parent=1 // pred_check_branch
      %7731 = sbr.rel (0) target = $region81
    $region80: #{tpu_custom_call.1} parent=1 // pred_region
      %s7733 = ssub.s32 32, 32
      %7734 = vsyncadd [#allocation3], %s7733
      %s7736 = sshll.u32 [#allocation2], 4
      %s7737 = int_to_ptr.vmem [resolvable:$true] %s7736
      %7739 = dma.vmem_to_hbm [thread:$0]  %s7737, 32, %s19, [#allocation3]
    $region81: #{tpu_custom_call.1} parent=1 // pred_fallthru
      _
    // Predicated region
    $region82: #{tpu_custom_call.1} parent=1 // pred_check
      _
    $region83: #{tpu_custom_call.1} parent=1 // pred_check_branch
      %7741 = sbr.rel (0) target = $region85
    $region84: #{tpu_custom_call.1} parent=1 // pred_region
      %7742 = dma.done [#allocation3], 32
    $region85: #{tpu_custom_call.1} parent=1 // pred_fallthru
      _
    %7743 = vsyncpa [#allocation3], 1

</llo_original>
